<compile_context>
chip_gen: v6e
topology: v6e:2x2x1
jax: 0.10.0
libtpu: 0.0.40
codegen_flags: <defaults>
</compile_context>

<pallas_src>
import functools
import numpy as np
import jax
import jax.numpy as jnp
from jax.experimental import pallas as pl
from jax.experimental.pallas import tpu as pltpu

# ----------------------------- reduced MobileNetV2 config -----------------------------
IN_C = 3
STEM_C = 8
# (expand_ratio t, out_channels c, num_blocks n, first_stride s)
CFG = [
    (1, 8, 1, 1),
    (6, 16, 2, 2),
    (6, 32, 2, 2),
]
LAST_C = 64      # "last_channel" of the reduced backbone (1280 in the full model)
LANE = 128       # TPU lane width; all channel dims are padded to a multiple of this


def _rup(c):
    return ((c + LANE - 1) // LANE) * LANE


# ------------------------------ flat-padded conv geometry ------------------------------
def _conv_geom(H, W, stride):
    """Geometry for a 3x3 / pad=1 conv in flat-padded layout.

    Activations are stored as (P, C) with P = (H+2)*(W+2) row-major over the zero-halo grid.
    The stride-1 conv is evaluated on the contiguous slab of L = (H-1)*(W+2)+W positions;
    `sel` (0/1, bf16 at use) gathers the (possibly strided) outputs back into the padded
    layout of the next stage and zeroes its halo.
    """
    Hp, Wp = H + 2, W + 2
    P_in = Hp * Wp
    L = (H - 1) * Wp + W
    Ho, Wo = H // stride, W // stride
    Hop, Wop = Ho + 2, Wo + 2
    P_out = Hop * Wop
    sel = np.zeros((P_out, L), np.float32)
    out_mask = np.zeros((P_out, 1), np.float32)
    for io in range(Ho):
        for jo in range(Wo):
            q = stride * io * Wp + stride * jo          # slab index of input pos (s*io, s*jo)
            p = (io + 1) * Wop + (jo + 1)               # padded flat index of output (io, jo)
            sel[p, q] = 1.0
            out_mask[p, 0] = 1.0
    in_mask = np.zeros((P_in, 1), np.float32)
    for i in range(H):
        for j in range(W):
            in_mask[(i + 1) * Wp + (j + 1), 0] = 1.0
    return dict(Wp=Wp, P_in=P_in, L=L, P_out=P_out,
                sel=jnp.asarray(sel),
                in_mask=jnp.asarray(in_mask),
                out_mask=jnp.asarray(out_mask))


def _interior_mask(H):
    m = np.zeros(((H + 2) * (H + 2), 1), np.float32)
    for i in range(H):
        for j in range(H):
            m[(i + 1) * (H + 2) + (j + 1), 0] = 1.0
    return jnp.asarray(m)


# -------------------------------- fully fused kernel -----------------------------------
def fused_kernel(xc_ref, *refs, blocks_meta, n_weights):
    """Whole network for one sample per grid step; activations never leave VMEM."""
    w_refs = refs[:n_weights]
    o_ref = refs[n_weights]
    hid_refs = refs[n_weights + 1:]

    idx = [0]
    def nxt():
        r = w_refs[idx[0]]
        idx[0] += 1
        return r

    # ---- stem: one K=27 (lane-padded) matmul + bias + ReLU6 + halo re-zero ----
    w_s, b_s, m_s = nxt(), nxt(), nxt()
    x = jnp.dot(xc_ref[...], w_s[...], preferred_element_type=jnp.float32)
    x = (jnp.clip(x + b_s[...], 0.0, 6.0) * m_s[...]).astype(jnp.bfloat16)

    # ---- inverted residual blocks (expand + depthwise + project, fused) ----
    for bi, meta in enumerate(blocks_meta):
        hid = hid_refs[bi]
        L, Wp = meta["L"], meta["Wp"]
        if meta["expand"]:
            w_e, b_e, m_in = nxt(), nxt(), nxt()
            h = jnp.dot(x, w_e[...], preferred_element_type=jnp.float32)
            h = jnp.clip(h + b_e[...], 0.0, 6.0) * m_in[...]   # re-zero the halo rows
            hid[...] = h.astype(jnp.bfloat16)
        else:
            hid[...] = x                                       # halo already zero

        w_d, b_d, sel, w_p, b_p, m_out = nxt(), nxt(), nxt(), nxt(), nxt(), nxt()

        # depthwise 3x3 + bias + ReLU6 over the contiguous slab of stride-1 positions
        acc = jnp.zeros((L, hid.shape[-1]), jnp.float32)
        for kh in range(3):
            for kw in range(3):
                acc += (hid[pl.ds(kh * Wp + kw, L), :].astype(jnp.float32)
                        * w_d[3 * kh + kw])
        acc = jnp.clip(acc + b_d[...], 0.0, 6.0).astype(jnp.bfloat16)

        # strided output gather (bf16 0/1 matmul, exact) + 1x1 projection + bias
        picked = jnp.dot(sel[...], acc, preferred_element_type=jnp.float32)
        y = jnp.dot(picked.astype(jnp.bfloat16), w_p[...],
                    preferred_element_type=jnp.float32)
        y = (y + b_p[...]) * m_out[...]                        # keep the halo exactly zero
        if meta["use_res"]:
            y = y + x.astype(jnp.float32)                      # stride 1 & Cin==Cout only
        x = y.astype(jnp.bfloat16)

    # ---- head: last 1x1 conv + bias + ReLU6 + global average pool + Linear ----
    w_l, b_l, pool, w_c, b_c = nxt(), nxt(), nxt(), nxt(), nxt()
    y = jnp.dot(x, w_l[...], preferred_element_type=jnp.float32)
    y = jnp.clip(y + b_l[...], 0.0, 6.0)
    pooled = jnp.sum(y * pool[...], axis=0, keepdims=True)     # (1, 128), halo weighted 0
    # TODO(synk): nn.Dropout(0.3) is identity at inference; omitted.
    logit = jnp.dot(pooled, w_c[...], preferred_element_type=jnp.float32) + b_c[...]
    o_ref[...] = jnp.broadcast_to(logit, o_ref.shape)


def _const_spec(a):
    nd = a.ndim
    return pl.BlockSpec(a.shape, lambda n, _nd=nd: (0,) * _nd)


def fused_call(xc, params):
    N = xc.shape[0]
    stem, blocks, head = params["stem"], params["blocks"], params["head"]

    w_list = [stem["w"], stem["b"], stem["mask"]]
    for blk in blocks:
        if blk["expand"]:
            w_list += [blk["w_exp"], blk["b_exp"], blk["m_in"]]
        w_list += [blk["w_dw"], blk["b_dw"], blk["sel"],
                   blk["w_pr"], blk["b_pr"], blk["m_out"]]
    w_list += [head["w_last"], head["b_last"], head["pool"],
               head["w_cls"], head["b_cls"]]

    meta = tuple(dict(expand=b["expand"], use_res=b["use_res"],
                      L=b["L"], Wp=b["Wp"]) for b in blocks)

    in_specs = [pl.BlockSpec((None, xc.shape[1], xc.shape[2]), lambda n: (n, 0, 0))]
    in_specs += [_const_spec(a) for a in w_list]

    scratch = [pltpu.VMEM((b["P_in"], b["hid_p"]), jnp.bfloat16) for b in blocks]

    out = pl.pallas_call(
        functools.partial(fused_kernel, blocks_meta=meta, n_weights=len(w_list)),
        grid=(N,),
        in_specs=in_specs,
        out_specs=pl.BlockSpec((None, 8, LANE), lambda n: (n, 0, 0)),
        out_shape=jax.ShapeDtypeStruct((N, 8, LANE), jnp.float32),
        scratch_shapes=scratch,
        compiler_params=pltpu.CompilerParams(dimension_semantics=("parallel",)),
    )(xc, *w_list)
    return out[:, 0, :1]                                       # (N, 1) real logit column


# ------------------------------- parameter construction --------------------------------
def _bn_fold(key, c):
    k1, k2, k3, k4 = jax.random.split(key, 4)
    gamma = jax.random.uniform(k1, (c,), minval=0.5, maxval=1.5)
    beta = 0.1 * jax.random.normal(k2, (c,))
    mean = 0.1 * jax.random.normal(k3, (c,))
    var = jax.random.uniform(k4, (c,), minval=0.5, maxval=1.5)
    scale = gamma / jnp.sqrt(var + 1e-5)
    bias = beta - mean * scale
    return scale, bias


def _pad_row(v, cp):
    return jnp.zeros((1, cp), jnp.float32).at[0, :v.shape[0]].set(v)


def _pad_mat(w, rp, cp, dtype=jnp.bfloat16):
    return (jnp.zeros((rp, cp), jnp.float32)
            .at[:w.shape[0], :w.shape[1]].set(w).astype(dtype))


def build_model(key):
    keys = iter(jax.random.split(key, 256))
    nk = lambda: next(keys)
    params = {}

    # stem: 3x3 conv stride 2, IN_C -> STEM_C; BN scale folded into the weight
    s_s, b_s = _bn_fold(nk(), STEM_C)
    w = jax.random.normal(nk(), (9, IN_C, STEM_C)) / np.sqrt(9 * IN_C)
    w = (w * s_s[None, None, :]).reshape(9 * IN_C, STEM_C)      # tap-major, channel-minor
    params["stem"] = dict(w=_pad_mat(w, LANE, LANE), b=_pad_row(b_s, LANE),
                          mask=_interior_mask(16 // 2))

    # inverted residual blocks
    blocks = []
    cin = STEM_C
    H = 16 // 2                       # spatial side after the stride-2 stem
    for t, c, n, st in CFG:
        for i in range(n):
            stride = st if i == 0 else 1
            hidden = cin * t
            cin_p, hid_p, cout_p = _rup(cin), _rup(hidden), _rup(c)
            g = _conv_geom(H, H, stride)
            blk = dict(expand=(t != 1), use_res=(stride == 1 and cin == c),
                       L=g["L"], Wp=g["Wp"], P_in=g["P_in"], P_out=g["P_out"],
                       hid_p=hid_p)
            if t != 1:
                s_e, b_e = _bn_fold(nk(), hidden)
                we = jax.random.normal(nk(), (cin, hidden)) / np.sqrt(cin) * s_e[None, :]
                blk["w_exp"] = _pad_mat(we, cin_p, hid_p)
                blk["b_exp"] = _pad_row(b_e, hid_p)
                blk["m_in"] = g["in_mask"]
            s_d, b_d = _bn_fold(nk(), hidden)
            wd = jax.random.normal(nk(), (9, hidden)) / 3.0 * s_d[None, :]
            blk["w_dw"] = jnp.zeros((9, 1, hid_p), jnp.float32).at[:, 0, :hidden].set(wd)
            blk["b_dw"] = _pad_row(b_d, hid_p)
            blk["sel"] = g["sel"].astype(jnp.bfloat16)          # exact 0/1
            s_p, b_p = _bn_fold(nk(), c)
            wp = jax.random.normal(nk(), (hidden, c)) / np.sqrt(hidden) * s_p[None, :]
            blk["w_pr"] = _pad_mat(wp, hid_p, cout_p)
            blk["b_pr"] = _pad_row(b_p, cout_p)
            blk["m_out"] = g["out_mask"]
            blocks.append(blk)
            cin = c
            H //= stride
    params["blocks"] = blocks

    # head: 1x1 conv cin -> LAST_C (+ BN folded) + ReLU6, avg pool, Linear(LAST_C, 1)
    cin_p, cl_p = _rup(cin), _rup(LAST_C)
    s_l, b_l = _bn_fold(nk(), LAST_C)
    wl = jax.random.normal(nk(), (cin, LAST_C)) / np.sqrt(cin) * s_l[None, :]
    S = H                              # final spatial side (2)
    pool = np.zeros(((S + 2) * (S + 2), 1), np.float32)
    for i in range(S):
        for j in range(S):
            pool[(i + 1) * (S + 2) + (j + 1), 0] = 1.0 / (S * S)
    wc = jax.random.normal(nk(), (LAST_C,)) / np.sqrt(LAST_C)
    params["head"] = dict(
        w_last=_pad_mat(wl, cin_p, cl_p), b_last=_pad_row(b_l, cl_p),
        pool=jnp.asarray(pool),
        w_cls=jnp.zeros((cl_p, LANE), jnp.float32).at[:LAST_C, 0].set(wc),
        b_cls=jnp.zeros((1, LANE), jnp.float32).at[0, 0].set(
            0.01 * jax.random.normal(nk(), ())),
        spatial=S)
    return params


# --------------------------------------- forward ---------------------------------------
def _stem_im2col(x_nchw):
    """NCHW -> lane-dense stride-2 im2col laid out on the stem's 10x10 zero-halo grid."""
    x = jnp.transpose(x_nchw, (0, 2, 3, 1)).astype(jnp.float32)   # (N, H, W, C)
    N, H, W, C = x.shape
    Ho, Wo = H // 2, W // 2
    xp = jnp.pad(x, ((0, 0), (1, 1), (1, 1), (0, 0)))
    taps = [xp[:, kh:kh + 2 * Ho:2, kw:kw + 2 * Wo:2, :]
            for kh in range(3) for kw in range(3)]
    xc = jnp.concatenate(taps, axis=-1)                           # (N, Ho, Wo, 9*C)
    xc = jnp.pad(xc, ((0, 0), (1, 1), (1, 1), (0, LANE - 9 * C))) # zero halo + lane pad
    return xc.reshape(N, (Ho + 2) * (Wo + 2), LANE).astype(jnp.bfloat16)


def forward(params, x_nchw):
    xc = _stem_im2col(x_nchw)
    return fused_call(xc, params)


# ----------------------------------------- main -----------------------------------------
if __name__ == "__main__":
    key = jax.random.PRNGKey(0)
    kx, kp = jax.random.split(key)
    x = jax.random.normal(kx, (2, IN_C, 16, 16), dtype=jnp.float32)   # NCHW, like PyTorch
    params = build_model(kp)

    fwd = jax.jit(lambda xin: forward(params, xin))
    logits = jax.block_until_ready(fwd(x))

    assert logits.shape == (2, 1), logits.shape
    assert bool(jnp.all(jnp.isfinite(logits)))
    print("KERNEL_OK")
</pallas_src>

<mosaic_0001>
module attributes {stable_mosaic.version = 11 : i64} {
  func.func @fused_kernel(%arg0: i32, %arg1: memref<1x100x128xbf16, #tpu.memory_space<vmem>>, %arg2: memref<128x128xbf16, #tpu.memory_space<vmem>>, %arg3: memref<1x128xf32, #tpu.memory_space<vmem>>, %arg4: memref<100x1xf32, #tpu.memory_space<vmem>>, %arg5: memref<9x1x128xf32, #tpu.memory_space<vmem>>, %arg6: memref<1x128xf32, #tpu.memory_space<vmem>>, %arg7: memref<100x78xbf16, #tpu.memory_space<vmem>>, %arg8: memref<128x128xbf16, #tpu.memory_space<vmem>>, %arg9: memref<1x128xf32, #tpu.memory_space<vmem>>, %arg10: memref<100x1xf32, #tpu.memory_space<vmem>>, %arg11: memref<128x128xbf16, #tpu.memory_space<vmem>>, %arg12: memref<1x128xf32, #tpu.memory_space<vmem>>, %arg13: memref<100x1xf32, #tpu.memory_space<vmem>>, %arg14: memref<9x1x128xf32, #tpu.memory_space<vmem>>, %arg15: memref<1x128xf32, #tpu.memory_space<vmem>>, %arg16: memref<36x78xbf16, #tpu.memory_space<vmem>>, %arg17: memref<128x128xbf16, #tpu.memory_space<vmem>>, %arg18: memref<1x128xf32, #tpu.memory_space<vmem>>, %arg19: memref<36x1xf32, #tpu.memory_space<vmem>>, %arg20: memref<128x128xbf16, #tpu.memory_space<vmem>>, %arg21: memref<1x128xf32, #tpu.memory_space<vmem>>, %arg22: memref<36x1xf32, #tpu.memory_space<vmem>>, %arg23: memref<9x1x128xf32, #tpu.memory_space<vmem>>, %arg24: memref<1x128xf32, #tpu.memory_space<vmem>>, %arg25: memref<36x22xbf16, #tpu.memory_space<vmem>>, %arg26: memref<128x128xbf16, #tpu.memory_space<vmem>>, %arg27: memref<1x128xf32, #tpu.memory_space<vmem>>, %arg28: memref<36x1xf32, #tpu.memory_space<vmem>>, %arg29: memref<128x128xbf16, #tpu.memory_space<vmem>>, %arg30: memref<1x128xf32, #tpu.memory_space<vmem>>, %arg31: memref<36x1xf32, #tpu.memory_space<vmem>>, %arg32: memref<9x1x128xf32, #tpu.memory_space<vmem>>, %arg33: memref<1x128xf32, #tpu.memory_space<vmem>>, %arg34: memref<16x22xbf16, #tpu.memory_space<vmem>>, %arg35: memref<128x128xbf16, #tpu.memory_space<vmem>>, %arg36: memref<1x128xf32, #tpu.memory_space<vmem>>, %arg37: memref<16x1xf32, #tpu.memory_space<vmem>>, %arg38: memref<128x256xbf16, #tpu.memory_space<vmem>>, %arg39: memref<1x256xf32, #tpu.memory_space<vmem>>, %arg40: memref<16x1xf32, #tpu.memory_space<vmem>>, %arg41: memref<9x1x256xf32, #tpu.memory_space<vmem>>, %arg42: memref<1x256xf32, #tpu.memory_space<vmem>>, %arg43: memref<16x6xbf16, #tpu.memory_space<vmem>>, %arg44: memref<256x128xbf16, #tpu.memory_space<vmem>>, %arg45: memref<1x128xf32, #tpu.memory_space<vmem>>, %arg46: memref<16x1xf32, #tpu.memory_space<vmem>>, %arg47: memref<128x128xbf16, #tpu.memory_space<vmem>>, %arg48: memref<1x128xf32, #tpu.memory_space<vmem>>, %arg49: memref<16x1xf32, #tpu.memory_space<vmem>>, %arg50: memref<128x128xf32, #tpu.memory_space<vmem>>, %arg51: memref<1x128xf32, #tpu.memory_space<vmem>>, %arg52: memref<1x8x128xf32, #tpu.memory_space<vmem>>, %arg53: memref<100x128xbf16, #tpu.memory_space<vmem>>, %arg54: memref<100x128xbf16, #tpu.memory_space<vmem>>, %arg55: memref<36x128xbf16, #tpu.memory_space<vmem>>, %arg56: memref<36x128xbf16, #tpu.memory_space<vmem>>, %arg57: memref<16x256xbf16, #tpu.memory_space<vmem>>) attributes {dimension_semantics = [#tpu.dimension_semantics<parallel>], iteration_bounds = array<i64: 2>, scalar_prefetch = 0 : i64, scratch_operands = 5 : i64, tpu.core_type = #tpu.core_type<tc>, window_params = [{transform_indices = @transform_0, window_bounds = array<i64: 1, 100, 128>}, {pipeline_mode = #tpu.pipeline_mode<synchronous>, transform_indices = @transform_1, window_bounds = array<i64: 128, 128>}, {pipeline_mode = #tpu.pipeline_mode<synchronous>, transform_indices = @transform_2, window_bounds = array<i64: 1, 128>}, {pipeline_mode = #tpu.pipeline_mode<synchronous>, transform_indices = @transform_3, window_bounds = array<i64: 100, 1>}, {pipeline_mode = #tpu.pipeline_mode<synchronous>, transform_indices = @transform_4, window_bounds = array<i64: 9, 1, 128>}, {pipeline_mode = #tpu.pipeline_mode<synchronous>, transform_indices = @transform_5, window_bounds = array<i64: 1, 128>}, {pipeline_mode = #tpu.pipeline_mode<synchronous>, transform_indices = @transform_6, window_bounds = array<i64: 100, 78>}, {pipeline_mode = #tpu.pipeline_mode<synchronous>, transform_indices = @transform_7, window_bounds = array<i64: 128, 128>}, {pipeline_mode = #tpu.pipeline_mode<synchronous>, transform_indices = @transform_8, window_bounds = array<i64: 1, 128>}, {pipeline_mode = #tpu.pipeline_mode<synchronous>, transform_indices = @transform_9, window_bounds = array<i64: 100, 1>}, {pipeline_mode = #tpu.pipeline_mode<synchronous>, transform_indices = @transform_10, window_bounds = array<i64: 128, 128>}, {pipeline_mode = #tpu.pipeline_mode<synchronous>, transform_indices = @transform_11, window_bounds = array<i64: 1, 128>}, {pipeline_mode = #tpu.pipeline_mode<synchronous>, transform_indices = @transform_12, window_bounds = array<i64: 100, 1>}, {pipeline_mode = #tpu.pipeline_mode<synchronous>, transform_indices = @transform_13, window_bounds = array<i64: 9, 1, 128>}, {pipeline_mode = #tpu.pipeline_mode<synchronous>, transform_indices = @transform_14, window_bounds = array<i64: 1, 128>}, {pipeline_mode = #tpu.pipeline_mode<synchronous>, transform_indices = @transform_15, window_bounds = array<i64: 36, 78>}, {pipeline_mode = #tpu.pipeline_mode<synchronous>, transform_indices = @transform_16, window_bounds = array<i64: 128, 128>}, {pipeline_mode = #tpu.pipeline_mode<synchronous>, transform_indices = @transform_17, window_bounds = array<i64: 1, 128>}, {pipeline_mode = #tpu.pipeline_mode<synchronous>, transform_indices = @transform_18, window_bounds = array<i64: 36, 1>}, {pipeline_mode = #tpu.pipeline_mode<synchronous>, transform_indices = @transform_19, window_bounds = array<i64: 128, 128>}, {pipeline_mode = #tpu.pipeline_mode<synchronous>, transform_indices = @transform_20, window_bounds = array<i64: 1, 128>}, {pipeline_mode = #tpu.pipeline_mode<synchronous>, transform_indices = @transform_21, window_bounds = array<i64: 36, 1>}, {pipeline_mode = #tpu.pipeline_mode<synchronous>, transform_indices = @transform_22, window_bounds = array<i64: 9, 1, 128>}, {pipeline_mode = #tpu.pipeline_mode<synchronous>, transform_indices = @transform_23, window_bounds = array<i64: 1, 128>}, {pipeline_mode = #tpu.pipeline_mode<synchronous>, transform_indices = @transform_24, window_bounds = array<i64: 36, 22>}, {pipeline_mode = #tpu.pipeline_mode<synchronous>, transform_indices = @transform_25, window_bounds = array<i64: 128, 128>}, {pipeline_mode = #tpu.pipeline_mode<synchronous>, transform_indices = @transform_26, window_bounds = array<i64: 1, 128>}, {pipeline_mode = #tpu.pipeline_mode<synchronous>, transform_indices = @transform_27, window_bounds = array<i64: 36, 1>}, {pipeline_mode = #tpu.pipeline_mode<synchronous>, transform_indices = @transform_28, window_bounds = array<i64: 128, 128>}, {pipeline_mode = #tpu.pipeline_mode<synchronous>, transform_indices = @transform_29, window_bounds = array<i64: 1, 128>}, {pipeline_mode = #tpu.pipeline_mode<synchronous>, transform_indices = @transform_30, window_bounds = array<i64: 36, 1>}, {pipeline_mode = #tpu.pipeline_mode<synchronous>, transform_indices = @transform_31, window_bounds = array<i64: 9, 1, 128>}, {pipeline_mode = #tpu.pipeline_mode<synchronous>, transform_indices = @transform_32, window_bounds = array<i64: 1, 128>}, {pipeline_mode = #tpu.pipeline_mode<synchronous>, transform_indices = @transform_33, window_bounds = array<i64: 16, 22>}, {pipeline_mode = #tpu.pipeline_mode<synchronous>, transform_indices = @transform_34, window_bounds = array<i64: 128, 128>}, {pipeline_mode = #tpu.pipeline_mode<synchronous>, transform_indices = @transform_35, window_bounds = array<i64: 1, 128>}, {pipeline_mode = #tpu.pipeline_mode<synchronous>, transform_indices = @transform_36, window_bounds = array<i64: 16, 1>}, {pipeline_mode = #tpu.pipeline_mode<synchronous>, transform_indices = @transform_37, window_bounds = array<i64: 128, 256>}, {pipeline_mode = #tpu.pipeline_mode<synchronous>, transform_indices = @transform_38, window_bounds = array<i64: 1, 256>}, {pipeline_mode = #tpu.pipeline_mode<synchronous>, transform_indices = @transform_39, window_bounds = array<i64: 16, 1>}, {pipeline_mode = #tpu.pipeline_mode<synchronous>, transform_indices = @transform_40, window_bounds = array<i64: 9, 1, 256>}, {pipeline_mode = #tpu.pipeline_mode<synchronous>, transform_indices = @transform_41, window_bounds = array<i64: 1, 256>}, {pipeline_mode = #tpu.pipeline_mode<synchronous>, transform_indices = @transform_42, window_bounds = array<i64: 16, 6>}, {pipeline_mode = #tpu.pipeline_mode<synchronous>, transform_indices = @transform_43, window_bounds = array<i64: 256, 128>}, {pipeline_mode = #tpu.pipeline_mode<synchronous>, transform_indices = @transform_44, window_bounds = array<i64: 1, 128>}, {pipeline_mode = #tpu.pipeline_mode<synchronous>, transform_indices = @transform_45, window_bounds = array<i64: 16, 1>}, {pipeline_mode = #tpu.pipeline_mode<synchronous>, transform_indices = @transform_46, window_bounds = array<i64: 128, 128>}, {pipeline_mode = #tpu.pipeline_mode<synchronous>, transform_indices = @transform_47, window_bounds = array<i64: 1, 128>}, {pipeline_mode = #tpu.pipeline_mode<synchronous>, transform_indices = @transform_48, window_bounds = array<i64: 16, 1>}, {pipeline_mode = #tpu.pipeline_mode<synchronous>, transform_indices = @transform_49, window_bounds = array<i64: 128, 128>}, {pipeline_mode = #tpu.pipeline_mode<synchronous>, transform_indices = @transform_50, window_bounds = array<i64: 1, 128>}, {transform_indices = @transform_51, window_bounds = array<i64: 1, 8, 128>}]} {
    %c0 = arith.constant 0 : index
    %c0_0 = arith.constant 0 : index
    %c0_1 = arith.constant 0 : index
    %0 = vector.load %arg1[%c0, %c0_0, %c0_1] : memref<1x100x128xbf16, #tpu.memory_space<vmem>>, vector<1x100x128xbf16>
    %1 = vector.shape_cast %0 : vector<1x100x128xbf16> to vector<100x128xbf16>
    %c0_2 = arith.constant 0 : index
    %c0_3 = arith.constant 0 : index
    %2 = vector.load %arg2[%c0_2, %c0_3] : memref<128x128xbf16, #tpu.memory_space<vmem>>, vector<128x128xbf16>
    %cst = arith.constant dense<0.000000e+00> : vector<100x128xf32>
    %3 = tpu.matmul %1, %2, %cst {dimension_numbers = #tpu.dot_dimension_numbers<[1], [0], [0], [1], [0, 0, 1, 1], [], []>} : vector<100x128xbf16>, vector<128x128xbf16>, vector<100x128xf32> -> vector<100x128xf32>
    %c0_4 = arith.constant 0 : index
    %c0_5 = arith.constant 0 : index
    %4 = vector.load %arg3[%c0_4, %c0_5] : memref<1x128xf32, #tpu.memory_space<vmem>>, vector<1x128xf32>
    %5 = vector.broadcast %4 : vector<1x128xf32> to vector<100x128xf32>
    %6 = arith.addf %3, %5 : vector<100x128xf32>
    %cst_6 = arith.constant 0.000000e+00 : f32
    %cst_7 = arith.constant 6.000000e+00 : f32
    %7 = vector.broadcast %cst_6 : f32 to vector<100x128xf32>
    %8 = arith.maximumf %7, %6 : vector<100x128xf32>
    %9 = vector.broadcast %cst_7 : f32 to vector<100x128xf32>
    %10 = arith.minimumf %9, %8 : vector<100x128xf32>
    %c0_8 = arith.constant 0 : index
    %c0_9 = arith.constant 0 : index
    %11 = vector.load %arg4[%c0_8, %c0_9] : memref<100x1xf32, #tpu.memory_space<vmem>>, vector<100x1xf32>
    %12 = vector.broadcast %11 : vector<100x1xf32> to vector<100x128xf32>
    %13 = arith.mulf %10, %12 : vector<100x128xf32>
    %14 = arith.truncf %13 : vector<100x128xf32> to vector<100x128xbf16>
    %c0_10 = arith.constant 0 : index
    %c0_11 = arith.constant 0 : index
    %15 = vector.load %arg53[%c0_10, %c0_11] : memref<100x128xbf16, #tpu.memory_space<vmem>>, vector<100x128xbf16>
    tpu.vector_store %arg53[%c0_10, %c0_11], %14 {strides = array<i32>} : memref<100x128xbf16, #tpu.memory_space<vmem>>, vector<100x128xbf16>,
    %cst_12 = arith.constant 0.000000e+00 : f32
    %16 = vector.broadcast %cst_12 : f32 to vector<78x128xf32>
    %c0_13 = arith.constant 0 : index
    %c0_14 = arith.constant 0 : index
    %17 = vector.load %arg53[%c0_13, %c0_14] : memref<100x128xbf16, #tpu.memory_space<vmem>>, vector<78x128xbf16>
    %18 = arith.extf %17 : vector<78x128xbf16> to vector<78x128xf32>
    %c0_15 = arith.constant 0 : index
    %c0_16 = arith.constant 0 : index
    %c0_17 = arith.constant 0 : index
    %19 = vector.load %arg5[%c0_15, %c0_16, %c0_17] : memref<9x1x128xf32, #tpu.memory_space<vmem>>, vector<1x1x128xf32>
    %20 = vector.shape_cast %19 : vector<1x1x128xf32> to vector<1x128xf32>
    %21 = vector.broadcast %20 : vector<1x128xf32> to vector<78x128xf32>
    %22 = arith.mulf %18, %21 : vector<78x128xf32>
    %23 = arith.addf %16, %22 : vector<78x128xf32>
    %c1 = arith.constant 1 : index
    %c0_18 = arith.constant 0 : index
    %24 = vector.load %arg53[%c1, %c0_18] : memref<100x128xbf16, #tpu.memory_space<vmem>>, vector<78x128xbf16>
    %25 = arith.extf %24 : vector<78x128xbf16> to vector<78x128xf32>
    %c1_19 = arith.constant 1 : index
    %c0_20 = arith.constant 0 : index
    %c0_21 = arith.constant 0 : index
    %26 = vector.load %arg5[%c1_19, %c0_20, %c0_21] : memref<9x1x128xf32, #tpu.memory_space<vmem>>, vector<1x1x128xf32>
    %27 = vector.shape_cast %26 : vector<1x1x128xf32> to vector<1x128xf32>
    %28 = vector.broadcast %27 : vector<1x128xf32> to vector<78x128xf32>
    %29 = arith.mulf %25, %28 : vector<78x128xf32>
    %30 = arith.addf %23, %29 : vector<78x128xf32>
    %c2 = arith.constant 2 : index
    %c0_22 = arith.constant 0 : index
    %31 = vector.load %arg53[%c2, %c0_22] : memref<100x128xbf16, #tpu.memory_space<vmem>>, vector<78x128xbf16>
    %32 = arith.extf %31 : vector<78x128xbf16> to vector<78x128xf32>
    %c2_23 = arith.constant 2 : index
    %c0_24 = arith.constant 0 : index
    %c0_25 = arith.constant 0 : index
    %33 = vector.load %arg5[%c2_23, %c0_24, %c0_25] : memref<9x1x128xf32, #tpu.memory_space<vmem>>, vector<1x1x128xf32>
    %34 = vector.shape_cast %33 : vector<1x1x128xf32> to vector<1x128xf32>
    %35 = vector.broadcast %34 : vector<1x128xf32> to vector<78x128xf32>
    %36 = arith.mulf %32, %35 : vector<78x128xf32>
    %37 = arith.addf %30, %36 : vector<78x128xf32>
    %c10 = arith.constant 10 : index
    %c0_26 = arith.constant 0 : index
    %38 = vector.load %arg53[%c10, %c0_26] : memref<100x128xbf16, #tpu.memory_space<vmem>>, vector<78x128xbf16>
    %39 = arith.extf %38 : vector<78x128xbf16> to vector<78x128xf32>
    %c3 = arith.constant 3 : index
    %c0_27 = arith.constant 0 : index
    %c0_28 = arith.constant 0 : index
    %40 = vector.load %arg5[%c3, %c0_27, %c0_28] : memref<9x1x128xf32, #tpu.memory_space<vmem>>, vector<1x1x128xf32>
    %41 = vector.shape_cast %40 : vector<1x1x128xf32> to vector<1x128xf32>
    %42 = vector.broadcast %41 : vector<1x128xf32> to vector<78x128xf32>
    %43 = arith.mulf %39, %42 : vector<78x128xf32>
    %44 = arith.addf %37, %43 : vector<78x128xf32>
    %c11 = arith.constant 11 : index
    %c0_29 = arith.constant 0 : index
    %45 = vector.load %arg53[%c11, %c0_29] : memref<100x128xbf16, #tpu.memory_space<vmem>>, vector<78x128xbf16>
    %46 = arith.extf %45 : vector<78x128xbf16> to vector<78x128xf32>
    %c4 = arith.constant 4 : index
    %c0_30 = arith.constant 0 : index
    %c0_31 = arith.constant 0 : index
    %47 = vector.load %arg5[%c4, %c0_30, %c0_31] : memref<9x1x128xf32, #tpu.memory_space<vmem>>, vector<1x1x128xf32>
    %48 = vector.shape_cast %47 : vector<1x1x128xf32> to vector<1x128xf32>
    %49 = vector.broadcast %48 : vector<1x128xf32> to vector<78x128xf32>
    %50 = arith.mulf %46, %49 : vector<78x128xf32>
    %51 = arith.addf %44, %50 : vector<78x128xf32>
    %c12 = arith.constant 12 : index
    %c0_32 = arith.constant 0 : index
    %52 = vector.load %arg53[%c12, %c0_32] : memref<100x128xbf16, #tpu.memory_space<vmem>>, vector<78x128xbf16>
    %53 = arith.extf %52 : vector<78x128xbf16> to vector<78x128xf32>
    %c5 = arith.constant 5 : index
    %c0_33 = arith.constant 0 : index
    %c0_34 = arith.constant 0 : index
    %54 = vector.load %arg5[%c5, %c0_33, %c0_34] : memref<9x1x128xf32, #tpu.memory_space<vmem>>, vector<1x1x128xf32>
    %55 = vector.shape_cast %54 : vector<1x1x128xf32> to vector<1x128xf32>
    %56 = vector.broadcast %55 : vector<1x128xf32> to vector<78x128xf32>
    %57 = arith.mulf %53, %56 : vector<78x128xf32>
    %58 = arith.addf %51, %57 : vector<78x128xf32>
    %c20 = arith.constant 20 : index
    %c0_35 = arith.constant 0 : index
    %59 = vector.load %arg53[%c20, %c0_35] : memref<100x128xbf16, #tpu.memory_space<vmem>>, vector<78x128xbf16>
    %60 = arith.extf %59 : vector<78x128xbf16> to vector<78x128xf32>
    %c6 = arith.constant 6 : index
    %c0_36 = arith.constant 0 : index
    %c0_37 = arith.constant 0 : index
    %61 = vector.load %arg5[%c6, %c0_36, %c0_37] : memref<9x1x128xf32, #tpu.memory_space<vmem>>, vector<1x1x128xf32>
    %62 = vector.shape_cast %61 : vector<1x1x128xf32> to vector<1x128xf32>
    %63 = vector.broadcast %62 : vector<1x128xf32> to vector<78x128xf32>
    %64 = arith.mulf %60, %63 : vector<78x128xf32>
    %65 = arith.addf %58, %64 : vector<78x128xf32>
    %c21 = arith.constant 21 : index
    %c0_38 = arith.constant 0 : index
    %66 = vector.load %arg53[%c21, %c0_38] : memref<100x128xbf16, #tpu.memory_space<vmem>>, vector<78x128xbf16>
    %67 = arith.extf %66 : vector<78x128xbf16> to vector<78x128xf32>
    %c7 = arith.constant 7 : index
    %c0_39 = arith.constant 0 : index
    %c0_40 = arith.constant 0 : index
    %68 = vector.load %arg5[%c7, %c0_39, %c0_40] : memref<9x1x128xf32, #tpu.memory_space<vmem>>, vector<1x1x128xf32>
    %69 = vector.shape_cast %68 : vector<1x1x128xf32> to vector<1x128xf32>
    %70 = vector.broadcast %69 : vector<1x128xf32> to vector<78x128xf32>
    %71 = arith.mulf %67, %70 : vector<78x128xf32>
    %72 = arith.addf %65, %71 : vector<78x128xf32>
    %c22 = arith.constant 22 : index
    %c0_41 = arith.constant 0 : index
    %73 = vector.load %arg53[%c22, %c0_41] : memref<100x128xbf16, #tpu.memory_space<vmem>>, vector<78x128xbf16>
    %74 = arith.extf %73 : vector<78x128xbf16> to vector<78x128xf32>
    %c8 = arith.constant 8 : index
    %c0_42 = arith.constant 0 : index
    %c0_43 = arith.constant 0 : index
    %75 = vector.load %arg5[%c8, %c0_42, %c0_43] : memref<9x1x128xf32, #tpu.memory_space<vmem>>, vector<1x1x128xf32>
    %76 = vector.shape_cast %75 : vector<1x1x128xf32> to vector<1x128xf32>
    %77 = vector.broadcast %76 : vector<1x128xf32> to vector<78x128xf32>
    %78 = arith.mulf %74, %77 : vector<78x128xf32>
    %79 = arith.addf %72, %78 : vector<78x128xf32>
    %c0_44 = arith.constant 0 : index
    %c0_45 = arith.constant 0 : index
    %80 = vector.load %arg6[%c0_44, %c0_45] : memref<1x128xf32, #tpu.memory_space<vmem>>, vector<1x128xf32>
    %81 = vector.broadcast %80 : vector<1x128xf32> to vector<78x128xf32>
    %82 = arith.addf %79, %81 : vector<78x128xf32>
    %cst_46 = arith.constant 0.000000e+00 : f32
    %cst_47 = arith.constant 6.000000e+00 : f32
    %83 = vector.broadcast %cst_46 : f32 to vector<78x128xf32>
    %84 = arith.maximumf %83, %82 : vector<78x128xf32>
    %85 = vector.broadcast %cst_47 : f32 to vector<78x128xf32>
    %86 = arith.minimumf %85, %84 : vector<78x128xf32>
    %87 = arith.truncf %86 : vector<78x128xf32> to vector<78x128xbf16>
    %c0_48 = arith.constant 0 : index
    %c0_49 = arith.constant 0 : index
    %88 = vector.load %arg7[%c0_48, %c0_49] : memref<100x78xbf16, #tpu.memory_space<vmem>>, vector<100x78xbf16>
    %cst_50 = arith.constant dense<0.000000e+00> : vector<100x128xf32>
    %89 = tpu.matmul %88, %87, %cst_50 {dimension_numbers = #tpu.dot_dimension_numbers<[1], [0], [0], [1], [0, 0, 1, 1], [], []>} : vector<100x78xbf16>, vector<78x128xbf16>, vector<100x128xf32> -> vector<100x128xf32>
    %90 = arith.truncf %89 : vector<100x128xf32> to vector<100x128xbf16>
    %c0_51 = arith.constant 0 : index
    %c0_52 = arith.constant 0 : index
    %91 = vector.load %arg8[%c0_51, %c0_52] : memref<128x128xbf16, #tpu.memory_space<vmem>>, vector<128x128xbf16>
    %cst_53 = arith.constant dense<0.000000e+00> : vector<100x128xf32>
    %92 = tpu.matmul %90, %91, %cst_53 {dimension_numbers = #tpu.dot_dimension_numbers<[1], [0], [0], [1], [0, 0, 1, 1], [], []>} : vector<100x128xbf16>, vector<128x128xbf16>, vector<100x128xf32> -> vector<100x128xf32>
    %c0_54 = arith.constant 0 : index
    %c0_55 = arith.constant 0 : index
    %93 = vector.load %arg9[%c0_54, %c0_55] : memref<1x128xf32, #tpu.memory_space<vmem>>, vector<1x128xf32>
    %94 = vector.broadcast %93 : vector<1x128xf32> to vector<100x128xf32>
    %95 = arith.addf %92, %94 : vector<100x128xf32>
    %c0_56 = arith.constant 0 : index
    %c0_57 = arith.constant 0 : index
    %96 = vector.load %arg10[%c0_56, %c0_57] : memref<100x1xf32, #tpu.memory_space<vmem>>, vector<100x1xf32>
    %97 = vector.broadcast %96 : vector<100x1xf32> to vector<100x128xf32>
    %98 = arith.mulf %95, %97 : vector<100x128xf32>
    %99 = arith.extf %14 : vector<100x128xbf16> to vector<100x128xf32>
    %100 = arith.addf %98, %99 : vector<100x128xf32>
    %101 = arith.truncf %100 : vector<100x128xf32> to vector<100x128xbf16>
    %c0_58 = arith.constant 0 : index
    %c0_59 = arith.constant 0 : index
    %102 = vector.load %arg11[%c0_58, %c0_59] : memref<128x128xbf16, #tpu.memory_space<vmem>>, vector<128x128xbf16>
    %cst_60 = arith.constant dense<0.000000e+00> : vector<100x128xf32>
    %103 = tpu.matmul %101, %102, %cst_60 {dimension_numbers = #tpu.dot_dimension_numbers<[1], [0], [0], [1], [0, 0, 1, 1], [], []>} : vector<100x128xbf16>, vector<128x128xbf16>, vector<100x128xf32> -> vector<100x128xf32>
    %c0_61 = arith.constant 0 : index
    %c0_62 = arith.constant 0 : index
    %104 = vector.load %arg12[%c0_61, %c0_62] : memref<1x128xf32, #tpu.memory_space<vmem>>, vector<1x128xf32>
    %105 = vector.broadcast %104 : vector<1x128xf32> to vector<100x128xf32>
    %106 = arith.addf %103, %105 : vector<100x128xf32>
    %cst_63 = arith.constant 0.000000e+00 : f32
    %cst_64 = arith.constant 6.000000e+00 : f32
    %107 = vector.broadcast %cst_63 : f32 to vector<100x128xf32>
    %108 = arith.maximumf %107, %106 : vector<100x128xf32>
    %109 = vector.broadcast %cst_64 : f32 to vector<100x128xf32>
    %110 = arith.minimumf %109, %108 : vector<100x128xf32>
    %c0_65 = arith.constant 0 : index
    %c0_66 = arith.constant 0 : index
    %111 = vector.load %arg13[%c0_65, %c0_66] : memref<100x1xf32, #tpu.memory_space<vmem>>, vector<100x1xf32>
    %112 = vector.broadcast %111 : vector<100x1xf32> to vector<100x128xf32>
    %113 = arith.mulf %110, %112 : vector<100x128xf32>
    %114 = arith.truncf %113 : vector<100x128xf32> to vector<100x128xbf16>
    %c0_67 = arith.constant 0 : index
    %c0_68 = arith.constant 0 : index
    %115 = vector.load %arg54[%c0_67, %c0_68] : memref<100x128xbf16, #tpu.memory_space<vmem>>, vector<100x128xbf16>
    tpu.vector_store %arg54[%c0_67, %c0_68], %114 {strides = array<i32>} : memref<100x128xbf16, #tpu.memory_space<vmem>>, vector<100x128xbf16>,
    %cst_69 = arith.constant 0.000000e+00 : f32
    %116 = vector.broadcast %cst_69 : f32 to vector<78x128xf32>
    %c0_70 = arith.constant 0 : index
    %c0_71 = arith.constant 0 : index
    %117 = vector.load %arg54[%c0_70, %c0_71] : memref<100x128xbf16, #tpu.memory_space<vmem>>, vector<78x128xbf16>
    %118 = arith.extf %117 : vector<78x128xbf16> to vector<78x128xf32>
    %c0_72 = arith.constant 0 : index
    %c0_73 = arith.constant 0 : index
    %c0_74 = arith.constant 0 : index
    %119 = vector.load %arg14[%c0_72, %c0_73, %c0_74] : memref<9x1x128xf32, #tpu.memory_space<vmem>>, vector<1x1x128xf32>
    %120 = vector.shape_cast %119 : vector<1x1x128xf32> to vector<1x128xf32>
    %121 = vector.broadcast %120 : vector<1x128xf32> to vector<78x128xf32>
    %122 = arith.mulf %118, %121 : vector<78x128xf32>
    %123 = arith.addf %116, %122 : vector<78x128xf32>
    %c1_75 = arith.constant 1 : index
    %c0_76 = arith.constant 0 : index
    %124 = vector.load %arg54[%c1_75, %c0_76] : memref<100x128xbf16, #tpu.memory_space<vmem>>, vector<78x128xbf16>
    %125 = arith.extf %124 : vector<78x128xbf16> to vector<78x128xf32>
    %c1_77 = arith.constant 1 : index
    %c0_78 = arith.constant 0 : index
    %c0_79 = arith.constant 0 : index
    %126 = vector.load %arg14[%c1_77, %c0_78, %c0_79] : memref<9x1x128xf32, #tpu.memory_space<vmem>>, vector<1x1x128xf32>
    %127 = vector.shape_cast %126 : vector<1x1x128xf32> to vector<1x128xf32>
    %128 = vector.broadcast %127 : vector<1x128xf32> to vector<78x128xf32>
    %129 = arith.mulf %125, %128 : vector<78x128xf32>
    %130 = arith.addf %123, %129 : vector<78x128xf32>
    %c2_80 = arith.constant 2 : index
    %c0_81 = arith.constant 0 : index
    %131 = vector.load %arg54[%c2_80, %c0_81] : memref<100x128xbf16, #tpu.memory_space<vmem>>, vector<78x128xbf16>
    %132 = arith.extf %131 : vector<78x128xbf16> to vector<78x128xf32>
    %c2_82 = arith.constant 2 : index
    %c0_83 = arith.constant 0 : index
    %c0_84 = arith.constant 0 : index
    %133 = vector.load %arg14[%c2_82, %c0_83, %c0_84] : memref<9x1x128xf32, #tpu.memory_space<vmem>>, vector<1x1x128xf32>
    %134 = vector.shape_cast %133 : vector<1x1x128xf32> to vector<1x128xf32>
    %135 = vector.broadcast %134 : vector<1x128xf32> to vector<78x128xf32>
    %136 = arith.mulf %132, %135 : vector<78x128xf32>
    %137 = arith.addf %130, %136 : vector<78x128xf32>
    %c10_85 = arith.constant 10 : index
    %c0_86 = arith.constant 0 : index
    %138 = vector.load %arg54[%c10_85, %c0_86] : memref<100x128xbf16, #tpu.memory_space<vmem>>, vector<78x128xbf16>
    %139 = arith.extf %138 : vector<78x128xbf16> to vector<78x128xf32>
    %c3_87 = arith.constant 3 : index
    %c0_88 = arith.constant 0 : index
    %c0_89 = arith.constant 0 : index
    %140 = vector.load %arg14[%c3_87, %c0_88, %c0_89] : memref<9x1x128xf32, #tpu.memory_space<vmem>>, vector<1x1x128xf32>
    %141 = vector.shape_cast %140 : vector<1x1x128xf32> to vector<1x128xf32>
    %142 = vector.broadcast %141 : vector<1x128xf32> to vector<78x128xf32>
    %143 = arith.mulf %139, %142 : vector<78x128xf32>
    %144 = arith.addf %137, %143 : vector<78x128xf32>
    %c11_90 = arith.constant 11 : index
    %c0_91 = arith.constant 0 : index
    %145 = vector.load %arg54[%c11_90, %c0_91] : memref<100x128xbf16, #tpu.memory_space<vmem>>, vector<78x128xbf16>
    %146 = arith.extf %145 : vector<78x128xbf16> to vector<78x128xf32>
    %c4_92 = arith.constant 4 : index
    %c0_93 = arith.constant 0 : index
    %c0_94 = arith.constant 0 : index
    %147 = vector.load %arg14[%c4_92, %c0_93, %c0_94] : memref<9x1x128xf32, #tpu.memory_space<vmem>>, vector<1x1x128xf32>
    %148 = vector.shape_cast %147 : vector<1x1x128xf32> to vector<1x128xf32>
    %149 = vector.broadcast %148 : vector<1x128xf32> to vector<78x128xf32>
    %150 = arith.mulf %146, %149 : vector<78x128xf32>
    %151 = arith.addf %144, %150 : vector<78x128xf32>
    %c12_95 = arith.constant 12 : index
    %c0_96 = arith.constant 0 : index
    %152 = vector.load %arg54[%c12_95, %c0_96] : memref<100x128xbf16, #tpu.memory_space<vmem>>, vector<78x128xbf16>
    %153 = arith.extf %152 : vector<78x128xbf16> to vector<78x128xf32>
    %c5_97 = arith.constant 5 : index
    %c0_98 = arith.constant 0 : index
    %c0_99 = arith.constant 0 : index
    %154 = vector.load %arg14[%c5_97, %c0_98, %c0_99] : memref<9x1x128xf32, #tpu.memory_space<vmem>>, vector<1x1x128xf32>
    %155 = vector.shape_cast %154 : vector<1x1x128xf32> to vector<1x128xf32>
    %156 = vector.broadcast %155 : vector<1x128xf32> to vector<78x128xf32>
    %157 = arith.mulf %153, %156 : vector<78x128xf32>
    %158 = arith.addf %151, %157 : vector<78x128xf32>
    %c20_100 = arith.constant 20 : index
    %c0_101 = arith.constant 0 : index
    %159 = vector.load %arg54[%c20_100, %c0_101] : memref<100x128xbf16, #tpu.memory_space<vmem>>, vector<78x128xbf16>
    %160 = arith.extf %159 : vector<78x128xbf16> to vector<78x128xf32>
    %c6_102 = arith.constant 6 : index
    %c0_103 = arith.constant 0 : index
    %c0_104 = arith.constant 0 : index
    %161 = vector.load %arg14[%c6_102, %c0_103, %c0_104] : memref<9x1x128xf32, #tpu.memory_space<vmem>>, vector<1x1x128xf32>
    %162 = vector.shape_cast %161 : vector<1x1x128xf32> to vector<1x128xf32>
    %163 = vector.broadcast %162 : vector<1x128xf32> to vector<78x128xf32>
    %164 = arith.mulf %160, %163 : vector<78x128xf32>
    %165 = arith.addf %158, %164 : vector<78x128xf32>
    %c21_105 = arith.constant 21 : index
    %c0_106 = arith.constant 0 : index
    %166 = vector.load %arg54[%c21_105, %c0_106] : memref<100x128xbf16, #tpu.memory_space<vmem>>, vector<78x128xbf16>
    %167 = arith.extf %166 : vector<78x128xbf16> to vector<78x128xf32>
    %c7_107 = arith.constant 7 : index
    %c0_108 = arith.constant 0 : index
    %c0_109 = arith.constant 0 : index
    %168 = vector.load %arg14[%c7_107, %c0_108, %c0_109] : memref<9x1x128xf32, #tpu.memory_space<vmem>>, vector<1x1x128xf32>
    %169 = vector.shape_cast %168 : vector<1x1x128xf32> to vector<1x128xf32>
    %170 = vector.broadcast %169 : vector<1x128xf32> to vector<78x128xf32>
    %171 = arith.mulf %167, %170 : vector<78x128xf32>
    %172 = arith.addf %165, %171 : vector<78x128xf32>
    %c22_110 = arith.constant 22 : index
    %c0_111 = arith.constant 0 : index
    %173 = vector.load %arg54[%c22_110, %c0_111] : memref<100x128xbf16, #tpu.memory_space<vmem>>, vector<78x128xbf16>
    %174 = arith.extf %173 : vector<78x128xbf16> to vector<78x128xf32>
    %c8_112 = arith.constant 8 : index
    %c0_113 = arith.constant 0 : index
    %c0_114 = arith.constant 0 : index
    %175 = vector.load %arg14[%c8_112, %c0_113, %c0_114] : memref<9x1x128xf32, #tpu.memory_space<vmem>>, vector<1x1x128xf32>
    %176 = vector.shape_cast %175 : vector<1x1x128xf32> to vector<1x128xf32>
    %177 = vector.broadcast %176 : vector<1x128xf32> to vector<78x128xf32>
    %178 = arith.mulf %174, %177 : vector<78x128xf32>
    %179 = arith.addf %172, %178 : vector<78x128xf32>
    %c0_115 = arith.constant 0 : index
    %c0_116 = arith.constant 0 : index
    %180 = vector.load %arg15[%c0_115, %c0_116] : memref<1x128xf32, #tpu.memory_space<vmem>>, vector<1x128xf32>
    %181 = vector.broadcast %180 : vector<1x128xf32> to vector<78x128xf32>
    %182 = arith.addf %179, %181 : vector<78x128xf32>
    %cst_117 = arith.constant 0.000000e+00 : f32
    %cst_118 = arith.constant 6.000000e+00 : f32
    %183 = vector.broadcast %cst_117 : f32 to vector<78x128xf32>
    %184 = arith.maximumf %183, %182 : vector<78x128xf32>
    %185 = vector.broadcast %cst_118 : f32 to vector<78x128xf32>
    %186 = arith.minimumf %185, %184 : vector<78x128xf32>
    %187 = arith.truncf %186 : vector<78x128xf32> to vector<78x128xbf16>
    %c0_119 = arith.constant 0 : index
    %c0_120 = arith.constant 0 : index
    %188 = vector.load %arg16[%c0_119, %c0_120] : memref<36x78xbf16, #tpu.memory_space<vmem>>, vector<36x78xbf16>
    %cst_121 = arith.constant dense<0.000000e+00> : vector<36x128xf32>
    %189 = tpu.matmul %188, %187, %cst_121 {dimension_numbers = #tpu.dot_dimension_numbers<[1], [0], [0], [1], [0, 0, 1, 1], [], []>} : vector<36x78xbf16>, vector<78x128xbf16>, vector<36x128xf32> -> vector<36x128xf32>
    %190 = arith.truncf %189 : vector<36x128xf32> to vector<36x128xbf16>
    %c0_122 = arith.constant 0 : index
    %c0_123 = arith.constant 0 : index
    %191 = vector.load %arg17[%c0_122, %c0_123] : memref<128x128xbf16, #tpu.memory_space<vmem>>, vector<128x128xbf16>
    %cst_124 = arith.constant dense<0.000000e+00> : vector<36x128xf32>
    %192 = tpu.matmul %190, %191, %cst_124 {dimension_numbers = #tpu.dot_dimension_numbers<[1], [0], [0], [1], [0, 0, 1, 1], [], []>} : vector<36x128xbf16>, vector<128x128xbf16>, vector<36x128xf32> -> vector<36x128xf32>
    %c0_125 = arith.constant 0 : index
    %c0_126 = arith.constant 0 : index
    %193 = vector.load %arg18[%c0_125, %c0_126] : memref<1x128xf32, #tpu.memory_space<vmem>>, vector<1x128xf32>
    %194 = vector.broadcast %193 : vector<1x128xf32> to vector<36x128xf32>
    %195 = arith.addf %192, %194 : vector<36x128xf32>
    %c0_127 = arith.constant 0 : index
    %c0_128 = arith.constant 0 : index
    %196 = vector.load %arg19[%c0_127, %c0_128] : memref<36x1xf32, #tpu.memory_space<vmem>>, vector<36x1xf32>
    %197 = vector.broadcast %196 : vector<36x1xf32> to vector<36x128xf32>
    %198 = arith.mulf %195, %197 : vector<36x128xf32>
    %199 = arith.truncf %198 : vector<36x128xf32> to vector<36x128xbf16>
    %c0_129 = arith.constant 0 : index
    %c0_130 = arith.constant 0 : index
    %200 = vector.load %arg20[%c0_129, %c0_130] : memref<128x128xbf16, #tpu.memory_space<vmem>>, vector<128x128xbf16>
    %cst_131 = arith.constant dense<0.000000e+00> : vector<36x128xf32>
    %201 = tpu.matmul %199, %200, %cst_131 {dimension_numbers = #tpu.dot_dimension_numbers<[1], [0], [0], [1], [0, 0, 1, 1], [], []>} : vector<36x128xbf16>, vector<128x128xbf16>, vector<36x128xf32> -> vector<36x128xf32>
    %c0_132 = arith.constant 0 : index
    %c0_133 = arith.constant 0 : index
    %202 = vector.load %arg21[%c0_132, %c0_133] : memref<1x128xf32, #tpu.memory_space<vmem>>, vector<1x128xf32>
    %203 = vector.broadcast %202 : vector<1x128xf32> to vector<36x128xf32>
    %204 = arith.addf %201, %203 : vector<36x128xf32>
    %cst_134 = arith.constant 0.000000e+00 : f32
    %cst_135 = arith.constant 6.000000e+00 : f32
    %205 = vector.broadcast %cst_134 : f32 to vector<36x128xf32>
    %206 = arith.maximumf %205, %204 : vector<36x128xf32>
    %207 = vector.broadcast %cst_135 : f32 to vector<36x128xf32>
    %208 = arith.minimumf %207, %206 : vector<36x128xf32>
    %c0_136 = arith.constant 0 : index
    %c0_137 = arith.constant 0 : index
    %209 = vector.load %arg22[%c0_136, %c0_137] : memref<36x1xf32, #tpu.memory_space<vmem>>, vector<36x1xf32>
    %210 = vector.broadcast %209 : vector<36x1xf32> to vector<36x128xf32>
    %211 = arith.mulf %208, %210 : vector<36x128xf32>
    %212 = arith.truncf %211 : vector<36x128xf32> to vector<36x128xbf16>
    %c0_138 = arith.constant 0 : index
    %c0_139 = arith.constant 0 : index
    %213 = vector.load %arg55[%c0_138, %c0_139] : memref<36x128xbf16, #tpu.memory_space<vmem>>, vector<36x128xbf16>
    tpu.vector_store %arg55[%c0_138, %c0_139], %212 {strides = array<i32>} : memref<36x128xbf16, #tpu.memory_space<vmem>>, vector<36x128xbf16>,
    %cst_140 = arith.constant 0.000000e+00 : f32
    %214 = vector.broadcast %cst_140 : f32 to vector<22x128xf32>
    %c0_141 = arith.constant 0 : index
    %c0_142 = arith.constant 0 : index
    %215 = vector.load %arg55[%c0_141, %c0_142] : memref<36x128xbf16, #tpu.memory_space<vmem>>, vector<22x128xbf16>
    %216 = arith.extf %215 : vector<22x128xbf16> to vector<22x128xf32>
    %c0_143 = arith.constant 0 : index
    %c0_144 = arith.constant 0 : index
    %c0_145 = arith.constant 0 : index
    %217 = vector.load %arg23[%c0_143, %c0_144, %c0_145] : memref<9x1x128xf32, #tpu.memory_space<vmem>>, vector<1x1x128xf32>
    %218 = vector.shape_cast %217 : vector<1x1x128xf32> to vector<1x128xf32>
    %219 = vector.broadcast %218 : vector<1x128xf32> to vector<22x128xf32>
    %220 = arith.mulf %216, %219 : vector<22x128xf32>
    %221 = arith.addf %214, %220 : vector<22x128xf32>
    %c1_146 = arith.constant 1 : index
    %c0_147 = arith.constant 0 : index
    %222 = vector.load %arg55[%c1_146, %c0_147] : memref<36x128xbf16, #tpu.memory_space<vmem>>, vector<22x128xbf16>
    %223 = arith.extf %222 : vector<22x128xbf16> to vector<22x128xf32>
    %c1_148 = arith.constant 1 : index
    %c0_149 = arith.constant 0 : index
    %c0_150 = arith.constant 0 : index
    %224 = vector.load %arg23[%c1_148, %c0_149, %c0_150] : memref<9x1x128xf32, #tpu.memory_space<vmem>>, vector<1x1x128xf32>
    %225 = vector.shape_cast %224 : vector<1x1x128xf32> to vector<1x128xf32>
    %226 = vector.broadcast %225 : vector<1x128xf32> to vector<22x128xf32>
    %227 = arith.mulf %223, %226 : vector<22x128xf32>
    %228 = arith.addf %221, %227 : vector<22x128xf32>
    %c2_151 = arith.constant 2 : index
    %c0_152 = arith.constant 0 : index
    %229 = vector.load %arg55[%c2_151, %c0_152] : memref<36x128xbf16, #tpu.memory_space<vmem>>, vector<22x128xbf16>
    %230 = arith.extf %229 : vector<22x128xbf16> to vector<22x128xf32>
    %c2_153 = arith.constant 2 : index
    %c0_154 = arith.constant 0 : index
    %c0_155 = arith.constant 0 : index
    %231 = vector.load %arg23[%c2_153, %c0_154, %c0_155] : memref<9x1x128xf32, #tpu.memory_space<vmem>>, vector<1x1x128xf32>
    %232 = vector.shape_cast %231 : vector<1x1x128xf32> to vector<1x128xf32>
    %233 = vector.broadcast %232 : vector<1x128xf32> to vector<22x128xf32>
    %234 = arith.mulf %230, %233 : vector<22x128xf32>
    %235 = arith.addf %228, %234 : vector<22x128xf32>
    %c6_156 = arith.constant 6 : index
    %c0_157 = arith.constant 0 : index
    %236 = vector.load %arg55[%c6_156, %c0_157] : memref<36x128xbf16, #tpu.memory_space<vmem>>, vector<22x128xbf16>
    %237 = arith.extf %236 : vector<22x128xbf16> to vector<22x128xf32>
    %c3_158 = arith.constant 3 : index
    %c0_159 = arith.constant 0 : index
    %c0_160 = arith.constant 0 : index
    %238 = vector.load %arg23[%c3_158, %c0_159, %c0_160] : memref<9x1x128xf32, #tpu.memory_space<vmem>>, vector<1x1x128xf32>
    %239 = vector.shape_cast %238 : vector<1x1x128xf32> to vector<1x128xf32>
    %240 = vector.broadcast %239 : vector<1x128xf32> to vector<22x128xf32>
    %241 = arith.mulf %237, %240 : vector<22x128xf32>
    %242 = arith.addf %235, %241 : vector<22x128xf32>
    %c7_161 = arith.constant 7 : index
    %c0_162 = arith.constant 0 : index
    %243 = vector.load %arg55[%c7_161, %c0_162] : memref<36x128xbf16, #tpu.memory_space<vmem>>, vector<22x128xbf16>
    %244 = arith.extf %243 : vector<22x128xbf16> to vector<22x128xf32>
    %c4_163 = arith.constant 4 : index
    %c0_164 = arith.constant 0 : index
    %c0_165 = arith.constant 0 : index
    %245 = vector.load %arg23[%c4_163, %c0_164, %c0_165] : memref<9x1x128xf32, #tpu.memory_space<vmem>>, vector<1x1x128xf32>
    %246 = vector.shape_cast %245 : vector<1x1x128xf32> to vector<1x128xf32>
    %247 = vector.broadcast %246 : vector<1x128xf32> to vector<22x128xf32>
    %248 = arith.mulf %244, %247 : vector<22x128xf32>
    %249 = arith.addf %242, %248 : vector<22x128xf32>
    %c8_166 = arith.constant 8 : index
    %c0_167 = arith.constant 0 : index
    %250 = vector.load %arg55[%c8_166, %c0_167] : memref<36x128xbf16, #tpu.memory_space<vmem>>, vector<22x128xbf16>
    %251 = arith.extf %250 : vector<22x128xbf16> to vector<22x128xf32>
    %c5_168 = arith.constant 5 : index
    %c0_169 = arith.constant 0 : index
    %c0_170 = arith.constant 0 : index
    %252 = vector.load %arg23[%c5_168, %c0_169, %c0_170] : memref<9x1x128xf32, #tpu.memory_space<vmem>>, vector<1x1x128xf32>
    %253 = vector.shape_cast %252 : vector<1x1x128xf32> to vector<1x128xf32>
    %254 = vector.broadcast %253 : vector<1x128xf32> to vector<22x128xf32>
    %255 = arith.mulf %251, %254 : vector<22x128xf32>
    %256 = arith.addf %249, %255 : vector<22x128xf32>
    %c12_171 = arith.constant 12 : index
    %c0_172 = arith.constant 0 : index
    %257 = vector.load %arg55[%c12_171, %c0_172] : memref<36x128xbf16, #tpu.memory_space<vmem>>, vector<22x128xbf16>
    %258 = arith.extf %257 : vector<22x128xbf16> to vector<22x128xf32>
    %c6_173 = arith.constant 6 : index
    %c0_174 = arith.constant 0 : index
    %c0_175 = arith.constant 0 : index
    %259 = vector.load %arg23[%c6_173, %c0_174, %c0_175] : memref<9x1x128xf32, #tpu.memory_space<vmem>>, vector<1x1x128xf32>
    %260 = vector.shape_cast %259 : vector<1x1x128xf32> to vector<1x128xf32>
    %261 = vector.broadcast %260 : vector<1x128xf32> to vector<22x128xf32>
    %262 = arith.mulf %258, %261 : vector<22x128xf32>
    %263 = arith.addf %256, %262 : vector<22x128xf32>
    %c13 = arith.constant 13 : index
    %c0_176 = arith.constant 0 : index
    %264 = vector.load %arg55[%c13, %c0_176] : memref<36x128xbf16, #tpu.memory_space<vmem>>, vector<22x128xbf16>
    %265 = arith.extf %264 : vector<22x128xbf16> to vector<22x128xf32>
    %c7_177 = arith.constant 7 : index
    %c0_178 = arith.constant 0 : index
    %c0_179 = arith.constant 0 : index
    %266 = vector.load %arg23[%c7_177, %c0_178, %c0_179] : memref<9x1x128xf32, #tpu.memory_space<vmem>>, vector<1x1x128xf32>
    %267 = vector.shape_cast %266 : vector<1x1x128xf32> to vector<1x128xf32>
    %268 = vector.broadcast %267 : vector<1x128xf32> to vector<22x128xf32>
    %269 = arith.mulf %265, %268 : vector<22x128xf32>
    %270 = arith.addf %263, %269 : vector<22x128xf32>
    %c14 = arith.constant 14 : index
    %c0_180 = arith.constant 0 : index
    %271 = vector.load %arg55[%c14, %c0_180] : memref<36x128xbf16, #tpu.memory_space<vmem>>, vector<22x128xbf16>
    %272 = arith.extf %271 : vector<22x128xbf16> to vector<22x128xf32>
    %c8_181 = arith.constant 8 : index
    %c0_182 = arith.constant 0 : index
    %c0_183 = arith.constant 0 : index
    %273 = vector.load %arg23[%c8_181, %c0_182, %c0_183] : memref<9x1x128xf32, #tpu.memory_space<vmem>>, vector<1x1x128xf32>
    %274 = vector.shape_cast %273 : vector<1x1x128xf32> to vector<1x128xf32>
    %275 = vector.broadcast %274 : vector<1x128xf32> to vector<22x128xf32>
    %276 = arith.mulf %272, %275 : vector<22x128xf32>
    %277 = arith.addf %270, %276 : vector<22x128xf32>
    %c0_184 = arith.constant 0 : index
    %c0_185 = arith.constant 0 : index
    %278 = vector.load %arg24[%c0_184, %c0_185] : memref<1x128xf32, #tpu.memory_space<vmem>>, vector<1x128xf32>
    %279 = vector.broadcast %278 : vector<1x128xf32> to vector<22x128xf32>
    %280 = arith.addf %277, %279 : vector<22x128xf32>
    %cst_186 = arith.constant 0.000000e+00 : f32
    %cst_187 = arith.constant 6.000000e+00 : f32
    %281 = vector.broadcast %cst_186 : f32 to vector<22x128xf32>
    %282 = arith.maximumf %281, %280 : vector<22x128xf32>
    %283 = vector.broadcast %cst_187 : f32 to vector<22x128xf32>
    %284 = arith.minimumf %283, %282 : vector<22x128xf32>
    %285 = arith.truncf %284 : vector<22x128xf32> to vector<22x128xbf16>
    %c0_188 = arith.constant 0 : index
    %c0_189 = arith.constant 0 : index
    %286 = vector.load %arg25[%c0_188, %c0_189] : memref<36x22xbf16, #tpu.memory_space<vmem>>, vector<36x22xbf16>
    %cst_190 = arith.constant dense<0.000000e+00> : vector<36x128xf32>
    %287 = tpu.matmul %286, %285, %cst_190 {dimension_numbers = #tpu.dot_dimension_numbers<[1], [0], [0], [1], [0, 0, 1, 1], [], []>} : vector<36x22xbf16>, vector<22x128xbf16>, vector<36x128xf32> -> vector<36x128xf32>
    %288 = arith.truncf %287 : vector<36x128xf32> to vector<36x128xbf16>
    %c0_191 = arith.constant 0 : index
    %c0_192 = arith.constant 0 : index
    %289 = vector.load %arg26[%c0_191, %c0_192] : memref<128x128xbf16, #tpu.memory_space<vmem>>, vector<128x128xbf16>
    %cst_193 = arith.constant dense<0.000000e+00> : vector<36x128xf32>
    %290 = tpu.matmul %288, %289, %cst_193 {dimension_numbers = #tpu.dot_dimension_numbers<[1], [0], [0], [1], [0, 0, 1, 1], [], []>} : vector<36x128xbf16>, vector<128x128xbf16>, vector<36x128xf32> -> vector<36x128xf32>
    %c0_194 = arith.constant 0 : index
    %c0_195 = arith.constant 0 : index
    %291 = vector.load %arg27[%c0_194, %c0_195] : memref<1x128xf32, #tpu.memory_space<vmem>>, vector<1x128xf32>
    %292 = vector.broadcast %291 : vector<1x128xf32> to vector<36x128xf32>
    %293 = arith.addf %290, %292 : vector<36x128xf32>
    %c0_196 = arith.constant 0 : index
    %c0_197 = arith.constant 0 : index
    %294 = vector.load %arg28[%c0_196, %c0_197] : memref<36x1xf32, #tpu.memory_space<vmem>>, vector<36x1xf32>
    %295 = vector.broadcast %294 : vector<36x1xf32> to vector<36x128xf32>
    %296 = arith.mulf %293, %295 : vector<36x128xf32>
    %297 = arith.extf %199 : vector<36x128xbf16> to vector<36x128xf32>
    %298 = arith.addf %296, %297 : vector<36x128xf32>
    %299 = arith.truncf %298 : vector<36x128xf32> to vector<36x128xbf16>
    %c0_198 = arith.constant 0 : index
    %c0_199 = arith.constant 0 : index
    %300 = vector.load %arg29[%c0_198, %c0_199] : memref<128x128xbf16, #tpu.memory_space<vmem>>, vector<128x128xbf16>
    %cst_200 = arith.constant dense<0.000000e+00> : vector<36x128xf32>
    %301 = tpu.matmul %299, %300, %cst_200 {dimension_numbers = #tpu.dot_dimension_numbers<[1], [0], [0], [1], [0, 0, 1, 1], [], []>} : vector<36x128xbf16>, vector<128x128xbf16>, vector<36x128xf32> -> vector<36x128xf32>
    %c0_201 = arith.constant 0 : index
    %c0_202 = arith.constant 0 : index
    %302 = vector.load %arg30[%c0_201, %c0_202] : memref<1x128xf32, #tpu.memory_space<vmem>>, vector<1x128xf32>
    %303 = vector.broadcast %302 : vector<1x128xf32> to vector<36x128xf32>
    %304 = arith.addf %301, %303 : vector<36x128xf32>
    %cst_203 = arith.constant 0.000000e+00 : f32
    %cst_204 = arith.constant 6.000000e+00 : f32
    %305 = vector.broadcast %cst_203 : f32 to vector<36x128xf32>
    %306 = arith.maximumf %305, %304 : vector<36x128xf32>
    %307 = vector.broadcast %cst_204 : f32 to vector<36x128xf32>
    %308 = arith.minimumf %307, %306 : vector<36x128xf32>
    %c0_205 = arith.constant 0 : index
    %c0_206 = arith.constant 0 : index
    %309 = vector.load %arg31[%c0_205, %c0_206] : memref<36x1xf32, #tpu.memory_space<vmem>>, vector<36x1xf32>
    %310 = vector.broadcast %309 : vector<36x1xf32> to vector<36x128xf32>
    %311 = arith.mulf %308, %310 : vector<36x128xf32>
    %312 = arith.truncf %311 : vector<36x128xf32> to vector<36x128xbf16>
    %c0_207 = arith.constant 0 : index
    %c0_208 = arith.constant 0 : index
    %313 = vector.load %arg56[%c0_207, %c0_208] : memref<36x128xbf16, #tpu.memory_space<vmem>>, vector<36x128xbf16>
    tpu.vector_store %arg56[%c0_207, %c0_208], %312 {strides = array<i32>} : memref<36x128xbf16, #tpu.memory_space<vmem>>, vector<36x128xbf16>,
    %cst_209 = arith.constant 0.000000e+00 : f32
    %314 = vector.broadcast %cst_209 : f32 to vector<22x128xf32>
    %c0_210 = arith.constant 0 : index
    %c0_211 = arith.constant 0 : index
    %315 = vector.load %arg56[%c0_210, %c0_211] : memref<36x128xbf16, #tpu.memory_space<vmem>>, vector<22x128xbf16>
    %316 = arith.extf %315 : vector<22x128xbf16> to vector<22x128xf32>
    %c0_212 = arith.constant 0 : index
    %c0_213 = arith.constant 0 : index
    %c0_214 = arith.constant 0 : index
    %317 = vector.load %arg32[%c0_212, %c0_213, %c0_214] : memref<9x1x128xf32, #tpu.memory_space<vmem>>, vector<1x1x128xf32>
    %318 = vector.shape_cast %317 : vector<1x1x128xf32> to vector<1x128xf32>
    %319 = vector.broadcast %318 : vector<1x128xf32> to vector<22x128xf32>
    %320 = arith.mulf %316, %319 : vector<22x128xf32>
    %321 = arith.addf %314, %320 : vector<22x128xf32>
    %c1_215 = arith.constant 1 : index
    %c0_216 = arith.constant 0 : index
    %322 = vector.load %arg56[%c1_215, %c0_216] : memref<36x128xbf16, #tpu.memory_space<vmem>>, vector<22x128xbf16>
    %323 = arith.extf %322 : vector<22x128xbf16> to vector<22x128xf32>
    %c1_217 = arith.constant 1 : index
    %c0_218 = arith.constant 0 : index
    %c0_219 = arith.constant 0 : index
    %324 = vector.load %arg32[%c1_217, %c0_218, %c0_219] : memref<9x1x128xf32, #tpu.memory_space<vmem>>, vector<1x1x128xf32>
    %325 = vector.shape_cast %324 : vector<1x1x128xf32> to vector<1x128xf32>
    %326 = vector.broadcast %325 : vector<1x128xf32> to vector<22x128xf32>
    %327 = arith.mulf %323, %326 : vector<22x128xf32>
    %328 = arith.addf %321, %327 : vector<22x128xf32>
    %c2_220 = arith.constant 2 : index
    %c0_221 = arith.constant 0 : index
    %329 = vector.load %arg56[%c2_220, %c0_221] : memref<36x128xbf16, #tpu.memory_space<vmem>>, vector<22x128xbf16>
    %330 = arith.extf %329 : vector<22x128xbf16> to vector<22x128xf32>
    %c2_222 = arith.constant 2 : index
    %c0_223 = arith.constant 0 : index
    %c0_224 = arith.constant 0 : index
    %331 = vector.load %arg32[%c2_222, %c0_223, %c0_224] : memref<9x1x128xf32, #tpu.memory_space<vmem>>, vector<1x1x128xf32>
    %332 = vector.shape_cast %331 : vector<1x1x128xf32> to vector<1x128xf32>
    %333 = vector.broadcast %332 : vector<1x128xf32> to vector<22x128xf32>
    %334 = arith.mulf %330, %333 : vector<22x128xf32>
    %335 = arith.addf %328, %334 : vector<22x128xf32>
    %c6_225 = arith.constant 6 : index
    %c0_226 = arith.constant 0 : index
    %336 = vector.load %arg56[%c6_225, %c0_226] : memref<36x128xbf16, #tpu.memory_space<vmem>>, vector<22x128xbf16>
    %337 = arith.extf %336 : vector<22x128xbf16> to vector<22x128xf32>
    %c3_227 = arith.constant 3 : index
    %c0_228 = arith.constant 0 : index
    %c0_229 = arith.constant 0 : index
    %338 = vector.load %arg32[%c3_227, %c0_228, %c0_229] : memref<9x1x128xf32, #tpu.memory_space<vmem>>, vector<1x1x128xf32>
    %339 = vector.shape_cast %338 : vector<1x1x128xf32> to vector<1x128xf32>
    %340 = vector.broadcast %339 : vector<1x128xf32> to vector<22x128xf32>
    %341 = arith.mulf %337, %340 : vector<22x128xf32>
    %342 = arith.addf %335, %341 : vector<22x128xf32>
    %c7_230 = arith.constant 7 : index
    %c0_231 = arith.constant 0 : index
    %343 = vector.load %arg56[%c7_230, %c0_231] : memref<36x128xbf16, #tpu.memory_space<vmem>>, vector<22x128xbf16>
    %344 = arith.extf %343 : vector<22x128xbf16> to vector<22x128xf32>
    %c4_232 = arith.constant 4 : index
    %c0_233 = arith.constant 0 : index
    %c0_234 = arith.constant 0 : index
    %345 = vector.load %arg32[%c4_232, %c0_233, %c0_234] : memref<9x1x128xf32, #tpu.memory_space<vmem>>, vector<1x1x128xf32>
    %346 = vector.shape_cast %345 : vector<1x1x128xf32> to vector<1x128xf32>
    %347 = vector.broadcast %346 : vector<1x128xf32> to vector<22x128xf32>
    %348 = arith.mulf %344, %347 : vector<22x128xf32>
    %349 = arith.addf %342, %348 : vector<22x128xf32>
    %c8_235 = arith.constant 8 : index
    %c0_236 = arith.constant 0 : index
    %350 = vector.load %arg56[%c8_235, %c0_236] : memref<36x128xbf16, #tpu.memory_space<vmem>>, vector<22x128xbf16>
    %351 = arith.extf %350 : vector<22x128xbf16> to vector<22x128xf32>
    %c5_237 = arith.constant 5 : index
    %c0_238 = arith.constant 0 : index
    %c0_239 = arith.constant 0 : index
    %352 = vector.load %arg32[%c5_237, %c0_238, %c0_239] : memref<9x1x128xf32, #tpu.memory_space<vmem>>, vector<1x1x128xf32>
    %353 = vector.shape_cast %352 : vector<1x1x128xf32> to vector<1x128xf32>
    %354 = vector.broadcast %353 : vector<1x128xf32> to vector<22x128xf32>
    %355 = arith.mulf %351, %354 : vector<22x128xf32>
    %356 = arith.addf %349, %355 : vector<22x128xf32>
    %c12_240 = arith.constant 12 : index
    %c0_241 = arith.constant 0 : index
    %357 = vector.load %arg56[%c12_240, %c0_241] : memref<36x128xbf16, #tpu.memory_space<vmem>>, vector<22x128xbf16>
    %358 = arith.extf %357 : vector<22x128xbf16> to vector<22x128xf32>
    %c6_242 = arith.constant 6 : index
    %c0_243 = arith.constant 0 : index
    %c0_244 = arith.constant 0 : index
    %359 = vector.load %arg32[%c6_242, %c0_243, %c0_244] : memref<9x1x128xf32, #tpu.memory_space<vmem>>, vector<1x1x128xf32>
    %360 = vector.shape_cast %359 : vector<1x1x128xf32> to vector<1x128xf32>
    %361 = vector.broadcast %360 : vector<1x128xf32> to vector<22x128xf32>
    %362 = arith.mulf %358, %361 : vector<22x128xf32>
    %363 = arith.addf %356, %362 : vector<22x128xf32>
    %c13_245 = arith.constant 13 : index
    %c0_246 = arith.constant 0 : index
    %364 = vector.load %arg56[%c13_245, %c0_246] : memref<36x128xbf16, #tpu.memory_space<vmem>>, vector<22x128xbf16>
    %365 = arith.extf %364 : vector<22x128xbf16> to vector<22x128xf32>
    %c7_247 = arith.constant 7 : index
    %c0_248 = arith.constant 0 : index
    %c0_249 = arith.constant 0 : index
    %366 = vector.load %arg32[%c7_247, %c0_248, %c0_249] : memref<9x1x128xf32, #tpu.memory_space<vmem>>, vector<1x1x128xf32>
    %367 = vector.shape_cast %366 : vector<1x1x128xf32> to vector<1x128xf32>
    %368 = vector.broadcast %367 : vector<1x128xf32> to vector<22x128xf32>
    %369 = arith.mulf %365, %368 : vector<22x128xf32>
    %370 = arith.addf %363, %369 : vector<22x128xf32>
    %c14_250 = arith.constant 14 : index
    %c0_251 = arith.constant 0 : index
    %371 = vector.load %arg56[%c14_250, %c0_251] : memref<36x128xbf16, #tpu.memory_space<vmem>>, vector<22x128xbf16>
    %372 = arith.extf %371 : vector<22x128xbf16> to vector<22x128xf32>
    %c8_252 = arith.constant 8 : index
    %c0_253 = arith.constant 0 : index
    %c0_254 = arith.constant 0 : index
    %373 = vector.load %arg32[%c8_252, %c0_253, %c0_254] : memref<9x1x128xf32, #tpu.memory_space<vmem>>, vector<1x1x128xf32>
    %374 = vector.shape_cast %373 : vector<1x1x128xf32> to vector<1x128xf32>
    %375 = vector.broadcast %374 : vector<1x128xf32> to vector<22x128xf32>
    %376 = arith.mulf %372, %375 : vector<22x128xf32>
    %377 = arith.addf %370, %376 : vector<22x128xf32>
    %c0_255 = arith.constant 0 : index
    %c0_256 = arith.constant 0 : index
    %378 = vector.load %arg33[%c0_255, %c0_256] : memref<1x128xf32, #tpu.memory_space<vmem>>, vector<1x128xf32>
    %379 = vector.broadcast %378 : vector<1x128xf32> to vector<22x128xf32>
    %380 = arith.addf %377, %379 : vector<22x128xf32>
    %cst_257 = arith.constant 0.000000e+00 : f32
    %cst_258 = arith.constant 6.000000e+00 : f32
    %381 = vector.broadcast %cst_257 : f32 to vector<22x128xf32>
    %382 = arith.maximumf %381, %380 : vector<22x128xf32>
    %383 = vector.broadcast %cst_258 : f32 to vector<22x128xf32>
    %384 = arith.minimumf %383, %382 : vector<22x128xf32>
    %385 = arith.truncf %384 : vector<22x128xf32> to vector<22x128xbf16>
    %c0_259 = arith.constant 0 : index
    %c0_260 = arith.constant 0 : index
    %386 = vector.load %arg34[%c0_259, %c0_260] : memref<16x22xbf16, #tpu.memory_space<vmem>>, vector<16x22xbf16>
    %cst_261 = arith.constant dense<0.000000e+00> : vector<16x128xf32>
    %387 = tpu.matmul %386, %385, %cst_261 {dimension_numbers = #tpu.dot_dimension_numbers<[1], [0], [0], [1], [0, 0, 1, 1], [], []>} : vector<16x22xbf16>, vector<22x128xbf16>, vector<16x128xf32> -> vector<16x128xf32>
    %388 = arith.truncf %387 : vector<16x128xf32> to vector<16x128xbf16>
    %c0_262 = arith.constant 0 : index
    %c0_263 = arith.constant 0 : index
    %389 = vector.load %arg35[%c0_262, %c0_263] : memref<128x128xbf16, #tpu.memory_space<vmem>>, vector<128x128xbf16>
    %cst_264 = arith.constant dense<0.000000e+00> : vector<16x128xf32>
    %390 = tpu.matmul %388, %389, %cst_264 {dimension_numbers = #tpu.dot_dimension_numbers<[1], [0], [0], [1], [0, 0, 1, 1], [], []>} : vector<16x128xbf16>, vector<128x128xbf16>, vector<16x128xf32> -> vector<16x128xf32>
    %c0_265 = arith.constant 0 : index
    %c0_266 = arith.constant 0 : index
    %391 = vector.load %arg36[%c0_265, %c0_266] : memref<1x128xf32, #tpu.memory_space<vmem>>, vector<1x128xf32>
    %392 = vector.broadcast %391 : vector<1x128xf32> to vector<16x128xf32>
    %393 = arith.addf %390, %392 : vector<16x128xf32>
    %c0_267 = arith.constant 0 : index
    %c0_268 = arith.constant 0 : index
    %394 = vector.load %arg37[%c0_267, %c0_268] : memref<16x1xf32, #tpu.memory_space<vmem>>, vector<16x1xf32>
    %395 = vector.broadcast %394 : vector<16x1xf32> to vector<16x128xf32>
    %396 = arith.mulf %393, %395 : vector<16x128xf32>
    %397 = arith.truncf %396 : vector<16x128xf32> to vector<16x128xbf16>
    %c0_269 = arith.constant 0 : index
    %c0_270 = arith.constant 0 : index
    %398 = vector.load %arg38[%c0_269, %c0_270] : memref<128x256xbf16, #tpu.memory_space<vmem>>, vector<128x256xbf16>
    %cst_271 = arith.constant dense<0.000000e+00> : vector<16x256xf32>
    %399 = tpu.matmul %397, %398, %cst_271 {dimension_numbers = #tpu.dot_dimension_numbers<[1], [0], [0], [1], [0, 0, 1, 1], [], []>} : vector<16x128xbf16>, vector<128x256xbf16>, vector<16x256xf32> -> vector<16x256xf32>
    %c0_272 = arith.constant 0 : index
    %c0_273 = arith.constant 0 : index
    %400 = vector.load %arg39[%c0_272, %c0_273] : memref<1x256xf32, #tpu.memory_space<vmem>>, vector<1x256xf32>
    %401 = vector.broadcast %400 : vector<1x256xf32> to vector<16x256xf32>
    %402 = arith.addf %399, %401 : vector<16x256xf32>
    %cst_274 = arith.constant 0.000000e+00 : f32
    %cst_275 = arith.constant 6.000000e+00 : f32
    %403 = vector.broadcast %cst_274 : f32 to vector<16x256xf32>
    %404 = arith.maximumf %403, %402 : vector<16x256xf32>
    %405 = vector.broadcast %cst_275 : f32 to vector<16x256xf32>
    %406 = arith.minimumf %405, %404 : vector<16x256xf32>
    %c0_276 = arith.constant 0 : index
    %c0_277 = arith.constant 0 : index
    %407 = vector.load %arg40[%c0_276, %c0_277] : memref<16x1xf32, #tpu.memory_space<vmem>>, vector<16x1xf32>
    %408 = vector.broadcast %407 : vector<16x1xf32> to vector<16x256xf32>
    %409 = arith.mulf %406, %408 : vector<16x256xf32>
    %410 = arith.truncf %409 : vector<16x256xf32> to vector<16x256xbf16>
    %c0_278 = arith.constant 0 : index
    %c0_279 = arith.constant 0 : index
    %411 = vector.load %arg57[%c0_278, %c0_279] : memref<16x256xbf16, #tpu.memory_space<vmem>>, vector<16x256xbf16>
    tpu.vector_store %arg57[%c0_278, %c0_279], %410 {strides = array<i32>} : memref<16x256xbf16, #tpu.memory_space<vmem>>, vector<16x256xbf16>,
    %cst_280 = arith.constant 0.000000e+00 : f32
    %412 = vector.broadcast %cst_280 : f32 to vector<6x256xf32>
    %c0_281 = arith.constant 0 : index
    %c0_282 = arith.constant 0 : index
    %413 = vector.load %arg57[%c0_281, %c0_282] : memref<16x256xbf16, #tpu.memory_space<vmem>>, vector<6x256xbf16>
    %414 = arith.extf %413 : vector<6x256xbf16> to vector<6x256xf32>
    %c0_283 = arith.constant 0 : index
    %c0_284 = arith.constant 0 : index
    %c0_285 = arith.constant 0 : index
    %415 = vector.load %arg41[%c0_283, %c0_284, %c0_285] : memref<9x1x256xf32, #tpu.memory_space<vmem>>, vector<1x1x256xf32>
    %416 = vector.shape_cast %415 : vector<1x1x256xf32> to vector<1x256xf32>
    %417 = vector.broadcast %416 : vector<1x256xf32> to vector<6x256xf32>
    %418 = arith.mulf %414, %417 : vector<6x256xf32>
    %419 = arith.addf %412, %418 : vector<6x256xf32>
    %c1_286 = arith.constant 1 : index
    %c0_287 = arith.constant 0 : index
    %420 = vector.load %arg57[%c1_286, %c0_287] : memref<16x256xbf16, #tpu.memory_space<vmem>>, vector<6x256xbf16>
    %421 = arith.extf %420 : vector<6x256xbf16> to vector<6x256xf32>
    %c1_288 = arith.constant 1 : index
    %c0_289 = arith.constant 0 : index
    %c0_290 = arith.constant 0 : index
    %422 = vector.load %arg41[%c1_288, %c0_289, %c0_290] : memref<9x1x256xf32, #tpu.memory_space<vmem>>, vector<1x1x256xf32>
    %423 = vector.shape_cast %422 : vector<1x1x256xf32> to vector<1x256xf32>
    %424 = vector.broadcast %423 : vector<1x256xf32> to vector<6x256xf32>
    %425 = arith.mulf %421, %424 : vector<6x256xf32>
    %426 = arith.addf %419, %425 : vector<6x256xf32>
    %c2_291 = arith.constant 2 : index
    %c0_292 = arith.constant 0 : index
    %427 = vector.load %arg57[%c2_291, %c0_292] : memref<16x256xbf16, #tpu.memory_space<vmem>>, vector<6x256xbf16>
    %428 = arith.extf %427 : vector<6x256xbf16> to vector<6x256xf32>
    %c2_293 = arith.constant 2 : index
    %c0_294 = arith.constant 0 : index
    %c0_295 = arith.constant 0 : index
    %429 = vector.load %arg41[%c2_293, %c0_294, %c0_295] : memref<9x1x256xf32, #tpu.memory_space<vmem>>, vector<1x1x256xf32>
    %430 = vector.shape_cast %429 : vector<1x1x256xf32> to vector<1x256xf32>
    %431 = vector.broadcast %430 : vector<1x256xf32> to vector<6x256xf32>
    %432 = arith.mulf %428, %431 : vector<6x256xf32>
    %433 = arith.addf %426, %432 : vector<6x256xf32>
    %c4_296 = arith.constant 4 : index
    %c0_297 = arith.constant 0 : index
    %434 = vector.load %arg57[%c4_296, %c0_297] : memref<16x256xbf16, #tpu.memory_space<vmem>>, vector<6x256xbf16>
    %435 = arith.extf %434 : vector<6x256xbf16> to vector<6x256xf32>
    %c3_298 = arith.constant 3 : index
    %c0_299 = arith.constant 0 : index
    %c0_300 = arith.constant 0 : index
    %436 = vector.load %arg41[%c3_298, %c0_299, %c0_300] : memref<9x1x256xf32, #tpu.memory_space<vmem>>, vector<1x1x256xf32>
    %437 = vector.shape_cast %436 : vector<1x1x256xf32> to vector<1x256xf32>
    %438 = vector.broadcast %437 : vector<1x256xf32> to vector<6x256xf32>
    %439 = arith.mulf %435, %438 : vector<6x256xf32>
    %440 = arith.addf %433, %439 : vector<6x256xf32>
    %c5_301 = arith.constant 5 : index
    %c0_302 = arith.constant 0 : index
    %441 = vector.load %arg57[%c5_301, %c0_302] : memref<16x256xbf16, #tpu.memory_space<vmem>>, vector<6x256xbf16>
    %442 = arith.extf %441 : vector<6x256xbf16> to vector<6x256xf32>
    %c4_303 = arith.constant 4 : index
    %c0_304 = arith.constant 0 : index
    %c0_305 = arith.constant 0 : index
    %443 = vector.load %arg41[%c4_303, %c0_304, %c0_305] : memref<9x1x256xf32, #tpu.memory_space<vmem>>, vector<1x1x256xf32>
    %444 = vector.shape_cast %443 : vector<1x1x256xf32> to vector<1x256xf32>
    %445 = vector.broadcast %444 : vector<1x256xf32> to vector<6x256xf32>
    %446 = arith.mulf %442, %445 : vector<6x256xf32>
    %447 = arith.addf %440, %446 : vector<6x256xf32>
    %c6_306 = arith.constant 6 : index
    %c0_307 = arith.constant 0 : index
    %448 = vector.load %arg57[%c6_306, %c0_307] : memref<16x256xbf16, #tpu.memory_space<vmem>>, vector<6x256xbf16>
    %449 = arith.extf %448 : vector<6x256xbf16> to vector<6x256xf32>
    %c5_308 = arith.constant 5 : index
    %c0_309 = arith.constant 0 : index
    %c0_310 = arith.constant 0 : index
    %450 = vector.load %arg41[%c5_308, %c0_309, %c0_310] : memref<9x1x256xf32, #tpu.memory_space<vmem>>, vector<1x1x256xf32>
    %451 = vector.shape_cast %450 : vector<1x1x256xf32> to vector<1x256xf32>
    %452 = vector.broadcast %451 : vector<1x256xf32> to vector<6x256xf32>
    %453 = arith.mulf %449, %452 : vector<6x256xf32>
    %454 = arith.addf %447, %453 : vector<6x256xf32>
    %c8_311 = arith.constant 8 : index
    %c0_312 = arith.constant 0 : index
    %455 = vector.load %arg57[%c8_311, %c0_312] : memref<16x256xbf16, #tpu.memory_space<vmem>>, vector<6x256xbf16>
    %456 = arith.extf %455 : vector<6x256xbf16> to vector<6x256xf32>
    %c6_313 = arith.constant 6 : index
    %c0_314 = arith.constant 0 : index
    %c0_315 = arith.constant 0 : index
    %457 = vector.load %arg41[%c6_313, %c0_314, %c0_315] : memref<9x1x256xf32, #tpu.memory_space<vmem>>, vector<1x1x256xf32>
    %458 = vector.shape_cast %457 : vector<1x1x256xf32> to vector<1x256xf32>
    %459 = vector.broadcast %458 : vector<1x256xf32> to vector<6x256xf32>
    %460 = arith.mulf %456, %459 : vector<6x256xf32>
    %461 = arith.addf %454, %460 : vector<6x256xf32>
    %c9 = arith.constant 9 : index
    %c0_316 = arith.constant 0 : index
    %462 = vector.load %arg57[%c9, %c0_316] : memref<16x256xbf16, #tpu.memory_space<vmem>>, vector<6x256xbf16>
    %463 = arith.extf %462 : vector<6x256xbf16> to vector<6x256xf32>
    %c7_317 = arith.constant 7 : index
    %c0_318 = arith.constant 0 : index
    %c0_319 = arith.constant 0 : index
    %464 = vector.load %arg41[%c7_317, %c0_318, %c0_319] : memref<9x1x256xf32, #tpu.memory_space<vmem>>, vector<1x1x256xf32>
    %465 = vector.shape_cast %464 : vector<1x1x256xf32> to vector<1x256xf32>
    %466 = vector.broadcast %465 : vector<1x256xf32> to vector<6x256xf32>
    %467 = arith.mulf %463, %466 : vector<6x256xf32>
    %468 = arith.addf %461, %467 : vector<6x256xf32>
    %c10_320 = arith.constant 10 : index
    %c0_321 = arith.constant 0 : index
    %469 = vector.load %arg57[%c10_320, %c0_321] : memref<16x256xbf16, #tpu.memory_space<vmem>>, vector<6x256xbf16>
    %470 = arith.extf %469 : vector<6x256xbf16> to vector<6x256xf32>
    %c8_322 = arith.constant 8 : index
    %c0_323 = arith.constant 0 : index
    %c0_324 = arith.constant 0 : index
    %471 = vector.load %arg41[%c8_322, %c0_323, %c0_324] : memref<9x1x256xf32, #tpu.memory_space<vmem>>, vector<1x1x256xf32>
    %472 = vector.shape_cast %471 : vector<1x1x256xf32> to vector<1x256xf32>
    %473 = vector.broadcast %472 : vector<1x256xf32> to vector<6x256xf32>
    %474 = arith.mulf %470, %473 : vector<6x256xf32>
    %475 = arith.addf %468, %474 : vector<6x256xf32>
    %c0_325 = arith.constant 0 : index
    %c0_326 = arith.constant 0 : index
    %476 = vector.load %arg42[%c0_325, %c0_326] : memref<1x256xf32, #tpu.memory_space<vmem>>, vector<1x256xf32>
    %477 = vector.broadcast %476 : vector<1x256xf32> to vector<6x256xf32>
    %478 = arith.addf %475, %477 : vector<6x256xf32>
    %cst_327 = arith.constant 0.000000e+00 : f32
    %cst_328 = arith.constant 6.000000e+00 : f32
    %479 = vector.broadcast %cst_327 : f32 to vector<6x256xf32>
    %480 = arith.maximumf %479, %478 : vector<6x256xf32>
    %481 = vector.broadcast %cst_328 : f32 to vector<6x256xf32>
    %482 = arith.minimumf %481, %480 : vector<6x256xf32>
    %483 = arith.truncf %482 : vector<6x256xf32> to vector<6x256xbf16>
    %c0_329 = arith.constant 0 : index
    %c0_330 = arith.constant 0 : index
    %484 = vector.load %arg43[%c0_329, %c0_330] : memref<16x6xbf16, #tpu.memory_space<vmem>>, vector<16x6xbf16>
    %cst_331 = arith.constant dense<0.000000e+00> : vector<16x256xf32>
    %485 = tpu.matmul %484, %483, %cst_331 {dimension_numbers = #tpu.dot_dimension_numbers<[1], [0], [0], [1], [0, 0, 1, 1], [], []>} : vector<16x6xbf16>, vector<6x256xbf16>, vector<16x256xf32> -> vector<16x256xf32>
    %486 = arith.truncf %485 : vector<16x256xf32> to vector<16x256xbf16>
    %c0_332 = arith.constant 0 : index
    %c0_333 = arith.constant 0 : index
    %487 = vector.load %arg44[%c0_332, %c0_333] : memref<256x128xbf16, #tpu.memory_space<vmem>>, vector<256x128xbf16>
    %cst_334 = arith.constant dense<0.000000e+00> : vector<16x128xf32>
    %488 = tpu.matmul %486, %487, %cst_334 {dimension_numbers = #tpu.dot_dimension_numbers<[1], [0], [0], [1], [0, 0, 1, 1], [], []>} : vector<16x256xbf16>, vector<256x128xbf16>, vector<16x128xf32> -> vector<16x128xf32>
    %c0_335 = arith.constant 0 : index
    %c0_336 = arith.constant 0 : index
    %489 = vector.load %arg45[%c0_335, %c0_336] : memref<1x128xf32, #tpu.memory_space<vmem>>, vector<1x128xf32>
    %490 = vector.broadcast %489 : vector<1x128xf32> to vector<16x128xf32>
    %491 = arith.addf %488, %490 : vector<16x128xf32>
    %c0_337 = arith.constant 0 : index
    %c0_338 = arith.constant 0 : index
    %492 = vector.load %arg46[%c0_337, %c0_338] : memref<16x1xf32, #tpu.memory_space<vmem>>, vector<16x1xf32>
    %493 = vector.broadcast %492 : vector<16x1xf32> to vector<16x128xf32>
    %494 = arith.mulf %491, %493 : vector<16x128xf32>
    %495 = arith.extf %397 : vector<16x128xbf16> to vector<16x128xf32>
    %496 = arith.addf %494, %495 : vector<16x128xf32>
    %497 = arith.truncf %496 : vector<16x128xf32> to vector<16x128xbf16>
    %c0_339 = arith.constant 0 : index
    %c0_340 = arith.constant 0 : index
    %498 = vector.load %arg47[%c0_339, %c0_340] : memref<128x128xbf16, #tpu.memory_space<vmem>>, vector<128x128xbf16>
    %cst_341 = arith.constant dense<0.000000e+00> : vector<16x128xf32>
    %499 = tpu.matmul %497, %498, %cst_341 {dimension_numbers = #tpu.dot_dimension_numbers<[1], [0], [0], [1], [0, 0, 1, 1], [], []>} : vector<16x128xbf16>, vector<128x128xbf16>, vector<16x128xf32> -> vector<16x128xf32>
    %c0_342 = arith.constant 0 : index
    %c0_343 = arith.constant 0 : index
    %500 = vector.load %arg48[%c0_342, %c0_343] : memref<1x128xf32, #tpu.memory_space<vmem>>, vector<1x128xf32>
    %501 = vector.broadcast %500 : vector<1x128xf32> to vector<16x128xf32>
    %502 = arith.addf %499, %501 : vector<16x128xf32>
    %cst_344 = arith.constant 0.000000e+00 : f32
    %cst_345 = arith.constant 6.000000e+00 : f32
    %503 = vector.broadcast %cst_344 : f32 to vector<16x128xf32>
    %504 = arith.maximumf %503, %502 : vector<16x128xf32>
    %505 = vector.broadcast %cst_345 : f32 to vector<16x128xf32>
    %506 = arith.minimumf %505, %504 : vector<16x128xf32>
    %c0_346 = arith.constant 0 : index
    %c0_347 = arith.constant 0 : index
    %507 = vector.load %arg49[%c0_346, %c0_347] : memref<16x1xf32, #tpu.memory_space<vmem>>, vector<16x1xf32>
    %508 = vector.broadcast %507 : vector<16x1xf32> to vector<16x128xf32>
    %509 = arith.mulf %506, %508 : vector<16x128xf32>
    %cst_348 = arith.constant dense<0.000000e+00> : vector<128xf32>
    %510 = vector.multi_reduction <add>, %509, %cst_348 [0] : vector<16x128xf32> to vector<128xf32>
    %511 = vector.shape_cast %510 : vector<128xf32> to vector<1x128xf32>
    %c0_349 = arith.constant 0 : index
    %c0_350 = arith.constant 0 : index
    %512 = vector.load %arg50[%c0_349, %c0_350] : memref<128x128xf32, #tpu.memory_space<vmem>>, vector<128x128xf32>
    %cst_351 = arith.constant dense<0.000000e+00> : vector<1x128xf32>
    %513 = tpu.matmul %511, %512, %cst_351 {dimension_numbers = #tpu.dot_dimension_numbers<[1], [0], [0], [1], [0, 0, 1, 1], [], []>} : vector<1x128xf32>, vector<128x128xf32>, vector<1x128xf32> -> vector<1x128xf32>
    %c0_352 = arith.constant 0 : index
    %c0_353 = arith.constant 0 : index
    %514 = vector.load %arg51[%c0_352, %c0_353] : memref<1x128xf32, #tpu.memory_space<vmem>>, vector<1x128xf32>
    %515 = arith.addf %513, %514 : vector<1x128xf32>
    %516 = vector.shape_cast %515 : vector<1x128xf32> to vector<1x128xf32>
    %517 = vector.broadcast %516 : vector<1x128xf32> to vector<8x128xf32>
    %c0_354 = arith.constant 0 : index
    %c0_355 = arith.constant 0 : index
    %c0_356 = arith.constant 0 : index
    %518 = vector.load %arg52[%c0_354, %c0_355, %c0_356] : memref<1x8x128xf32, #tpu.memory_space<vmem>>, vector<1x8x128xf32>
    %519 = vector.shape_cast %518 : vector<1x8x128xf32> to vector<8x128xf32>
    %520 = vector.shape_cast %517 : vector<8x128xf32> to vector<1x8x128xf32>
    tpu.vector_store %arg52[%c0_354, %c0_355, %c0_356], %520 {strides = array<i32>} : memref<1x8x128xf32, #tpu.memory_space<vmem>>, vector<1x8x128xf32>,
    return
  }
  func.func @transform_0(%arg0: i32) -> (i32, i32, i32) {
    %c0_i32 = arith.constant 0 : i32
    %c0_i32_0 = arith.constant 0 : i32
    %c0_i32_1 = arith.constant 0 : i32
    return %arg0, %c0_i32, %c0_i32_0 : i32, i32, i32
  }
  func.func @transform_1(%arg0: i32) -> (i32, i32) {
    %c0_i32 = arith.constant 0 : i32
    %c0_i32_0 = arith.constant 0 : i32
    %c0_i32_1 = arith.constant 0 : i32
    return %c0_i32, %c0_i32_0 : i32, i32
  }
  func.func @transform_2(%arg0: i32) -> (i32, i32) {
    %c0_i32 = arith.constant 0 : i32
    %c0_i32_0 = arith.constant 0 : i32
    %c0_i32_1 = arith.constant 0 : i32
    return %c0_i32, %c0_i32_0 : i32, i32
  }
  func.func @transform_3(%arg0: i32) -> (i32, i32) {
    %c0_i32 = arith.constant 0 : i32
    %c0_i32_0 = arith.constant 0 : i32
    %c0_i32_1 = arith.constant 0 : i32
    return %c0_i32, %c0_i32_0 : i32, i32
  }
  func.func @transform_4(%arg0: i32) -> (i32, i32, i32) {
    %c0_i32 = arith.constant 0 : i32
    %c0_i32_0 = arith.constant 0 : i32
    %c0_i32_1 = arith.constant 0 : i32
    %c0_i32_2 = arith.constant 0 : i32
    return %c0_i32, %c0_i32_0, %c0_i32_1 : i32, i32, i32
  }
  func.func @transform_5(%arg0: i32) -> (i32, i32) {
    %c0_i32 = arith.constant 0 : i32
    %c0_i32_0 = arith.constant 0 : i32
    %c0_i32_1 = arith.constant 0 : i32
    return %c0_i32, %c0_i32_0 : i32, i32
  }
  func.func @transform_6(%arg0: i32) -> (i32, i32) {
    %c0_i32 = arith.constant 0 : i32
    %c0_i32_0 = arith.constant 0 : i32
    %c0_i32_1 = arith.constant 0 : i32
    return %c0_i32, %c0_i32_0 : i32, i32
  }
  func.func @transform_7(%arg0: i32) -> (i32, i32) {
    %c0_i32 = arith.constant 0 : i32
    %c0_i32_0 = arith.constant 0 : i32
    %c0_i32_1 = arith.constant 0 : i32
    return %c0_i32, %c0_i32_0 : i32, i32
  }
  func.func @transform_8(%arg0: i32) -> (i32, i32) {
    %c0_i32 = arith.constant 0 : i32
    %c0_i32_0 = arith.constant 0 : i32
    %c0_i32_1 = arith.constant 0 : i32
    return %c0_i32, %c0_i32_0 : i32, i32
  }
  func.func @transform_9(%arg0: i32) -> (i32, i32) {
    %c0_i32 = arith.constant 0 : i32
    %c0_i32_0 = arith.constant 0 : i32
    %c0_i32_1 = arith.constant 0 : i32
    return %c0_i32, %c0_i32_0 : i32, i32
  }
  func.func @transform_10(%arg0: i32) -> (i32, i32) {
    %c0_i32 = arith.constant 0 : i32
    %c0_i32_0 = arith.constant 0 : i32
    %c0_i32_1 = arith.constant 0 : i32
    return %c0_i32, %c0_i32_0 : i32, i32
  }
  func.func @transform_11(%arg0: i32) -> (i32, i32) {
    %c0_i32 = arith.constant 0 : i32
    %c0_i32_0 = arith.constant 0 : i32
    %c0_i32_1 = arith.constant 0 : i32
    return %c0_i32, %c0_i32_0 : i32, i32
  }
  func.func @transform_12(%arg0: i32) -> (i32, i32) {
    %c0_i32 = arith.constant 0 : i32
    %c0_i32_0 = arith.constant 0 : i32
    %c0_i32_1 = arith.constant 0 : i32
    return %c0_i32, %c0_i32_0 : i32, i32
  }
  func.func @transform_13(%arg0: i32) -> (i32, i32, i32) {
    %c0_i32 = arith.constant 0 : i32
    %c0_i32_0 = arith.constant 0 : i32
    %c0_i32_1 = arith.constant 0 : i32
    %c0_i32_2 = arith.constant 0 : i32
    return %c0_i32, %c0_i32_0, %c0_i32_1 : i32, i32, i32
  }
  func.func @transform_14(%arg0: i32) -> (i32, i32) {
    %c0_i32 = arith.constant 0 : i32
    %c0_i32_0 = arith.constant 0 : i32
    %c0_i32_1 = arith.constant 0 : i32
    return %c0_i32, %c0_i32_0 : i32, i32
  }
  func.func @transform_15(%arg0: i32) -> (i32, i32) {
    %c0_i32 = arith.constant 0 : i32
    %c0_i32_0 = arith.constant 0 : i32
    %c0_i32_1 = arith.constant 0 : i32
    return %c0_i32, %c0_i32_0 : i32, i32
  }
  func.func @transform_16(%arg0: i32) -> (i32, i32) {
    %c0_i32 = arith.constant 0 : i32
    %c0_i32_0 = arith.constant 0 : i32
    %c0_i32_1 = arith.constant 0 : i32
    return %c0_i32, %c0_i32_0 : i32, i32
  }
  func.func @transform_17(%arg0: i32) -> (i32, i32) {
    %c0_i32 = arith.constant 0 : i32
    %c0_i32_0 = arith.constant 0 : i32
    %c0_i32_1 = arith.constant 0 : i32
    return %c0_i32, %c0_i32_0 : i32, i32
  }
  func.func @transform_18(%arg0: i32) -> (i32, i32) {
    %c0_i32 = arith.constant 0 : i32
    %c0_i32_0 = arith.constant 0 : i32
    %c0_i32_1 = arith.constant 0 : i32
    return %c0_i32, %c0_i32_0 : i32, i32
  }
  func.func @transform_19(%arg0: i32) -> (i32, i32) {
    %c0_i32 = arith.constant 0 : i32
    %c0_i32_0 = arith.constant 0 : i32
    %c0_i32_1 = arith.constant 0 : i32
    return %c0_i32, %c0_i32_0 : i32, i32
  }
  func.func @transform_20(%arg0: i32) -> (i32, i32) {
    %c0_i32 = arith.constant 0 : i32
    %c0_i32_0 = arith.constant 0 : i32
    %c0_i32_1 = arith.constant 0 : i32
    return %c0_i32, %c0_i32_0 : i32, i32
  }
  func.func @transform_21(%arg0: i32) -> (i32, i32) {
    %c0_i32 = arith.constant 0 : i32
    %c0_i32_0 = arith.constant 0 : i32
    %c0_i32_1 = arith.constant 0 : i32
    return %c0_i32, %c0_i32_0 : i32, i32
  }
  func.func @transform_22(%arg0: i32) -> (i32, i32, i32) {
    %c0_i32 = arith.constant 0 : i32
    %c0_i32_0 = arith.constant 0 : i32
    %c0_i32_1 = arith.constant 0 : i32
    %c0_i32_2 = arith.constant 0 : i32
    return %c0_i32, %c0_i32_0, %c0_i32_1 : i32, i32, i32
  }
  func.func @transform_23(%arg0: i32) -> (i32, i32) {
    %c0_i32 = arith.constant 0 : i32
    %c0_i32_0 = arith.constant 0 : i32
    %c0_i32_1 = arith.constant 0 : i32
    return %c0_i32, %c0_i32_0 : i32, i32
  }
  func.func @transform_24(%arg0: i32) -> (i32, i32) {
    %c0_i32 = arith.constant 0 : i32
    %c0_i32_0 = arith.constant 0 : i32
    %c0_i32_1 = arith.constant 0 : i32
    return %c0_i32, %c0_i32_0 : i32, i32
  }
  func.func @transform_25(%arg0: i32) -> (i32, i32) {
    %c0_i32 = arith.constant 0 : i32
    %c0_i32_0 = arith.constant 0 : i32
    %c0_i32_1 = arith.constant 0 : i32
    return %c0_i32, %c0_i32_0 : i32, i32
  }
  func.func @transform_26(%arg0: i32) -> (i32, i32) {
    %c0_i32 = arith.constant 0 : i32
    %c0_i32_0 = arith.constant 0 : i32
    %c0_i32_1 = arith.constant 0 : i32
    return %c0_i32, %c0_i32_0 : i32, i32
  }
  func.func @transform_27(%arg0: i32) -> (i32, i32) {
    %c0_i32 = arith.constant 0 : i32
    %c0_i32_0 = arith.constant 0 : i32
    %c0_i32_1 = arith.constant 0 : i32
    return %c0_i32, %c0_i32_0 : i32, i32
  }
  func.func @transform_28(%arg0: i32) -> (i32, i32) {
    %c0_i32 = arith.constant 0 : i32
    %c0_i32_0 = arith.constant 0 : i32
    %c0_i32_1 = arith.constant 0 : i32
    return %c0_i32, %c0_i32_0 : i32, i32
  }
  func.func @transform_29(%arg0: i32) -> (i32, i32) {
    %c0_i32 = arith.constant 0 : i32
    %c0_i32_0 = arith.constant 0 : i32
    %c0_i32_1 = arith.constant 0 : i32
    return %c0_i32, %c0_i32_0 : i32, i32
  }
  func.func @transform_30(%arg0: i32) -> (i32, i32) {
    %c0_i32 = arith.constant 0 : i32
    %c0_i32_0 = arith.constant 0 : i32
    %c0_i32_1 = arith.constant 0 : i32
    return %c0_i32, %c0_i32_0 : i32, i32
  }
  func.func @transform_31(%arg0: i32) -> (i32, i32, i32) {
    %c0_i32 = arith.constant 0 : i32
    %c0_i32_0 = arith.constant 0 : i32
    %c0_i32_1 = arith.constant 0 : i32
    %c0_i32_2 = arith.constant 0 : i32
    return %c0_i32, %c0_i32_0, %c0_i32_1 : i32, i32, i32
  }
  func.func @transform_32(%arg0: i32) -> (i32, i32) {
    %c0_i32 = arith.constant 0 : i32
    %c0_i32_0 = arith.constant 0 : i32
    %c0_i32_1 = arith.constant 0 : i32
    return %c0_i32, %c0_i32_0 : i32, i32
  }
  func.func @transform_33(%arg0: i32) -> (i32, i32) {
    %c0_i32 = arith.constant 0 : i32
    %c0_i32_0 = arith.constant 0 : i32
    %c0_i32_1 = arith.constant 0 : i32
    return %c0_i32, %c0_i32_0 : i32, i32
  }
  func.func @transform_34(%arg0: i32) -> (i32, i32) {
    %c0_i32 = arith.constant 0 : i32
    %c0_i32_0 = arith.constant 0 : i32
    %c0_i32_1 = arith.constant 0 : i32
    return %c0_i32, %c0_i32_0 : i32, i32
  }
  func.func @transform_35(%arg0: i32) -> (i32, i32) {
    %c0_i32 = arith.constant 0 : i32
    %c0_i32_0 = arith.constant 0 : i32
    %c0_i32_1 = arith.constant 0 : i32
    return %c0_i32, %c0_i32_0 : i32, i32
  }
  func.func @transform_36(%arg0: i32) -> (i32, i32) {
    %c0_i32 = arith.constant 0 : i32
    %c0_i32_0 = arith.constant 0 : i32
    %c0_i32_1 = arith.constant 0 : i32
    return %c0_i32, %c0_i32_0 : i32, i32
  }
  func.func @transform_37(%arg0: i32) -> (i32, i32) {
    %c0_i32 = arith.constant 0 : i32
    %c0_i32_0 = arith.constant 0 : i32
    %c0_i32_1 = arith.constant 0 : i32
    return %c0_i32, %c0_i32_0 : i32, i32
  }
  func.func @transform_38(%arg0: i32) -> (i32, i32) {
    %c0_i32 = arith.constant 0 : i32
    %c0_i32_0 = arith.constant 0 : i32
    %c0_i32_1 = arith.constant 0 : i32
    return %c0_i32, %c0_i32_0 : i32, i32
  }
  func.func @transform_39(%arg0: i32) -> (i32, i32) {
    %c0_i32 = arith.constant 0 : i32
    %c0_i32_0 = arith.constant 0 : i32
    %c0_i32_1 = arith.constant 0 : i32
    return %c0_i32, %c0_i32_0 : i32, i32
  }
  func.func @transform_40(%arg0: i32) -> (i32, i32, i32) {
    %c0_i32 = arith.constant 0 : i32
    %c0_i32_0 = arith.constant 0 : i32
    %c0_i32_1 = arith.constant 0 : i32
    %c0_i32_2 = arith.constant 0 : i32
    return %c0_i32, %c0_i32_0, %c0_i32_1 : i32, i32, i32
  }
  func.func @transform_41(%arg0: i32) -> (i32, i32) {
    %c0_i32 = arith.constant 0 : i32
    %c0_i32_0 = arith.constant 0 : i32
    %c0_i32_1 = arith.constant 0 : i32
    return %c0_i32, %c0_i32_0 : i32, i32
  }
  func.func @transform_42(%arg0: i32) -> (i32, i32) {
    %c0_i32 = arith.constant 0 : i32
    %c0_i32_0 = arith.constant 0 : i32
    %c0_i32_1 = arith.constant 0 : i32
    return %c0_i32, %c0_i32_0 : i32, i32
  }
  func.func @transform_43(%arg0: i32) -> (i32, i32) {
    %c0_i32 = arith.constant 0 : i32
    %c0_i32_0 = arith.constant 0 : i32
    %c0_i32_1 = arith.constant 0 : i32
    return %c0_i32, %c0_i32_0 : i32, i32
  }
  func.func @transform_44(%arg0: i32) -> (i32, i32) {
    %c0_i32 = arith.constant 0 : i32
    %c0_i32_0 = arith.constant 0 : i32
    %c0_i32_1 = arith.constant 0 : i32
    return %c0_i32, %c0_i32_0 : i32, i32
  }
  func.func @transform_45(%arg0: i32) -> (i32, i32) {
    %c0_i32 = arith.constant 0 : i32
    %c0_i32_0 = arith.constant 0 : i32
    %c0_i32_1 = arith.constant 0 : i32
    return %c0_i32, %c0_i32_0 : i32, i32
  }
  func.func @transform_46(%arg0: i32) -> (i32, i32) {
    %c0_i32 = arith.constant 0 : i32
    %c0_i32_0 = arith.constant 0 : i32
    %c0_i32_1 = arith.constant 0 : i32
    return %c0_i32, %c0_i32_0 : i32, i32
  }
  func.func @transform_47(%arg0: i32) -> (i32, i32) {
    %c0_i32 = arith.constant 0 : i32
    %c0_i32_0 = arith.constant 0 : i32
    %c0_i32_1 = arith.constant 0 : i32
    return %c0_i32, %c0_i32_0 : i32, i32
  }
  func.func @transform_48(%arg0: i32) -> (i32, i32) {
    %c0_i32 = arith.constant 0 : i32
    %c0_i32_0 = arith.constant 0 : i32
    %c0_i32_1 = arith.constant 0 : i32
    return %c0_i32, %c0_i32_0 : i32, i32
  }
  func.func @transform_49(%arg0: i32) -> (i32, i32) {
    %c0_i32 = arith.constant 0 : i32
    %c0_i32_0 = arith.constant 0 : i32
    %c0_i32_1 = arith.constant 0 : i32
    return %c0_i32, %c0_i32_0 : i32, i32
  }
  func.func @transform_50(%arg0: i32) -> (i32, i32) {
    %c0_i32 = arith.constant 0 : i32
    %c0_i32_0 = arith.constant 0 : i32
    %c0_i32_1 = arith.constant 0 : i32
    return %c0_i32, %c0_i32_0 : i32, i32
  }
  func.func @transform_51(%arg0: i32) -> (i32, i32, i32) {
    %c0_i32 = arith.constant 0 : i32
    %c0_i32_0 = arith.constant 0 : i32
    %c0_i32_1 = arith.constant 0 : i32
    return %arg0, %c0_i32, %c0_i32_0 : i32, i32, i32
  }
}

</mosaic_0001>

<llo_original>
// kernel: _lambda_.1
$region0: #{_lambda_.1}
  #allocation0 [shape = 'u32[]', space=smem, size = 0x4, offset = 0x4, fixed_abs, tag = 'smem constant byte address 0x4 - core index']
  #allocation1 [shape = 'u32[144,128]{1,0:T(1,128)}', space=vmem, size = 0x12000, scoped, tag = 'internal scratch']
  #allocation2 [shape = 'bf16[100,128]{1,0:T(8,128)(2,1)}', space=vmem, size = 0x6800, scoped, tag = 'scratch operand']
  #allocation3 [shape = 'bf16[100,128]{1,0:T(8,128)(2,1)}', space=vmem, size = 0x6800, scoped, tag = 'scratch operand']
  #allocation4 [shape = 'bf16[36,128]{1,0:T(8,128)(2,1)}', space=vmem, size = 0x2800, scoped, tag = 'scratch operand']
  #allocation5 [shape = 'bf16[36,128]{1,0:T(8,128)(2,1)}', space=vmem, size = 0x2800, scoped, tag = 'scratch operand']
  #allocation6 [shape = 'bf16[16,256]{1,0:T(8,128)(2,1)}', space=vmem, size = 0x2000, scoped, tag = 'scratch operand']
  %s0 = inlined_call_operand.smem [shape: u32[52], index: -1, kind: input, shape index: {}]
  %s1 = sld [smem:[%s0]]
  %s2 = scalar_lea.smem %s0, 1
  %s3 = sld [smem:[%s2]]
  %s4 = scalar_lea.smem %s0, 2
  %s5 = sld [smem:[%s4]]
  %s6 = scalar_lea.smem %s0, 3
  %s7 = sld [smem:[%s6]]
  %s8 = scalar_lea.smem %s0, 4
  %s9 = sld [smem:[%s8]]
  %s10 = scalar_lea.smem %s0, 5
  %s11 = sld [smem:[%s10]]
  %s12 = scalar_lea.smem %s0, 6
  %s13 = sld [smem:[%s12]]
  %s14 = scalar_lea.smem %s0, 7
  %s15 = sld [smem:[%s14]]
  %s16 = scalar_lea.smem %s0, 8
  %s17 = sld [smem:[%s16]]
  %s18 = scalar_lea.smem %s0, 9
  %s19 = sld [smem:[%s18]]
  %s20 = scalar_lea.smem %s0, 10
  %s21 = sld [smem:[%s20]]
  %s22 = scalar_lea.smem %s0, 11
  %s23 = sld [smem:[%s22]]
  %s24 = scalar_lea.smem %s0, 12
  %s25 = sld [smem:[%s24]]
  %s26 = scalar_lea.smem %s0, 13
  %s27 = sld [smem:[%s26]]
  %s28 = scalar_lea.smem %s0, 14
  %s29 = sld [smem:[%s28]]
  %s30 = scalar_lea.smem %s0, 15
  %s31 = sld [smem:[%s30]]
  %s32 = scalar_lea.smem %s0, 16
  %s33 = sld [smem:[%s32]]
  %s34 = scalar_lea.smem %s0, 17
  %s35 = sld [smem:[%s34]]
  %s36 = scalar_lea.smem %s0, 18
  %s37 = sld [smem:[%s36]]
  %s38 = scalar_lea.smem %s0, 19
  %s39 = sld [smem:[%s38]]
  %s40 = scalar_lea.smem %s0, 20
  %s41 = sld [smem:[%s40]]
  %s42 = scalar_lea.smem %s0, 21
  %s43 = sld [smem:[%s42]]
  %s44 = scalar_lea.smem %s0, 22
  %s45 = sld [smem:[%s44]]
  %s46 = scalar_lea.smem %s0, 23
  %s47 = sld [smem:[%s46]]
  %s48 = scalar_lea.smem %s0, 24
  %s49 = sld [smem:[%s48]]
  %s50 = scalar_lea.smem %s0, 25
  %s51 = sld [smem:[%s50]]
  %s52 = scalar_lea.smem %s0, 26
  %s53 = sld [smem:[%s52]]
  %s54 = scalar_lea.smem %s0, 27
  %s55 = sld [smem:[%s54]]
  %s56 = scalar_lea.smem %s0, 28
  %s57 = sld [smem:[%s56]]
  %s58 = scalar_lea.smem %s0, 29
  %s59 = sld [smem:[%s58]]
  %s60 = scalar_lea.smem %s0, 30
  %s61 = sld [smem:[%s60]]
  %s62 = scalar_lea.smem %s0, 31
  %s63 = sld [smem:[%s62]]
  %s64 = scalar_lea.smem %s0, 32
  %s65 = sld [smem:[%s64]]
  %s66 = scalar_lea.smem %s0, 33
  %s67 = sld [smem:[%s66]]
  %s68 = scalar_lea.smem %s0, 34
  %s69 = sld [smem:[%s68]]
  %s70 = scalar_lea.smem %s0, 35
  %s71 = sld [smem:[%s70]]
  %s72 = scalar_lea.smem %s0, 36
  %s73 = sld [smem:[%s72]]
  %s74 = scalar_lea.smem %s0, 37
  %s75 = sld [smem:[%s74]]
  %s76 = scalar_lea.smem %s0, 38
  %s77 = sld [smem:[%s76]]
  %s78 = scalar_lea.smem %s0, 39
  %s79 = sld [smem:[%s78]]
  %s80 = scalar_lea.smem %s0, 40
  %s81 = sld [smem:[%s80]]
  %s82 = scalar_lea.smem %s0, 41
  %s83 = sld [smem:[%s82]]
  %s84 = scalar_lea.smem %s0, 42
  %s85 = sld [smem:[%s84]]
  %s86 = scalar_lea.smem %s0, 43
  %s87 = sld [smem:[%s86]]
  %s88 = scalar_lea.smem %s0, 44
  %s89 = sld [smem:[%s88]]
  %s90 = scalar_lea.smem %s0, 45
  %s91 = sld [smem:[%s90]]
  %s92 = scalar_lea.smem %s0, 46
  %s93 = sld [smem:[%s92]]
  %s94 = scalar_lea.smem %s0, 47
  %s95 = sld [smem:[%s94]]
  %s96 = scalar_lea.smem %s0, 48
  %s97 = sld [smem:[%s96]]
  %s98 = scalar_lea.smem %s0, 49
  %s99 = sld [smem:[%s98]]
  %s100 = scalar_lea.smem %s0, 50
  %s101 = sld [smem:[%s100]]
  %s102 = scalar_lea.smem %s0, 51
  %s103 = sld [smem:[%s102]]
  %s104 = sld [smem:[#allocation0]]
  $region249: #{_lambda_.1} parent=0
    _
  %s106 = ssub.s32 1, %s104
  %s107 = scalar_select 0, %s106, %s104
  $region1: #{_lambda_.1} parent=0
    #allocation7 [shape = 'u8[512]{0}', space=vmem, size = 0x400, scoped, tag = 'input window, operand 2, single buffered']
    #allocation8 [shape = 's32[2]{0}', space=sflag, size = 0x8, scoped, tag = 'scoped memory for _lambda_.1']
    #allocation9 [shape = 'u8[512]{0}', space=vmem, size = 0x400, scoped, tag = 'input window, operand 5, single buffered']
    #allocation10 [shape = 's32[1]{0}', space=sflag, size = 0x4, scoped, tag = 'scoped memory for _lambda_.1']
    #allocation11 [shape = 'u8[512]{0}', space=vmem, size = 0x400, scoped, tag = 'input window, operand 8, single buffered']
    %108 = vsyncpa [#allocation8], 0
    %109 = vsyncpa [#allocation10], 0
    loop: start=0, step=1, limit=4
    $region2: #{_lambda_.1} parent=1 // loop_pre_header
      _
    $region3: #{_lambda_.1} parent=1 // loop_header
      %s111 = sphi 0, %s115
      %p112 = scmp.ge.s32.totalorder %s111, 4
      %s121 = sphi 0, %s123
      %s124 = sphi 0, %s121
      %s125 = sphi 0, %s124
      %s141 = sphi 0, %s125
      %s145 = sphi 0, %s145
      %s147 = sphi 0, %s145
      %s148 = sphi 0, %s147
      %s162 = sphi 0, %s148
      %s166 = sphi 0, %s166
      %s168 = sphi 0, %s166
      %s169 = sphi 0, %s168
      %s183 = sphi 0, %s169
      %s187 = sphi 0, %s187
      %s189 = sphi 0, %s187
      %s190 = sphi 0, %s189
      %s204 = sphi 0, %s190
      %s208 = sphi 0, %s208
      %s210 = sphi 0, %s208
      %s211 = sphi 0, %s210
      %s225 = sphi 0, %s211
      %s229 = sphi 0, %s229
      %s231 = sphi 0, %s229
      %s232 = sphi 0, %s231
      %s246 = sphi 0, %s232
      %s250 = sphi 0, %s250
      %s252 = sphi 0, %s250
      %s253 = sphi 0, %s252
      %s267 = sphi 0, %s253
      %s271 = sphi 0, %s271
      %s273 = sphi 0, %s271
      %s274 = sphi 0, %s273
      %s288 = sphi 0, %s274
      %s292 = sphi 0, %s292
      %s294 = sphi 0, %s292
      %s295 = sphi 0, %s294
      %s309 = sphi 0, %s295
      %s313 = sphi 0, %s313
      %s315 = sphi 0, %s313
      %s316 = sphi 0, %s315
      %s330 = sphi 0, %s316
      %s334 = sphi 0, %s334
      %s336 = sphi 0, %s334
      %s337 = sphi 0, %s336
      %s351 = sphi 0, %s337
      %s355 = sphi 0, %s355
      %s357 = sphi 0, %s355
      %s358 = sphi 0, %s357
      %s372 = sphi 0, %s358
      %s376 = sphi 0, %s376
      %s378 = sphi 0, %s376
      %s379 = sphi 0, %s378
      %s393 = sphi 0, %s379
      %s397 = sphi 0, %s397
      %s399 = sphi 0, %s397
      %s400 = sphi 0, %s399
      %s414 = sphi 0, %s400
      %s418 = sphi 0, %s418
      %s420 = sphi 0, %s418
      %s421 = sphi 0, %s420
      %s435 = sphi 0, %s421
      %s439 = sphi 0, %s439
      %s441 = sphi 0, %s439
      %s442 = sphi 0, %s441
      %s456 = sphi 0, %s442
      %s460 = sphi 0, %s460
      %s462 = sphi 0, %s460
      %s463 = sphi 0, %s462
      %s477 = sphi 0, %s463
      %s481 = sphi 0, %s481
      %s483 = sphi 0, %s481
      %s484 = sphi 0, %s483
      %s498 = sphi 0, %s484
      %s502 = sphi 0, %s502
      %s504 = sphi 0, %s502
      %s505 = sphi 0, %s504
      %s519 = sphi 0, %s505
      %s523 = sphi 0, %s523
      %s525 = sphi 0, %s523
      %s526 = sphi 0, %s525
      %s540 = sphi 0, %s526
      %s544 = sphi 0, %s544
      %s546 = sphi 0, %s544
      %s547 = sphi 0, %s546
      %s561 = sphi 0, %s547
      %s565 = sphi 0, %s565
      %s567 = sphi 0, %s565
      %s568 = sphi 0, %s567
      %s582 = sphi 0, %s568
      %s586 = sphi 0, %s586
      %s588 = sphi 0, %s586
      %s589 = sphi 0, %s588
      %s603 = sphi 0, %s589
      %s607 = sphi 0, %s607
      %s609 = sphi 0, %s607
      %s610 = sphi 0, %s609
      %s624 = sphi 0, %s610
      %s628 = sphi 0, %s628
      %s630 = sphi 0, %s628
      %s631 = sphi 0, %s630
      %s645 = sphi 0, %s631
      %s649 = sphi 0, %s649
      %s651 = sphi 0, %s649
      %s652 = sphi 0, %s651
      %s666 = sphi 0, %s652
      %s670 = sphi 0, %s670
      %s672 = sphi 0, %s670
      %s673 = sphi 0, %s672
      %s687 = sphi 0, %s673
      %s691 = sphi 0, %s691
      %s693 = sphi 0, %s691
      %s694 = sphi 0, %s693
      %s708 = sphi 0, %s694
      %s712 = sphi 0, %s712
      %s714 = sphi 0, %s712
      %s715 = sphi 0, %s714
      %s729 = sphi 0, %s715
      %s733 = sphi 0, %s733
      %s735 = sphi 0, %s733
      %s736 = sphi 0, %s735
      %s750 = sphi 0, %s736
      %s754 = sphi 0, %s754
      %s756 = sphi 0, %s754
      %s757 = sphi 0, %s756
      %s771 = sphi 0, %s757
      %s775 = sphi 0, %s775
      %s777 = sphi 0, %s775
      %s778 = sphi 0, %s777
      %s792 = sphi 0, %s778
      %s796 = sphi 0, %s796
      %s798 = sphi 0, %s796
      %s799 = sphi 0, %s798
      %s813 = sphi 0, %s799
      %s817 = sphi 0, %s817
      %s819 = sphi 0, %s817
      %s820 = sphi 0, %s819
      %s834 = sphi 0, %s820
      %s838 = sphi 0, %s838
      %s840 = sphi 0, %s838
      %s841 = sphi 0, %s840
      %s855 = sphi 0, %s841
      %s859 = sphi 0, %s859
      %s861 = sphi 0, %s859
      %s862 = sphi 0, %s861
      %s876 = sphi 0, %s862
      %s880 = sphi 0, %s880
      %s882 = sphi 0, %s880
      %s883 = sphi 0, %s882
      %s897 = sphi 0, %s883
      %s901 = sphi 0, %s901
      %s903 = sphi 0, %s901
      %s904 = sphi 0, %s903
      %s918 = sphi 0, %s904
      %s922 = sphi 0, %s922
      %s924 = sphi 0, %s922
      %s925 = sphi 0, %s924
      %s939 = sphi 0, %s925
      %s943 = sphi 0, %s943
      %s945 = sphi 0, %s943
      %s946 = sphi 0, %s945
      %s960 = sphi 0, %s946
      %s964 = sphi 0, %s964
      %s966 = sphi 0, %s964
      %s967 = sphi 0, %s966
      %s981 = sphi 0, %s967
      %s985 = sphi 0, %s985
      %s987 = sphi 0, %s985
      %s988 = sphi 0, %s987
      %s1002 = sphi 0, %s988
      %s1006 = sphi 0, %s1006
      %s1008 = sphi 0, %s1006
      %s1009 = sphi 0, %s1008
      %s1023 = sphi 0, %s1009
      %s1027 = sphi 0, %s1027
      %s1029 = sphi 0, %s1027
      %s1030 = sphi 0, %s1029
      %s1044 = sphi 0, %s1030
      %s1048 = sphi 0, %s1048
      %s1050 = sphi 0, %s1048
      %s1051 = sphi 0, %s1050
      %s1065 = sphi 0, %s1051
      %s1069 = sphi 0, %s1069
      %s1071 = sphi 0, %s1069
      %s1072 = sphi 0, %s1071
      %s1086 = sphi 0, %s1072
      %s1090 = sphi 0, %s1090
      %s1092 = sphi 0, %s1090
      %s1093 = sphi 0, %s1092
      %s1107 = sphi 0, %s1093
      %s1111 = sphi 0, %s1111
      %s1113 = sphi 0, %s1111
      %s1114 = sphi 0, %s1113
      %s1128 = sphi 0, %s1114
      %s1132 = sphi 0, %s1132
      %s1134 = sphi 0, %s1132
      %s1135 = sphi 0, %s1134
      %s1149 = sphi 0, %s1135
      %s1153 = sphi 0, %s1153
      %s1155 = sphi 0, %s1153
      %s1156 = sphi 0, %s1155
      %s1170 = sphi 0, %s1156
      %s1174 = sphi 0, %s1174
      %s1176 = sphi 0, %s1174
      %s1177 = sphi 0, %s1176
      %s1191 = sphi 0, %s1177
      %s1197 = sphi 0, %s1199
      %s1200 = sphi 0, %s1197
      %s1201 = sphi 0, %s1200
      %s1217 = sphi 0, %s1201
    $region4: #{_lambda_.1} parent=1 // loop_header_branch
      %114 = sbr.rel (%p112) target = $region8
    $region5: #{_lambda_.1} parent=1 // loop_body
      %s116 = ssub.s32 %s111, 1
      %s117 = ssub.s32 %s111, 2
      %s118 = sadd.s32 %s111, 1
      %s119 = ssub.s32 %s111, %s118
      %p120 = scmp.eq.s32.totalorder %s119, 0
      %s122 = sadd.s32 %s121, 1
      %s123 = scalar_select %p120, %s121, %s122
      %p126 = pneg %p120
      %p127 = scmp.eq.s32.totalorder %s111, 1
      %p128 = por %p126, %p127
      %p129 = scmp.ne.s32.totalorder %s121, %s124
      %p130 = scmp.eq.s32.totalorder %s111, 0
      %p131 = por %p129, %p130
      %p132 = scmp.ne.s32.totalorder %s121, %s124
      %p133 = scmp.eq.s32.totalorder %s116, 1
      %p134 = por %p132, %p133
      %p135 = scmp.ne.s32.totalorder %s124, %s125
      %p136 = scmp.eq.s32.totalorder %s116, 0
      %p137 = por %p135, %p136
      %p138 = scmp.ne.s32.totalorder %s124, %s125
      %p139 = scmp.eq.s32.totalorder %s117, 1
      %p140 = por %p138, %p139
      %p142 = scmp.ne.s32.totalorder %s125, %s141
      %p143 = scmp.eq.s32.totalorder %s117, 0
      %p144 = por %p142, %p143
      %s146 = sadd.s32 %s145, 1
      %p149 = scmp.eq.s32.totalorder %s111, 1
      %p150 = scmp.ne.s32.totalorder %s145, %s147
      %p151 = scmp.eq.s32.totalorder %s111, 0
      %p152 = por %p150, %p151
      %p153 = scmp.ne.s32.totalorder %s145, %s147
      %p154 = scmp.eq.s32.totalorder %s116, 1
      %p155 = por %p153, %p154
      %p156 = scmp.ne.s32.totalorder %s147, %s148
      %p157 = scmp.eq.s32.totalorder %s116, 0
      %p158 = por %p156, %p157
      %p159 = scmp.ne.s32.totalorder %s147, %s148
      %p160 = scmp.eq.s32.totalorder %s117, 1
      %p161 = por %p159, %p160
      %p163 = scmp.ne.s32.totalorder %s148, %s162
      %p164 = scmp.eq.s32.totalorder %s117, 0
      %p165 = por %p163, %p164
      %s167 = sadd.s32 %s166, 1
      %p170 = scmp.eq.s32.totalorder %s111, 1
      %p171 = scmp.ne.s32.totalorder %s166, %s168
      %p172 = scmp.eq.s32.totalorder %s111, 0
      %p173 = por %p171, %p172
      %p174 = scmp.ne.s32.totalorder %s166, %s168
      %p175 = scmp.eq.s32.totalorder %s116, 1
      %p176 = por %p174, %p175
      %p177 = scmp.ne.s32.totalorder %s168, %s169
      %p178 = scmp.eq.s32.totalorder %s116, 0
      %p179 = por %p177, %p178
      %p180 = scmp.ne.s32.totalorder %s168, %s169
      %p181 = scmp.eq.s32.totalorder %s117, 1
      %p182 = por %p180, %p181
      %p184 = scmp.ne.s32.totalorder %s169, %s183
      %p185 = scmp.eq.s32.totalorder %s117, 0
      %p186 = por %p184, %p185
      %s188 = sadd.s32 %s187, 1
      %p191 = scmp.eq.s32.totalorder %s111, 1
      %p192 = scmp.ne.s32.totalorder %s187, %s189
      %p193 = scmp.eq.s32.totalorder %s111, 0
      %p194 = por %p192, %p193
      %p195 = scmp.ne.s32.totalorder %s187, %s189
      %p196 = scmp.eq.s32.totalorder %s116, 1
      %p197 = por %p195, %p196
      %p198 = scmp.ne.s32.totalorder %s189, %s190
      %p199 = scmp.eq.s32.totalorder %s116, 0
      %p200 = por %p198, %p199
      %p201 = scmp.ne.s32.totalorder %s189, %s190
      %p202 = scmp.eq.s32.totalorder %s117, 1
      %p203 = por %p201, %p202
      %p205 = scmp.ne.s32.totalorder %s190, %s204
      %p206 = scmp.eq.s32.totalorder %s117, 0
      %p207 = por %p205, %p206
      %s209 = sadd.s32 %s208, 1
      %p212 = scmp.eq.s32.totalorder %s111, 1
      %p213 = scmp.ne.s32.totalorder %s208, %s210
      %p214 = scmp.eq.s32.totalorder %s111, 0
      %p215 = por %p213, %p214
      %p216 = scmp.ne.s32.totalorder %s208, %s210
      %p217 = scmp.eq.s32.totalorder %s116, 1
      %p218 = por %p216, %p217
      %p219 = scmp.ne.s32.totalorder %s210, %s211
      %p220 = scmp.eq.s32.totalorder %s116, 0
      %p221 = por %p219, %p220
      %p222 = scmp.ne.s32.totalorder %s210, %s211
      %p223 = scmp.eq.s32.totalorder %s117, 1
      %p224 = por %p222, %p223
      %p226 = scmp.ne.s32.totalorder %s211, %s225
      %p227 = scmp.eq.s32.totalorder %s117, 0
      %p228 = por %p226, %p227
      %s230 = sadd.s32 %s229, 1
      %p233 = scmp.eq.s32.totalorder %s111, 1
      %p234 = scmp.ne.s32.totalorder %s229, %s231
      %p235 = scmp.eq.s32.totalorder %s111, 0
      %p236 = por %p234, %p235
      %p237 = scmp.ne.s32.totalorder %s229, %s231
      %p238 = scmp.eq.s32.totalorder %s116, 1
      %p239 = por %p237, %p238
      %p240 = scmp.ne.s32.totalorder %s231, %s232
      %p241 = scmp.eq.s32.totalorder %s116, 0
      %p242 = por %p240, %p241
      %p243 = scmp.ne.s32.totalorder %s231, %s232
      %p244 = scmp.eq.s32.totalorder %s117, 1
      %p245 = por %p243, %p244
      %p247 = scmp.ne.s32.totalorder %s232, %s246
      %p248 = scmp.eq.s32.totalorder %s117, 0
      %p249 = por %p247, %p248
      %s251 = sadd.s32 %s250, 1
      %p254 = scmp.eq.s32.totalorder %s111, 1
      %p255 = scmp.ne.s32.totalorder %s250, %s252
      %p256 = scmp.eq.s32.totalorder %s111, 0
      %p257 = por %p255, %p256
      %p258 = scmp.ne.s32.totalorder %s250, %s252
      %p259 = scmp.eq.s32.totalorder %s116, 1
      %p260 = por %p258, %p259
      %p261 = scmp.ne.s32.totalorder %s252, %s253
      %p262 = scmp.eq.s32.totalorder %s116, 0
      %p263 = por %p261, %p262
      %p264 = scmp.ne.s32.totalorder %s252, %s253
      %p265 = scmp.eq.s32.totalorder %s117, 1
      %p266 = por %p264, %p265
      %p268 = scmp.ne.s32.totalorder %s253, %s267
      %p269 = scmp.eq.s32.totalorder %s117, 0
      %p270 = por %p268, %p269
      %s272 = sadd.s32 %s271, 1
      %p275 = scmp.eq.s32.totalorder %s111, 1
      %p276 = scmp.ne.s32.totalorder %s271, %s273
      %p277 = scmp.eq.s32.totalorder %s111, 0
      %p278 = por %p276, %p277
      %p279 = scmp.ne.s32.totalorder %s271, %s273
      %p280 = scmp.eq.s32.totalorder %s116, 1
      %p281 = por %p279, %p280
      %p282 = scmp.ne.s32.totalorder %s273, %s274
      %p283 = scmp.eq.s32.totalorder %s116, 0
      %p284 = por %p282, %p283
      %p285 = scmp.ne.s32.totalorder %s273, %s274
      %p286 = scmp.eq.s32.totalorder %s117, 1
      %p287 = por %p285, %p286
      %p289 = scmp.ne.s32.totalorder %s274, %s288
      %p290 = scmp.eq.s32.totalorder %s117, 0
      %p291 = por %p289, %p290
      %s293 = sadd.s32 %s292, 1
      %p296 = scmp.eq.s32.totalorder %s111, 1
      %p297 = scmp.ne.s32.totalorder %s292, %s294
      %p298 = scmp.eq.s32.totalorder %s111, 0
      %p299 = por %p297, %p298
      %p300 = scmp.ne.s32.totalorder %s292, %s294
      %p301 = scmp.eq.s32.totalorder %s116, 1
      %p302 = por %p300, %p301
      %p303 = scmp.ne.s32.totalorder %s294, %s295
      %p304 = scmp.eq.s32.totalorder %s116, 0
      %p305 = por %p303, %p304
      %p306 = scmp.ne.s32.totalorder %s294, %s295
      %p307 = scmp.eq.s32.totalorder %s117, 1
      %p308 = por %p306, %p307
      %p310 = scmp.ne.s32.totalorder %s295, %s309
      %p311 = scmp.eq.s32.totalorder %s117, 0
      %p312 = por %p310, %p311
      %s314 = sadd.s32 %s313, 1
      %p317 = scmp.eq.s32.totalorder %s111, 1
      %p318 = scmp.ne.s32.totalorder %s313, %s315
      %p319 = scmp.eq.s32.totalorder %s111, 0
      %p320 = por %p318, %p319
      %p321 = scmp.ne.s32.totalorder %s313, %s315
      %p322 = scmp.eq.s32.totalorder %s116, 1
      %p323 = por %p321, %p322
      %p324 = scmp.ne.s32.totalorder %s315, %s316
      %p325 = scmp.eq.s32.totalorder %s116, 0
      %p326 = por %p324, %p325
      %p327 = scmp.ne.s32.totalorder %s315, %s316
      %p328 = scmp.eq.s32.totalorder %s117, 1
      %p329 = por %p327, %p328
      %p331 = scmp.ne.s32.totalorder %s316, %s330
      %p332 = scmp.eq.s32.totalorder %s117, 0
      %p333 = por %p331, %p332
      %s335 = sadd.s32 %s334, 1
      %p338 = scmp.eq.s32.totalorder %s111, 1
      %p339 = scmp.ne.s32.totalorder %s334, %s336
      %p340 = scmp.eq.s32.totalorder %s111, 0
      %p341 = por %p339, %p340
      %p342 = scmp.ne.s32.totalorder %s334, %s336
      %p343 = scmp.eq.s32.totalorder %s116, 1
      %p344 = por %p342, %p343
      %p345 = scmp.ne.s32.totalorder %s336, %s337
      %p346 = scmp.eq.s32.totalorder %s116, 0
      %p347 = por %p345, %p346
      %p348 = scmp.ne.s32.totalorder %s336, %s337
      %p349 = scmp.eq.s32.totalorder %s117, 1
      %p350 = por %p348, %p349
      %p352 = scmp.ne.s32.totalorder %s337, %s351
      %p353 = scmp.eq.s32.totalorder %s117, 0
      %p354 = por %p352, %p353
      %s356 = sadd.s32 %s355, 1
      %p359 = scmp.eq.s32.totalorder %s111, 1
      %p360 = scmp.ne.s32.totalorder %s355, %s357
      %p361 = scmp.eq.s32.totalorder %s111, 0
      %p362 = por %p360, %p361
      %p363 = scmp.ne.s32.totalorder %s355, %s357
      %p364 = scmp.eq.s32.totalorder %s116, 1
      %p365 = por %p363, %p364
      %p366 = scmp.ne.s32.totalorder %s357, %s358
      %p367 = scmp.eq.s32.totalorder %s116, 0
      %p368 = por %p366, %p367
      %p369 = scmp.ne.s32.totalorder %s357, %s358
      %p370 = scmp.eq.s32.totalorder %s117, 1
      %p371 = por %p369, %p370
      %p373 = scmp.ne.s32.totalorder %s358, %s372
      %p374 = scmp.eq.s32.totalorder %s117, 0
      %p375 = por %p373, %p374
      %s377 = sadd.s32 %s376, 1
      %p380 = scmp.eq.s32.totalorder %s111, 1
      %p381 = scmp.ne.s32.totalorder %s376, %s378
      %p382 = scmp.eq.s32.totalorder %s111, 0
      %p383 = por %p381, %p382
      %p384 = scmp.ne.s32.totalorder %s376, %s378
      %p385 = scmp.eq.s32.totalorder %s116, 1
      %p386 = por %p384, %p385
      %p387 = scmp.ne.s32.totalorder %s378, %s379
      %p388 = scmp.eq.s32.totalorder %s116, 0
      %p389 = por %p387, %p388
      %p390 = scmp.ne.s32.totalorder %s378, %s379
      %p391 = scmp.eq.s32.totalorder %s117, 1
      %p392 = por %p390, %p391
      %p394 = scmp.ne.s32.totalorder %s379, %s393
      %p395 = scmp.eq.s32.totalorder %s117, 0
      %p396 = por %p394, %p395
      %s398 = sadd.s32 %s397, 1
      %p401 = scmp.eq.s32.totalorder %s111, 1
      %p402 = scmp.ne.s32.totalorder %s397, %s399
      %p403 = scmp.eq.s32.totalorder %s111, 0
      %p404 = por %p402, %p403
      %p405 = scmp.ne.s32.totalorder %s397, %s399
      %p406 = scmp.eq.s32.totalorder %s116, 1
      %p407 = por %p405, %p406
      %p408 = scmp.ne.s32.totalorder %s399, %s400
      %p409 = scmp.eq.s32.totalorder %s116, 0
      %p410 = por %p408, %p409
      %p411 = scmp.ne.s32.totalorder %s399, %s400
      %p412 = scmp.eq.s32.totalorder %s117, 1
      %p413 = por %p411, %p412
      %p415 = scmp.ne.s32.totalorder %s400, %s414
      %p416 = scmp.eq.s32.totalorder %s117, 0
      %p417 = por %p415, %p416
      %s419 = sadd.s32 %s418, 1
      %p422 = scmp.eq.s32.totalorder %s111, 1
      %p423 = scmp.ne.s32.totalorder %s418, %s420
      %p424 = scmp.eq.s32.totalorder %s111, 0
      %p425 = por %p423, %p424
      %p426 = scmp.ne.s32.totalorder %s418, %s420
      %p427 = scmp.eq.s32.totalorder %s116, 1
      %p428 = por %p426, %p427
      %p429 = scmp.ne.s32.totalorder %s420, %s421
      %p430 = scmp.eq.s32.totalorder %s116, 0
      %p431 = por %p429, %p430
      %p432 = scmp.ne.s32.totalorder %s420, %s421
      %p433 = scmp.eq.s32.totalorder %s117, 1
      %p434 = por %p432, %p433
      %p436 = scmp.ne.s32.totalorder %s421, %s435
      %p437 = scmp.eq.s32.totalorder %s117, 0
      %p438 = por %p436, %p437
      %s440 = sadd.s32 %s439, 1
      %p443 = scmp.eq.s32.totalorder %s111, 1
      %p444 = scmp.ne.s32.totalorder %s439, %s441
      %p445 = scmp.eq.s32.totalorder %s111, 0
      %p446 = por %p444, %p445
      %p447 = scmp.ne.s32.totalorder %s439, %s441
      %p448 = scmp.eq.s32.totalorder %s116, 1
      %p449 = por %p447, %p448
      %p450 = scmp.ne.s32.totalorder %s441, %s442
      %p451 = scmp.eq.s32.totalorder %s116, 0
      %p452 = por %p450, %p451
      %p453 = scmp.ne.s32.totalorder %s441, %s442
      %p454 = scmp.eq.s32.totalorder %s117, 1
      %p455 = por %p453, %p454
      %p457 = scmp.ne.s32.totalorder %s442, %s456
      %p458 = scmp.eq.s32.totalorder %s117, 0
      %p459 = por %p457, %p458
      %s461 = sadd.s32 %s460, 1
      %p464 = scmp.eq.s32.totalorder %s111, 1
      %p465 = scmp.ne.s32.totalorder %s460, %s462
      %p466 = scmp.eq.s32.totalorder %s111, 0
      %p467 = por %p465, %p466
      %p468 = scmp.ne.s32.totalorder %s460, %s462
      %p469 = scmp.eq.s32.totalorder %s116, 1
      %p470 = por %p468, %p469
      %p471 = scmp.ne.s32.totalorder %s462, %s463
      %p472 = scmp.eq.s32.totalorder %s116, 0
      %p473 = por %p471, %p472
      %p474 = scmp.ne.s32.totalorder %s462, %s463
      %p475 = scmp.eq.s32.totalorder %s117, 1
      %p476 = por %p474, %p475
      %p478 = scmp.ne.s32.totalorder %s463, %s477
      %p479 = scmp.eq.s32.totalorder %s117, 0
      %p480 = por %p478, %p479
      %s482 = sadd.s32 %s481, 1
      %p485 = scmp.eq.s32.totalorder %s111, 1
      %p486 = scmp.ne.s32.totalorder %s481, %s483
      %p487 = scmp.eq.s32.totalorder %s111, 0
      %p488 = por %p486, %p487
      %p489 = scmp.ne.s32.totalorder %s481, %s483
      %p490 = scmp.eq.s32.totalorder %s116, 1
      %p491 = por %p489, %p490
      %p492 = scmp.ne.s32.totalorder %s483, %s484
      %p493 = scmp.eq.s32.totalorder %s116, 0
      %p494 = por %p492, %p493
      %p495 = scmp.ne.s32.totalorder %s483, %s484
      %p496 = scmp.eq.s32.totalorder %s117, 1
      %p497 = por %p495, %p496
      %p499 = scmp.ne.s32.totalorder %s484, %s498
      %p500 = scmp.eq.s32.totalorder %s117, 0
      %p501 = por %p499, %p500
      %s503 = sadd.s32 %s502, 1
      %p506 = scmp.eq.s32.totalorder %s111, 1
      %p507 = scmp.ne.s32.totalorder %s502, %s504
      %p508 = scmp.eq.s32.totalorder %s111, 0
      %p509 = por %p507, %p508
      %p510 = scmp.ne.s32.totalorder %s502, %s504
      %p511 = scmp.eq.s32.totalorder %s116, 1
      %p512 = por %p510, %p511
      %p513 = scmp.ne.s32.totalorder %s504, %s505
      %p514 = scmp.eq.s32.totalorder %s116, 0
      %p515 = por %p513, %p514
      %p516 = scmp.ne.s32.totalorder %s504, %s505
      %p517 = scmp.eq.s32.totalorder %s117, 1
      %p518 = por %p516, %p517
      %p520 = scmp.ne.s32.totalorder %s505, %s519
      %p521 = scmp.eq.s32.totalorder %s117, 0
      %p522 = por %p520, %p521
      %s524 = sadd.s32 %s523, 1
      %p527 = scmp.eq.s32.totalorder %s111, 1
      %p528 = scmp.ne.s32.totalorder %s523, %s525
      %p529 = scmp.eq.s32.totalorder %s111, 0
      %p530 = por %p528, %p529
      %p531 = scmp.ne.s32.totalorder %s523, %s525
      %p532 = scmp.eq.s32.totalorder %s116, 1
      %p533 = por %p531, %p532
      %p534 = scmp.ne.s32.totalorder %s525, %s526
      %p535 = scmp.eq.s32.totalorder %s116, 0
      %p536 = por %p534, %p535
      %p537 = scmp.ne.s32.totalorder %s525, %s526
      %p538 = scmp.eq.s32.totalorder %s117, 1
      %p539 = por %p537, %p538
      %p541 = scmp.ne.s32.totalorder %s526, %s540
      %p542 = scmp.eq.s32.totalorder %s117, 0
      %p543 = por %p541, %p542
      %s545 = sadd.s32 %s544, 1
      %p548 = scmp.eq.s32.totalorder %s111, 1
      %p549 = scmp.ne.s32.totalorder %s544, %s546
      %p550 = scmp.eq.s32.totalorder %s111, 0
      %p551 = por %p549, %p550
      %p552 = scmp.ne.s32.totalorder %s544, %s546
      %p553 = scmp.eq.s32.totalorder %s116, 1
      %p554 = por %p552, %p553
      %p555 = scmp.ne.s32.totalorder %s546, %s547
      %p556 = scmp.eq.s32.totalorder %s116, 0
      %p557 = por %p555, %p556
      %p558 = scmp.ne.s32.totalorder %s546, %s547
      %p559 = scmp.eq.s32.totalorder %s117, 1
      %p560 = por %p558, %p559
      %p562 = scmp.ne.s32.totalorder %s547, %s561
      %p563 = scmp.eq.s32.totalorder %s117, 0
      %p564 = por %p562, %p563
      %s566 = sadd.s32 %s565, 1
      %p569 = scmp.eq.s32.totalorder %s111, 1
      %p570 = scmp.ne.s32.totalorder %s565, %s567
      %p571 = scmp.eq.s32.totalorder %s111, 0
      %p572 = por %p570, %p571
      %p573 = scmp.ne.s32.totalorder %s565, %s567
      %p574 = scmp.eq.s32.totalorder %s116, 1
      %p575 = por %p573, %p574
      %p576 = scmp.ne.s32.totalorder %s567, %s568
      %p577 = scmp.eq.s32.totalorder %s116, 0
      %p578 = por %p576, %p577
      %p579 = scmp.ne.s32.totalorder %s567, %s568
      %p580 = scmp.eq.s32.totalorder %s117, 1
      %p581 = por %p579, %p580
      %p583 = scmp.ne.s32.totalorder %s568, %s582
      %p584 = scmp.eq.s32.totalorder %s117, 0
      %p585 = por %p583, %p584
      %s587 = sadd.s32 %s586, 1
      %p590 = scmp.eq.s32.totalorder %s111, 1
      %p591 = scmp.ne.s32.totalorder %s586, %s588
      %p592 = scmp.eq.s32.totalorder %s111, 0
      %p593 = por %p591, %p592
      %p594 = scmp.ne.s32.totalorder %s586, %s588
      %p595 = scmp.eq.s32.totalorder %s116, 1
      %p596 = por %p594, %p595
      %p597 = scmp.ne.s32.totalorder %s588, %s589
      %p598 = scmp.eq.s32.totalorder %s116, 0
      %p599 = por %p597, %p598
      %p600 = scmp.ne.s32.totalorder %s588, %s589
      %p601 = scmp.eq.s32.totalorder %s117, 1
      %p602 = por %p600, %p601
      %p604 = scmp.ne.s32.totalorder %s589, %s603
      %p605 = scmp.eq.s32.totalorder %s117, 0
      %p606 = por %p604, %p605
      %s608 = sadd.s32 %s607, 1
      %p611 = scmp.eq.s32.totalorder %s111, 1
      %p612 = scmp.ne.s32.totalorder %s607, %s609
      %p613 = scmp.eq.s32.totalorder %s111, 0
      %p614 = por %p612, %p613
      %p615 = scmp.ne.s32.totalorder %s607, %s609
      %p616 = scmp.eq.s32.totalorder %s116, 1
      %p617 = por %p615, %p616
      %p618 = scmp.ne.s32.totalorder %s609, %s610
      %p619 = scmp.eq.s32.totalorder %s116, 0
      %p620 = por %p618, %p619
      %p621 = scmp.ne.s32.totalorder %s609, %s610
      %p622 = scmp.eq.s32.totalorder %s117, 1
      %p623 = por %p621, %p622
      %p625 = scmp.ne.s32.totalorder %s610, %s624
      %p626 = scmp.eq.s32.totalorder %s117, 0
      %p627 = por %p625, %p626
      %s629 = sadd.s32 %s628, 1
      %p632 = scmp.eq.s32.totalorder %s111, 1
      %p633 = scmp.ne.s32.totalorder %s628, %s630
      %p634 = scmp.eq.s32.totalorder %s111, 0
      %p635 = por %p633, %p634
      %p636 = scmp.ne.s32.totalorder %s628, %s630
      %p637 = scmp.eq.s32.totalorder %s116, 1
      %p638 = por %p636, %p637
      %p639 = scmp.ne.s32.totalorder %s630, %s631
      %p640 = scmp.eq.s32.totalorder %s116, 0
      %p641 = por %p639, %p640
      %p642 = scmp.ne.s32.totalorder %s630, %s631
      %p643 = scmp.eq.s32.totalorder %s117, 1
      %p644 = por %p642, %p643
      %p646 = scmp.ne.s32.totalorder %s631, %s645
      %p647 = scmp.eq.s32.totalorder %s117, 0
      %p648 = por %p646, %p647
      %s650 = sadd.s32 %s649, 1
      %p653 = scmp.eq.s32.totalorder %s111, 1
      %p654 = scmp.ne.s32.totalorder %s649, %s651
      %p655 = scmp.eq.s32.totalorder %s111, 0
      %p656 = por %p654, %p655
      %p657 = scmp.ne.s32.totalorder %s649, %s651
      %p658 = scmp.eq.s32.totalorder %s116, 1
      %p659 = por %p657, %p658
      %p660 = scmp.ne.s32.totalorder %s651, %s652
      %p661 = scmp.eq.s32.totalorder %s116, 0
      %p662 = por %p660, %p661
      %p663 = scmp.ne.s32.totalorder %s651, %s652
      %p664 = scmp.eq.s32.totalorder %s117, 1
      %p665 = por %p663, %p664
      %p667 = scmp.ne.s32.totalorder %s652, %s666
      %p668 = scmp.eq.s32.totalorder %s117, 0
      %p669 = por %p667, %p668
      %s671 = sadd.s32 %s670, 1
      %p674 = scmp.eq.s32.totalorder %s111, 1
      %p675 = scmp.ne.s32.totalorder %s670, %s672
      %p676 = scmp.eq.s32.totalorder %s111, 0
      %p677 = por %p675, %p676
      %p678 = scmp.ne.s32.totalorder %s670, %s672
      %p679 = scmp.eq.s32.totalorder %s116, 1
      %p680 = por %p678, %p679
      %p681 = scmp.ne.s32.totalorder %s672, %s673
      %p682 = scmp.eq.s32.totalorder %s116, 0
      %p683 = por %p681, %p682
      %p684 = scmp.ne.s32.totalorder %s672, %s673
      %p685 = scmp.eq.s32.totalorder %s117, 1
      %p686 = por %p684, %p685
      %p688 = scmp.ne.s32.totalorder %s673, %s687
      %p689 = scmp.eq.s32.totalorder %s117, 0
      %p690 = por %p688, %p689
      %s692 = sadd.s32 %s691, 1
      %p695 = scmp.eq.s32.totalorder %s111, 1
      %p696 = scmp.ne.s32.totalorder %s691, %s693
      %p697 = scmp.eq.s32.totalorder %s111, 0
      %p698 = por %p696, %p697
      %p699 = scmp.ne.s32.totalorder %s691, %s693
      %p700 = scmp.eq.s32.totalorder %s116, 1
      %p701 = por %p699, %p700
      %p702 = scmp.ne.s32.totalorder %s693, %s694
      %p703 = scmp.eq.s32.totalorder %s116, 0
      %p704 = por %p702, %p703
      %p705 = scmp.ne.s32.totalorder %s693, %s694
      %p706 = scmp.eq.s32.totalorder %s117, 1
      %p707 = por %p705, %p706
      %p709 = scmp.ne.s32.totalorder %s694, %s708
      %p710 = scmp.eq.s32.totalorder %s117, 0
      %p711 = por %p709, %p710
      %s713 = sadd.s32 %s712, 1
      %p716 = scmp.eq.s32.totalorder %s111, 1
      %p717 = scmp.ne.s32.totalorder %s712, %s714
      %p718 = scmp.eq.s32.totalorder %s111, 0
      %p719 = por %p717, %p718
      %p720 = scmp.ne.s32.totalorder %s712, %s714
      %p721 = scmp.eq.s32.totalorder %s116, 1
      %p722 = por %p720, %p721
      %p723 = scmp.ne.s32.totalorder %s714, %s715
      %p724 = scmp.eq.s32.totalorder %s116, 0
      %p725 = por %p723, %p724
      %p726 = scmp.ne.s32.totalorder %s714, %s715
      %p727 = scmp.eq.s32.totalorder %s117, 1
      %p728 = por %p726, %p727
      %p730 = scmp.ne.s32.totalorder %s715, %s729
      %p731 = scmp.eq.s32.totalorder %s117, 0
      %p732 = por %p730, %p731
      %s734 = sadd.s32 %s733, 1
      %p737 = scmp.eq.s32.totalorder %s111, 1
      %p738 = scmp.ne.s32.totalorder %s733, %s735
      %p739 = scmp.eq.s32.totalorder %s111, 0
      %p740 = por %p738, %p739
      %p741 = scmp.ne.s32.totalorder %s733, %s735
      %p742 = scmp.eq.s32.totalorder %s116, 1
      %p743 = por %p741, %p742
      %p744 = scmp.ne.s32.totalorder %s735, %s736
      %p745 = scmp.eq.s32.totalorder %s116, 0
      %p746 = por %p744, %p745
      %p747 = scmp.ne.s32.totalorder %s735, %s736
      %p748 = scmp.eq.s32.totalorder %s117, 1
      %p749 = por %p747, %p748
      %p751 = scmp.ne.s32.totalorder %s736, %s750
      %p752 = scmp.eq.s32.totalorder %s117, 0
      %p753 = por %p751, %p752
      %s755 = sadd.s32 %s754, 1
      %p758 = scmp.eq.s32.totalorder %s111, 1
      %p759 = scmp.ne.s32.totalorder %s754, %s756
      %p760 = scmp.eq.s32.totalorder %s111, 0
      %p761 = por %p759, %p760
      %p762 = scmp.ne.s32.totalorder %s754, %s756
      %p763 = scmp.eq.s32.totalorder %s116, 1
      %p764 = por %p762, %p763
      %p765 = scmp.ne.s32.totalorder %s756, %s757
      %p766 = scmp.eq.s32.totalorder %s116, 0
      %p767 = por %p765, %p766
      %p768 = scmp.ne.s32.totalorder %s756, %s757
      %p769 = scmp.eq.s32.totalorder %s117, 1
      %p770 = por %p768, %p769
      %p772 = scmp.ne.s32.totalorder %s757, %s771
      %p773 = scmp.eq.s32.totalorder %s117, 0
      %p774 = por %p772, %p773
      %s776 = sadd.s32 %s775, 1
      %p779 = scmp.eq.s32.totalorder %s111, 1
      %p780 = scmp.ne.s32.totalorder %s775, %s777
      %p781 = scmp.eq.s32.totalorder %s111, 0
      %p782 = por %p780, %p781
      %p783 = scmp.ne.s32.totalorder %s775, %s777
      %p784 = scmp.eq.s32.totalorder %s116, 1
      %p785 = por %p783, %p784
      %p786 = scmp.ne.s32.totalorder %s777, %s778
      %p787 = scmp.eq.s32.totalorder %s116, 0
      %p788 = por %p786, %p787
      %p789 = scmp.ne.s32.totalorder %s777, %s778
      %p790 = scmp.eq.s32.totalorder %s117, 1
      %p791 = por %p789, %p790
      %p793 = scmp.ne.s32.totalorder %s778, %s792
      %p794 = scmp.eq.s32.totalorder %s117, 0
      %p795 = por %p793, %p794
      %s797 = sadd.s32 %s796, 1
      %p800 = scmp.eq.s32.totalorder %s111, 1
      %p801 = scmp.ne.s32.totalorder %s796, %s798
      %p802 = scmp.eq.s32.totalorder %s111, 0
      %p803 = por %p801, %p802
      %p804 = scmp.ne.s32.totalorder %s796, %s798
      %p805 = scmp.eq.s32.totalorder %s116, 1
      %p806 = por %p804, %p805
      %p807 = scmp.ne.s32.totalorder %s798, %s799
      %p808 = scmp.eq.s32.totalorder %s116, 0
      %p809 = por %p807, %p808
      %p810 = scmp.ne.s32.totalorder %s798, %s799
      %p811 = scmp.eq.s32.totalorder %s117, 1
      %p812 = por %p810, %p811
      %p814 = scmp.ne.s32.totalorder %s799, %s813
      %p815 = scmp.eq.s32.totalorder %s117, 0
      %p816 = por %p814, %p815
      %s818 = sadd.s32 %s817, 1
      %p821 = scmp.eq.s32.totalorder %s111, 1
      %p822 = scmp.ne.s32.totalorder %s817, %s819
      %p823 = scmp.eq.s32.totalorder %s111, 0
      %p824 = por %p822, %p823
      %p825 = scmp.ne.s32.totalorder %s817, %s819
      %p826 = scmp.eq.s32.totalorder %s116, 1
      %p827 = por %p825, %p826
      %p828 = scmp.ne.s32.totalorder %s819, %s820
      %p829 = scmp.eq.s32.totalorder %s116, 0
      %p830 = por %p828, %p829
      %p831 = scmp.ne.s32.totalorder %s819, %s820
      %p832 = scmp.eq.s32.totalorder %s117, 1
      %p833 = por %p831, %p832
      %p835 = scmp.ne.s32.totalorder %s820, %s834
      %p836 = scmp.eq.s32.totalorder %s117, 0
      %p837 = por %p835, %p836
      %s839 = sadd.s32 %s838, 1
      %p842 = scmp.eq.s32.totalorder %s111, 1
      %p843 = scmp.ne.s32.totalorder %s838, %s840
      %p844 = scmp.eq.s32.totalorder %s111, 0
      %p845 = por %p843, %p844
      %p846 = scmp.ne.s32.totalorder %s838, %s840
      %p847 = scmp.eq.s32.totalorder %s116, 1
      %p848 = por %p846, %p847
      %p849 = scmp.ne.s32.totalorder %s840, %s841
      %p850 = scmp.eq.s32.totalorder %s116, 0
      %p851 = por %p849, %p850
      %p852 = scmp.ne.s32.totalorder %s840, %s841
      %p853 = scmp.eq.s32.totalorder %s117, 1
      %p854 = por %p852, %p853
      %p856 = scmp.ne.s32.totalorder %s841, %s855
      %p857 = scmp.eq.s32.totalorder %s117, 0
      %p858 = por %p856, %p857
      %s860 = sadd.s32 %s859, 1
      %p863 = scmp.eq.s32.totalorder %s111, 1
      %p864 = scmp.ne.s32.totalorder %s859, %s861
      %p865 = scmp.eq.s32.totalorder %s111, 0
      %p866 = por %p864, %p865
      %p867 = scmp.ne.s32.totalorder %s859, %s861
      %p868 = scmp.eq.s32.totalorder %s116, 1
      %p869 = por %p867, %p868
      %p870 = scmp.ne.s32.totalorder %s861, %s862
      %p871 = scmp.eq.s32.totalorder %s116, 0
      %p872 = por %p870, %p871
      %p873 = scmp.ne.s32.totalorder %s861, %s862
      %p874 = scmp.eq.s32.totalorder %s117, 1
      %p875 = por %p873, %p874
      %p877 = scmp.ne.s32.totalorder %s862, %s876
      %p878 = scmp.eq.s32.totalorder %s117, 0
      %p879 = por %p877, %p878
      %s881 = sadd.s32 %s880, 1
      %p884 = scmp.eq.s32.totalorder %s111, 1
      %p885 = scmp.ne.s32.totalorder %s880, %s882
      %p886 = scmp.eq.s32.totalorder %s111, 0
      %p887 = por %p885, %p886
      %p888 = scmp.ne.s32.totalorder %s880, %s882
      %p889 = scmp.eq.s32.totalorder %s116, 1
      %p890 = por %p888, %p889
      %p891 = scmp.ne.s32.totalorder %s882, %s883
      %p892 = scmp.eq.s32.totalorder %s116, 0
      %p893 = por %p891, %p892
      %p894 = scmp.ne.s32.totalorder %s882, %s883
      %p895 = scmp.eq.s32.totalorder %s117, 1
      %p896 = por %p894, %p895
      %p898 = scmp.ne.s32.totalorder %s883, %s897
      %p899 = scmp.eq.s32.totalorder %s117, 0
      %p900 = por %p898, %p899
      %s902 = sadd.s32 %s901, 1
      %p905 = scmp.eq.s32.totalorder %s111, 1
      %p906 = scmp.ne.s32.totalorder %s901, %s903
      %p907 = scmp.eq.s32.totalorder %s111, 0
      %p908 = por %p906, %p907
      %p909 = scmp.ne.s32.totalorder %s901, %s903
      %p910 = scmp.eq.s32.totalorder %s116, 1
      %p911 = por %p909, %p910
      %p912 = scmp.ne.s32.totalorder %s903, %s904
      %p913 = scmp.eq.s32.totalorder %s116, 0
      %p914 = por %p912, %p913
      %p915 = scmp.ne.s32.totalorder %s903, %s904
      %p916 = scmp.eq.s32.totalorder %s117, 1
      %p917 = por %p915, %p916
      %p919 = scmp.ne.s32.totalorder %s904, %s918
      %p920 = scmp.eq.s32.totalorder %s117, 0
      %p921 = por %p919, %p920
      %s923 = sadd.s32 %s922, 1
      %p926 = scmp.eq.s32.totalorder %s111, 1
      %p927 = scmp.ne.s32.totalorder %s922, %s924
      %p928 = scmp.eq.s32.totalorder %s111, 0
      %p929 = por %p927, %p928
      %p930 = scmp.ne.s32.totalorder %s922, %s924
      %p931 = scmp.eq.s32.totalorder %s116, 1
      %p932 = por %p930, %p931
      %p933 = scmp.ne.s32.totalorder %s924, %s925
      %p934 = scmp.eq.s32.totalorder %s116, 0
      %p935 = por %p933, %p934
      %p936 = scmp.ne.s32.totalorder %s924, %s925
      %p937 = scmp.eq.s32.totalorder %s117, 1
      %p938 = por %p936, %p937
      %p940 = scmp.ne.s32.totalorder %s925, %s939
      %p941 = scmp.eq.s32.totalorder %s117, 0
      %p942 = por %p940, %p941
      %s944 = sadd.s32 %s943, 1
      %p947 = scmp.eq.s32.totalorder %s111, 1
      %p948 = scmp.ne.s32.totalorder %s943, %s945
      %p949 = scmp.eq.s32.totalorder %s111, 0
      %p950 = por %p948, %p949
      %p951 = scmp.ne.s32.totalorder %s943, %s945
      %p952 = scmp.eq.s32.totalorder %s116, 1
      %p953 = por %p951, %p952
      %p954 = scmp.ne.s32.totalorder %s945, %s946
      %p955 = scmp.eq.s32.totalorder %s116, 0
      %p956 = por %p954, %p955
      %p957 = scmp.ne.s32.totalorder %s945, %s946
      %p958 = scmp.eq.s32.totalorder %s117, 1
      %p959 = por %p957, %p958
      %p961 = scmp.ne.s32.totalorder %s946, %s960
      %p962 = scmp.eq.s32.totalorder %s117, 0
      %p963 = por %p961, %p962
      %s965 = sadd.s32 %s964, 1
      %p968 = scmp.eq.s32.totalorder %s111, 1
      %p969 = scmp.ne.s32.totalorder %s964, %s966
      %p970 = scmp.eq.s32.totalorder %s111, 0
      %p971 = por %p969, %p970
      %p972 = scmp.ne.s32.totalorder %s964, %s966
      %p973 = scmp.eq.s32.totalorder %s116, 1
      %p974 = por %p972, %p973
      %p975 = scmp.ne.s32.totalorder %s966, %s967
      %p976 = scmp.eq.s32.totalorder %s116, 0
      %p977 = por %p975, %p976
      %p978 = scmp.ne.s32.totalorder %s966, %s967
      %p979 = scmp.eq.s32.totalorder %s117, 1
      %p980 = por %p978, %p979
      %p982 = scmp.ne.s32.totalorder %s967, %s981
      %p983 = scmp.eq.s32.totalorder %s117, 0
      %p984 = por %p982, %p983
      %s986 = sadd.s32 %s985, 1
      %p989 = scmp.eq.s32.totalorder %s111, 1
      %p990 = scmp.ne.s32.totalorder %s985, %s987
      %p991 = scmp.eq.s32.totalorder %s111, 0
      %p992 = por %p990, %p991
      %p993 = scmp.ne.s32.totalorder %s985, %s987
      %p994 = scmp.eq.s32.totalorder %s116, 1
      %p995 = por %p993, %p994
      %p996 = scmp.ne.s32.totalorder %s987, %s988
      %p997 = scmp.eq.s32.totalorder %s116, 0
      %p998 = por %p996, %p997
      %p999 = scmp.ne.s32.totalorder %s987, %s988
      %p1000 = scmp.eq.s32.totalorder %s117, 1
      %p1001 = por %p999, %p1000
      %p1003 = scmp.ne.s32.totalorder %s988, %s1002
      %p1004 = scmp.eq.s32.totalorder %s117, 0
      %p1005 = por %p1003, %p1004
      %s1007 = sadd.s32 %s1006, 1
      %p1010 = scmp.eq.s32.totalorder %s111, 1
      %p1011 = scmp.ne.s32.totalorder %s1006, %s1008
      %p1012 = scmp.eq.s32.totalorder %s111, 0
      %p1013 = por %p1011, %p1012
      %p1014 = scmp.ne.s32.totalorder %s1006, %s1008
      %p1015 = scmp.eq.s32.totalorder %s116, 1
      %p1016 = por %p1014, %p1015
      %p1017 = scmp.ne.s32.totalorder %s1008, %s1009
      %p1018 = scmp.eq.s32.totalorder %s116, 0
      %p1019 = por %p1017, %p1018
      %p1020 = scmp.ne.s32.totalorder %s1008, %s1009
      %p1021 = scmp.eq.s32.totalorder %s117, 1
      %p1022 = por %p1020, %p1021
      %p1024 = scmp.ne.s32.totalorder %s1009, %s1023
      %p1025 = scmp.eq.s32.totalorder %s117, 0
      %p1026 = por %p1024, %p1025
      %s1028 = sadd.s32 %s1027, 1
      %p1031 = scmp.eq.s32.totalorder %s111, 1
      %p1032 = scmp.ne.s32.totalorder %s1027, %s1029
      %p1033 = scmp.eq.s32.totalorder %s111, 0
      %p1034 = por %p1032, %p1033
      %p1035 = scmp.ne.s32.totalorder %s1027, %s1029
      %p1036 = scmp.eq.s32.totalorder %s116, 1
      %p1037 = por %p1035, %p1036
      %p1038 = scmp.ne.s32.totalorder %s1029, %s1030
      %p1039 = scmp.eq.s32.totalorder %s116, 0
      %p1040 = por %p1038, %p1039
      %p1041 = scmp.ne.s32.totalorder %s1029, %s1030
      %p1042 = scmp.eq.s32.totalorder %s117, 1
      %p1043 = por %p1041, %p1042
      %p1045 = scmp.ne.s32.totalorder %s1030, %s1044
      %p1046 = scmp.eq.s32.totalorder %s117, 0
      %p1047 = por %p1045, %p1046
      %s1049 = sadd.s32 %s1048, 1
      %p1052 = scmp.eq.s32.totalorder %s111, 1
      %p1053 = scmp.ne.s32.totalorder %s1048, %s1050
      %p1054 = scmp.eq.s32.totalorder %s111, 0
      %p1055 = por %p1053, %p1054
      %p1056 = scmp.ne.s32.totalorder %s1048, %s1050
      %p1057 = scmp.eq.s32.totalorder %s116, 1
      %p1058 = por %p1056, %p1057
      %p1059 = scmp.ne.s32.totalorder %s1050, %s1051
      %p1060 = scmp.eq.s32.totalorder %s116, 0
      %p1061 = por %p1059, %p1060
      %p1062 = scmp.ne.s32.totalorder %s1050, %s1051
      %p1063 = scmp.eq.s32.totalorder %s117, 1
      %p1064 = por %p1062, %p1063
      %p1066 = scmp.ne.s32.totalorder %s1051, %s1065
      %p1067 = scmp.eq.s32.totalorder %s117, 0
      %p1068 = por %p1066, %p1067
      %s1070 = sadd.s32 %s1069, 1
      %p1073 = scmp.eq.s32.totalorder %s111, 1
      %p1074 = scmp.ne.s32.totalorder %s1069, %s1071
      %p1075 = scmp.eq.s32.totalorder %s111, 0
      %p1076 = por %p1074, %p1075
      %p1077 = scmp.ne.s32.totalorder %s1069, %s1071
      %p1078 = scmp.eq.s32.totalorder %s116, 1
      %p1079 = por %p1077, %p1078
      %p1080 = scmp.ne.s32.totalorder %s1071, %s1072
      %p1081 = scmp.eq.s32.totalorder %s116, 0
      %p1082 = por %p1080, %p1081
      %p1083 = scmp.ne.s32.totalorder %s1071, %s1072
      %p1084 = scmp.eq.s32.totalorder %s117, 1
      %p1085 = por %p1083, %p1084
      %p1087 = scmp.ne.s32.totalorder %s1072, %s1086
      %p1088 = scmp.eq.s32.totalorder %s117, 0
      %p1089 = por %p1087, %p1088
      %s1091 = sadd.s32 %s1090, 1
      %p1094 = scmp.eq.s32.totalorder %s111, 1
      %p1095 = scmp.ne.s32.totalorder %s1090, %s1092
      %p1096 = scmp.eq.s32.totalorder %s111, 0
      %p1097 = por %p1095, %p1096
      %p1098 = scmp.ne.s32.totalorder %s1090, %s1092
      %p1099 = scmp.eq.s32.totalorder %s116, 1
      %p1100 = por %p1098, %p1099
      %p1101 = scmp.ne.s32.totalorder %s1092, %s1093
      %p1102 = scmp.eq.s32.totalorder %s116, 0
      %p1103 = por %p1101, %p1102
      %p1104 = scmp.ne.s32.totalorder %s1092, %s1093
      %p1105 = scmp.eq.s32.totalorder %s117, 1
      %p1106 = por %p1104, %p1105
      %p1108 = scmp.ne.s32.totalorder %s1093, %s1107
      %p1109 = scmp.eq.s32.totalorder %s117, 0
      %p1110 = por %p1108, %p1109
      %s1112 = sadd.s32 %s1111, 1
      %p1115 = scmp.eq.s32.totalorder %s111, 1
      %p1116 = scmp.ne.s32.totalorder %s1111, %s1113
      %p1117 = scmp.eq.s32.totalorder %s111, 0
      %p1118 = por %p1116, %p1117
      %p1119 = scmp.ne.s32.totalorder %s1111, %s1113
      %p1120 = scmp.eq.s32.totalorder %s116, 1
      %p1121 = por %p1119, %p1120
      %p1122 = scmp.ne.s32.totalorder %s1113, %s1114
      %p1123 = scmp.eq.s32.totalorder %s116, 0
      %p1124 = por %p1122, %p1123
      %p1125 = scmp.ne.s32.totalorder %s1113, %s1114
      %p1126 = scmp.eq.s32.totalorder %s117, 1
      %p1127 = por %p1125, %p1126
      %p1129 = scmp.ne.s32.totalorder %s1114, %s1128
      %p1130 = scmp.eq.s32.totalorder %s117, 0
      %p1131 = por %p1129, %p1130
      %s1133 = sadd.s32 %s1132, 1
      %p1136 = scmp.eq.s32.totalorder %s111, 1
      %p1137 = scmp.ne.s32.totalorder %s1132, %s1134
      %p1138 = scmp.eq.s32.totalorder %s111, 0
      %p1139 = por %p1137, %p1138
      %p1140 = scmp.ne.s32.totalorder %s1132, %s1134
      %p1141 = scmp.eq.s32.totalorder %s116, 1
      %p1142 = por %p1140, %p1141
      %p1143 = scmp.ne.s32.totalorder %s1134, %s1135
      %p1144 = scmp.eq.s32.totalorder %s116, 0
      %p1145 = por %p1143, %p1144
      %p1146 = scmp.ne.s32.totalorder %s1134, %s1135
      %p1147 = scmp.eq.s32.totalorder %s117, 1
      %p1148 = por %p1146, %p1147
      %p1150 = scmp.ne.s32.totalorder %s1135, %s1149
      %p1151 = scmp.eq.s32.totalorder %s117, 0
      %p1152 = por %p1150, %p1151
      %s1154 = sadd.s32 %s1153, 1
      %p1157 = scmp.eq.s32.totalorder %s111, 1
      %p1158 = scmp.ne.s32.totalorder %s1153, %s1155
      %p1159 = scmp.eq.s32.totalorder %s111, 0
      %p1160 = por %p1158, %p1159
      %p1161 = scmp.ne.s32.totalorder %s1153, %s1155
      %p1162 = scmp.eq.s32.totalorder %s116, 1
      %p1163 = por %p1161, %p1162
      %p1164 = scmp.ne.s32.totalorder %s1155, %s1156
      %p1165 = scmp.eq.s32.totalorder %s116, 0
      %p1166 = por %p1164, %p1165
      %p1167 = scmp.ne.s32.totalorder %s1155, %s1156
      %p1168 = scmp.eq.s32.totalorder %s117, 1
      %p1169 = por %p1167, %p1168
      %p1171 = scmp.ne.s32.totalorder %s1156, %s1170
      %p1172 = scmp.eq.s32.totalorder %s117, 0
      %p1173 = por %p1171, %p1172
      %s1175 = sadd.s32 %s1174, 1
      %p1178 = scmp.eq.s32.totalorder %s111, 1
      %p1179 = scmp.ne.s32.totalorder %s1174, %s1176
      %p1180 = scmp.eq.s32.totalorder %s111, 0
      %p1181 = por %p1179, %p1180
      %p1182 = scmp.ne.s32.totalorder %s1174, %s1176
      %p1183 = scmp.eq.s32.totalorder %s116, 1
      %p1184 = por %p1182, %p1183
      %p1185 = scmp.ne.s32.totalorder %s1176, %s1177
      %p1186 = scmp.eq.s32.totalorder %s116, 0
      %p1187 = por %p1185, %p1186
      %p1188 = scmp.ne.s32.totalorder %s1176, %s1177
      %p1189 = scmp.eq.s32.totalorder %s117, 1
      %p1190 = por %p1188, %p1189
      %p1192 = scmp.ne.s32.totalorder %s1177, %s1191
      %p1193 = scmp.eq.s32.totalorder %s117, 0
      %p1194 = por %p1192, %p1193
      %s1195 = ssub.s32 %s111, %s118
      %p1196 = scmp.eq.s32.totalorder %s1195, 0
      %s1198 = sadd.s32 %s1197, 1
      %s1199 = scalar_select %p1196, %s1197, %s1198
      %p1202 = pneg %p1196
      %p1203 = scmp.eq.s32.totalorder %s111, 1
      %p1204 = por %p1202, %p1203
      %p1205 = scmp.ne.s32.totalorder %s1197, %s1200
      %p1206 = scmp.eq.s32.totalorder %s111, 0
      %p1207 = por %p1205, %p1206
      %p1208 = scmp.ne.s32.totalorder %s1197, %s1200
      %p1209 = scmp.eq.s32.totalorder %s116, 1
      %p1210 = por %p1208, %p1209
      %p1211 = scmp.ne.s32.totalorder %s1200, %s1201
      %p1212 = scmp.eq.s32.totalorder %s116, 0
      %p1213 = por %p1211, %p1212
      %p1214 = scmp.ne.s32.totalorder %s1200, %s1201
      %p1215 = scmp.eq.s32.totalorder %s117, 1
      %p1216 = por %p1214, %p1215
      %p1218 = scmp.ne.s32.totalorder %s1201, %s1217
      %p1219 = scmp.eq.s32.totalorder %s117, 0
      %p1220 = por %p1218, %p1219
      %p1221 = scmp.le.s32.totalorder 1, %s111
      %p1222 = scmp.lt.s32.totalorder %s111, 3
      %p1223 = pnand %p1221, %p1222
      %p1224 = pneg %p1223
      // Predicated region
      $region9: #{_lambda_.1} parent=5 // pred_check
        _
      $region10: #{_lambda_.1} parent=5 // pred_check_branch
        %1226 = sbr.rel (%p1223) target = $region12
      $region11: #{_lambda_.1} parent=5 // pred_region
        %s1227 = ssub.s32 %s111, 1
        // Predicated region
        $region13: #{_lambda_.1} parent=11 // pred_check
          %p1228 = pneg %p158
        $region14: #{_lambda_.1} parent=11 // pred_check_branch
          %1230 = sbr.rel (%p1228) target = $region16
        $region15: #{_lambda_.1} parent=11 // pred_region
          _
        $region16: #{_lambda_.1} parent=11 // pred_fallthru
          _
        // Predicated region
        $region17: #{_lambda_.1} parent=11 // pred_check
          %p1231 = pneg %p179
        $region18: #{_lambda_.1} parent=11 // pred_check_branch
          %1233 = sbr.rel (%p1231) target = $region20
        $region19: #{_lambda_.1} parent=11 // pred_region
          %s1235 = ssub.s32 16, 16
          %1236 = vsyncadd [#allocation8], %s1235
          %s1238 = sshll.u32 [#allocation7], 4
          %s1239 = int_to_ptr.vmem [resolvable:$true] %s1238
          %1241 = dma.hbm_to_vmem [thread:$0]  %s5, 16, %s1239, [#allocation8]
        $region20: #{_lambda_.1} parent=11 // pred_fallthru
          _
        // Predicated region
        $region21: #{_lambda_.1} parent=11 // pred_check
          %p1242 = pneg %p200
        $region22: #{_lambda_.1} parent=11 // pred_check_branch
          %1244 = sbr.rel (%p1242) target = $region24
        $region23: #{_lambda_.1} parent=11 // pred_region
          _
        $region24: #{_lambda_.1} parent=11 // pred_fallthru
          _
        // Predicated region
        $region25: #{_lambda_.1} parent=11 // pred_check
          %p1245 = pneg %p221
        $region26: #{_lambda_.1} parent=11 // pred_check_branch
          %1247 = sbr.rel (%p1245) target = $region28
        $region27: #{_lambda_.1} parent=11 // pred_region
          _
        $region28: #{_lambda_.1} parent=11 // pred_fallthru
          _
        // Predicated region
        $region29: #{_lambda_.1} parent=11 // pred_check
          %p1248 = pneg %p242
        $region30: #{_lambda_.1} parent=11 // pred_check_branch
          %1250 = sbr.rel (%p1248) target = $region32
        $region31: #{_lambda_.1} parent=11 // pred_region
          %s1252 = ssub.s32 16, 16
          %1253 = vsyncadd [#allocation10], %s1252
          %s1255 = sshll.u32 [#allocation9], 4
          %s1256 = int_to_ptr.vmem [resolvable:$true] %s1255
          %1258 = dma.hbm_to_vmem [thread:$0]  %s11, 16, %s1256, [#allocation10]
        $region32: #{_lambda_.1} parent=11 // pred_fallthru
          _
        // Predicated region
        $region33: #{_lambda_.1} parent=11 // pred_check
          %p1259 = pneg %p263
        $region34: #{_lambda_.1} parent=11 // pred_check_branch
          %1261 = sbr.rel (%p1259) target = $region36
        $region35: #{_lambda_.1} parent=11 // pred_region
          _
        $region36: #{_lambda_.1} parent=11 // pred_fallthru
          _
        // Predicated region
        $region37: #{_lambda_.1} parent=11 // pred_check
          %p1262 = pneg %p284
        $region38: #{_lambda_.1} parent=11 // pred_check_branch
          %1264 = sbr.rel (%p1262) target = $region40
        $region39: #{_lambda_.1} parent=11 // pred_region
          _
        $region40: #{_lambda_.1} parent=11 // pred_fallthru
          _
        // Predicated region
        $region41: #{_lambda_.1} parent=11 // pred_check
          %p1265 = pneg %p305
        $region42: #{_lambda_.1} parent=11 // pred_check_branch
          %1267 = sbr.rel (%p1265) target = $region44
        $region43: #{_lambda_.1} parent=11 // pred_region
          %s1269 = ssub.s32 16, 16
          %1270 = vsyncadd [#allocation10], %s1269
          %s1272 = sshll.u32 [#allocation11], 4
          %s1273 = int_to_ptr.vmem [resolvable:$true] %s1272
          %1275 = dma.hbm_to_vmem [thread:$0]  %s17, 16, %s1273, [#allocation10]
        $region44: #{_lambda_.1} parent=11 // pred_fallthru
          _
        // Predicated region
        $region45: #{_lambda_.1} parent=11 // pred_check
          %p1276 = pneg %p326
        $region46: #{_lambda_.1} parent=11 // pred_check_branch
          %1278 = sbr.rel (%p1276) target = $region48
        $region47: #{_lambda_.1} parent=11 // pred_region
          _
        $region48: #{_lambda_.1} parent=11 // pred_fallthru
          _
        // Predicated region
        $region49: #{_lambda_.1} parent=11 // pred_check
          %p1279 = pneg %p347
        $region50: #{_lambda_.1} parent=11 // pred_check_branch
          %1281 = sbr.rel (%p1279) target = $region52
        $region51: #{_lambda_.1} parent=11 // pred_region
          _
        $region52: #{_lambda_.1} parent=11 // pred_fallthru
          _
        // Predicated region
        $region53: #{_lambda_.1} parent=11 // pred_check
          %p1282 = pneg %p368
        $region54: #{_lambda_.1} parent=11 // pred_check_branch
          %1284 = sbr.rel (%p1282) target = $region56
        $region55: #{_lambda_.1} parent=11 // pred_region
          _
        $region56: #{_lambda_.1} parent=11 // pred_fallthru
          _
        // Predicated region
        $region57: #{_lambda_.1} parent=11 // pred_check
          %p1285 = pneg %p389
        $region58: #{_lambda_.1} parent=11 // pred_check_branch
          %1287 = sbr.rel (%p1285) target = $region60
        $region59: #{_lambda_.1} parent=11 // pred_region
          _
        $region60: #{_lambda_.1} parent=11 // pred_fallthru
          _
        // Predicated region
        $region61: #{_lambda_.1} parent=11 // pred_check
          %p1288 = pneg %p410
        $region62: #{_lambda_.1} parent=11 // pred_check_branch
          %1290 = sbr.rel (%p1288) target = $region64
        $region63: #{_lambda_.1} parent=11 // pred_region
          _
        $region64: #{_lambda_.1} parent=11 // pred_fallthru
          _
        // Predicated region
        $region65: #{_lambda_.1} parent=11 // pred_check
          %p1291 = pneg %p431
        $region66: #{_lambda_.1} parent=11 // pred_check_branch
          %1293 = sbr.rel (%p1291) target = $region68
        $region67: #{_lambda_.1} parent=11 // pred_region
          _
        $region68: #{_lambda_.1} parent=11 // pred_fallthru
          _
        // Predicated region
        $region69: #{_lambda_.1} parent=11 // pred_check
          %p1294 = pneg %p452
        $region70: #{_lambda_.1} parent=11 // pred_check_branch
          %1296 = sbr.rel (%p1294) target = $region72
        $region71: #{_lambda_.1} parent=11 // pred_region
          _
        $region72: #{_lambda_.1} parent=11 // pred_fallthru
          _
        // Predicated region
        $region73: #{_lambda_.1} parent=11 // pred_check
          %p1297 = pneg %p473
        $region74: #{_lambda_.1} parent=11 // pred_check_branch
          %1299 = sbr.rel (%p1297) target = $region76
        $region75: #{_lambda_.1} parent=11 // pred_region
          _
        $region76: #{_lambda_.1} parent=11 // pred_fallthru
          _
        // Predicated region
        $region77: #{_lambda_.1} parent=11 // pred_check
          %p1300 = pneg %p494
        $region78: #{_lambda_.1} parent=11 // pred_check_branch
          %1302 = sbr.rel (%p1300) target = $region80
        $region79: #{_lambda_.1} parent=11 // pred_region
          _
        $region80: #{_lambda_.1} parent=11 // pred_fallthru
          _
        // Predicated region
        $region81: #{_lambda_.1} parent=11 // pred_check
          %p1303 = pneg %p515
        $region82: #{_lambda_.1} parent=11 // pred_check_branch
          %1305 = sbr.rel (%p1303) target = $region84
        $region83: #{_lambda_.1} parent=11 // pred_region
          _
        $region84: #{_lambda_.1} parent=11 // pred_fallthru
          _
        // Predicated region
        $region85: #{_lambda_.1} parent=11 // pred_check
          %p1306 = pneg %p536
        $region86: #{_lambda_.1} parent=11 // pred_check_branch
          %1308 = sbr.rel (%p1306) target = $region88
        $region87: #{_lambda_.1} parent=11 // pred_region
          _
        $region88: #{_lambda_.1} parent=11 // pred_fallthru
          _
        // Predicated region
        $region89: #{_lambda_.1} parent=11 // pred_check
          %p1309 = pneg %p557
        $region90: #{_lambda_.1} parent=11 // pred_check_branch
          %1311 = sbr.rel (%p1309) target = $region92
        $region91: #{_lambda_.1} parent=11 // pred_region
          _
        $region92: #{_lambda_.1} parent=11 // pred_fallthru
          _
        // Predicated region
        $region93: #{_lambda_.1} parent=11 // pred_check
          %p1312 = pneg %p578
        $region94: #{_lambda_.1} parent=11 // pred_check_branch
          %1314 = sbr.rel (%p1312) target = $region96
        $region95: #{_lambda_.1} parent=11 // pred_region
          _
        $region96: #{_lambda_.1} parent=11 // pred_fallthru
          _
        // Predicated region
        $region97: #{_lambda_.1} parent=11 // pred_check
          %p1315 = pneg %p599
        $region98: #{_lambda_.1} parent=11 // pred_check_branch
          %1317 = sbr.rel (%p1315) target = $region100
        $region99: #{_lambda_.1} parent=11 // pred_region
          _
        $region100: #{_lambda_.1} parent=11 // pred_fallthru
          _
        // Predicated region
        $region101: #{_lambda_.1} parent=11 // pred_check
          %p1318 = pneg %p620
        $region102: #{_lambda_.1} parent=11 // pred_check_branch
          %1320 = sbr.rel (%p1318) target = $region104
        $region103: #{_lambda_.1} parent=11 // pred_region
          _
        $region104: #{_lambda_.1} parent=11 // pred_fallthru
          _
        // Predicated region
        $region105: #{_lambda_.1} parent=11 // pred_check
          %p1321 = pneg %p641
        $region106: #{_lambda_.1} parent=11 // pred_check_branch
          %1323 = sbr.rel (%p1321) target = $region108
        $region107: #{_lambda_.1} parent=11 // pred_region
          _
        $region108: #{_lambda_.1} parent=11 // pred_fallthru
          _
        // Predicated region
        $region109: #{_lambda_.1} parent=11 // pred_check
          %p1324 = pneg %p662
        $region110: #{_lambda_.1} parent=11 // pred_check_branch
          %1326 = sbr.rel (%p1324) target = $region112
        $region111: #{_lambda_.1} parent=11 // pred_region
          _
        $region112: #{_lambda_.1} parent=11 // pred_fallthru
          _
        // Predicated region
        $region113: #{_lambda_.1} parent=11 // pred_check
          %p1327 = pneg %p683
        $region114: #{_lambda_.1} parent=11 // pred_check_branch
          %1329 = sbr.rel (%p1327) target = $region116
        $region115: #{_lambda_.1} parent=11 // pred_region
          _
        $region116: #{_lambda_.1} parent=11 // pred_fallthru
          _
        // Predicated region
        $region117: #{_lambda_.1} parent=11 // pred_check
          %p1330 = pneg %p704
        $region118: #{_lambda_.1} parent=11 // pred_check_branch
          %1332 = sbr.rel (%p1330) target = $region120
        $region119: #{_lambda_.1} parent=11 // pred_region
          _
        $region120: #{_lambda_.1} parent=11 // pred_fallthru
          _
        // Predicated region
        $region121: #{_lambda_.1} parent=11 // pred_check
          %p1333 = pneg %p725
        $region122: #{_lambda_.1} parent=11 // pred_check_branch
          %1335 = sbr.rel (%p1333) target = $region124
        $region123: #{_lambda_.1} parent=11 // pred_region
          _
        $region124: #{_lambda_.1} parent=11 // pred_fallthru
          _
        // Predicated region
        $region125: #{_lambda_.1} parent=11 // pred_check
          %p1336 = pneg %p746
        $region126: #{_lambda_.1} parent=11 // pred_check_branch
          %1338 = sbr.rel (%p1336) target = $region128
        $region127: #{_lambda_.1} parent=11 // pred_region
          _
        $region128: #{_lambda_.1} parent=11 // pred_fallthru
          _
        // Predicated region
        $region129: #{_lambda_.1} parent=11 // pred_check
          %p1339 = pneg %p767
        $region130: #{_lambda_.1} parent=11 // pred_check_branch
          %1341 = sbr.rel (%p1339) target = $region132
        $region131: #{_lambda_.1} parent=11 // pred_region
          _
        $region132: #{_lambda_.1} parent=11 // pred_fallthru
          _
        // Predicated region
        $region133: #{_lambda_.1} parent=11 // pred_check
          %p1342 = pneg %p788
        $region134: #{_lambda_.1} parent=11 // pred_check_branch
          %1344 = sbr.rel (%p1342) target = $region136
        $region135: #{_lambda_.1} parent=11 // pred_region
          _
        $region136: #{_lambda_.1} parent=11 // pred_fallthru
          _
        // Predicated region
        $region137: #{_lambda_.1} parent=11 // pred_check
          %p1345 = pneg %p809
        $region138: #{_lambda_.1} parent=11 // pred_check_branch
          %1347 = sbr.rel (%p1345) target = $region140
        $region139: #{_lambda_.1} parent=11 // pred_region
          _
        $region140: #{_lambda_.1} parent=11 // pred_fallthru
          _
        // Predicated region
        $region141: #{_lambda_.1} parent=11 // pred_check
          %p1348 = pneg %p830
        $region142: #{_lambda_.1} parent=11 // pred_check_branch
          %1350 = sbr.rel (%p1348) target = $region144
        $region143: #{_lambda_.1} parent=11 // pred_region
          _
        $region144: #{_lambda_.1} parent=11 // pred_fallthru
          _
        // Predicated region
        $region145: #{_lambda_.1} parent=11 // pred_check
          %p1351 = pneg %p851
        $region146: #{_lambda_.1} parent=11 // pred_check_branch
          %1353 = sbr.rel (%p1351) target = $region148
        $region147: #{_lambda_.1} parent=11 // pred_region
          _
        $region148: #{_lambda_.1} parent=11 // pred_fallthru
          _
        // Predicated region
        $region149: #{_lambda_.1} parent=11 // pred_check
          %p1354 = pneg %p872
        $region150: #{_lambda_.1} parent=11 // pred_check_branch
          %1356 = sbr.rel (%p1354) target = $region152
        $region151: #{_lambda_.1} parent=11 // pred_region
          _
        $region152: #{_lambda_.1} parent=11 // pred_fallthru
          _
        // Predicated region
        $region153: #{_lambda_.1} parent=11 // pred_check
          %p1357 = pneg %p893
        $region154: #{_lambda_.1} parent=11 // pred_check_branch
          %1359 = sbr.rel (%p1357) target = $region156
        $region155: #{_lambda_.1} parent=11 // pred_region
          _
        $region156: #{_lambda_.1} parent=11 // pred_fallthru
          _
        // Predicated region
        $region157: #{_lambda_.1} parent=11 // pred_check
          %p1360 = pneg %p914
        $region158: #{_lambda_.1} parent=11 // pred_check_branch
          %1362 = sbr.rel (%p1360) target = $region160
        $region159: #{_lambda_.1} parent=11 // pred_region
          _
        $region160: #{_lambda_.1} parent=11 // pred_fallthru
          _
        // Predicated region
        $region161: #{_lambda_.1} parent=11 // pred_check
          %p1363 = pneg %p935
        $region162: #{_lambda_.1} parent=11 // pred_check_branch
          %1365 = sbr.rel (%p1363) target = $region164
        $region163: #{_lambda_.1} parent=11 // pred_region
          _
        $region164: #{_lambda_.1} parent=11 // pred_fallthru
          _
        // Predicated region
        $region165: #{_lambda_.1} parent=11 // pred_check
          %p1366 = pneg %p956
        $region166: #{_lambda_.1} parent=11 // pred_check_branch
          %1368 = sbr.rel (%p1366) target = $region168
        $region167: #{_lambda_.1} parent=11 // pred_region
          _
        $region168: #{_lambda_.1} parent=11 // pred_fallthru
          _
        // Predicated region
        $region169: #{_lambda_.1} parent=11 // pred_check
          %p1369 = pneg %p977
        $region170: #{_lambda_.1} parent=11 // pred_check_branch
          %1371 = sbr.rel (%p1369) target = $region172
        $region171: #{_lambda_.1} parent=11 // pred_region
          _
        $region172: #{_lambda_.1} parent=11 // pred_fallthru
          _
        // Predicated region
        $region173: #{_lambda_.1} parent=11 // pred_check
          %p1372 = pneg %p998
        $region174: #{_lambda_.1} parent=11 // pred_check_branch
          %1374 = sbr.rel (%p1372) target = $region176
        $region175: #{_lambda_.1} parent=11 // pred_region
          _
        $region176: #{_lambda_.1} parent=11 // pred_fallthru
          _
        // Predicated region
        $region177: #{_lambda_.1} parent=11 // pred_check
          %p1375 = pneg %p1019
        $region178: #{_lambda_.1} parent=11 // pred_check_branch
          %1377 = sbr.rel (%p1375) target = $region180
        $region179: #{_lambda_.1} parent=11 // pred_region
          _
        $region180: #{_lambda_.1} parent=11 // pred_fallthru
          _
        // Predicated region
        $region181: #{_lambda_.1} parent=11 // pred_check
          %p1378 = pneg %p1040
        $region182: #{_lambda_.1} parent=11 // pred_check_branch
          %1380 = sbr.rel (%p1378) target = $region184
        $region183: #{_lambda_.1} parent=11 // pred_region
          _
        $region184: #{_lambda_.1} parent=11 // pred_fallthru
          _
        // Predicated region
        $region185: #{_lambda_.1} parent=11 // pred_check
          %p1381 = pneg %p1061
        $region186: #{_lambda_.1} parent=11 // pred_check_branch
          %1383 = sbr.rel (%p1381) target = $region188
        $region187: #{_lambda_.1} parent=11 // pred_region
          _
        $region188: #{_lambda_.1} parent=11 // pred_fallthru
          _
        // Predicated region
        $region189: #{_lambda_.1} parent=11 // pred_check
          %p1384 = pneg %p1082
        $region190: #{_lambda_.1} parent=11 // pred_check_branch
          %1386 = sbr.rel (%p1384) target = $region192
        $region191: #{_lambda_.1} parent=11 // pred_region
          _
        $region192: #{_lambda_.1} parent=11 // pred_fallthru
          _
        // Predicated region
        $region193: #{_lambda_.1} parent=11 // pred_check
          %p1387 = pneg %p1103
        $region194: #{_lambda_.1} parent=11 // pred_check_branch
          %1389 = sbr.rel (%p1387) target = $region196
        $region195: #{_lambda_.1} parent=11 // pred_region
          _
        $region196: #{_lambda_.1} parent=11 // pred_fallthru
          _
        // Predicated region
        $region197: #{_lambda_.1} parent=11 // pred_check
          %p1390 = pneg %p1124
        $region198: #{_lambda_.1} parent=11 // pred_check_branch
          %1392 = sbr.rel (%p1390) target = $region200
        $region199: #{_lambda_.1} parent=11 // pred_region
          _
        $region200: #{_lambda_.1} parent=11 // pred_fallthru
          _
        // Predicated region
        $region201: #{_lambda_.1} parent=11 // pred_check
          %p1393 = pneg %p1145
        $region202: #{_lambda_.1} parent=11 // pred_check_branch
          %1395 = sbr.rel (%p1393) target = $region204
        $region203: #{_lambda_.1} parent=11 // pred_region
          _
        $region204: #{_lambda_.1} parent=11 // pred_fallthru
          _
        // Predicated region
        $region205: #{_lambda_.1} parent=11 // pred_check
          %p1396 = pneg %p1166
        $region206: #{_lambda_.1} parent=11 // pred_check_branch
          %1398 = sbr.rel (%p1396) target = $region208
        $region207: #{_lambda_.1} parent=11 // pred_region
          _
        $region208: #{_lambda_.1} parent=11 // pred_fallthru
          _
        // Predicated region
        $region209: #{_lambda_.1} parent=11 // pred_check
          %p1399 = pneg %p1187
        $region210: #{_lambda_.1} parent=11 // pred_check_branch
          %1401 = sbr.rel (%p1399) target = $region212
        $region211: #{_lambda_.1} parent=11 // pred_region
          _
        $region212: #{_lambda_.1} parent=11 // pred_fallthru
          _
      $region12: #{_lambda_.1} parent=5 // pred_fallthru
        _
      %p1402 = scmp.lt.s32.totalorder %s111, 2
      // Predicated region
      $region213: #{_lambda_.1} parent=5 // pred_check
        %p1403 = pneg %p1402
      $region214: #{_lambda_.1} parent=5 // pred_check_branch
        %1405 = sbr.rel (%p1403) target = $region216
      $region215: #{_lambda_.1} parent=5 // pred_region
        // Predicated region
        $region217: #{_lambda_.1} parent=215 // pred_check
          %p1406 = pneg %p131
        $region218: #{_lambda_.1} parent=215 // pred_check_branch
          %1408 = sbr.rel (%p1406) target = $region220
        $region219: #{_lambda_.1} parent=215 // pred_region
          %p1409 = scmp.lt.s32.totalorder %s111, 1
          %s1410 = scalar_select %p1409, %s111, 1
          %s1411 = smul.addr %s1410, 13
          %s1412 = smul.addr %s1411, 4
          %s1413 = scalar_lea.vmem %s1, %s1412
        $region220: #{_lambda_.1} parent=215 // pred_fallthru
          _
      $region216: #{_lambda_.1} parent=5 // pred_fallthru
        _
      %p1414 = scmp.le.s32.totalorder 1, %s111
      %p1415 = scmp.lt.s32.totalorder %s111, 3
      %p1416 = pnand %p1414, %p1415
      %p1417 = pneg %p1416
      // Predicated region
      $region221: #{_lambda_.1} parent=5 // pred_check
        _
      $region222: #{_lambda_.1} parent=5 // pred_check_branch
        %1419 = sbr.rel (%p1416) target = $region224
      $region223: #{_lambda_.1} parent=5 // pred_region
        %s1420 = ssub.s32 %s111, 1
        // Predicated region
        $region225: #{_lambda_.1} parent=223 // pred_check
          %p1421 = pneg %p179
        $region226: #{_lambda_.1} parent=223 // pred_check_branch
          %1423 = sbr.rel (%p1421) target = $region228
        $region227: #{_lambda_.1} parent=223 // pred_region
          %1424 = dma.done [#allocation8], 16
        $region228: #{_lambda_.1} parent=223 // pred_fallthru
          _
        // Predicated region
        $region229: #{_lambda_.1} parent=223 // pred_check
          %p1425 = pneg %p242
        $region230: #{_lambda_.1} parent=223 // pred_check_branch
          %1427 = sbr.rel (%p1425) target = $region232
        $region231: #{_lambda_.1} parent=223 // pred_region
          %1428 = dma.done [#allocation10], 16
        $region232: #{_lambda_.1} parent=223 // pred_fallthru
          _
        // Predicated region
        $region233: #{_lambda_.1} parent=223 // pred_check
          %p1429 = pneg %p305
        $region234: #{_lambda_.1} parent=223 // pred_check_branch
          %1431 = sbr.rel (%p1429) target = $region236
        $region235: #{_lambda_.1} parent=223 // pred_region
          %1432 = dma.done [#allocation10], 16
        $region236: #{_lambda_.1} parent=223 // pred_fallthru
          _
        %p1433 = scmp.lt.s32.totalorder %s116, 1
        %s1434 = scalar_select %p1433, %s116, 1
        %s1435 = smul.addr %s1434, 13
        %s1436 = smul.addr %s1435, 4
        %s1437 = scalar_lea.vmem %s1, %s1436
        %p1438 = pneg %p137
        %p1439 = pneg %p134
        %p1440 = pneg %p158
        %p1441 = pneg %p155
        %p1442 = pneg %p179
        %p1443 = pneg %p176
        %p1444 = pneg %p200
        %p1445 = pneg %p197
        %p1446 = pneg %p221
        %p1447 = pneg %p218
        %p1448 = pneg %p242
        %p1449 = pneg %p239
        %p1450 = pneg %p263
        %p1451 = pneg %p260
        %p1452 = pneg %p284
        %p1453 = pneg %p281
        %p1454 = pneg %p305
        %p1455 = pneg %p302
        %p1456 = pneg %p326
        %p1457 = pneg %p323
        %p1458 = pneg %p347
        %p1459 = pneg %p344
        %p1460 = pneg %p368
        %p1461 = pneg %p365
        %p1462 = pneg %p389
        %p1463 = pneg %p386
        %p1464 = pneg %p410
        %p1465 = pneg %p407
        %p1466 = pneg %p431
        %p1467 = pneg %p428
        %p1468 = pneg %p452
        %p1469 = pneg %p449
        %p1470 = pneg %p473
        %p1471 = pneg %p470
        %p1472 = pneg %p494
        %p1473 = pneg %p491
        %p1474 = pneg %p515
        %p1475 = pneg %p512
        %p1476 = pneg %p536
        %p1477 = pneg %p533
        %p1478 = pneg %p557
        %p1479 = pneg %p554
        %p1480 = pneg %p578
        %p1481 = pneg %p575
        %p1482 = pneg %p599
        %p1483 = pneg %p596
        %p1484 = pneg %p620
        %p1485 = pneg %p617
        %p1486 = pneg %p641
        %p1487 = pneg %p638
        %p1488 = pneg %p662
        %p1489 = pneg %p659
        %p1490 = pneg %p683
        %p1491 = pneg %p680
        %p1492 = pneg %p704
        %p1493 = pneg %p701
        %p1494 = pneg %p725
        %p1495 = pneg %p722
        %p1496 = pneg %p746
        %p1497 = pneg %p743
        %p1498 = pneg %p767
        %p1499 = pneg %p764
        %p1500 = pneg %p788
        %p1501 = pneg %p785
        %p1502 = pneg %p809
        %p1503 = pneg %p806
        %p1504 = pneg %p830
        %p1505 = pneg %p827
        %p1506 = pneg %p851
        %p1507 = pneg %p848
        %p1508 = pneg %p872
        %p1509 = pneg %p869
        %p1510 = pneg %p893
        %p1511 = pneg %p890
        %p1512 = pneg %p914
        %p1513 = pneg %p911
        %p1514 = pneg %p935
        %p1515 = pneg %p932
        %p1516 = pneg %p956
        %p1517 = pneg %p953
        %p1518 = pneg %p977
        %p1519 = pneg %p974
        %p1520 = pneg %p998
        %p1521 = pneg %p995
        %p1522 = pneg %p1019
        %p1523 = pneg %p1016
        %p1524 = pneg %p1040
        %p1525 = pneg %p1037
        %p1526 = pneg %p1061
        %p1527 = pneg %p1058
        %p1528 = pneg %p1082
        %p1529 = pneg %p1079
        %p1530 = pneg %p1103
        %p1531 = pneg %p1100
        %p1532 = pneg %p1124
        %p1533 = pneg %p1121
        %p1534 = pneg %p1145
        %p1535 = pneg %p1142
        %p1536 = pneg %p1166
        %p1537 = pneg %p1163
        %p1538 = pneg %p1187
        %p1539 = pneg %p1184
        %p1540 = pneg %p1213
        %p1541 = pneg %p1210
        %p1542 = scmp.lt.s32.totalorder %s116, 1
        %s1543 = scalar_select %p1542, %s116, 1
        %s1544 = smul.addr %s1543, 8
        %s1545 = scalar_lea.vmem %s103, %s1544
        %p1546 = scmp.lt.s32.totalorder %s116, 1
        %s1547 = scalar_select %p1546, %s116, 1
        %s1548 = smul.addr %s1547, 13
        %s1549 = smul.addr %s1548, 4
        %s1550 = scalar_lea.vmem %s1, %s1549
        %p1551 = scmp.lt.s32.totalorder %s116, 1
        %s1552 = scalar_select %p1551, %s116, 1
        %s1553 = smul.addr %s1552, 8
        %s1554 = scalar_lea.vmem %s103, %s1553
        %v1556 = vld [vmem:[%s1550] sm:$0xf]
        %v1557 = vld [vmem:[%s1550 + $0x4] sm:$0xf]
        %v1558 = vld [vmem:[%s1550 + $0x8] sm:$0xf]
        %v1559 = vld [vmem:[%s1550 + $0xc] sm:$0xf]
        %v1560 = vld [vmem:[%s1550 + $0x10] sm:$0xf]
        %v1561 = vld [vmem:[%s1550 + $0x14] sm:$0xf]
        %v1562 = vld [vmem:[%s1550 + $0x18] sm:$0xf]
        %v1563 = vld [vmem:[%s1550 + $0x1c] sm:$0xf]
        %v1564 = vld [vmem:[%s1550 + $0x20] sm:$0xf]
        %v1565 = vld [vmem:[%s1550 + $0x24] sm:$0xf]
        %v1566 = vld [vmem:[%s1550 + $0x28] sm:$0xf]
        %v1567 = vld [vmem:[%s1550 + $0x2c] sm:$0xf]
        %v1568 = vld [vmem:[%s1550 + $0x30] sm:$0x3]
        %v1569 = vld [vmem:[%s3] sm:$0xf]
        %v1570 = vld [vmem:[%s3 + $0x4] sm:$0xf]
        %v1571 = vld [vmem:[%s3 + $0x8] sm:$0xf]
        %v1572 = vld [vmem:[%s3 + $0xc] sm:$0xf]
        %v1573 = vld [vmem:[%s3 + $0x10] sm:$0xf]
        %v1574 = vld [vmem:[%s3 + $0x14] sm:$0xf]
        %v1575 = vld [vmem:[%s3 + $0x18] sm:$0xf]
        %v1576 = vld [vmem:[%s3 + $0x1c] sm:$0xf]
        %v1577 = vld [vmem:[%s3 + $0x20] sm:$0xf]
        %v1578 = vld [vmem:[%s3 + $0x24] sm:$0xf]
        %v1579 = vld [vmem:[%s3 + $0x28] sm:$0xf]
        %v1580 = vld [vmem:[%s3 + $0x2c] sm:$0xf]
        %v1581 = vld [vmem:[%s3 + $0x30] sm:$0xf]
        %v1582 = vld [vmem:[%s3 + $0x34] sm:$0xf]
        %v1583 = vld [vmem:[%s3 + $0x38] sm:$0xf]
        %v1584 = vld [vmem:[%s3 + $0x3c] sm:$0xf]
        %v1585 = vld [vmem:[#allocation7] sm:$0x1]
        %v1587 = vlaneseq
        %v1588 = vshrl.u32 %v1587, 7
        %v1589 = vsub.s32 0, %v1588
        %v1590 = vrot.slane %v1585, %v1589
        %v1605 = vunpack.c.l.b16 %v1556
        %v1606 = vunpack.c.l.b16 %v1557
        %v1607 = vunpack.c.l.b16 %v1558
        %v1608 = vunpack.c.l.b16 %v1559
        %v1609 = vunpack.c.l.b16 %v1560
        %v1610 = vunpack.c.l.b16 %v1561
        %v1611 = vunpack.c.l.b16 %v1562
        %v1612 = vunpack.c.l.b16 %v1563
        %v1613 = vunpack.c.l.b16 %v1564
        %v1614 = vunpack.c.l.b16 %v1565
        %v1615 = vunpack.c.l.b16 %v1566
        %v1616 = vunpack.c.l.b16 %v1567
        %v1617 = vunpack.c.l.b16 %v1568
        %v1618 = vpack.c.b16 %v1606, %v1605
        %v1619 = vpack.c.b16 %v1608, %v1607
        %v1620 = vpack.c.b16 %v1610, %v1609
        %v1621 = vpack.c.b16 %v1612, %v1611
        %v1622 = vpack.c.b16 %v1614, %v1613
        %v1623 = vpack.c.b16 %v1616, %v1615
        %v1624 = vpack.c.b16 %v1617, %v1617
        %v1648 = vunpack.c.l.b16 %v1569
        %v1649 = vunpack.c.l.b16 %v1570
        %v1650 = vunpack.c.l.b16 %v1571
        %v1651 = vunpack.c.l.b16 %v1572
        %v1652 = vunpack.c.l.b16 %v1573
        %v1653 = vunpack.c.l.b16 %v1574
        %v1654 = vunpack.c.l.b16 %v1575
        %v1655 = vunpack.c.l.b16 %v1576
        %v1656 = vunpack.c.l.b16 %v1577
        %v1657 = vunpack.c.l.b16 %v1578
        %v1658 = vunpack.c.l.b16 %v1579
        %v1659 = vunpack.c.l.b16 %v1580
        %v1660 = vunpack.c.l.b16 %v1581
        %v1661 = vunpack.c.l.b16 %v1582
        %v1662 = vunpack.c.l.b16 %v1583
        %v1663 = vunpack.c.l.b16 %v1584
        %v1664 = vpack.c.b16 %v1649, %v1648
        %v1665 = vpack.c.b16 %v1651, %v1650
        %v1666 = vpack.c.b16 %v1653, %v1652
        %v1667 = vpack.c.b16 %v1655, %v1654
        %v1668 = vpack.c.b16 %v1657, %v1656
        %v1669 = vpack.c.b16 %v1659, %v1658
        %v1670 = vpack.c.b16 %v1661, %v1660
        %v1671 = vpack.c.b16 %v1663, %v1662
        %1680 = vmatprep.subr.bf16.mxu0 0
        %1681 = vmatpush1.bf16.msra.mxu0 %v1671
        %1682 = vmatprep.subr.bf16.mxu0 0
        %1683 = vmatpush1.bf16.msra.mxu0 %v1670
        %1684 = vmatprep.subr.bf16.mxu0 0
        %1685 = vmatpush1.bf16.msra.mxu0 %v1669
        %1686 = vmatprep.subr.bf16.mxu0 0
        %1687 = vmatpush1.bf16.msra.mxu0 %v1668
        %1688 = vmatprep.subr.bf16.mxu0 0
        %1689 = vmatpush1.bf16.msra.mxu0 %v1667
        %1690 = vmatprep.subr.bf16.mxu0 0
        %1691 = vmatpush1.bf16.msra.mxu0 %v1666
        %1692 = vmatprep.subr.bf16.mxu0 0
        %1693 = vmatpush1.bf16.msra.mxu0 %v1665
        %1694 = vmatprep.subr.bf16.mxu0 0
        %1695 = vmatpush1.bf16.msra.mxu0 %v1664
        %1696 = vmatprep.subr.bf16.mxu0 0
        %1697 = vmatpush2.bf16.msra.mxu0 0
        %1698 = vmatprep.subr.bf16.mxu0 0
        %1699 = vmatpush2.bf16.msra.mxu0 0
        %1700 = vmatprep.subr.bf16.mxu0 0
        %1701 = vmatpush2.bf16.msra.mxu0 0
        %1702 = vmatprep.subr.bf16.mxu0 0
        %1703 = vmatpush2.bf16.msra.mxu0 0
        %1704 = vmatprep.subr.bf16.mxu0 0
        %1705 = vmatpush2.bf16.msra.mxu0 0
        %1706 = vmatprep.subr.bf16.mxu0 0
        %1707 = vmatpush2.bf16.msra.mxu0 0
        %1708 = vmatprep.subr.bf16.mxu0 0
        %1709 = vmatpush2.bf16.msra.mxu0 0
        %1710 = vmatprep.subr.bf16.mxu0 0
        %1711 = vmatpush2.bf16.msra.mxu0 0
        %1712 = vmatprep.mubr.bf16.mxu0 0
        %1713 = vmatmul.mubr.bf16.gmra.mxu0 %v1618
        %v1714 = vpop.f32.mrf.mxu0
        %v1715 = vadd.f32 %v1590, %v1714
        %v1716 = vpop.f32.mrf.mxu0
        %v1717 = vpop.f32.mrf.mxu0
        %v1718 = vadd.f32 %v1590, %v1717
        %v1719 = vpop.f32.mrf.mxu0
        %1720 = vmatprep.mubr.bf16.mxu0 0
        %1721 = vmatmul.mubr.bf16.gmra.mxu0 %v1619
        %v1722 = vpop.f32.mrf.mxu0
        %v1723 = vadd.f32 %v1590, %v1722
        %v1724 = vpop.f32.mrf.mxu0
        %v1725 = vpop.f32.mrf.mxu0
        %v1726 = vadd.f32 %v1590, %v1725
        %v1727 = vpop.f32.mrf.mxu0
        %1728 = vmatprep.mubr.bf16.mxu0 0
        %1729 = vmatmul.mubr.bf16.gmra.mxu0 %v1620
        %v1730 = vpop.f32.mrf.mxu0
        %v1731 = vadd.f32 %v1590, %v1730
        %v1732 = vpop.f32.mrf.mxu0
        %v1733 = vpop.f32.mrf.mxu0
        %v1734 = vadd.f32 %v1590, %v1733
        %v1735 = vpop.f32.mrf.mxu0
        %1736 = vmatprep.mubr.bf16.mxu0 0
        %1737 = vmatmul.mubr.bf16.gmra.mxu0 %v1621
        %v1738 = vpop.f32.mrf.mxu0
        %v1739 = vadd.f32 %v1590, %v1738
        %v1740 = vpop.f32.mrf.mxu0
        %v1741 = vpop.f32.mrf.mxu0
        %v1742 = vadd.f32 %v1590, %v1741
        %v1743 = vpop.f32.mrf.mxu0
        %1744 = vmatprep.mubr.bf16.mxu0 0
        %1745 = vmatmul.mubr.bf16.gmra.mxu0 %v1622
        %v1746 = vpop.f32.mrf.mxu0
        %v1747 = vadd.f32 %v1590, %v1746
        %v1748 = vpop.f32.mrf.mxu0
        %v1749 = vpop.f32.mrf.mxu0
        %v1750 = vadd.f32 %v1590, %v1749
        %v1751 = vpop.f32.mrf.mxu0
        %1752 = vmatprep.mubr.bf16.mxu0 0
        %1753 = vmatmul.mubr.bf16.gmra.mxu0 %v1623
        %v1754 = vpop.f32.mrf.mxu0
        %v1755 = vadd.f32 %v1590, %v1754
        %v1756 = vpop.f32.mrf.mxu0
        %v1757 = vpop.f32.mrf.mxu0
        %v1758 = vadd.f32 %v1590, %v1757
        %v1759 = vpop.f32.mrf.mxu0
        %1760 = vmatprep.mubr.bf16.mxu0 0
        %1761 = vmatmul.mubr.bf16.gmra.mxu0 %v1624
        %v1762 = vpop.f32.mrf.mxu0
        %v1763 = vadd.f32 %v1590, %v1762
        %v1764 = vpop.f32.mrf.mxu0
        %v1765 = vpop.f32.mrf.mxu0
        %v1766 = vpop.f32.mrf.mxu0
        %1767 = vdwg.mxu0
        %v1768 = vmax.f32 %v1715, 0.0
        %v1769 = vmax.f32 %v1718, 0.0
        %v1770 = vmax.f32 %v1723, 0.0
        %v1771 = vmax.f32 %v1726, 0.0
        %v1772 = vmax.f32 %v1731, 0.0
        %v1773 = vmax.f32 %v1734, 0.0
        %v1774 = vmax.f32 %v1739, 0.0
        %v1775 = vmax.f32 %v1742, 0.0
        %v1776 = vmax.f32 %v1747, 0.0
        %v1777 = vmax.f32 %v1750, 0.0
        %v1778 = vmax.f32 %v1755, 0.0
        %v1779 = vmax.f32 %v1758, 0.0
        %v1780 = vmax.f32 %v1763, 0.0
        %v1781 = vmin.f32 %v1768, 6.0
        %v1782 = vmin.f32 %v1769, 6.0
        %v1783 = vmin.f32 %v1770, 6.0
        %v1784 = vmin.f32 %v1771, 6.0
        %v1785 = vmin.f32 %v1772, 6.0
        %v1786 = vmin.f32 %v1773, 6.0
        %v1787 = vmin.f32 %v1774, 6.0
        %v1788 = vmin.f32 %v1775, 6.0
        %v1789 = vmin.f32 %v1776, 6.0
        %v1790 = vmin.f32 %v1777, 6.0
        %v1791 = vmin.f32 %v1778, 6.0
        %v1792 = vmin.f32 %v1779, 6.0
        %v1793 = vmin.f32 %v1780, 6.0
        %v1794 = vld [vmem:[%s7] sm:$0xff]
        %v1795 = vld [vmem:[%s7 + $0x8] sm:$0xff]
        %v1796 = vld [vmem:[%s7 + $0x10] sm:$0xff]
        %v1797 = vld [vmem:[%s7 + $0x18] sm:$0xff]
        %v1798 = vld [vmem:[%s7 + $0x20] sm:$0xff]
        %v1799 = vld [vmem:[%s7 + $0x28] sm:$0xff]
        %v1800 = vld [vmem:[%s7 + $0x30] sm:$0xff]
        %v1801 = vld [vmem:[%s7 + $0x38] sm:$0xff]
        %v1802 = vld [vmem:[%s7 + $0x40] sm:$0xff]
        %v1803 = vld [vmem:[%s7 + $0x48] sm:$0xff]
        %v1804 = vld [vmem:[%s7 + $0x50] sm:$0xff]
        %v1805 = vld [vmem:[%s7 + $0x58] sm:$0xff]
        %v1806 = vld [vmem:[%s7 + $0x60] sm:$0xf]
        %1808 = vset.pattern.permute.xlu0 0
        %1809 = vperm.xlu0 %1808, %v1794
        %v1810 = vpop.permute.xlu0 %1809
        %1813 = vset.pattern.permute.xlu0 0
        %1814 = vperm.xlu0 %1813, %v1795
        %v1815 = vpop.permute.xlu0 %1814
        %1818 = vset.pattern.permute.xlu0 0
        %1819 = vperm.xlu0 %1818, %v1796
        %v1820 = vpop.permute.xlu0 %1819
        %1823 = vset.pattern.permute.xlu0 0
        %1824 = vperm.xlu0 %1823, %v1797
        %v1825 = vpop.permute.xlu0 %1824
        %1828 = vset.pattern.permute.xlu0 0
        %1829 = vperm.xlu0 %1828, %v1798
        %v1830 = vpop.permute.xlu0 %1829
        %1833 = vset.pattern.permute.xlu0 0
        %1834 = vperm.xlu0 %1833, %v1799
        %v1835 = vpop.permute.xlu0 %1834
        %1838 = vset.pattern.permute.xlu0 0
        %1839 = vperm.xlu0 %1838, %v1800
        %v1840 = vpop.permute.xlu0 %1839
        %1843 = vset.pattern.permute.xlu0 0
        %1844 = vperm.xlu0 %1843, %v1801
        %v1845 = vpop.permute.xlu0 %1844
        %1848 = vset.pattern.permute.xlu0 0
        %1849 = vperm.xlu0 %1848, %v1802
        %v1850 = vpop.permute.xlu0 %1849
        %1853 = vset.pattern.permute.xlu0 0
        %1854 = vperm.xlu0 %1853, %v1803
        %v1855 = vpop.permute.xlu0 %1854
        %1858 = vset.pattern.permute.xlu0 0
        %1859 = vperm.xlu0 %1858, %v1804
        %v1860 = vpop.permute.xlu0 %1859
        %1863 = vset.pattern.permute.xlu0 0
        %1864 = vperm.xlu0 %1863, %v1805
        %v1865 = vpop.permute.xlu0 %1864
        %1868 = vset.pattern.permute.xlu0 0
        %1869 = vperm.xlu0 %1868, %v1806
        %v1870 = vpop.permute.xlu0 %1869
        %v1872 = vmul.f32 %v1781, %v1810
        %v1873 = vmul.f32 %v1782, %v1815
        %v1874 = vmul.f32 %v1783, %v1820
        %v1875 = vmul.f32 %v1784, %v1825
        %v1876 = vmul.f32 %v1785, %v1830
        %v1877 = vmul.f32 %v1786, %v1835
        %v1878 = vmul.f32 %v1787, %v1840
        %v1879 = vmul.f32 %v1788, %v1845
        %v1880 = vmul.f32 %v1789, %v1850
        %v1881 = vmul.f32 %v1790, %v1855
        %v1882 = vmul.f32 %v1791, %v1860
        %v1883 = vmul.f32 %v1792, %v1865
        %v1884 = vmul.f32 %v1793, %v1870
        %v1885 = vpack.c.bf16 %v1873, %v1872
        %v1886 = vpack.c.bf16 %v1875, %v1874
        %v1887 = vpack.c.bf16 %v1877, %v1876
        %v1888 = vpack.c.bf16 %v1879, %v1878
        %v1889 = vpack.c.bf16 %v1881, %v1880
        %v1890 = vpack.c.bf16 %v1883, %v1882
        %v1891 = vpack.c.bf16 %v1884, %v1884
        %v1899 = vunpack.c.l.b16 %v1885
        %v1900 = vunpack.c.h.b16 %v1885
        %v1901 = vunpack.c.l.b16 %v1886
        %v1902 = vunpack.c.h.b16 %v1886
        %v1903 = vunpack.c.l.b16 %v1887
        %v1904 = vunpack.c.h.b16 %v1887
        %v1905 = vunpack.c.l.b16 %v1888
        %v1906 = vunpack.c.h.b16 %v1888
        %v1907 = vunpack.c.l.b16 %v1889
        %v1908 = vunpack.c.h.b16 %v1889
        %v1909 = vunpack.c.l.b16 %v1890
        %v1910 = vunpack.c.h.b16 %v1890
        %v1911 = vunpack.c.l.b16 %v1891
        %v1912 = vpack.c.b16 %v1899, %v1899
        %v1913 = vpack.c.b16 %v1900, %v1900
        %v1914 = vpack.c.b16 %v1901, %v1901
        %v1915 = vpack.c.b16 %v1902, %v1902
        %v1916 = vpack.c.b16 %v1903, %v1903
        %v1917 = vpack.c.b16 %v1904, %v1904
        %v1918 = vpack.c.b16 %v1905, %v1905
        %v1919 = vpack.c.b16 %v1906, %v1906
        %v1920 = vpack.c.b16 %v1907, %v1907
        %v1921 = vpack.c.b16 %v1908, %v1908
        %v1922 = vpack.c.b16 %v1909, %v1909
        %v1923 = vpack.c.b16 %v1910, %v1910
        %v1924 = vpack.c.b16 %v1911, %v1911
        %1938 = vst [vmem:[#allocation2] sm:$0xf] %v1912
        %1939 = vst [vmem:[#allocation2 + $0x4] sm:$0xf] %v1913
        %1940 = vst [vmem:[#allocation2 + $0x8] sm:$0xf] %v1914
        %1941 = vst [vmem:[#allocation2 + $0xc] sm:$0xf] %v1915
        %1942 = vst [vmem:[#allocation2 + $0x10] sm:$0xf] %v1916
        %1943 = vst [vmem:[#allocation2 + $0x14] sm:$0xf] %v1917
        %1944 = vst [vmem:[#allocation2 + $0x18] sm:$0xf] %v1918
        %1945 = vst [vmem:[#allocation2 + $0x1c] sm:$0xf] %v1919
        %1946 = vst [vmem:[#allocation2 + $0x20] sm:$0xf] %v1920
        %1947 = vst [vmem:[#allocation2 + $0x24] sm:$0xf] %v1921
        %1948 = vst [vmem:[#allocation2 + $0x28] sm:$0xf] %v1922
        %1949 = vst [vmem:[#allocation2 + $0x2c] sm:$0xf] %v1923
        %1950 = vst [vmem:[#allocation2 + $0x30] sm:$0x3] %v1924
        %v1951 = vld [vmem:[#allocation2] sm:$0xf]
        %v1952 = vld [vmem:[#allocation2 + $0x4] sm:$0xf]
        %v1953 = vld [vmem:[#allocation2 + $0x8] sm:$0xf]
        %v1954 = vld [vmem:[#allocation2 + $0xc] sm:$0xf]
        %v1955 = vld [vmem:[#allocation2 + $0x10] sm:$0xf]
        %v1956 = vld [vmem:[#allocation2 + $0x14] sm:$0xf]
        %v1957 = vld [vmem:[#allocation2 + $0x18] sm:$0xf]
        %v1958 = vld [vmem:[#allocation2 + $0x1c] sm:$0xf]
        %v1959 = vld [vmem:[#allocation2 + $0x20] sm:$0xf]
        %v1960 = vld [vmem:[#allocation2 + $0x24] sm:$0x7]
        %v1961 = vunpack.c.l.bf16 %v1951
        %v1962 = vunpack.c.l.bf16 %v1952
        %v1963 = vunpack.c.l.bf16 %v1953
        %v1964 = vunpack.c.l.bf16 %v1954
        %v1965 = vunpack.c.l.bf16 %v1955
        %v1966 = vunpack.c.l.bf16 %v1956
        %v1967 = vunpack.c.l.bf16 %v1957
        %v1968 = vunpack.c.l.bf16 %v1958
        %v1969 = vunpack.c.l.bf16 %v1959
        %v1970 = vunpack.c.l.bf16 %v1960
        %v1971 = vld [vmem:[%s9] sm:$0x1]
        %v1973 = vlaneseq
        %v1974 = vshrl.u32 %v1973, 7
        %v1975 = vsub.s32 0, %v1974
        %v1976 = vrot.slane %v1971, %v1975
        %v1978 = vmul.f32 %v1961, %v1976
        %v1979 = vmul.f32 %v1962, %v1976
        %v1980 = vmul.f32 %v1963, %v1976
        %v1981 = vmul.f32 %v1964, %v1976
        %v1982 = vmul.f32 %v1965, %v1976
        %v1983 = vmul.f32 %v1966, %v1976
        %v1984 = vmul.f32 %v1967, %v1976
        %v1985 = vmul.f32 %v1968, %v1976
        %v1986 = vmul.f32 %v1969, %v1976
        %v1987 = vmul.f32 %v1970, %v1976
        %v1988 = vadd.f32 %v1978, 0.0
        %v1989 = vadd.f32 %v1979, 0.0
        %v1990 = vadd.f32 %v1980, 0.0
        %v1991 = vadd.f32 %v1981, 0.0
        %v1992 = vadd.f32 %v1982, 0.0
        %v1993 = vadd.f32 %v1983, 0.0
        %v1994 = vadd.f32 %v1984, 0.0
        %v1995 = vadd.f32 %v1985, 0.0
        %v1996 = vadd.f32 %v1986, 0.0
        %v1997 = vadd.f32 %v1987, 0.0
        %v1998 = vld [vmem:[#allocation2 + $0x24] sm:$0xf]
        %v1999 = vunpack.c.l.bf16 %v1998
        %s2000 = scalar_lea.vmem %s9, 1
        %v2001 = vld [vmem:[%s2000] sm:$0x1]
        %v2003 = vlaneseq
        %v2004 = vshrl.u32 %v2003, 7
        %v2005 = vsub.s32 0, %v2004
        %v2006 = vrot.slane %v2001, %v2005
        %v2008 = vmul.f32 %v1961, %v2006
        %v2009 = vmul.f32 %v1962, %v2006
        %v2010 = vmul.f32 %v1963, %v2006
        %v2011 = vmul.f32 %v1964, %v2006
        %v2012 = vmul.f32 %v1965, %v2006
        %v2013 = vmul.f32 %v1966, %v2006
        %v2014 = vmul.f32 %v1967, %v2006
        %v2015 = vmul.f32 %v1968, %v2006
        %v2016 = vmul.f32 %v1969, %v2006
        %v2017 = vmul.f32 %v1999, %v2006
        %vm2028 = vcmask 1046528
        %v2029 = vrot.slane %v2008, 1
        %v2030 = vrot.slane %v2009, 1
        %v2031 = vsel %vm2028, %v2029, %v2030
        %v2032 = vrot.slane %v2010, 1
        %v2033 = vsel %vm2028, %v2030, %v2032
        %v2034 = vrot.slane %v2011, 1
        %v2035 = vsel %vm2028, %v2032, %v2034
        %v2036 = vrot.slane %v2012, 1
        %v2037 = vsel %vm2028, %v2034, %v2036
        %v2038 = vrot.slane %v2013, 1
        %v2039 = vsel %vm2028, %v2036, %v2038
        %v2040 = vrot.slane %v2014, 1
        %v2041 = vsel %vm2028, %v2038, %v2040
        %v2042 = vrot.slane %v2015, 1
        %v2043 = vsel %vm2028, %v2040, %v2042
        %v2044 = vrot.slane %v2016, 1
        %v2045 = vsel %vm2028, %v2042, %v2044
        %v2046 = vrot.slane %v2017, 1
        %v2047 = vsel %vm2028, %v2044, %v2046
        %v2058 = vadd.f32 %v1988, %v2031
        %v2059 = vadd.f32 %v1989, %v2033
        %v2060 = vadd.f32 %v1990, %v2035
        %v2061 = vadd.f32 %v1991, %v2037
        %v2062 = vadd.f32 %v1992, %v2039
        %v2063 = vadd.f32 %v1993, %v2041
        %v2064 = vadd.f32 %v1994, %v2043
        %v2065 = vadd.f32 %v1995, %v2045
        %v2066 = vadd.f32 %v1996, %v2047
        %v2067 = vadd.f32 %v1997, %v2046
        %v2068 = vld [vmem:[#allocation2] sm:$0xe]
        %v2069 = vunpack.c.l.bf16 %v2068
        %s2070 = scalar_lea.vmem %s9, 2
        %v2071 = vld [vmem:[%s2070] sm:$0x1]
        %v2073 = vlaneseq
        %v2074 = vshrl.u32 %v2073, 7
        %v2075 = vsub.s32 0, %v2074
        %v2076 = vrot.slane %v2071, %v2075
        %v2078 = vmul.f32 %v2069, %v2076
        %v2079 = vmul.f32 %v1962, %v2076
        %v2080 = vmul.f32 %v1963, %v2076
        %v2081 = vmul.f32 %v1964, %v2076
        %v2082 = vmul.f32 %v1965, %v2076
        %v2083 = vmul.f32 %v1966, %v2076
        %v2084 = vmul.f32 %v1967, %v2076
        %v2085 = vmul.f32 %v1968, %v2076
        %v2086 = vmul.f32 %v1969, %v2076
        %v2087 = vmul.f32 %v1999, %v2076
        %vm2098 = vcmask 1045504
        %v2099 = vrot.slane %v2078, 2
        %v2100 = vrot.slane %v2079, 2
        %v2101 = vsel %vm2098, %v2099, %v2100
        %v2102 = vrot.slane %v2080, 2
        %v2103 = vsel %vm2098, %v2100, %v2102
        %v2104 = vrot.slane %v2081, 2
        %v2105 = vsel %vm2098, %v2102, %v2104
        %v2106 = vrot.slane %v2082, 2
        %v2107 = vsel %vm2098, %v2104, %v2106
        %v2108 = vrot.slane %v2083, 2
        %v2109 = vsel %vm2098, %v2106, %v2108
        %v2110 = vrot.slane %v2084, 2
        %v2111 = vsel %vm2098, %v2108, %v2110
        %v2112 = vrot.slane %v2085, 2
        %v2113 = vsel %vm2098, %v2110, %v2112
        %v2114 = vrot.slane %v2086, 2
        %v2115 = vsel %vm2098, %v2112, %v2114
        %v2116 = vrot.slane %v2087, 2
        %v2117 = vsel %vm2098, %v2114, %v2116
        %v2128 = vadd.f32 %v2058, %v2101
        %v2129 = vadd.f32 %v2059, %v2103
        %v2130 = vadd.f32 %v2060, %v2105
        %v2131 = vadd.f32 %v2061, %v2107
        %v2132 = vadd.f32 %v2062, %v2109
        %v2133 = vadd.f32 %v2063, %v2111
        %v2134 = vadd.f32 %v2064, %v2113
        %v2135 = vadd.f32 %v2065, %v2115
        %v2136 = vadd.f32 %v2066, %v2117
        %v2137 = vadd.f32 %v2067, %v2116
        %v2138 = vld [vmem:[#allocation2 + $0x4] sm:$0xe]
        %v2139 = vld [vmem:[#allocation2 + $0x28] sm:$0xf]
        %v2140 = vunpack.c.l.bf16 %v2138
        %v2141 = vunpack.c.l.bf16 %v2139
        %s2142 = scalar_lea.vmem %s9, 3
        %v2143 = vld [vmem:[%s2142] sm:$0x1]
        %v2145 = vlaneseq
        %v2146 = vshrl.u32 %v2145, 7
        %v2147 = vsub.s32 0, %v2146
        %v2148 = vrot.slane %v2143, %v2147
        %v2150 = vmul.f32 %v2140, %v2148
        %v2151 = vmul.f32 %v1963, %v2148
        %v2152 = vmul.f32 %v1964, %v2148
        %v2153 = vmul.f32 %v1965, %v2148
        %v2154 = vmul.f32 %v1966, %v2148
        %v2155 = vmul.f32 %v1967, %v2148
        %v2156 = vmul.f32 %v1968, %v2148
        %v2157 = vmul.f32 %v1969, %v2148
        %v2158 = vmul.f32 %v1999, %v2148
        %v2159 = vmul.f32 %v2141, %v2148
        %v2170 = vrot.slane %v2150, 2
        %v2171 = vrot.slane %v2151, 2
        %v2172 = vsel %vm2098, %v2170, %v2171
        %v2173 = vrot.slane %v2152, 2
        %v2174 = vsel %vm2098, %v2171, %v2173
        %v2175 = vrot.slane %v2153, 2
        %v2176 = vsel %vm2098, %v2173, %v2175
        %v2177 = vrot.slane %v2154, 2
        %v2178 = vsel %vm2098, %v2175, %v2177
        %v2179 = vrot.slane %v2155, 2
        %v2180 = vsel %vm2098, %v2177, %v2179
        %v2181 = vrot.slane %v2156, 2
        %v2182 = vsel %vm2098, %v2179, %v2181
        %v2183 = vrot.slane %v2157, 2
        %v2184 = vsel %vm2098, %v2181, %v2183
        %v2185 = vrot.slane %v2158, 2
        %v2186 = vsel %vm2098, %v2183, %v2185
        %v2187 = vrot.slane %v2159, 2
        %v2188 = vsel %vm2098, %v2185, %v2187
        %v2199 = vadd.f32 %v2128, %v2172
        %v2200 = vadd.f32 %v2129, %v2174
        %v2201 = vadd.f32 %v2130, %v2176
        %v2202 = vadd.f32 %v2131, %v2178
        %v2203 = vadd.f32 %v2132, %v2180
        %v2204 = vadd.f32 %v2133, %v2182
        %v2205 = vadd.f32 %v2134, %v2184
        %v2206 = vadd.f32 %v2135, %v2186
        %v2207 = vadd.f32 %v2136, %v2188
        %v2208 = vadd.f32 %v2137, %v2187
        %v2209 = vld [vmem:[#allocation2 + $0x2c] sm:$0x1]
        %v2210 = vunpack.c.l.bf16 %v2209
        %s2211 = scalar_lea.vmem %s9, 4
        %v2212 = vld [vmem:[%s2211] sm:$0x1]
        %v2214 = vlaneseq
        %v2215 = vshrl.u32 %v2214, 7
        %v2216 = vsub.s32 0, %v2215
        %v2217 = vrot.slane %v2212, %v2216
        %v2219 = vmul.f32 %v2140, %v2217
        %v2220 = vmul.f32 %v1963, %v2217
        %v2221 = vmul.f32 %v1964, %v2217
        %v2222 = vmul.f32 %v1965, %v2217
        %v2223 = vmul.f32 %v1966, %v2217
        %v2224 = vmul.f32 %v1967, %v2217
        %v2225 = vmul.f32 %v1968, %v2217
        %v2226 = vmul.f32 %v1969, %v2217
        %v2227 = vmul.f32 %v1999, %v2217
        %v2228 = vmul.f32 %v2141, %v2217
        %v2229 = vmul.f32 %v2210, %v2217
        %vm2241 = vcmask 1044480
        %v2242 = vrot.slane %v2219, 3
        %v2243 = vrot.slane %v2220, 3
        %v2244 = vsel %vm2241, %v2242, %v2243
        %v2245 = vrot.slane %v2221, 3
        %v2246 = vsel %vm2241, %v2243, %v2245
        %v2247 = vrot.slane %v2222, 3
        %v2248 = vsel %vm2241, %v2245, %v2247
        %v2249 = vrot.slane %v2223, 3
        %v2250 = vsel %vm2241, %v2247, %v2249
        %v2251 = vrot.slane %v2224, 3
        %v2252 = vsel %vm2241, %v2249, %v2251
        %v2253 = vrot.slane %v2225, 3
        %v2254 = vsel %vm2241, %v2251, %v2253
        %v2255 = vrot.slane %v2226, 3
        %v2256 = vsel %vm2241, %v2253, %v2255
        %v2257 = vrot.slane %v2227, 3
        %v2258 = vsel %vm2241, %v2255, %v2257
        %v2259 = vrot.slane %v2228, 3
        %v2260 = vsel %vm2241, %v2257, %v2259
        %v2261 = vrot.slane %v2229, 3
        %v2262 = vsel %vm2241, %v2259, %v2261
        %v2273 = vadd.f32 %v2199, %v2244
        %v2274 = vadd.f32 %v2200, %v2246
        %v2275 = vadd.f32 %v2201, %v2248
        %v2276 = vadd.f32 %v2202, %v2250
        %v2277 = vadd.f32 %v2203, %v2252
        %v2278 = vadd.f32 %v2204, %v2254
        %v2279 = vadd.f32 %v2205, %v2256
        %v2280 = vadd.f32 %v2206, %v2258
        %v2281 = vadd.f32 %v2207, %v2260
        %v2282 = vadd.f32 %v2208, %v2262
        %v2283 = vld [vmem:[#allocation2 + $0x4] sm:$0xc]
        %v2284 = vunpack.c.l.bf16 %v2283
        %s2285 = scalar_lea.vmem %s9, 5
        %v2286 = vld [vmem:[%s2285] sm:$0x1]
        %v2288 = vlaneseq
        %v2289 = vshrl.u32 %v2288, 7
        %v2290 = vsub.s32 0, %v2289
        %v2291 = vrot.slane %v2286, %v2290
        %v2293 = vmul.f32 %v2284, %v2291
        %v2294 = vmul.f32 %v1963, %v2291
        %v2295 = vmul.f32 %v1964, %v2291
        %v2296 = vmul.f32 %v1965, %v2291
        %v2297 = vmul.f32 %v1966, %v2291
        %v2298 = vmul.f32 %v1967, %v2291
        %v2299 = vmul.f32 %v1968, %v2291
        %v2300 = vmul.f32 %v1969, %v2291
        %v2301 = vmul.f32 %v1999, %v2291
        %v2302 = vmul.f32 %v2141, %v2291
        %v2303 = vmul.f32 %v2210, %v2291
        %vm2315 = vcmask 1043456
        %v2316 = vrot.slane %v2293, 4
        %v2317 = vrot.slane %v2294, 4
        %v2318 = vsel %vm2315, %v2316, %v2317
        %v2319 = vrot.slane %v2295, 4
        %v2320 = vsel %vm2315, %v2317, %v2319
        %v2321 = vrot.slane %v2296, 4
        %v2322 = vsel %vm2315, %v2319, %v2321
        %v2323 = vrot.slane %v2297, 4
        %v2324 = vsel %vm2315, %v2321, %v2323
        %v2325 = vrot.slane %v2298, 4
        %v2326 = vsel %vm2315, %v2323, %v2325
        %v2327 = vrot.slane %v2299, 4
        %v2328 = vsel %vm2315, %v2325, %v2327
        %v2329 = vrot.slane %v2300, 4
        %v2330 = vsel %vm2315, %v2327, %v2329
        %v2331 = vrot.slane %v2301, 4
        %v2332 = vsel %vm2315, %v2329, %v2331
        %v2333 = vrot.slane %v2302, 4
        %v2334 = vsel %vm2315, %v2331, %v2333
        %v2335 = vrot.slane %v2303, 4
        %v2336 = vsel %vm2315, %v2333, %v2335
        %v2347 = vadd.f32 %v2273, %v2318
        %v2348 = vadd.f32 %v2274, %v2320
        %v2349 = vadd.f32 %v2275, %v2322
        %v2350 = vadd.f32 %v2276, %v2324
        %v2351 = vadd.f32 %v2277, %v2326
        %v2352 = vadd.f32 %v2278, %v2328
        %v2353 = vadd.f32 %v2279, %v2330
        %v2354 = vadd.f32 %v2280, %v2332
        %v2355 = vadd.f32 %v2281, %v2334
        %v2356 = vadd.f32 %v2282, %v2336
        %v2357 = vld [vmem:[#allocation2 + $0x8] sm:$0xc]
        %v2358 = vld [vmem:[#allocation2 + $0x2c] sm:$0xf]
        %v2359 = vld [vmem:[#allocation2 + $0x30] sm:$0x1]
        %v2360 = vunpack.c.l.bf16 %v2357
        %v2361 = vunpack.c.l.bf16 %v2358
        %v2362 = vunpack.c.l.bf16 %v2359
        %s2363 = scalar_lea.vmem %s9, 6
        %v2364 = vld [vmem:[%s2363] sm:$0x1]
        %v2366 = vlaneseq
        %v2367 = vshrl.u32 %v2366, 7
        %v2368 = vsub.s32 0, %v2367
        %v2369 = vrot.slane %v2364, %v2368
        %v2371 = vmul.f32 %v2360, %v2369
        %v2372 = vmul.f32 %v1964, %v2369
        %v2373 = vmul.f32 %v1965, %v2369
        %v2374 = vmul.f32 %v1966, %v2369
        %v2375 = vmul.f32 %v1967, %v2369
        %v2376 = vmul.f32 %v1968, %v2369
        %v2377 = vmul.f32 %v1969, %v2369
        %v2378 = vmul.f32 %v1999, %v2369
        %v2379 = vmul.f32 %v2141, %v2369
        %v2380 = vmul.f32 %v2361, %v2369
        %v2381 = vmul.f32 %v2362, %v2369
        %v2393 = vrot.slane %v2371, 4
        %v2394 = vrot.slane %v2372, 4
        %v2395 = vsel %vm2315, %v2393, %v2394
        %v2396 = vrot.slane %v2373, 4
        %v2397 = vsel %vm2315, %v2394, %v2396
        %v2398 = vrot.slane %v2374, 4
        %v2399 = vsel %vm2315, %v2396, %v2398
        %v2400 = vrot.slane %v2375, 4
        %v2401 = vsel %vm2315, %v2398, %v2400
        %v2402 = vrot.slane %v2376, 4
        %v2403 = vsel %vm2315, %v2400, %v2402
        %v2404 = vrot.slane %v2377, 4
        %v2405 = vsel %vm2315, %v2402, %v2404
        %v2406 = vrot.slane %v2378, 4
        %v2407 = vsel %vm2315, %v2404, %v2406
        %v2408 = vrot.slane %v2379, 4
        %v2409 = vsel %vm2315, %v2406, %v2408
        %v2410 = vrot.slane %v2380, 4
        %v2411 = vsel %vm2315, %v2408, %v2410
        %v2412 = vrot.slane %v2381, 4
        %v2413 = vsel %vm2315, %v2410, %v2412
        %v2424 = vadd.f32 %v2347, %v2395
        %v2425 = vadd.f32 %v2348, %v2397
        %v2426 = vadd.f32 %v2349, %v2399
        %v2427 = vadd.f32 %v2350, %v2401
        %v2428 = vadd.f32 %v2351, %v2403
        %v2429 = vadd.f32 %v2352, %v2405
        %v2430 = vadd.f32 %v2353, %v2407
        %v2431 = vadd.f32 %v2354, %v2409
        %v2432 = vadd.f32 %v2355, %v2411
        %v2433 = vadd.f32 %v2356, %v2413
        %v2434 = vld [vmem:[#allocation2 + $0x30] sm:$0x3]
        %v2435 = vunpack.c.l.bf16 %v2434
        %s2436 = scalar_lea.vmem %s9, 7
        %v2437 = vld [vmem:[%s2436] sm:$0x1]
        %v2439 = vlaneseq
        %v2440 = vshrl.u32 %v2439, 7
        %v2441 = vsub.s32 0, %v2440
        %v2442 = vrot.slane %v2437, %v2441
        %v2444 = vmul.f32 %v2360, %v2442
        %v2445 = vmul.f32 %v1964, %v2442
        %v2446 = vmul.f32 %v1965, %v2442
        %v2447 = vmul.f32 %v1966, %v2442
        %v2448 = vmul.f32 %v1967, %v2442
        %v2449 = vmul.f32 %v1968, %v2442
        %v2450 = vmul.f32 %v1969, %v2442
        %v2451 = vmul.f32 %v1999, %v2442
        %v2452 = vmul.f32 %v2141, %v2442
        %v2453 = vmul.f32 %v2361, %v2442
        %v2454 = vmul.f32 %v2435, %v2442
        %vm2466 = vcmask 1042432
        %v2467 = vrot.slane %v2444, 5
        %v2468 = vrot.slane %v2445, 5
        %v2469 = vsel %vm2466, %v2467, %v2468
        %v2470 = vrot.slane %v2446, 5
        %v2471 = vsel %vm2466, %v2468, %v2470
        %v2472 = vrot.slane %v2447, 5
        %v2473 = vsel %vm2466, %v2470, %v2472
        %v2474 = vrot.slane %v2448, 5
        %v2475 = vsel %vm2466, %v2472, %v2474
        %v2476 = vrot.slane %v2449, 5
        %v2477 = vsel %vm2466, %v2474, %v2476
        %v2478 = vrot.slane %v2450, 5
        %v2479 = vsel %vm2466, %v2476, %v2478
        %v2480 = vrot.slane %v2451, 5
        %v2481 = vsel %vm2466, %v2478, %v2480
        %v2482 = vrot.slane %v2452, 5
        %v2483 = vsel %vm2466, %v2480, %v2482
        %v2484 = vrot.slane %v2453, 5
        %v2485 = vsel %vm2466, %v2482, %v2484
        %v2486 = vrot.slane %v2454, 5
        %v2487 = vsel %vm2466, %v2484, %v2486
        %v2498 = vadd.f32 %v2424, %v2469
        %v2499 = vadd.f32 %v2425, %v2471
        %v2500 = vadd.f32 %v2426, %v2473
        %v2501 = vadd.f32 %v2427, %v2475
        %v2502 = vadd.f32 %v2428, %v2477
        %v2503 = vadd.f32 %v2429, %v2479
        %v2504 = vadd.f32 %v2430, %v2481
        %v2505 = vadd.f32 %v2431, %v2483
        %v2506 = vadd.f32 %v2432, %v2485
        %v2507 = vadd.f32 %v2433, %v2487
        %v2508 = vld [vmem:[#allocation2 + $0x8] sm:$0x8]
        %v2509 = vunpack.c.l.bf16 %v2508
        %s2510 = scalar_lea.vmem %s9, 8
        %v2511 = vld [vmem:[%s2510] sm:$0x1]
        %v2513 = vlaneseq
        %v2514 = vshrl.u32 %v2513, 7
        %v2515 = vsub.s32 0, %v2514
        %v2516 = vrot.slane %v2511, %v2515
        %v2518 = vmul.f32 %v2509, %v2516
        %v2519 = vmul.f32 %v1964, %v2516
        %v2520 = vmul.f32 %v1965, %v2516
        %v2521 = vmul.f32 %v1966, %v2516
        %v2522 = vmul.f32 %v1967, %v2516
        %v2523 = vmul.f32 %v1968, %v2516
        %v2524 = vmul.f32 %v1969, %v2516
        %v2525 = vmul.f32 %v1999, %v2516
        %v2526 = vmul.f32 %v2141, %v2516
        %v2527 = vmul.f32 %v2361, %v2516
        %v2528 = vmul.f32 %v2435, %v2516
        %vm2540 = vcmask 1041408
        %v2541 = vrot.slane %v2518, 6
        %v2542 = vrot.slane %v2519, 6
        %v2543 = vsel %vm2540, %v2541, %v2542
        %v2544 = vrot.slane %v2520, 6
        %v2545 = vsel %vm2540, %v2542, %v2544
        %v2546 = vrot.slane %v2521, 6
        %v2547 = vsel %vm2540, %v2544, %v2546
        %v2548 = vrot.slane %v2522, 6
        %v2549 = vsel %vm2540, %v2546, %v2548
        %v2550 = vrot.slane %v2523, 6
        %v2551 = vsel %vm2540, %v2548, %v2550
        %v2552 = vrot.slane %v2524, 6
        %v2553 = vsel %vm2540, %v2550, %v2552
        %v2554 = vrot.slane %v2525, 6
        %v2555 = vsel %vm2540, %v2552, %v2554
        %v2556 = vrot.slane %v2526, 6
        %v2557 = vsel %vm2540, %v2554, %v2556
        %v2558 = vrot.slane %v2527, 6
        %v2559 = vsel %vm2540, %v2556, %v2558
        %v2560 = vrot.slane %v2528, 6
        %v2561 = vsel %vm2540, %v2558, %v2560
        %v2572 = vadd.f32 %v2498, %v2543
        %v2573 = vadd.f32 %v2499, %v2545
        %v2574 = vadd.f32 %v2500, %v2547
        %v2575 = vadd.f32 %v2501, %v2549
        %v2576 = vadd.f32 %v2502, %v2551
        %v2577 = vadd.f32 %v2503, %v2553
        %v2578 = vadd.f32 %v2504, %v2555
        %v2579 = vadd.f32 %v2505, %v2557
        %v2580 = vadd.f32 %v2506, %v2559
        %v2581 = vadd.f32 %v2507, %v2561
        %v2582 = vld [vmem:[#allocation9] sm:$0x1]
        %v2584 = vlaneseq
        %v2585 = vshrl.u32 %v2584, 7
        %v2586 = vsub.s32 0, %v2585
        %v2587 = vrot.slane %v2582, %v2586
        %v2589 = vadd.f32 %v2572, %v2587
        %v2590 = vadd.f32 %v2573, %v2587
        %v2591 = vadd.f32 %v2574, %v2587
        %v2592 = vadd.f32 %v2575, %v2587
        %v2593 = vadd.f32 %v2576, %v2587
        %v2594 = vadd.f32 %v2577, %v2587
        %v2595 = vadd.f32 %v2578, %v2587
        %v2596 = vadd.f32 %v2579, %v2587
        %v2597 = vadd.f32 %v2580, %v2587
        %v2598 = vadd.f32 %v2581, %v2587
        %v2599 = vmax.f32 %v2589, 0.0
        %v2600 = vmax.f32 %v2590, 0.0
        %v2601 = vmax.f32 %v2591, 0.0
        %v2602 = vmax.f32 %v2592, 0.0
        %v2603 = vmax.f32 %v2593, 0.0
        %v2604 = vmax.f32 %v2594, 0.0
        %v2605 = vmax.f32 %v2595, 0.0
        %v2606 = vmax.f32 %v2596, 0.0
        %v2607 = vmax.f32 %v2597, 0.0
        %v2608 = vmax.f32 %v2598, 0.0
        %v2609 = vmin.f32 %v2599, 6.0
        %v2610 = vmin.f32 %v2600, 6.0
        %v2611 = vmin.f32 %v2601, 6.0
        %v2612 = vmin.f32 %v2602, 6.0
        %v2613 = vmin.f32 %v2603, 6.0
        %v2614 = vmin.f32 %v2604, 6.0
        %v2615 = vmin.f32 %v2605, 6.0
        %v2616 = vmin.f32 %v2606, 6.0
        %v2617 = vmin.f32 %v2607, 6.0
        %v2618 = vmin.f32 %v2608, 6.0
        %v2619 = vpack.c.bf16 %v2610, %v2609
        %v2620 = vpack.c.bf16 %v2612, %v2611
        %v2621 = vpack.c.bf16 %v2614, %v2613
        %v2622 = vpack.c.bf16 %v2616, %v2615
        %v2623 = vpack.c.bf16 %v2618, %v2617
        %v2624 = vld [vmem:[%s13] sm:$0xf]
        %v2625 = vld [vmem:[%s13 + $0x4] sm:$0xf]
        %v2626 = vld [vmem:[%s13 + $0x8] sm:$0xf]
        %v2627 = vld [vmem:[%s13 + $0xc] sm:$0xf]
        %v2628 = vld [vmem:[%s13 + $0x10] sm:$0xf]
        %v2629 = vld [vmem:[%s13 + $0x14] sm:$0xf]
        %v2630 = vld [vmem:[%s13 + $0x18] sm:$0xf]
        %v2631 = vld [vmem:[%s13 + $0x1c] sm:$0xf]
        %v2632 = vld [vmem:[%s13 + $0x20] sm:$0xf]
        %v2633 = vld [vmem:[%s13 + $0x24] sm:$0xf]
        %v2634 = vld [vmem:[%s13 + $0x28] sm:$0xf]
        %v2635 = vld [vmem:[%s13 + $0x2c] sm:$0xf]
        %v2636 = vld [vmem:[%s13 + $0x30] sm:$0x3]
        %v2650 = vunpack.c.l.b16 %v2624
        %v2651 = vunpack.c.l.b16 %v2625
        %v2652 = vunpack.c.l.b16 %v2626
        %v2653 = vunpack.c.l.b16 %v2627
        %v2654 = vunpack.c.l.b16 %v2628
        %v2655 = vunpack.c.l.b16 %v2629
        %v2656 = vunpack.c.l.b16 %v2630
        %v2657 = vunpack.c.l.b16 %v2631
        %v2658 = vunpack.c.l.b16 %v2632
        %v2659 = vunpack.c.l.b16 %v2633
        %v2660 = vunpack.c.l.b16 %v2634
        %v2661 = vunpack.c.l.b16 %v2635
        %v2662 = vunpack.c.l.b16 %v2636
        %v2663 = vpack.c.b16 %v2651, %v2650
        %v2664 = vpack.c.b16 %v2653, %v2652
        %v2665 = vpack.c.b16 %v2655, %v2654
        %v2666 = vpack.c.b16 %v2657, %v2656
        %v2667 = vpack.c.b16 %v2659, %v2658
        %v2668 = vpack.c.b16 %v2661, %v2660
        %v2669 = vpack.c.b16 %v2662, %v2662
        %vm2670 = vcmask 637952
        %v2672 = vsel %vm2670, %v2663, 0
        %v2675 = vsel %vm2670, %v2664, 0
        %v2678 = vsel %vm2670, %v2665, 0
        %v2681 = vsel %vm2670, %v2666, 0
        %v2684 = vsel %vm2670, %v2667, 0
        %v2687 = vsel %vm2670, %v2668, 0
        %v2690 = vsel %vm2670, %v2669, 0
        %v2693 = vsel %vm2028, %v2623, 0
        %2695 = vmatprep.subr.bf16.mxu0 0
        %2696 = vmatpush1.bf16.msra.mxu0 0
        %2697 = vmatprep.subr.bf16.mxu0 0
        %2698 = vmatpush1.bf16.msra.mxu0 0
        %2699 = vmatprep.subr.bf16.mxu0 0
        %2700 = vmatpush1.bf16.msra.mxu0 0
        %2701 = vmatprep.subr.bf16.mxu0 0
        %2702 = vmatpush1.bf16.msra.mxu0 %v2693
        %2703 = vmatprep.subr.bf16.mxu0 0
        %2704 = vmatpush1.bf16.msra.mxu0 %v2622
        %2705 = vmatprep.subr.bf16.mxu0 0
        %2706 = vmatpush1.bf16.msra.mxu0 %v2621
        %2707 = vmatprep.subr.bf16.mxu0 0
        %2708 = vmatpush1.bf16.msra.mxu0 %v2620
        %2709 = vmatprep.subr.bf16.mxu0 0
        %2710 = vmatpush1.bf16.msra.mxu0 %v2619
        %2711 = vmatprep.subr.bf16.mxu0 0
        %2712 = vmatpush2.bf16.msra.mxu0 0
        %2713 = vmatprep.subr.bf16.mxu0 0
        %2714 = vmatpush2.bf16.msra.mxu0 0
        %2715 = vmatprep.subr.bf16.mxu0 0
        %2716 = vmatpush2.bf16.msra.mxu0 0
        %2717 = vmatprep.subr.bf16.mxu0 0
        %2718 = vmatpush2.bf16.msra.mxu0 0
        %2719 = vmatprep.subr.bf16.mxu0 0
        %2720 = vmatpush2.bf16.msra.mxu0 0
        %2721 = vmatprep.subr.bf16.mxu0 0
        %2722 = vmatpush2.bf16.msra.mxu0 0
        %2723 = vmatprep.subr.bf16.mxu0 0
        %2724 = vmatpush2.bf16.msra.mxu0 0
        %2725 = vmatprep.subr.bf16.mxu0 0
        %2726 = vmatpush2.bf16.msra.mxu0 0
        %2727 = vmatprep.mubr.bf16.mxu0 0
        %2728 = vmatmul.mubr.bf16.gmra.mxu0 %v2672
        %v2729 = vpop.f32.mrf.mxu0
        %v2730 = vadd.f32 0.0, %v2729
        %v2731 = vpop.f32.mrf.mxu0
        %v2732 = vpop.f32.mrf.mxu0
        %v2733 = vadd.f32 0.0, %v2732
        %v2734 = vpop.f32.mrf.mxu0
        %2735 = vmatprep.mubr.bf16.mxu0 0
        %2736 = vmatmul.mubr.bf16.gmra.mxu0 %v2675
        %v2737 = vpop.f32.mrf.mxu0
        %v2738 = vadd.f32 0.0, %v2737
        %v2739 = vpop.f32.mrf.mxu0
        %v2740 = vpop.f32.mrf.mxu0
        %v2741 = vadd.f32 0.0, %v2740
        %v2742 = vpop.f32.mrf.mxu0
        %2743 = vmatprep.mubr.bf16.mxu0 0
        %2744 = vmatmul.mubr.bf16.gmra.mxu0 %v2678
        %v2745 = vpop.f32.mrf.mxu0
        %v2746 = vadd.f32 0.0, %v2745
        %v2747 = vpop.f32.mrf.mxu0
        %v2748 = vpop.f32.mrf.mxu0
        %v2749 = vadd.f32 0.0, %v2748
        %v2750 = vpop.f32.mrf.mxu0
        %2751 = vmatprep.mubr.bf16.mxu0 0
        %2752 = vmatmul.mubr.bf16.gmra.mxu0 %v2681
        %v2753 = vpop.f32.mrf.mxu0
        %v2754 = vadd.f32 0.0, %v2753
        %v2755 = vpop.f32.mrf.mxu0
        %v2756 = vpop.f32.mrf.mxu0
        %v2757 = vadd.f32 0.0, %v2756
        %v2758 = vpop.f32.mrf.mxu0
        %2759 = vmatprep.mubr.bf16.mxu0 0
        %2760 = vmatmul.mubr.bf16.gmra.mxu0 %v2684
        %v2761 = vpop.f32.mrf.mxu0
        %v2762 = vadd.f32 0.0, %v2761
        %v2763 = vpop.f32.mrf.mxu0
        %v2764 = vpop.f32.mrf.mxu0
        %v2765 = vadd.f32 0.0, %v2764
        %v2766 = vpop.f32.mrf.mxu0
        %2767 = vmatprep.mubr.bf16.mxu0 0
        %2768 = vmatmul.mubr.bf16.gmra.mxu0 %v2687
        %v2769 = vpop.f32.mrf.mxu0
        %v2770 = vadd.f32 0.0, %v2769
        %v2771 = vpop.f32.mrf.mxu0
        %v2772 = vpop.f32.mrf.mxu0
        %v2773 = vadd.f32 0.0, %v2772
        %v2774 = vpop.f32.mrf.mxu0
        %2775 = vmatprep.mubr.bf16.mxu0 0
        %2776 = vmatmul.mubr.bf16.gmra.mxu0 %v2690
        %v2777 = vpop.f32.mrf.mxu0
        %v2778 = vadd.f32 0.0, %v2777
        %v2779 = vpop.f32.mrf.mxu0
        %v2780 = vpop.f32.mrf.mxu0
        %v2781 = vpop.f32.mrf.mxu0
        %2782 = vdwg.mxu0
        %v2783 = vpack.c.bf16 %v2733, %v2730
        %v2784 = vpack.c.bf16 %v2741, %v2738
        %v2785 = vpack.c.bf16 %v2749, %v2746
        %v2786 = vpack.c.bf16 %v2757, %v2754
        %v2787 = vpack.c.bf16 %v2765, %v2762
        %v2788 = vpack.c.bf16 %v2773, %v2770
        %v2789 = vpack.c.bf16 %v2778, %v2778
        %v2790 = vld [vmem:[%s15] sm:$0xf]
        %v2791 = vld [vmem:[%s15 + $0x4] sm:$0xf]
        %v2792 = vld [vmem:[%s15 + $0x8] sm:$0xf]
        %v2793 = vld [vmem:[%s15 + $0xc] sm:$0xf]
        %v2794 = vld [vmem:[%s15 + $0x10] sm:$0xf]
        %v2795 = vld [vmem:[%s15 + $0x14] sm:$0xf]
        %v2796 = vld [vmem:[%s15 + $0x18] sm:$0xf]
        %v2797 = vld [vmem:[%s15 + $0x1c] sm:$0xf]
        %v2798 = vld [vmem:[%s15 + $0x20] sm:$0xf]
        %v2799 = vld [vmem:[%s15 + $0x24] sm:$0xf]
        %v2800 = vld [vmem:[%s15 + $0x28] sm:$0xf]
        %v2801 = vld [vmem:[%s15 + $0x2c] sm:$0xf]
        %v2802 = vld [vmem:[%s15 + $0x30] sm:$0xf]
        %v2803 = vld [vmem:[%s15 + $0x34] sm:$0xf]
        %v2804 = vld [vmem:[%s15 + $0x38] sm:$0xf]
        %v2805 = vld [vmem:[%s15 + $0x3c] sm:$0xf]
        %v2806 = vld [vmem:[#allocation11] sm:$0x1]
        %v2808 = vlaneseq
        %v2809 = vshrl.u32 %v2808, 7
        %v2810 = vsub.s32 0, %v2809
        %v2811 = vrot.slane %v2806, %v2810
        %v2829 = vunpack.c.l.b16 %v2790
        %v2830 = vunpack.c.l.b16 %v2791
        %v2831 = vunpack.c.l.b16 %v2792
        %v2832 = vunpack.c.l.b16 %v2793
        %v2833 = vunpack.c.l.b16 %v2794
        %v2834 = vunpack.c.l.b16 %v2795
        %v2835 = vunpack.c.l.b16 %v2796
        %v2836 = vunpack.c.l.b16 %v2797
        %v2837 = vunpack.c.l.b16 %v2798
        %v2838 = vunpack.c.l.b16 %v2799
        %v2839 = vunpack.c.l.b16 %v2800
        %v2840 = vunpack.c.l.b16 %v2801
        %v2841 = vunpack.c.l.b16 %v2802
        %v2842 = vunpack.c.l.b16 %v2803
        %v2843 = vunpack.c.l.b16 %v2804
        %v2844 = vunpack.c.l.b16 %v2805
        %v2845 = vpack.c.b16 %v2830, %v2829
        %v2846 = vpack.c.b16 %v2832, %v2831
        %v2847 = vpack.c.b16 %v2834, %v2833
        %v2848 = vpack.c.b16 %v2836, %v2835
        %v2849 = vpack.c.b16 %v2838, %v2837
        %v2850 = vpack.c.b16 %v2840, %v2839
        %v2851 = vpack.c.b16 %v2842, %v2841
        %v2852 = vpack.c.b16 %v2844, %v2843
        %2861 = vmatprep.subr.bf16.mxu0 0
        %2862 = vmatpush1.bf16.msra.mxu0 %v2852
        %2863 = vmatprep.subr.bf16.mxu0 0
        %2864 = vmatpush1.bf16.msra.mxu0 %v2851
        %2865 = vmatprep.subr.bf16.mxu0 0
        %2866 = vmatpush1.bf16.msra.mxu0 %v2850
        %2867 = vmatprep.subr.bf16.mxu0 0
        %2868 = vmatpush1.bf16.msra.mxu0 %v2849
        %2869 = vmatprep.subr.bf16.mxu0 0
        %2870 = vmatpush1.bf16.msra.mxu0 %v2848
        %2871 = vmatprep.subr.bf16.mxu0 0
        %2872 = vmatpush1.bf16.msra.mxu0 %v2847
        %2873 = vmatprep.subr.bf16.mxu0 0
        %2874 = vmatpush1.bf16.msra.mxu0 %v2846
        %2875 = vmatprep.subr.bf16.mxu0 0
        %2876 = vmatpush1.bf16.msra.mxu0 %v2845
        %2877 = vmatprep.subr.bf16.mxu0 0
        %2878 = vmatpush2.bf16.msra.mxu0 0
        %2879 = vmatprep.subr.bf16.mxu0 0
        %2880 = vmatpush2.bf16.msra.mxu0 0
        %2881 = vmatprep.subr.bf16.mxu0 0
        %2882 = vmatpush2.bf16.msra.mxu0 0
        %2883 = vmatprep.subr.bf16.mxu0 0
        %2884 = vmatpush2.bf16.msra.mxu0 0
        %2885 = vmatprep.subr.bf16.mxu0 0
        %2886 = vmatpush2.bf16.msra.mxu0 0
        %2887 = vmatprep.subr.bf16.mxu0 0
        %2888 = vmatpush2.bf16.msra.mxu0 0
        %2889 = vmatprep.subr.bf16.mxu0 0
        %2890 = vmatpush2.bf16.msra.mxu0 0
        %2891 = vmatprep.subr.bf16.mxu0 0
        %2892 = vmatpush2.bf16.msra.mxu0 0
        %2893 = vmatprep.mubr.bf16.mxu0 0
        %2894 = vmatmul.mubr.bf16.gmra.mxu0 %v2783
        %v2895 = vpop.f32.mrf.mxu0
        %v2896 = vadd.f32 %v2811, %v2895
        %v2897 = vpop.f32.mrf.mxu0
        %v2898 = vpop.f32.mrf.mxu0
        %v2899 = vadd.f32 %v2811, %v2898
        %v2900 = vpop.f32.mrf.mxu0
        %2901 = vmatprep.mubr.bf16.mxu0 0
        %2902 = vmatmul.mubr.bf16.gmra.mxu0 %v2784
        %v2903 = vpop.f32.mrf.mxu0
        %v2904 = vadd.f32 %v2811, %v2903
        %v2905 = vpop.f32.mrf.mxu0
        %v2906 = vpop.f32.mrf.mxu0
        %v2907 = vadd.f32 %v2811, %v2906
        %v2908 = vpop.f32.mrf.mxu0
        %2909 = vmatprep.mubr.bf16.mxu0 0
        %2910 = vmatmul.mubr.bf16.gmra.mxu0 %v2785
        %v2911 = vpop.f32.mrf.mxu0
        %v2912 = vadd.f32 %v2811, %v2911
        %v2913 = vpop.f32.mrf.mxu0
        %v2914 = vpop.f32.mrf.mxu0
        %v2915 = vadd.f32 %v2811, %v2914
        %v2916 = vpop.f32.mrf.mxu0
        %2917 = vmatprep.mubr.bf16.mxu0 0
        %2918 = vmatmul.mubr.bf16.gmra.mxu0 %v2786
        %v2919 = vpop.f32.mrf.mxu0
        %v2920 = vadd.f32 %v2811, %v2919
        %v2921 = vpop.f32.mrf.mxu0
        %v2922 = vpop.f32.mrf.mxu0
        %v2923 = vadd.f32 %v2811, %v2922
        %v2924 = vpop.f32.mrf.mxu0
        %2925 = vmatprep.mubr.bf16.mxu0 0
        %2926 = vmatmul.mubr.bf16.gmra.mxu0 %v2787
        %v2927 = vpop.f32.mrf.mxu0
        %v2928 = vadd.f32 %v2811, %v2927
        %v2929 = vpop.f32.mrf.mxu0
        %v2930 = vpop.f32.mrf.mxu0
        %v2931 = vadd.f32 %v2811, %v2930
        %v2932 = vpop.f32.mrf.mxu0
        %2933 = vmatprep.mubr.bf16.mxu0 0
        %2934 = vmatmul.mubr.bf16.gmra.mxu0 %v2788
        %v2935 = vpop.f32.mrf.mxu0
        %v2936 = vadd.f32 %v2811, %v2935
        %v2937 = vpop.f32.mrf.mxu0
        %v2938 = vpop.f32.mrf.mxu0
        %v2939 = vadd.f32 %v2811, %v2938
        %v2940 = vpop.f32.mrf.mxu0
        %2941 = vmatprep.mubr.bf16.mxu0 0
        %2942 = vmatmul.mubr.bf16.gmra.mxu0 %v2789
        %v2943 = vpop.f32.mrf.mxu0
        %v2944 = vadd.f32 %v2811, %v2943
        %v2945 = vpop.f32.mrf.mxu0
        %v2946 = vpop.f32.mrf.mxu0
        %v2947 = vpop.f32.mrf.mxu0
        %2948 = vdwg.mxu0
        %v2949 = vld [vmem:[%s19] sm:$0xff]
        %v2950 = vld [vmem:[%s19 + $0x8] sm:$0xff]
        %v2951 = vld [vmem:[%s19 + $0x10] sm:$0xff]
        %v2952 = vld [vmem:[%s19 + $0x18] sm:$0xff]
        %v2953 = vld [vmem:[%s19 + $0x20] sm:$0xff]
        %v2954 = vld [vmem:[%s19 + $0x28] sm:$0xff]
        %v2955 = vld [vmem:[%s19 + $0x30] sm:$0xff]
        %v2956 = vld [vmem:[%s19 + $0x38] sm:$0xff]
        %v2957 = vld [vmem:[%s19 + $0x40] sm:$0xff]
        %v2958 = vld [vmem:[%s19 + $0x48] sm:$0xff]
        %v2959 = vld [vmem:[%s19 + $0x50] sm:$0xff]
        %v2960 = vld [vmem:[%s19 + $0x58] sm:$0xff]
        %v2961 = vld [vmem:[%s19 + $0x60] sm:$0xf]
        %2963 = vset.pattern.permute.xlu0 0
        %2964 = vperm.xlu0 %2963, %v2949
        %v2965 = vpop.permute.xlu0 %2964
        %2968 = vset.pattern.permute.xlu0 0
        %2969 = vperm.xlu0 %2968, %v2950
        %v2970 = vpop.permute.xlu0 %2969
        %2973 = vset.pattern.permute.xlu0 0
        %2974 = vperm.xlu0 %2973, %v2951
        %v2975 = vpop.permute.xlu0 %2974
        %2978 = vset.pattern.permute.xlu0 0
        %2979 = vperm.xlu0 %2978, %v2952
        %v2980 = vpop.permute.xlu0 %2979
        %2983 = vset.pattern.permute.xlu0 0
        %2984 = vperm.xlu0 %2983, %v2953
        %v2985 = vpop.permute.xlu0 %2984
        %2988 = vset.pattern.permute.xlu0 0
        %2989 = vperm.xlu0 %2988, %v2954
        %v2990 = vpop.permute.xlu0 %2989
        %2993 = vset.pattern.permute.xlu0 0
        %2994 = vperm.xlu0 %2993, %v2955
        %v2995 = vpop.permute.xlu0 %2994
        %2998 = vset.pattern.permute.xlu0 0
        %2999 = vperm.xlu0 %2998, %v2956
        %v3000 = vpop.permute.xlu0 %2999
        %3003 = vset.pattern.permute.xlu0 0
        %3004 = vperm.xlu0 %3003, %v2957
        %v3005 = vpop.permute.xlu0 %3004
        %3008 = vset.pattern.permute.xlu0 0
        %3009 = vperm.xlu0 %3008, %v2958
        %v3010 = vpop.permute.xlu0 %3009
        %3013 = vset.pattern.permute.xlu0 0
        %3014 = vperm.xlu0 %3013, %v2959
        %v3015 = vpop.permute.xlu0 %3014
        %3018 = vset.pattern.permute.xlu0 0
        %3019 = vperm.xlu0 %3018, %v2960
        %v3020 = vpop.permute.xlu0 %3019
        %3023 = vset.pattern.permute.xlu0 0
        %3024 = vperm.xlu0 %3023, %v2961
        %v3025 = vpop.permute.xlu0 %3024
        %v3027 = vmul.f32 %v2896, %v2965
        %v3028 = vmul.f32 %v2899, %v2970
        %v3029 = vmul.f32 %v2904, %v2975
        %v3030 = vmul.f32 %v2907, %v2980
        %v3031 = vmul.f32 %v2912, %v2985
        %v3032 = vmul.f32 %v2915, %v2990
        %v3033 = vmul.f32 %v2920, %v2995
        %v3034 = vmul.f32 %v2923, %v3000
        %v3035 = vmul.f32 %v2928, %v3005
        %v3036 = vmul.f32 %v2931, %v3010
        %v3037 = vmul.f32 %v2936, %v3015
        %v3038 = vmul.f32 %v2939, %v3020
        %v3039 = vmul.f32 %v2944, %v3025
        %v3040 = vunpack.c.l.bf16 %v1885
        %v3041 = vunpack.c.h.bf16 %v1885
        %v3042 = vunpack.c.l.bf16 %v1886
        %v3043 = vunpack.c.h.bf16 %v1886
        %v3044 = vunpack.c.l.bf16 %v1887
        %v3045 = vunpack.c.h.bf16 %v1887
        %v3046 = vunpack.c.l.bf16 %v1888
        %v3047 = vunpack.c.h.bf16 %v1888
        %v3048 = vunpack.c.l.bf16 %v1889
        %v3049 = vunpack.c.h.bf16 %v1889
        %v3050 = vunpack.c.l.bf16 %v1890
        %v3051 = vunpack.c.h.bf16 %v1890
        %v3052 = vunpack.c.l.bf16 %v1891
        %v3053 = vadd.f32 %v3027, %v3040
        %v3054 = vadd.f32 %v3028, %v3041
        %v3055 = vadd.f32 %v3029, %v3042
        %v3056 = vadd.f32 %v3030, %v3043
        %v3057 = vadd.f32 %v3031, %v3044
        %v3058 = vadd.f32 %v3032, %v3045
        %v3059 = vadd.f32 %v3033, %v3046
        %v3060 = vadd.f32 %v3034, %v3047
        %v3061 = vadd.f32 %v3035, %v3048
        %v3062 = vadd.f32 %v3036, %v3049
        %v3063 = vadd.f32 %v3037, %v3050
        %v3064 = vadd.f32 %v3038, %v3051
        %v3065 = vadd.f32 %v3039, %v3052
        %v3066 = vpack.c.bf16 %v3054, %v3053
        %v3067 = vpack.c.bf16 %v3056, %v3055
        %v3068 = vpack.c.bf16 %v3058, %v3057
        %v3069 = vpack.c.bf16 %v3060, %v3059
        %v3070 = vpack.c.bf16 %v3062, %v3061
        %v3071 = vpack.c.bf16 %v3064, %v3063
        %v3072 = vpack.c.bf16 %v3065, %v3065
        %v3073 = vld [vmem:[%s21] sm:$0xf]
        %v3074 = vld [vmem:[%s21 + $0x4] sm:$0xf]
        %v3075 = vld [vmem:[%s21 + $0x8] sm:$0xf]
        %v3076 = vld [vmem:[%s21 + $0xc] sm:$0xf]
        %v3077 = vld [vmem:[%s21 + $0x10] sm:$0xf]
        %v3078 = vld [vmem:[%s21 + $0x14] sm:$0xf]
        %v3079 = vld [vmem:[%s21 + $0x18] sm:$0xf]
        %v3080 = vld [vmem:[%s21 + $0x1c] sm:$0xf]
        %v3081 = vld [vmem:[%s21 + $0x20] sm:$0xf]
        %v3082 = vld [vmem:[%s21 + $0x24] sm:$0xf]
        %v3083 = vld [vmem:[%s21 + $0x28] sm:$0xf]
        %v3084 = vld [vmem:[%s21 + $0x2c] sm:$0xf]
        %v3085 = vld [vmem:[%s21 + $0x30] sm:$0xf]
        %v3086 = vld [vmem:[%s21 + $0x34] sm:$0xf]
        %v3087 = vld [vmem:[%s21 + $0x38] sm:$0xf]
        %v3088 = vld [vmem:[%s21 + $0x3c] sm:$0xf]
        %v3089 = vld [vmem:[%s23] sm:$0x1]
        %v3091 = vlaneseq
        %v3092 = vshrl.u32 %v3091, 7
        %v3093 = vsub.s32 0, %v3092
        %v3094 = vrot.slane %v3089, %v3093
        %v3112 = vunpack.c.l.b16 %v3073
        %v3113 = vunpack.c.l.b16 %v3074
        %v3114 = vunpack.c.l.b16 %v3075
        %v3115 = vunpack.c.l.b16 %v3076
        %v3116 = vunpack.c.l.b16 %v3077
        %v3117 = vunpack.c.l.b16 %v3078
        %v3118 = vunpack.c.l.b16 %v3079
        %v3119 = vunpack.c.l.b16 %v3080
        %v3120 = vunpack.c.l.b16 %v3081
        %v3121 = vunpack.c.l.b16 %v3082
        %v3122 = vunpack.c.l.b16 %v3083
        %v3123 = vunpack.c.l.b16 %v3084
        %v3124 = vunpack.c.l.b16 %v3085
        %v3125 = vunpack.c.l.b16 %v3086
        %v3126 = vunpack.c.l.b16 %v3087
        %v3127 = vunpack.c.l.b16 %v3088
        %v3128 = vpack.c.b16 %v3113, %v3112
        %v3129 = vpack.c.b16 %v3115, %v3114
        %v3130 = vpack.c.b16 %v3117, %v3116
        %v3131 = vpack.c.b16 %v3119, %v3118
        %v3132 = vpack.c.b16 %v3121, %v3120
        %v3133 = vpack.c.b16 %v3123, %v3122
        %v3134 = vpack.c.b16 %v3125, %v3124
        %v3135 = vpack.c.b16 %v3127, %v3126
        %3144 = vmatprep.subr.bf16.mxu0 0
        %3145 = vmatpush1.bf16.msra.mxu0 %v3135
        %3146 = vmatprep.subr.bf16.mxu0 0
        %3147 = vmatpush1.bf16.msra.mxu0 %v3134
        %3148 = vmatprep.subr.bf16.mxu0 0
        %3149 = vmatpush1.bf16.msra.mxu0 %v3133
        %3150 = vmatprep.subr.bf16.mxu0 0
        %3151 = vmatpush1.bf16.msra.mxu0 %v3132
        %3152 = vmatprep.subr.bf16.mxu0 0
        %3153 = vmatpush1.bf16.msra.mxu0 %v3131
        %3154 = vmatprep.subr.bf16.mxu0 0
        %3155 = vmatpush1.bf16.msra.mxu0 %v3130
        %3156 = vmatprep.subr.bf16.mxu0 0
        %3157 = vmatpush1.bf16.msra.mxu0 %v3129
        %3158 = vmatprep.subr.bf16.mxu0 0
        %3159 = vmatpush1.bf16.msra.mxu0 %v3128
        %3160 = vmatprep.subr.bf16.mxu0 0
        %3161 = vmatpush2.bf16.msra.mxu0 0
        %3162 = vmatprep.subr.bf16.mxu0 0
        %3163 = vmatpush2.bf16.msra.mxu0 0
        %3164 = vmatprep.subr.bf16.mxu0 0
        %3165 = vmatpush2.bf16.msra.mxu0 0
        %3166 = vmatprep.subr.bf16.mxu0 0
        %3167 = vmatpush2.bf16.msra.mxu0 0
        %3168 = vmatprep.subr.bf16.mxu0 0
        %3169 = vmatpush2.bf16.msra.mxu0 0
        %3170 = vmatprep.subr.bf16.mxu0 0
        %3171 = vmatpush2.bf16.msra.mxu0 0
        %3172 = vmatprep.subr.bf16.mxu0 0
        %3173 = vmatpush2.bf16.msra.mxu0 0
        %3174 = vmatprep.subr.bf16.mxu0 0
        %3175 = vmatpush2.bf16.msra.mxu0 0
        %3176 = vmatprep.mubr.bf16.mxu0 0
        %3177 = vmatmul.mubr.bf16.gmra.mxu0 %v3066
        %v3178 = vpop.f32.mrf.mxu0
        %v3179 = vadd.f32 %v3094, %v3178
        %v3180 = vpop.f32.mrf.mxu0
        %v3181 = vpop.f32.mrf.mxu0
        %v3182 = vadd.f32 %v3094, %v3181
        %v3183 = vpop.f32.mrf.mxu0
        %3184 = vmatprep.mubr.bf16.mxu0 0
        %3185 = vmatmul.mubr.bf16.gmra.mxu0 %v3067
        %v3186 = vpop.f32.mrf.mxu0
        %v3187 = vadd.f32 %v3094, %v3186
        %v3188 = vpop.f32.mrf.mxu0
        %v3189 = vpop.f32.mrf.mxu0
        %v3190 = vadd.f32 %v3094, %v3189
        %v3191 = vpop.f32.mrf.mxu0
        %3192 = vmatprep.mubr.bf16.mxu0 0
        %3193 = vmatmul.mubr.bf16.gmra.mxu0 %v3068
        %v3194 = vpop.f32.mrf.mxu0
        %v3195 = vadd.f32 %v3094, %v3194
        %v3196 = vpop.f32.mrf.mxu0
        %v3197 = vpop.f32.mrf.mxu0
        %v3198 = vadd.f32 %v3094, %v3197
        %v3199 = vpop.f32.mrf.mxu0
        %3200 = vmatprep.mubr.bf16.mxu0 0
        %3201 = vmatmul.mubr.bf16.gmra.mxu0 %v3069
        %v3202 = vpop.f32.mrf.mxu0
        %v3203 = vadd.f32 %v3094, %v3202
        %v3204 = vpop.f32.mrf.mxu0
        %v3205 = vpop.f32.mrf.mxu0
        %v3206 = vadd.f32 %v3094, %v3205
        %v3207 = vpop.f32.mrf.mxu0
        %3208 = vmatprep.mubr.bf16.mxu0 0
        %3209 = vmatmul.mubr.bf16.gmra.mxu0 %v3070
        %v3210 = vpop.f32.mrf.mxu0
        %v3211 = vadd.f32 %v3094, %v3210
        %v3212 = vpop.f32.mrf.mxu0
        %v3213 = vpop.f32.mrf.mxu0
        %v3214 = vadd.f32 %v3094, %v3213
        %v3215 = vpop.f32.mrf.mxu0
        %3216 = vmatprep.mubr.bf16.mxu0 0
        %3217 = vmatmul.mubr.bf16.gmra.mxu0 %v3071
        %v3218 = vpop.f32.mrf.mxu0
        %v3219 = vadd.f32 %v3094, %v3218
        %v3220 = vpop.f32.mrf.mxu0
        %v3221 = vpop.f32.mrf.mxu0
        %v3222 = vadd.f32 %v3094, %v3221
        %v3223 = vpop.f32.mrf.mxu0
        %3224 = vmatprep.mubr.bf16.mxu0 0
        %3225 = vmatmul.mubr.bf16.gmra.mxu0 %v3072
        %v3226 = vpop.f32.mrf.mxu0
        %v3227 = vadd.f32 %v3094, %v3226
        %v3228 = vpop.f32.mrf.mxu0
        %v3229 = vpop.f32.mrf.mxu0
        %v3230 = vpop.f32.mrf.mxu0
        %3231 = vdwg.mxu0
        %v3232 = vmax.f32 %v3179, 0.0
        %v3233 = vmax.f32 %v3182, 0.0
        %v3234 = vmax.f32 %v3187, 0.0
        %v3235 = vmax.f32 %v3190, 0.0
        %v3236 = vmax.f32 %v3195, 0.0
        %v3237 = vmax.f32 %v3198, 0.0
        %v3238 = vmax.f32 %v3203, 0.0
        %v3239 = vmax.f32 %v3206, 0.0
        %v3240 = vmax.f32 %v3211, 0.0
        %v3241 = vmax.f32 %v3214, 0.0
        %v3242 = vmax.f32 %v3219, 0.0
        %v3243 = vmax.f32 %v3222, 0.0
        %v3244 = vmax.f32 %v3227, 0.0
        %v3245 = vmin.f32 %v3232, 6.0
        %v3246 = vmin.f32 %v3233, 6.0
        %v3247 = vmin.f32 %v3234, 6.0
        %v3248 = vmin.f32 %v3235, 6.0
        %v3249 = vmin.f32 %v3236, 6.0
        %v3250 = vmin.f32 %v3237, 6.0
        %v3251 = vmin.f32 %v3238, 6.0
        %v3252 = vmin.f32 %v3239, 6.0
        %v3253 = vmin.f32 %v3240, 6.0
        %v3254 = vmin.f32 %v3241, 6.0
        %v3255 = vmin.f32 %v3242, 6.0
        %v3256 = vmin.f32 %v3243, 6.0
        %v3257 = vmin.f32 %v3244, 6.0
        %v3258 = vld [vmem:[%s25] sm:$0xff]
        %v3259 = vld [vmem:[%s25 + $0x8] sm:$0xff]
        %v3260 = vld [vmem:[%s25 + $0x10] sm:$0xff]
        %v3261 = vld [vmem:[%s25 + $0x18] sm:$0xff]
        %v3262 = vld [vmem:[%s25 + $0x20] sm:$0xff]
        %v3263 = vld [vmem:[%s25 + $0x28] sm:$0xff]
        %v3264 = vld [vmem:[%s25 + $0x30] sm:$0xff]
        %v3265 = vld [vmem:[%s25 + $0x38] sm:$0xff]
        %v3266 = vld [vmem:[%s25 + $0x40] sm:$0xff]
        %v3267 = vld [vmem:[%s25 + $0x48] sm:$0xff]
        %v3268 = vld [vmem:[%s25 + $0x50] sm:$0xff]
        %v3269 = vld [vmem:[%s25 + $0x58] sm:$0xff]
        %v3270 = vld [vmem:[%s25 + $0x60] sm:$0xf]
        %3272 = vset.pattern.permute.xlu0 0
        %3273 = vperm.xlu0 %3272, %v3258
        %v3274 = vpop.permute.xlu0 %3273
        %3277 = vset.pattern.permute.xlu0 0
        %3278 = vperm.xlu0 %3277, %v3259
        %v3279 = vpop.permute.xlu0 %3278
        %3282 = vset.pattern.permute.xlu0 0
        %3283 = vperm.xlu0 %3282, %v3260
        %v3284 = vpop.permute.xlu0 %3283
        %3287 = vset.pattern.permute.xlu0 0
        %3288 = vperm.xlu0 %3287, %v3261
        %v3289 = vpop.permute.xlu0 %3288
        %3292 = vset.pattern.permute.xlu0 0
        %3293 = vperm.xlu0 %3292, %v3262
        %v3294 = vpop.permute.xlu0 %3293
        %3297 = vset.pattern.permute.xlu0 0
        %3298 = vperm.xlu0 %3297, %v3263
        %v3299 = vpop.permute.xlu0 %3298
        %3302 = vset.pattern.permute.xlu0 0
        %3303 = vperm.xlu0 %3302, %v3264
        %v3304 = vpop.permute.xlu0 %3303
        %3307 = vset.pattern.permute.xlu0 0
        %3308 = vperm.xlu0 %3307, %v3265
        %v3309 = vpop.permute.xlu0 %3308
        %3312 = vset.pattern.permute.xlu0 0
        %3313 = vperm.xlu0 %3312, %v3266
        %v3314 = vpop.permute.xlu0 %3313
        %3317 = vset.pattern.permute.xlu0 0
        %3318 = vperm.xlu0 %3317, %v3267
        %v3319 = vpop.permute.xlu0 %3318
        %3322 = vset.pattern.permute.xlu0 0
        %3323 = vperm.xlu0 %3322, %v3268
        %v3324 = vpop.permute.xlu0 %3323
        %3327 = vset.pattern.permute.xlu0 0
        %3328 = vperm.xlu0 %3327, %v3269
        %v3329 = vpop.permute.xlu0 %3328
        %3332 = vset.pattern.permute.xlu0 0
        %3333 = vperm.xlu0 %3332, %v3270
        %v3334 = vpop.permute.xlu0 %3333
        %v3336 = vmul.f32 %v3245, %v3274
        %v3337 = vmul.f32 %v3246, %v3279
        %v3338 = vmul.f32 %v3247, %v3284
        %v3339 = vmul.f32 %v3248, %v3289
        %v3340 = vmul.f32 %v3249, %v3294
        %v3341 = vmul.f32 %v3250, %v3299
        %v3342 = vmul.f32 %v3251, %v3304
        %v3343 = vmul.f32 %v3252, %v3309
        %v3344 = vmul.f32 %v3253, %v3314
        %v3345 = vmul.f32 %v3254, %v3319
        %v3346 = vmul.f32 %v3255, %v3324
        %v3347 = vmul.f32 %v3256, %v3329
        %v3348 = vmul.f32 %v3257, %v3334
        %v3349 = vpack.c.bf16 %v3337, %v3336
        %v3350 = vpack.c.bf16 %v3339, %v3338
        %v3351 = vpack.c.bf16 %v3341, %v3340
        %v3352 = vpack.c.bf16 %v3343, %v3342
        %v3353 = vpack.c.bf16 %v3345, %v3344
        %v3354 = vpack.c.bf16 %v3347, %v3346
        %v3355 = vpack.c.bf16 %v3348, %v3348
        %v3363 = vunpack.c.l.b16 %v3349
        %v3364 = vunpack.c.h.b16 %v3349
        %v3365 = vunpack.c.l.b16 %v3350
        %v3366 = vunpack.c.h.b16 %v3350
        %v3367 = vunpack.c.l.b16 %v3351
        %v3368 = vunpack.c.h.b16 %v3351
        %v3369 = vunpack.c.l.b16 %v3352
        %v3370 = vunpack.c.h.b16 %v3352
        %v3371 = vunpack.c.l.b16 %v3353
        %v3372 = vunpack.c.h.b16 %v3353
        %v3373 = vunpack.c.l.b16 %v3354
        %v3374 = vunpack.c.h.b16 %v3354
        %v3375 = vunpack.c.l.b16 %v3355
        %v3376 = vpack.c.b16 %v3363, %v3363
        %v3377 = vpack.c.b16 %v3364, %v3364
        %v3378 = vpack.c.b16 %v3365, %v3365
        %v3379 = vpack.c.b16 %v3366, %v3366
        %v3380 = vpack.c.b16 %v3367, %v3367
        %v3381 = vpack.c.b16 %v3368, %v3368
        %v3382 = vpack.c.b16 %v3369, %v3369
        %v3383 = vpack.c.b16 %v3370, %v3370
        %v3384 = vpack.c.b16 %v3371, %v3371
        %v3385 = vpack.c.b16 %v3372, %v3372
        %v3386 = vpack.c.b16 %v3373, %v3373
        %v3387 = vpack.c.b16 %v3374, %v3374
        %v3388 = vpack.c.b16 %v3375, %v3375
        %3402 = vst [vmem:[#allocation3] sm:$0xf] %v3376
        %3403 = vst [vmem:[#allocation3 + $0x4] sm:$0xf] %v3377
        %3404 = vst [vmem:[#allocation3 + $0x8] sm:$0xf] %v3378
        %3405 = vst [vmem:[#allocation3 + $0xc] sm:$0xf] %v3379
        %3406 = vst [vmem:[#allocation3 + $0x10] sm:$0xf] %v3380
        %3407 = vst [vmem:[#allocation3 + $0x14] sm:$0xf] %v3381
        %3408 = vst [vmem:[#allocation3 + $0x18] sm:$0xf] %v3382
        %3409 = vst [vmem:[#allocation3 + $0x1c] sm:$0xf] %v3383
        %3410 = vst [vmem:[#allocation3 + $0x20] sm:$0xf] %v3384
        %3411 = vst [vmem:[#allocation3 + $0x24] sm:$0xf] %v3385
        %3412 = vst [vmem:[#allocation3 + $0x28] sm:$0xf] %v3386
        %3413 = vst [vmem:[#allocation3 + $0x2c] sm:$0xf] %v3387
        %3414 = vst [vmem:[#allocation3 + $0x30] sm:$0x3] %v3388
        %v3415 = vld [vmem:[#allocation3] sm:$0xf]
        %v3416 = vld [vmem:[#allocation3 + $0x4] sm:$0xf]
        %v3417 = vld [vmem:[#allocation3 + $0x8] sm:$0xf]
        %v3418 = vld [vmem:[#allocation3 + $0xc] sm:$0xf]
        %v3419 = vld [vmem:[#allocation3 + $0x10] sm:$0xf]
        %v3420 = vld [vmem:[#allocation3 + $0x14] sm:$0xf]
        %v3421 = vld [vmem:[#allocation3 + $0x18] sm:$0xf]
        %v3422 = vld [vmem:[#allocation3 + $0x1c] sm:$0xf]
        %v3423 = vld [vmem:[#allocation3 + $0x20] sm:$0xf]
        %v3424 = vld [vmem:[#allocation3 + $0x24] sm:$0x7]
        %v3425 = vunpack.c.l.bf16 %v3415
        %v3426 = vunpack.c.l.bf16 %v3416
        %v3427 = vunpack.c.l.bf16 %v3417
        %v3428 = vunpack.c.l.bf16 %v3418
        %v3429 = vunpack.c.l.bf16 %v3419
        %v3430 = vunpack.c.l.bf16 %v3420
        %v3431 = vunpack.c.l.bf16 %v3421
        %v3432 = vunpack.c.l.bf16 %v3422
        %v3433 = vunpack.c.l.bf16 %v3423
        %v3434 = vunpack.c.l.bf16 %v3424
        %v3435 = vld [vmem:[%s27] sm:$0x1]
        %v3437 = vlaneseq
        %v3438 = vshrl.u32 %v3437, 7
        %v3439 = vsub.s32 0, %v3438
        %v3440 = vrot.slane %v3435, %v3439
        %v3442 = vmul.f32 %v3425, %v3440
        %v3443 = vmul.f32 %v3426, %v3440
        %v3444 = vmul.f32 %v3427, %v3440
        %v3445 = vmul.f32 %v3428, %v3440
        %v3446 = vmul.f32 %v3429, %v3440
        %v3447 = vmul.f32 %v3430, %v3440
        %v3448 = vmul.f32 %v3431, %v3440
        %v3449 = vmul.f32 %v3432, %v3440
        %v3450 = vmul.f32 %v3433, %v3440
        %v3451 = vmul.f32 %v3434, %v3440
        %v3452 = vadd.f32 %v3442, 0.0
        %v3453 = vadd.f32 %v3443, 0.0
        %v3454 = vadd.f32 %v3444, 0.0
        %v3455 = vadd.f32 %v3445, 0.0
        %v3456 = vadd.f32 %v3446, 0.0
        %v3457 = vadd.f32 %v3447, 0.0
        %v3458 = vadd.f32 %v3448, 0.0
        %v3459 = vadd.f32 %v3449, 0.0
        %v3460 = vadd.f32 %v3450, 0.0
        %v3461 = vadd.f32 %v3451, 0.0
        %v3462 = vld [vmem:[#allocation3 + $0x24] sm:$0xf]
        %v3463 = vunpack.c.l.bf16 %v3462
        %s3464 = scalar_lea.vmem %s27, 1
        %v3465 = vld [vmem:[%s3464] sm:$0x1]
        %v3467 = vlaneseq
        %v3468 = vshrl.u32 %v3467, 7
        %v3469 = vsub.s32 0, %v3468
        %v3470 = vrot.slane %v3465, %v3469
        %v3472 = vmul.f32 %v3425, %v3470
        %v3473 = vmul.f32 %v3426, %v3470
        %v3474 = vmul.f32 %v3427, %v3470
        %v3475 = vmul.f32 %v3428, %v3470
        %v3476 = vmul.f32 %v3429, %v3470
        %v3477 = vmul.f32 %v3430, %v3470
        %v3478 = vmul.f32 %v3431, %v3470
        %v3479 = vmul.f32 %v3432, %v3470
        %v3480 = vmul.f32 %v3433, %v3470
        %v3481 = vmul.f32 %v3463, %v3470
        %v3492 = vrot.slane %v3472, 1
        %v3493 = vrot.slane %v3473, 1
        %v3494 = vsel %vm2028, %v3492, %v3493
        %v3495 = vrot.slane %v3474, 1
        %v3496 = vsel %vm2028, %v3493, %v3495
        %v3497 = vrot.slane %v3475, 1
        %v3498 = vsel %vm2028, %v3495, %v3497
        %v3499 = vrot.slane %v3476, 1
        %v3500 = vsel %vm2028, %v3497, %v3499
        %v3501 = vrot.slane %v3477, 1
        %v3502 = vsel %vm2028, %v3499, %v3501
        %v3503 = vrot.slane %v3478, 1
        %v3504 = vsel %vm2028, %v3501, %v3503
        %v3505 = vrot.slane %v3479, 1
        %v3506 = vsel %vm2028, %v3503, %v3505
        %v3507 = vrot.slane %v3480, 1
        %v3508 = vsel %vm2028, %v3505, %v3507
        %v3509 = vrot.slane %v3481, 1
        %v3510 = vsel %vm2028, %v3507, %v3509
        %v3521 = vadd.f32 %v3452, %v3494
        %v3522 = vadd.f32 %v3453, %v3496
        %v3523 = vadd.f32 %v3454, %v3498
        %v3524 = vadd.f32 %v3455, %v3500
        %v3525 = vadd.f32 %v3456, %v3502
        %v3526 = vadd.f32 %v3457, %v3504
        %v3527 = vadd.f32 %v3458, %v3506
        %v3528 = vadd.f32 %v3459, %v3508
        %v3529 = vadd.f32 %v3460, %v3510
        %v3530 = vadd.f32 %v3461, %v3509
        %v3531 = vld [vmem:[#allocation3] sm:$0xe]
        %v3532 = vunpack.c.l.bf16 %v3531
        %s3533 = scalar_lea.vmem %s27, 2
        %v3534 = vld [vmem:[%s3533] sm:$0x1]
        %v3536 = vlaneseq
        %v3537 = vshrl.u32 %v3536, 7
        %v3538 = vsub.s32 0, %v3537
        %v3539 = vrot.slane %v3534, %v3538
        %v3541 = vmul.f32 %v3532, %v3539
        %v3542 = vmul.f32 %v3426, %v3539
        %v3543 = vmul.f32 %v3427, %v3539
        %v3544 = vmul.f32 %v3428, %v3539
        %v3545 = vmul.f32 %v3429, %v3539
        %v3546 = vmul.f32 %v3430, %v3539
        %v3547 = vmul.f32 %v3431, %v3539
        %v3548 = vmul.f32 %v3432, %v3539
        %v3549 = vmul.f32 %v3433, %v3539
        %v3550 = vmul.f32 %v3463, %v3539
        %v3561 = vrot.slane %v3541, 2
        %v3562 = vrot.slane %v3542, 2
        %v3563 = vsel %vm2098, %v3561, %v3562
        %v3564 = vrot.slane %v3543, 2
        %v3565 = vsel %vm2098, %v3562, %v3564
        %v3566 = vrot.slane %v3544, 2
        %v3567 = vsel %vm2098, %v3564, %v3566
        %v3568 = vrot.slane %v3545, 2
        %v3569 = vsel %vm2098, %v3566, %v3568
        %v3570 = vrot.slane %v3546, 2
        %v3571 = vsel %vm2098, %v3568, %v3570
        %v3572 = vrot.slane %v3547, 2
        %v3573 = vsel %vm2098, %v3570, %v3572
        %v3574 = vrot.slane %v3548, 2
        %v3575 = vsel %vm2098, %v3572, %v3574
        %v3576 = vrot.slane %v3549, 2
        %v3577 = vsel %vm2098, %v3574, %v3576
        %v3578 = vrot.slane %v3550, 2
        %v3579 = vsel %vm2098, %v3576, %v3578
        %v3590 = vadd.f32 %v3521, %v3563
        %v3591 = vadd.f32 %v3522, %v3565
        %v3592 = vadd.f32 %v3523, %v3567
        %v3593 = vadd.f32 %v3524, %v3569
        %v3594 = vadd.f32 %v3525, %v3571
        %v3595 = vadd.f32 %v3526, %v3573
        %v3596 = vadd.f32 %v3527, %v3575
        %v3597 = vadd.f32 %v3528, %v3577
        %v3598 = vadd.f32 %v3529, %v3579
        %v3599 = vadd.f32 %v3530, %v3578
        %v3600 = vld [vmem:[#allocation3 + $0x4] sm:$0xe]
        %v3601 = vld [vmem:[#allocation3 + $0x28] sm:$0xf]
        %v3602 = vunpack.c.l.bf16 %v3600
        %v3603 = vunpack.c.l.bf16 %v3601
        %s3604 = scalar_lea.vmem %s27, 3
        %v3605 = vld [vmem:[%s3604] sm:$0x1]
        %v3607 = vlaneseq
        %v3608 = vshrl.u32 %v3607, 7
        %v3609 = vsub.s32 0, %v3608
        %v3610 = vrot.slane %v3605, %v3609
        %v3612 = vmul.f32 %v3602, %v3610
        %v3613 = vmul.f32 %v3427, %v3610
        %v3614 = vmul.f32 %v3428, %v3610
        %v3615 = vmul.f32 %v3429, %v3610
        %v3616 = vmul.f32 %v3430, %v3610
        %v3617 = vmul.f32 %v3431, %v3610
        %v3618 = vmul.f32 %v3432, %v3610
        %v3619 = vmul.f32 %v3433, %v3610
        %v3620 = vmul.f32 %v3463, %v3610
        %v3621 = vmul.f32 %v3603, %v3610
        %v3632 = vrot.slane %v3612, 2
        %v3633 = vrot.slane %v3613, 2
        %v3634 = vsel %vm2098, %v3632, %v3633
        %v3635 = vrot.slane %v3614, 2
        %v3636 = vsel %vm2098, %v3633, %v3635
        %v3637 = vrot.slane %v3615, 2
        %v3638 = vsel %vm2098, %v3635, %v3637
        %v3639 = vrot.slane %v3616, 2
        %v3640 = vsel %vm2098, %v3637, %v3639
        %v3641 = vrot.slane %v3617, 2
        %v3642 = vsel %vm2098, %v3639, %v3641
        %v3643 = vrot.slane %v3618, 2
        %v3644 = vsel %vm2098, %v3641, %v3643
        %v3645 = vrot.slane %v3619, 2
        %v3646 = vsel %vm2098, %v3643, %v3645
        %v3647 = vrot.slane %v3620, 2
        %v3648 = vsel %vm2098, %v3645, %v3647
        %v3649 = vrot.slane %v3621, 2
        %v3650 = vsel %vm2098, %v3647, %v3649
        %v3661 = vadd.f32 %v3590, %v3634
        %v3662 = vadd.f32 %v3591, %v3636
        %v3663 = vadd.f32 %v3592, %v3638
        %v3664 = vadd.f32 %v3593, %v3640
        %v3665 = vadd.f32 %v3594, %v3642
        %v3666 = vadd.f32 %v3595, %v3644
        %v3667 = vadd.f32 %v3596, %v3646
        %v3668 = vadd.f32 %v3597, %v3648
        %v3669 = vadd.f32 %v3598, %v3650
        %v3670 = vadd.f32 %v3599, %v3649
        %v3671 = vld [vmem:[#allocation3 + $0x2c] sm:$0x1]
        %v3672 = vunpack.c.l.bf16 %v3671
        %s3673 = scalar_lea.vmem %s27, 4
        %v3674 = vld [vmem:[%s3673] sm:$0x1]
        %v3676 = vlaneseq
        %v3677 = vshrl.u32 %v3676, 7
        %v3678 = vsub.s32 0, %v3677
        %v3679 = vrot.slane %v3674, %v3678
        %v3681 = vmul.f32 %v3602, %v3679
        %v3682 = vmul.f32 %v3427, %v3679
        %v3683 = vmul.f32 %v3428, %v3679
        %v3684 = vmul.f32 %v3429, %v3679
        %v3685 = vmul.f32 %v3430, %v3679
        %v3686 = vmul.f32 %v3431, %v3679
        %v3687 = vmul.f32 %v3432, %v3679
        %v3688 = vmul.f32 %v3433, %v3679
        %v3689 = vmul.f32 %v3463, %v3679
        %v3690 = vmul.f32 %v3603, %v3679
        %v3691 = vmul.f32 %v3672, %v3679
        %v3703 = vrot.slane %v3681, 3
        %v3704 = vrot.slane %v3682, 3
        %v3705 = vsel %vm2241, %v3703, %v3704
        %v3706 = vrot.slane %v3683, 3
        %v3707 = vsel %vm2241, %v3704, %v3706
        %v3708 = vrot.slane %v3684, 3
        %v3709 = vsel %vm2241, %v3706, %v3708
        %v3710 = vrot.slane %v3685, 3
        %v3711 = vsel %vm2241, %v3708, %v3710
        %v3712 = vrot.slane %v3686, 3
        %v3713 = vsel %vm2241, %v3710, %v3712
        %v3714 = vrot.slane %v3687, 3
        %v3715 = vsel %vm2241, %v3712, %v3714
        %v3716 = vrot.slane %v3688, 3
        %v3717 = vsel %vm2241, %v3714, %v3716
        %v3718 = vrot.slane %v3689, 3
        %v3719 = vsel %vm2241, %v3716, %v3718
        %v3720 = vrot.slane %v3690, 3
        %v3721 = vsel %vm2241, %v3718, %v3720
        %v3722 = vrot.slane %v3691, 3
        %v3723 = vsel %vm2241, %v3720, %v3722
        %v3734 = vadd.f32 %v3661, %v3705
        %v3735 = vadd.f32 %v3662, %v3707
        %v3736 = vadd.f32 %v3663, %v3709
        %v3737 = vadd.f32 %v3664, %v3711
        %v3738 = vadd.f32 %v3665, %v3713
        %v3739 = vadd.f32 %v3666, %v3715
        %v3740 = vadd.f32 %v3667, %v3717
        %v3741 = vadd.f32 %v3668, %v3719
        %v3742 = vadd.f32 %v3669, %v3721
        %v3743 = vadd.f32 %v3670, %v3723
        %v3744 = vld [vmem:[#allocation3 + $0x4] sm:$0xc]
        %v3745 = vunpack.c.l.bf16 %v3744
        %s3746 = scalar_lea.vmem %s27, 5
        %v3747 = vld [vmem:[%s3746] sm:$0x1]
        %v3749 = vlaneseq
        %v3750 = vshrl.u32 %v3749, 7
        %v3751 = vsub.s32 0, %v3750
        %v3752 = vrot.slane %v3747, %v3751
        %v3754 = vmul.f32 %v3745, %v3752
        %v3755 = vmul.f32 %v3427, %v3752
        %v3756 = vmul.f32 %v3428, %v3752
        %v3757 = vmul.f32 %v3429, %v3752
        %v3758 = vmul.f32 %v3430, %v3752
        %v3759 = vmul.f32 %v3431, %v3752
        %v3760 = vmul.f32 %v3432, %v3752
        %v3761 = vmul.f32 %v3433, %v3752
        %v3762 = vmul.f32 %v3463, %v3752
        %v3763 = vmul.f32 %v3603, %v3752
        %v3764 = vmul.f32 %v3672, %v3752
        %v3776 = vrot.slane %v3754, 4
        %v3777 = vrot.slane %v3755, 4
        %v3778 = vsel %vm2315, %v3776, %v3777
        %v3779 = vrot.slane %v3756, 4
        %v3780 = vsel %vm2315, %v3777, %v3779
        %v3781 = vrot.slane %v3757, 4
        %v3782 = vsel %vm2315, %v3779, %v3781
        %v3783 = vrot.slane %v3758, 4
        %v3784 = vsel %vm2315, %v3781, %v3783
        %v3785 = vrot.slane %v3759, 4
        %v3786 = vsel %vm2315, %v3783, %v3785
        %v3787 = vrot.slane %v3760, 4
        %v3788 = vsel %vm2315, %v3785, %v3787
        %v3789 = vrot.slane %v3761, 4
        %v3790 = vsel %vm2315, %v3787, %v3789
        %v3791 = vrot.slane %v3762, 4
        %v3792 = vsel %vm2315, %v3789, %v3791
        %v3793 = vrot.slane %v3763, 4
        %v3794 = vsel %vm2315, %v3791, %v3793
        %v3795 = vrot.slane %v3764, 4
        %v3796 = vsel %vm2315, %v3793, %v3795
        %v3807 = vadd.f32 %v3734, %v3778
        %v3808 = vadd.f32 %v3735, %v3780
        %v3809 = vadd.f32 %v3736, %v3782
        %v3810 = vadd.f32 %v3737, %v3784
        %v3811 = vadd.f32 %v3738, %v3786
        %v3812 = vadd.f32 %v3739, %v3788
        %v3813 = vadd.f32 %v3740, %v3790
        %v3814 = vadd.f32 %v3741, %v3792
        %v3815 = vadd.f32 %v3742, %v3794
        %v3816 = vadd.f32 %v3743, %v3796
        %v3817 = vld [vmem:[#allocation3 + $0x8] sm:$0xc]
        %v3818 = vld [vmem:[#allocation3 + $0x2c] sm:$0xf]
        %v3819 = vld [vmem:[#allocation3 + $0x30] sm:$0x1]
        %v3820 = vunpack.c.l.bf16 %v3817
        %v3821 = vunpack.c.l.bf16 %v3818
        %v3822 = vunpack.c.l.bf16 %v3819
        %s3823 = scalar_lea.vmem %s27, 6
        %v3824 = vld [vmem:[%s3823] sm:$0x1]
        %v3826 = vlaneseq
        %v3827 = vshrl.u32 %v3826, 7
        %v3828 = vsub.s32 0, %v3827
        %v3829 = vrot.slane %v3824, %v3828
        %v3831 = vmul.f32 %v3820, %v3829
        %v3832 = vmul.f32 %v3428, %v3829
        %v3833 = vmul.f32 %v3429, %v3829
        %v3834 = vmul.f32 %v3430, %v3829
        %v3835 = vmul.f32 %v3431, %v3829
        %v3836 = vmul.f32 %v3432, %v3829
        %v3837 = vmul.f32 %v3433, %v3829
        %v3838 = vmul.f32 %v3463, %v3829
        %v3839 = vmul.f32 %v3603, %v3829
        %v3840 = vmul.f32 %v3821, %v3829
        %v3841 = vmul.f32 %v3822, %v3829
        %v3853 = vrot.slane %v3831, 4
        %v3854 = vrot.slane %v3832, 4
        %v3855 = vsel %vm2315, %v3853, %v3854
        %v3856 = vrot.slane %v3833, 4
        %v3857 = vsel %vm2315, %v3854, %v3856
        %v3858 = vrot.slane %v3834, 4
        %v3859 = vsel %vm2315, %v3856, %v3858
        %v3860 = vrot.slane %v3835, 4
        %v3861 = vsel %vm2315, %v3858, %v3860
        %v3862 = vrot.slane %v3836, 4
        %v3863 = vsel %vm2315, %v3860, %v3862
        %v3864 = vrot.slane %v3837, 4
        %v3865 = vsel %vm2315, %v3862, %v3864
        %v3866 = vrot.slane %v3838, 4
        %v3867 = vsel %vm2315, %v3864, %v3866
        %v3868 = vrot.slane %v3839, 4
        %v3869 = vsel %vm2315, %v3866, %v3868
        %v3870 = vrot.slane %v3840, 4
        %v3871 = vsel %vm2315, %v3868, %v3870
        %v3872 = vrot.slane %v3841, 4
        %v3873 = vsel %vm2315, %v3870, %v3872
        %v3884 = vadd.f32 %v3807, %v3855
        %v3885 = vadd.f32 %v3808, %v3857
        %v3886 = vadd.f32 %v3809, %v3859
        %v3887 = vadd.f32 %v3810, %v3861
        %v3888 = vadd.f32 %v3811, %v3863
        %v3889 = vadd.f32 %v3812, %v3865
        %v3890 = vadd.f32 %v3813, %v3867
        %v3891 = vadd.f32 %v3814, %v3869
        %v3892 = vadd.f32 %v3815, %v3871
        %v3893 = vadd.f32 %v3816, %v3873
        %v3894 = vld [vmem:[#allocation3 + $0x30] sm:$0x3]
        %v3895 = vunpack.c.l.bf16 %v3894
        %s3896 = scalar_lea.vmem %s27, 7
        %v3897 = vld [vmem:[%s3896] sm:$0x1]
        %v3899 = vlaneseq
        %v3900 = vshrl.u32 %v3899, 7
        %v3901 = vsub.s32 0, %v3900
        %v3902 = vrot.slane %v3897, %v3901
        %v3904 = vmul.f32 %v3820, %v3902
        %v3905 = vmul.f32 %v3428, %v3902
        %v3906 = vmul.f32 %v3429, %v3902
        %v3907 = vmul.f32 %v3430, %v3902
        %v3908 = vmul.f32 %v3431, %v3902
        %v3909 = vmul.f32 %v3432, %v3902
        %v3910 = vmul.f32 %v3433, %v3902
        %v3911 = vmul.f32 %v3463, %v3902
        %v3912 = vmul.f32 %v3603, %v3902
        %v3913 = vmul.f32 %v3821, %v3902
        %v3914 = vmul.f32 %v3895, %v3902
        %v3926 = vrot.slane %v3904, 5
        %v3927 = vrot.slane %v3905, 5
        %v3928 = vsel %vm2466, %v3926, %v3927
        %v3929 = vrot.slane %v3906, 5
        %v3930 = vsel %vm2466, %v3927, %v3929
        %v3931 = vrot.slane %v3907, 5
        %v3932 = vsel %vm2466, %v3929, %v3931
        %v3933 = vrot.slane %v3908, 5
        %v3934 = vsel %vm2466, %v3931, %v3933
        %v3935 = vrot.slane %v3909, 5
        %v3936 = vsel %vm2466, %v3933, %v3935
        %v3937 = vrot.slane %v3910, 5
        %v3938 = vsel %vm2466, %v3935, %v3937
        %v3939 = vrot.slane %v3911, 5
        %v3940 = vsel %vm2466, %v3937, %v3939
        %v3941 = vrot.slane %v3912, 5
        %v3942 = vsel %vm2466, %v3939, %v3941
        %v3943 = vrot.slane %v3913, 5
        %v3944 = vsel %vm2466, %v3941, %v3943
        %v3945 = vrot.slane %v3914, 5
        %v3946 = vsel %vm2466, %v3943, %v3945
        %v3957 = vadd.f32 %v3884, %v3928
        %v3958 = vadd.f32 %v3885, %v3930
        %v3959 = vadd.f32 %v3886, %v3932
        %v3960 = vadd.f32 %v3887, %v3934
        %v3961 = vadd.f32 %v3888, %v3936
        %v3962 = vadd.f32 %v3889, %v3938
        %v3963 = vadd.f32 %v3890, %v3940
        %v3964 = vadd.f32 %v3891, %v3942
        %v3965 = vadd.f32 %v3892, %v3944
        %v3966 = vadd.f32 %v3893, %v3946
        %v3967 = vld [vmem:[#allocation3 + $0x8] sm:$0x8]
        %v3968 = vunpack.c.l.bf16 %v3967
        %s3969 = scalar_lea.vmem %s27, 8
        %v3970 = vld [vmem:[%s3969] sm:$0x1]
        %v3972 = vlaneseq
        %v3973 = vshrl.u32 %v3972, 7
        %v3974 = vsub.s32 0, %v3973
        %v3975 = vrot.slane %v3970, %v3974
        %v3977 = vmul.f32 %v3968, %v3975
        %v3978 = vmul.f32 %v3428, %v3975
        %v3979 = vmul.f32 %v3429, %v3975
        %v3980 = vmul.f32 %v3430, %v3975
        %v3981 = vmul.f32 %v3431, %v3975
        %v3982 = vmul.f32 %v3432, %v3975
        %v3983 = vmul.f32 %v3433, %v3975
        %v3984 = vmul.f32 %v3463, %v3975
        %v3985 = vmul.f32 %v3603, %v3975
        %v3986 = vmul.f32 %v3821, %v3975
        %v3987 = vmul.f32 %v3895, %v3975
        %v3999 = vrot.slane %v3977, 6
        %v4000 = vrot.slane %v3978, 6
        %v4001 = vsel %vm2540, %v3999, %v4000
        %v4002 = vrot.slane %v3979, 6
        %v4003 = vsel %vm2540, %v4000, %v4002
        %v4004 = vrot.slane %v3980, 6
        %v4005 = vsel %vm2540, %v4002, %v4004
        %v4006 = vrot.slane %v3981, 6
        %v4007 = vsel %vm2540, %v4004, %v4006
        %v4008 = vrot.slane %v3982, 6
        %v4009 = vsel %vm2540, %v4006, %v4008
        %v4010 = vrot.slane %v3983, 6
        %v4011 = vsel %vm2540, %v4008, %v4010
        %v4012 = vrot.slane %v3984, 6
        %v4013 = vsel %vm2540, %v4010, %v4012
        %v4014 = vrot.slane %v3985, 6
        %v4015 = vsel %vm2540, %v4012, %v4014
        %v4016 = vrot.slane %v3986, 6
        %v4017 = vsel %vm2540, %v4014, %v4016
        %v4018 = vrot.slane %v3987, 6
        %v4019 = vsel %vm2540, %v4016, %v4018
        %v4030 = vadd.f32 %v3957, %v4001
        %v4031 = vadd.f32 %v3958, %v4003
        %v4032 = vadd.f32 %v3959, %v4005
        %v4033 = vadd.f32 %v3960, %v4007
        %v4034 = vadd.f32 %v3961, %v4009
        %v4035 = vadd.f32 %v3962, %v4011
        %v4036 = vadd.f32 %v3963, %v4013
        %v4037 = vadd.f32 %v3964, %v4015
        %v4038 = vadd.f32 %v3965, %v4017
        %v4039 = vadd.f32 %v3966, %v4019
        %v4040 = vld [vmem:[%s29] sm:$0x1]
        %v4042 = vlaneseq
        %v4043 = vshrl.u32 %v4042, 7
        %v4044 = vsub.s32 0, %v4043
        %v4045 = vrot.slane %v4040, %v4044
        %v4047 = vadd.f32 %v4030, %v4045
        %v4048 = vadd.f32 %v4031, %v4045
        %v4049 = vadd.f32 %v4032, %v4045
        %v4050 = vadd.f32 %v4033, %v4045
        %v4051 = vadd.f32 %v4034, %v4045
        %v4052 = vadd.f32 %v4035, %v4045
        %v4053 = vadd.f32 %v4036, %v4045
        %v4054 = vadd.f32 %v4037, %v4045
        %v4055 = vadd.f32 %v4038, %v4045
        %v4056 = vadd.f32 %v4039, %v4045
        %v4057 = vmax.f32 %v4047, 0.0
        %v4058 = vmax.f32 %v4048, 0.0
        %v4059 = vmax.f32 %v4049, 0.0
        %v4060 = vmax.f32 %v4050, 0.0
        %v4061 = vmax.f32 %v4051, 0.0
        %v4062 = vmax.f32 %v4052, 0.0
        %v4063 = vmax.f32 %v4053, 0.0
        %v4064 = vmax.f32 %v4054, 0.0
        %v4065 = vmax.f32 %v4055, 0.0
        %v4066 = vmax.f32 %v4056, 0.0
        %v4067 = vmin.f32 %v4057, 6.0
        %v4068 = vmin.f32 %v4058, 6.0
        %v4069 = vmin.f32 %v4059, 6.0
        %v4070 = vmin.f32 %v4060, 6.0
        %v4071 = vmin.f32 %v4061, 6.0
        %v4072 = vmin.f32 %v4062, 6.0
        %v4073 = vmin.f32 %v4063, 6.0
        %v4074 = vmin.f32 %v4064, 6.0
        %v4075 = vmin.f32 %v4065, 6.0
        %v4076 = vmin.f32 %v4066, 6.0
        %v4077 = vpack.c.bf16 %v4068, %v4067
        %v4078 = vpack.c.bf16 %v4070, %v4069
        %v4079 = vpack.c.bf16 %v4072, %v4071
        %v4080 = vpack.c.bf16 %v4074, %v4073
        %v4081 = vpack.c.bf16 %v4076, %v4075
        %v4082 = vld [vmem:[%s31] sm:$0xf]
        %v4083 = vld [vmem:[%s31 + $0x4] sm:$0xf]
        %v4084 = vld [vmem:[%s31 + $0x8] sm:$0xf]
        %v4085 = vld [vmem:[%s31 + $0xc] sm:$0xf]
        %v4086 = vld [vmem:[%s31 + $0x10] sm:$0x3]
        %v4092 = vunpack.c.l.b16 %v4082
        %v4093 = vunpack.c.l.b16 %v4083
        %v4094 = vunpack.c.l.b16 %v4084
        %v4095 = vunpack.c.l.b16 %v4085
        %v4096 = vunpack.c.l.b16 %v4086
        %v4097 = vpack.c.b16 %v4093, %v4092
        %v4098 = vpack.c.b16 %v4095, %v4094
        %v4099 = vpack.c.b16 %v4096, %v4096
        %v4101 = vsel %vm2670, %v4097, 0
        %v4104 = vsel %vm2670, %v4098, 0
        %v4107 = vsel %vm2670, %v4099, 0
        %v4110 = vsel %vm2028, %v4081, 0
        %4112 = vmatprep.subr.bf16.mxu0 0
        %4113 = vmatpush1.bf16.msra.mxu0 0
        %4114 = vmatprep.subr.bf16.mxu0 0
        %4115 = vmatpush1.bf16.msra.mxu0 0
        %4116 = vmatprep.subr.bf16.mxu0 0
        %4117 = vmatpush1.bf16.msra.mxu0 0
        %4118 = vmatprep.subr.bf16.mxu0 0
        %4119 = vmatpush1.bf16.msra.mxu0 %v4110
        %4120 = vmatprep.subr.bf16.mxu0 0
        %4121 = vmatpush1.bf16.msra.mxu0 %v4080
        %4122 = vmatprep.subr.bf16.mxu0 0
        %4123 = vmatpush1.bf16.msra.mxu0 %v4079
        %4124 = vmatprep.subr.bf16.mxu0 0
        %4125 = vmatpush1.bf16.msra.mxu0 %v4078
        %4126 = vmatprep.subr.bf16.mxu0 0
        %4127 = vmatpush1.bf16.msra.mxu0 %v4077
        %4128 = vmatprep.subr.bf16.mxu0 0
        %4129 = vmatpush2.bf16.msra.mxu0 0
        %4130 = vmatprep.subr.bf16.mxu0 0
        %4131 = vmatpush2.bf16.msra.mxu0 0
        %4132 = vmatprep.subr.bf16.mxu0 0
        %4133 = vmatpush2.bf16.msra.mxu0 0
        %4134 = vmatprep.subr.bf16.mxu0 0
        %4135 = vmatpush2.bf16.msra.mxu0 0
        %4136 = vmatprep.subr.bf16.mxu0 0
        %4137 = vmatpush2.bf16.msra.mxu0 0
        %4138 = vmatprep.subr.bf16.mxu0 0
        %4139 = vmatpush2.bf16.msra.mxu0 0
        %4140 = vmatprep.subr.bf16.mxu0 0
        %4141 = vmatpush2.bf16.msra.mxu0 0
        %4142 = vmatprep.subr.bf16.mxu0 0
        %4143 = vmatpush2.bf16.msra.mxu0 0
        %4144 = vmatprep.mubr.bf16.mxu0 0
        %4145 = vmatmul.mubr.bf16.gmra.mxu0 %v4101
        %v4146 = vpop.f32.mrf.mxu0
        %v4147 = vadd.f32 0.0, %v4146
        %v4148 = vpop.f32.mrf.mxu0
        %v4149 = vpop.f32.mrf.mxu0
        %v4150 = vadd.f32 0.0, %v4149
        %v4151 = vpop.f32.mrf.mxu0
        %4152 = vmatprep.mubr.bf16.mxu0 0
        %4153 = vmatmul.mubr.bf16.gmra.mxu0 %v4104
        %v4154 = vpop.f32.mrf.mxu0
        %v4155 = vadd.f32 0.0, %v4154
        %v4156 = vpop.f32.mrf.mxu0
        %v4157 = vpop.f32.mrf.mxu0
        %v4158 = vadd.f32 0.0, %v4157
        %v4159 = vpop.f32.mrf.mxu0
        %4160 = vmatprep.mubr.bf16.mxu0 0
        %4161 = vmatmul.mubr.bf16.gmra.mxu0 %v4107
        %v4162 = vpop.f32.mrf.mxu0
        %v4163 = vadd.f32 0.0, %v4162
        %v4164 = vpop.f32.mrf.mxu0
        %v4165 = vpop.f32.mrf.mxu0
        %v4166 = vpop.f32.mrf.mxu0
        %4167 = vdwg.mxu0
        %v4168 = vpack.c.bf16 %v4150, %v4147
        %v4169 = vpack.c.bf16 %v4158, %v4155
        %v4170 = vpack.c.bf16 %v4163, %v4163
        %v4171 = vld [vmem:[%s33] sm:$0xf]
        %v4172 = vld [vmem:[%s33 + $0x4] sm:$0xf]
        %v4173 = vld [vmem:[%s33 + $0x8] sm:$0xf]
        %v4174 = vld [vmem:[%s33 + $0xc] sm:$0xf]
        %v4175 = vld [vmem:[%s33 + $0x10] sm:$0xf]
        %v4176 = vld [vmem:[%s33 + $0x14] sm:$0xf]
        %v4177 = vld [vmem:[%s33 + $0x18] sm:$0xf]
        %v4178 = vld [vmem:[%s33 + $0x1c] sm:$0xf]
        %v4179 = vld [vmem:[%s33 + $0x20] sm:$0xf]
        %v4180 = vld [vmem:[%s33 + $0x24] sm:$0xf]
        %v4181 = vld [vmem:[%s33 + $0x28] sm:$0xf]
        %v4182 = vld [vmem:[%s33 + $0x2c] sm:$0xf]
        %v4183 = vld [vmem:[%s33 + $0x30] sm:$0xf]
        %v4184 = vld [vmem:[%s33 + $0x34] sm:$0xf]
        %v4185 = vld [vmem:[%s33 + $0x38] sm:$0xf]
        %v4186 = vld [vmem:[%s33 + $0x3c] sm:$0xf]
        %v4187 = vld [vmem:[%s35] sm:$0x1]
        %v4189 = vlaneseq
        %v4190 = vshrl.u32 %v4189, 7
        %v4191 = vsub.s32 0, %v4190
        %v4192 = vrot.slane %v4187, %v4191
        %v4210 = vunpack.c.l.b16 %v4171
        %v4211 = vunpack.c.l.b16 %v4172
        %v4212 = vunpack.c.l.b16 %v4173
        %v4213 = vunpack.c.l.b16 %v4174
        %v4214 = vunpack.c.l.b16 %v4175
        %v4215 = vunpack.c.l.b16 %v4176
        %v4216 = vunpack.c.l.b16 %v4177
        %v4217 = vunpack.c.l.b16 %v4178
        %v4218 = vunpack.c.l.b16 %v4179
        %v4219 = vunpack.c.l.b16 %v4180
        %v4220 = vunpack.c.l.b16 %v4181
        %v4221 = vunpack.c.l.b16 %v4182
        %v4222 = vunpack.c.l.b16 %v4183
        %v4223 = vunpack.c.l.b16 %v4184
        %v4224 = vunpack.c.l.b16 %v4185
        %v4225 = vunpack.c.l.b16 %v4186
        %v4226 = vpack.c.b16 %v4211, %v4210
        %v4227 = vpack.c.b16 %v4213, %v4212
        %v4228 = vpack.c.b16 %v4215, %v4214
        %v4229 = vpack.c.b16 %v4217, %v4216
        %v4230 = vpack.c.b16 %v4219, %v4218
        %v4231 = vpack.c.b16 %v4221, %v4220
        %v4232 = vpack.c.b16 %v4223, %v4222
        %v4233 = vpack.c.b16 %v4225, %v4224
        %4242 = vmatprep.subr.bf16.mxu0 0
        %4243 = vmatpush1.bf16.msra.mxu0 %v4233
        %4244 = vmatprep.subr.bf16.mxu0 0
        %4245 = vmatpush1.bf16.msra.mxu0 %v4232
        %4246 = vmatprep.subr.bf16.mxu0 0
        %4247 = vmatpush1.bf16.msra.mxu0 %v4231
        %4248 = vmatprep.subr.bf16.mxu0 0
        %4249 = vmatpush1.bf16.msra.mxu0 %v4230
        %4250 = vmatprep.subr.bf16.mxu0 0
        %4251 = vmatpush1.bf16.msra.mxu0 %v4229
        %4252 = vmatprep.subr.bf16.mxu0 0
        %4253 = vmatpush1.bf16.msra.mxu0 %v4228
        %4254 = vmatprep.subr.bf16.mxu0 0
        %4255 = vmatpush1.bf16.msra.mxu0 %v4227
        %4256 = vmatprep.subr.bf16.mxu0 0
        %4257 = vmatpush1.bf16.msra.mxu0 %v4226
        %4258 = vmatprep.subr.bf16.mxu0 0
        %4259 = vmatpush2.bf16.msra.mxu0 0
        %4260 = vmatprep.subr.bf16.mxu0 0
        %4261 = vmatpush2.bf16.msra.mxu0 0
        %4262 = vmatprep.subr.bf16.mxu0 0
        %4263 = vmatpush2.bf16.msra.mxu0 0
        %4264 = vmatprep.subr.bf16.mxu0 0
        %4265 = vmatpush2.bf16.msra.mxu0 0
        %4266 = vmatprep.subr.bf16.mxu0 0
        %4267 = vmatpush2.bf16.msra.mxu0 0
        %4268 = vmatprep.subr.bf16.mxu0 0
        %4269 = vmatpush2.bf16.msra.mxu0 0
        %4270 = vmatprep.subr.bf16.mxu0 0
        %4271 = vmatpush2.bf16.msra.mxu0 0
        %4272 = vmatprep.subr.bf16.mxu0 0
        %4273 = vmatpush2.bf16.msra.mxu0 0
        %4274 = vmatprep.mubr.bf16.mxu0 0
        %4275 = vmatmul.mubr.bf16.gmra.mxu0 %v4168
        %v4276 = vpop.f32.mrf.mxu0
        %v4277 = vadd.f32 %v4192, %v4276
        %v4278 = vpop.f32.mrf.mxu0
        %v4279 = vpop.f32.mrf.mxu0
        %v4280 = vadd.f32 %v4192, %v4279
        %v4281 = vpop.f32.mrf.mxu0
        %4282 = vmatprep.mubr.bf16.mxu0 0
        %4283 = vmatmul.mubr.bf16.gmra.mxu0 %v4169
        %v4284 = vpop.f32.mrf.mxu0
        %v4285 = vadd.f32 %v4192, %v4284
        %v4286 = vpop.f32.mrf.mxu0
        %v4287 = vpop.f32.mrf.mxu0
        %v4288 = vadd.f32 %v4192, %v4287
        %v4289 = vpop.f32.mrf.mxu0
        %4290 = vmatprep.mubr.bf16.mxu0 0
        %4291 = vmatmul.mubr.bf16.gmra.mxu0 %v4170
        %v4292 = vpop.f32.mrf.mxu0
        %v4293 = vadd.f32 %v4192, %v4292
        %v4294 = vpop.f32.mrf.mxu0
        %v4295 = vpop.f32.mrf.mxu0
        %v4296 = vpop.f32.mrf.mxu0
        %4297 = vdwg.mxu0
        %v4298 = vld [vmem:[%s37] sm:$0xff]
        %v4299 = vld [vmem:[%s37 + $0x8] sm:$0xff]
        %v4300 = vld [vmem:[%s37 + $0x10] sm:$0xff]
        %v4301 = vld [vmem:[%s37 + $0x18] sm:$0xff]
        %v4302 = vld [vmem:[%s37 + $0x20] sm:$0xf]
        %4304 = vset.pattern.permute.xlu0 0
        %4305 = vperm.xlu0 %4304, %v4298
        %v4306 = vpop.permute.xlu0 %4305
        %4309 = vset.pattern.permute.xlu0 0
        %4310 = vperm.xlu0 %4309, %v4299
        %v4311 = vpop.permute.xlu0 %4310
        %4314 = vset.pattern.permute.xlu0 0
        %4315 = vperm.xlu0 %4314, %v4300
        %v4316 = vpop.permute.xlu0 %4315
        %4319 = vset.pattern.permute.xlu0 0
        %4320 = vperm.xlu0 %4319, %v4301
        %v4321 = vpop.permute.xlu0 %4320
        %4324 = vset.pattern.permute.xlu0 0
        %4325 = vperm.xlu0 %4324, %v4302
        %v4326 = vpop.permute.xlu0 %4325
        %v4328 = vmul.f32 %v4277, %v4306
        %v4329 = vmul.f32 %v4280, %v4311
        %v4330 = vmul.f32 %v4285, %v4316
        %v4331 = vmul.f32 %v4288, %v4321
        %v4332 = vmul.f32 %v4293, %v4326
        %v4333 = vpack.c.bf16 %v4329, %v4328
        %v4334 = vpack.c.bf16 %v4331, %v4330
        %v4335 = vpack.c.bf16 %v4332, %v4332
        %v4336 = vld [vmem:[%s39] sm:$0xf]
        %v4337 = vld [vmem:[%s39 + $0x4] sm:$0xf]
        %v4338 = vld [vmem:[%s39 + $0x8] sm:$0xf]
        %v4339 = vld [vmem:[%s39 + $0xc] sm:$0xf]
        %v4340 = vld [vmem:[%s39 + $0x10] sm:$0xf]
        %v4341 = vld [vmem:[%s39 + $0x14] sm:$0xf]
        %v4342 = vld [vmem:[%s39 + $0x18] sm:$0xf]
        %v4343 = vld [vmem:[%s39 + $0x1c] sm:$0xf]
        %v4344 = vld [vmem:[%s39 + $0x20] sm:$0xf]
        %v4345 = vld [vmem:[%s39 + $0x24] sm:$0xf]
        %v4346 = vld [vmem:[%s39 + $0x28] sm:$0xf]
        %v4347 = vld [vmem:[%s39 + $0x2c] sm:$0xf]
        %v4348 = vld [vmem:[%s39 + $0x30] sm:$0xf]
        %v4349 = vld [vmem:[%s39 + $0x34] sm:$0xf]
        %v4350 = vld [vmem:[%s39 + $0x38] sm:$0xf]
        %v4351 = vld [vmem:[%s39 + $0x3c] sm:$0xf]
        %v4352 = vld [vmem:[%s41] sm:$0x1]
        %v4354 = vlaneseq
        %v4355 = vshrl.u32 %v4354, 7
        %v4356 = vsub.s32 0, %v4355
        %v4357 = vrot.slane %v4352, %v4356
        %v4375 = vunpack.c.l.b16 %v4336
        %v4376 = vunpack.c.l.b16 %v4337
        %v4377 = vunpack.c.l.b16 %v4338
        %v4378 = vunpack.c.l.b16 %v4339
        %v4379 = vunpack.c.l.b16 %v4340
        %v4380 = vunpack.c.l.b16 %v4341
        %v4381 = vunpack.c.l.b16 %v4342
        %v4382 = vunpack.c.l.b16 %v4343
        %v4383 = vunpack.c.l.b16 %v4344
        %v4384 = vunpack.c.l.b16 %v4345
        %v4385 = vunpack.c.l.b16 %v4346
        %v4386 = vunpack.c.l.b16 %v4347
        %v4387 = vunpack.c.l.b16 %v4348
        %v4388 = vunpack.c.l.b16 %v4349
        %v4389 = vunpack.c.l.b16 %v4350
        %v4390 = vunpack.c.l.b16 %v4351
        %v4391 = vpack.c.b16 %v4376, %v4375
        %v4392 = vpack.c.b16 %v4378, %v4377
        %v4393 = vpack.c.b16 %v4380, %v4379
        %v4394 = vpack.c.b16 %v4382, %v4381
        %v4395 = vpack.c.b16 %v4384, %v4383
        %v4396 = vpack.c.b16 %v4386, %v4385
        %v4397 = vpack.c.b16 %v4388, %v4387
        %v4398 = vpack.c.b16 %v4390, %v4389
        %4407 = vmatprep.subr.bf16.mxu0 0
        %4408 = vmatpush1.bf16.msra.mxu0 %v4398
        %4409 = vmatprep.subr.bf16.mxu0 0
        %4410 = vmatpush1.bf16.msra.mxu0 %v4397
        %4411 = vmatprep.subr.bf16.mxu0 0
        %4412 = vmatpush1.bf16.msra.mxu0 %v4396
        %4413 = vmatprep.subr.bf16.mxu0 0
        %4414 = vmatpush1.bf16.msra.mxu0 %v4395
        %4415 = vmatprep.subr.bf16.mxu0 0
        %4416 = vmatpush1.bf16.msra.mxu0 %v4394
        %4417 = vmatprep.subr.bf16.mxu0 0
        %4418 = vmatpush1.bf16.msra.mxu0 %v4393
        %4419 = vmatprep.subr.bf16.mxu0 0
        %4420 = vmatpush1.bf16.msra.mxu0 %v4392
        %4421 = vmatprep.subr.bf16.mxu0 0
        %4422 = vmatpush1.bf16.msra.mxu0 %v4391
        %4423 = vmatprep.subr.bf16.mxu0 0
        %4424 = vmatpush2.bf16.msra.mxu0 0
        %4425 = vmatprep.subr.bf16.mxu0 0
        %4426 = vmatpush2.bf16.msra.mxu0 0
        %4427 = vmatprep.subr.bf16.mxu0 0
        %4428 = vmatpush2.bf16.msra.mxu0 0
        %4429 = vmatprep.subr.bf16.mxu0 0
        %4430 = vmatpush2.bf16.msra.mxu0 0
        %4431 = vmatprep.subr.bf16.mxu0 0
        %4432 = vmatpush2.bf16.msra.mxu0 0
        %4433 = vmatprep.subr.bf16.mxu0 0
        %4434 = vmatpush2.bf16.msra.mxu0 0
        %4435 = vmatprep.subr.bf16.mxu0 0
        %4436 = vmatpush2.bf16.msra.mxu0 0
        %4437 = vmatprep.subr.bf16.mxu0 0
        %4438 = vmatpush2.bf16.msra.mxu0 0
        %4439 = vmatprep.mubr.bf16.mxu0 0
        %4440 = vmatmul.mubr.bf16.gmra.mxu0 %v4333
        %v4441 = vpop.f32.mrf.mxu0
        %v4442 = vadd.f32 %v4357, %v4441
        %v4443 = vpop.f32.mrf.mxu0
        %v4444 = vpop.f32.mrf.mxu0
        %v4445 = vadd.f32 %v4357, %v4444
        %v4446 = vpop.f32.mrf.mxu0
        %4447 = vmatprep.mubr.bf16.mxu0 0
        %4448 = vmatmul.mubr.bf16.gmra.mxu0 %v4334
        %v4449 = vpop.f32.mrf.mxu0
        %v4450 = vadd.f32 %v4357, %v4449
        %v4451 = vpop.f32.mrf.mxu0
        %v4452 = vpop.f32.mrf.mxu0
        %v4453 = vadd.f32 %v4357, %v4452
        %v4454 = vpop.f32.mrf.mxu0
        %4455 = vmatprep.mubr.bf16.mxu0 0
        %4456 = vmatmul.mubr.bf16.gmra.mxu0 %v4335
        %v4457 = vpop.f32.mrf.mxu0
        %v4458 = vadd.f32 %v4357, %v4457
        %v4459 = vpop.f32.mrf.mxu0
        %v4460 = vpop.f32.mrf.mxu0
        %v4461 = vpop.f32.mrf.mxu0
        %4462 = vdwg.mxu0
        %v4463 = vmax.f32 %v4442, 0.0
        %v4464 = vmax.f32 %v4445, 0.0
        %v4465 = vmax.f32 %v4450, 0.0
        %v4466 = vmax.f32 %v4453, 0.0
        %v4467 = vmax.f32 %v4458, 0.0
        %v4468 = vmin.f32 %v4463, 6.0
        %v4469 = vmin.f32 %v4464, 6.0
        %v4470 = vmin.f32 %v4465, 6.0
        %v4471 = vmin.f32 %v4466, 6.0
        %v4472 = vmin.f32 %v4467, 6.0
        %v4473 = vld [vmem:[%s43] sm:$0xff]
        %v4474 = vld [vmem:[%s43 + $0x8] sm:$0xff]
        %v4475 = vld [vmem:[%s43 + $0x10] sm:$0xff]
        %v4476 = vld [vmem:[%s43 + $0x18] sm:$0xff]
        %v4477 = vld [vmem:[%s43 + $0x20] sm:$0xf]
        %4479 = vset.pattern.permute.xlu0 0
        %4480 = vperm.xlu0 %4479, %v4473
        %v4481 = vpop.permute.xlu0 %4480
        %4484 = vset.pattern.permute.xlu0 0
        %4485 = vperm.xlu0 %4484, %v4474
        %v4486 = vpop.permute.xlu0 %4485
        %4489 = vset.pattern.permute.xlu0 0
        %4490 = vperm.xlu0 %4489, %v4475
        %v4491 = vpop.permute.xlu0 %4490
        %4494 = vset.pattern.permute.xlu0 0
        %4495 = vperm.xlu0 %4494, %v4476
        %v4496 = vpop.permute.xlu0 %4495
        %4499 = vset.pattern.permute.xlu0 0
        %4500 = vperm.xlu0 %4499, %v4477
        %v4501 = vpop.permute.xlu0 %4500
        %v4503 = vmul.f32 %v4468, %v4481
        %v4504 = vmul.f32 %v4469, %v4486
        %v4505 = vmul.f32 %v4470, %v4491
        %v4506 = vmul.f32 %v4471, %v4496
        %v4507 = vmul.f32 %v4472, %v4501
        %v4508 = vpack.c.bf16 %v4504, %v4503
        %v4509 = vpack.c.bf16 %v4506, %v4505
        %v4510 = vpack.c.bf16 %v4507, %v4507
        %v4514 = vunpack.c.l.b16 %v4508
        %v4515 = vunpack.c.h.b16 %v4508
        %v4516 = vunpack.c.l.b16 %v4509
        %v4517 = vunpack.c.h.b16 %v4509
        %v4518 = vunpack.c.l.b16 %v4510
        %v4519 = vpack.c.b16 %v4514, %v4514
        %v4520 = vpack.c.b16 %v4515, %v4515
        %v4521 = vpack.c.b16 %v4516, %v4516
        %v4522 = vpack.c.b16 %v4517, %v4517
        %v4523 = vpack.c.b16 %v4518, %v4518
        %4529 = vst [vmem:[#allocation4] sm:$0xf] %v4519
        %4530 = vst [vmem:[#allocation4 + $0x4] sm:$0xf] %v4520
        %4531 = vst [vmem:[#allocation4 + $0x8] sm:$0xf] %v4521
        %4532 = vst [vmem:[#allocation4 + $0xc] sm:$0xf] %v4522
        %4533 = vst [vmem:[#allocation4 + $0x10] sm:$0x3] %v4523
        %v4534 = vld [vmem:[#allocation4] sm:$0xf]
        %v4535 = vld [vmem:[#allocation4 + $0x4] sm:$0xf]
        %v4536 = vld [vmem:[#allocation4 + $0x8] sm:$0x7]
        %v4537 = vunpack.c.l.bf16 %v4534
        %v4538 = vunpack.c.l.bf16 %v4535
        %v4539 = vunpack.c.l.bf16 %v4536
        %v4540 = vld [vmem:[%s45] sm:$0x1]
        %v4542 = vlaneseq
        %v4543 = vshrl.u32 %v4542, 7
        %v4544 = vsub.s32 0, %v4543
        %v4545 = vrot.slane %v4540, %v4544
        %v4547 = vmul.f32 %v4537, %v4545
        %v4548 = vmul.f32 %v4538, %v4545
        %v4549 = vmul.f32 %v4539, %v4545
        %v4550 = vadd.f32 %v4547, 0.0
        %v4551 = vadd.f32 %v4548, 0.0
        %v4552 = vadd.f32 %v4549, 0.0
        %v4553 = vld [vmem:[#allocation4 + $0x8] sm:$0xf]
        %v4554 = vunpack.c.l.bf16 %v4553
        %s4555 = scalar_lea.vmem %s45, 1
        %v4556 = vld [vmem:[%s4555] sm:$0x1]
        %v4558 = vlaneseq
        %v4559 = vshrl.u32 %v4558, 7
        %v4560 = vsub.s32 0, %v4559
        %v4561 = vrot.slane %v4556, %v4560
        %v4563 = vmul.f32 %v4537, %v4561
        %v4564 = vmul.f32 %v4538, %v4561
        %v4565 = vmul.f32 %v4554, %v4561
        %v4569 = vrot.slane %v4563, 1
        %v4570 = vrot.slane %v4564, 1
        %v4571 = vsel %vm2028, %v4569, %v4570
        %v4572 = vrot.slane %v4565, 1
        %v4573 = vsel %vm2028, %v4570, %v4572
        %v4577 = vadd.f32 %v4550, %v4571
        %v4578 = vadd.f32 %v4551, %v4573
        %v4579 = vadd.f32 %v4552, %v4572
        %v4580 = vld [vmem:[#allocation4] sm:$0xe]
        %v4581 = vunpack.c.l.bf16 %v4580
        %s4582 = scalar_lea.vmem %s45, 2
        %v4583 = vld [vmem:[%s4582] sm:$0x1]
        %v4585 = vlaneseq
        %v4586 = vshrl.u32 %v4585, 7
        %v4587 = vsub.s32 0, %v4586
        %v4588 = vrot.slane %v4583, %v4587
        %v4590 = vmul.f32 %v4581, %v4588
        %v4591 = vmul.f32 %v4538, %v4588
        %v4592 = vmul.f32 %v4554, %v4588
        %v4596 = vrot.slane %v4590, 2
        %v4597 = vrot.slane %v4591, 2
        %v4598 = vsel %vm2098, %v4596, %v4597
        %v4599 = vrot.slane %v4592, 2
        %v4600 = vsel %vm2098, %v4597, %v4599
        %v4604 = vadd.f32 %v4577, %v4598
        %v4605 = vadd.f32 %v4578, %v4600
        %v4606 = vadd.f32 %v4579, %v4599
        %v4607 = vld [vmem:[#allocation4] sm:$0x8]
        %v4608 = vld [vmem:[#allocation4 + $0xc] sm:$0x3]
        %v4609 = vunpack.c.l.bf16 %v4607
        %v4610 = vunpack.c.l.bf16 %v4608
        %s4611 = scalar_lea.vmem %s45, 3
        %v4612 = vld [vmem:[%s4611] sm:$0x1]
        %v4614 = vlaneseq
        %v4615 = vshrl.u32 %v4614, 7
        %v4616 = vsub.s32 0, %v4615
        %v4617 = vrot.slane %v4612, %v4616
        %v4619 = vmul.f32 %v4609, %v4617
        %v4620 = vmul.f32 %v4538, %v4617
        %v4621 = vmul.f32 %v4554, %v4617
        %v4622 = vmul.f32 %v4610, %v4617
        %v4627 = vrot.slane %v4619, 6
        %v4628 = vrot.slane %v4620, 6
        %v4629 = vsel %vm2540, %v4627, %v4628
        %v4630 = vrot.slane %v4621, 6
        %v4631 = vsel %vm2540, %v4628, %v4630
        %v4632 = vrot.slane %v4622, 6
        %v4633 = vsel %vm2540, %v4630, %v4632
        %v4637 = vadd.f32 %v4604, %v4629
        %v4638 = vadd.f32 %v4605, %v4631
        %v4639 = vadd.f32 %v4606, %v4633
        %v4640 = vld [vmem:[#allocation4 + $0xc] sm:$0x7]
        %v4641 = vunpack.c.l.bf16 %v4640
        %s4642 = scalar_lea.vmem %s45, 4
        %v4643 = vld [vmem:[%s4642] sm:$0x1]
        %v4645 = vlaneseq
        %v4646 = vshrl.u32 %v4645, 7
        %v4647 = vsub.s32 0, %v4646
        %v4648 = vrot.slane %v4643, %v4647
        %v4650 = vmul.f32 %v4609, %v4648
        %v4651 = vmul.f32 %v4538, %v4648
        %v4652 = vmul.f32 %v4554, %v4648
        %v4653 = vmul.f32 %v4641, %v4648
        %vm4658 = vcmask 1040384
        %v4659 = vrot.slane %v4650, 7
        %v4660 = vrot.slane %v4651, 7
        %v4661 = vsel %vm4658, %v4659, %v4660
        %v4662 = vrot.slane %v4652, 7
        %v4663 = vsel %vm4658, %v4660, %v4662
        %v4664 = vrot.slane %v4653, 7
        %v4665 = vsel %vm4658, %v4662, %v4664
        %v4669 = vadd.f32 %v4637, %v4661
        %v4670 = vadd.f32 %v4638, %v4663
        %v4671 = vadd.f32 %v4639, %v4665
        %s4672 = scalar_lea.vmem %s45, 5
        %v4673 = vld [vmem:[%s4672] sm:$0x1]
        %v4675 = vlaneseq
        %v4676 = vshrl.u32 %v4675, 7
        %v4677 = vsub.s32 0, %v4676
        %v4678 = vrot.slane %v4673, %v4677
        %v4680 = vmul.f32 %v4538, %v4678
        %v4681 = vmul.f32 %v4554, %v4678
        %v4682 = vmul.f32 %v4641, %v4678
        %v4683 = vadd.f32 %v4669, %v4680
        %v4684 = vadd.f32 %v4670, %v4681
        %v4685 = vadd.f32 %v4671, %v4682
        %v4686 = vld [vmem:[#allocation4 + $0x4] sm:$0xc]
        %v4687 = vld [vmem:[#allocation4 + $0xc] sm:$0xf]
        %v4688 = vld [vmem:[#allocation4 + $0x10] sm:$0x1]
        %v4689 = vunpack.c.l.bf16 %v4686
        %v4690 = vunpack.c.l.bf16 %v4687
        %v4691 = vunpack.c.l.bf16 %v4688
        %s4692 = scalar_lea.vmem %s45, 6
        %v4693 = vld [vmem:[%s4692] sm:$0x1]
        %v4695 = vlaneseq
        %v4696 = vshrl.u32 %v4695, 7
        %v4697 = vsub.s32 0, %v4696
        %v4698 = vrot.slane %v4693, %v4697
        %v4700 = vmul.f32 %v4689, %v4698
        %v4701 = vmul.f32 %v4554, %v4698
        %v4702 = vmul.f32 %v4690, %v4698
        %v4703 = vmul.f32 %v4691, %v4698
        %v4708 = vrot.slane %v4700, 4
        %v4709 = vrot.slane %v4701, 4
        %v4710 = vsel %vm2315, %v4708, %v4709
        %v4711 = vrot.slane %v4702, 4
        %v4712 = vsel %vm2315, %v4709, %v4711
        %v4713 = vrot.slane %v4703, 4
        %v4714 = vsel %vm2315, %v4711, %v4713
        %v4718 = vadd.f32 %v4683, %v4710
        %v4719 = vadd.f32 %v4684, %v4712
        %v4720 = vadd.f32 %v4685, %v4714
        %v4721 = vld [vmem:[#allocation4 + $0x10] sm:$0x3]
        %v4722 = vunpack.c.l.bf16 %v4721
        %s4723 = scalar_lea.vmem %s45, 7
        %v4724 = vld [vmem:[%s4723] sm:$0x1]
        %v4726 = vlaneseq
        %v4727 = vshrl.u32 %v4726, 7
        %v4728 = vsub.s32 0, %v4727
        %v4729 = vrot.slane %v4724, %v4728
        %v4731 = vmul.f32 %v4689, %v4729
        %v4732 = vmul.f32 %v4554, %v4729
        %v4733 = vmul.f32 %v4690, %v4729
        %v4734 = vmul.f32 %v4722, %v4729
        %v4739 = vrot.slane %v4731, 5
        %v4740 = vrot.slane %v4732, 5
        %v4741 = vsel %vm2466, %v4739, %v4740
        %v4742 = vrot.slane %v4733, 5
        %v4743 = vsel %vm2466, %v4740, %v4742
        %v4744 = vrot.slane %v4734, 5
        %v4745 = vsel %vm2466, %v4742, %v4744
        %v4749 = vadd.f32 %v4718, %v4741
        %v4750 = vadd.f32 %v4719, %v4743
        %v4751 = vadd.f32 %v4720, %v4745
        %v4752 = vld [vmem:[#allocation4 + $0x4] sm:$0x8]
        %v4753 = vunpack.c.l.bf16 %v4752
        %s4754 = scalar_lea.vmem %s45, 8
        %v4755 = vld [vmem:[%s4754] sm:$0x1]
        %v4757 = vlaneseq
        %v4758 = vshrl.u32 %v4757, 7
        %v4759 = vsub.s32 0, %v4758
        %v4760 = vrot.slane %v4755, %v4759
        %v4762 = vmul.f32 %v4753, %v4760
        %v4763 = vmul.f32 %v4554, %v4760
        %v4764 = vmul.f32 %v4690, %v4760
        %v4765 = vmul.f32 %v4722, %v4760
        %v4770 = vrot.slane %v4762, 6
        %v4771 = vrot.slane %v4763, 6
        %v4772 = vsel %vm2540, %v4770, %v4771
        %v4773 = vrot.slane %v4764, 6
        %v4774 = vsel %vm2540, %v4771, %v4773
        %v4775 = vrot.slane %v4765, 6
        %v4776 = vsel %vm2540, %v4773, %v4775
        %v4780 = vadd.f32 %v4749, %v4772
        %v4781 = vadd.f32 %v4750, %v4774
        %v4782 = vadd.f32 %v4751, %v4776
        %v4783 = vld [vmem:[%s47] sm:$0x1]
        %v4785 = vlaneseq
        %v4786 = vshrl.u32 %v4785, 7
        %v4787 = vsub.s32 0, %v4786
        %v4788 = vrot.slane %v4783, %v4787
        %v4790 = vadd.f32 %v4780, %v4788
        %v4791 = vadd.f32 %v4781, %v4788
        %v4792 = vadd.f32 %v4782, %v4788
        %v4793 = vmax.f32 %v4790, 0.0
        %v4794 = vmax.f32 %v4791, 0.0
        %v4795 = vmax.f32 %v4792, 0.0
        %v4796 = vmin.f32 %v4793, 6.0
        %v4797 = vmin.f32 %v4794, 6.0
        %v4798 = vmin.f32 %v4795, 6.0
        %v4799 = vpack.c.bf16 %v4797, %v4796
        %v4800 = vpack.c.bf16 %v4798, %v4798
        %v4801 = vld [vmem:[%s49] sm:$0xf]
        %v4802 = vld [vmem:[%s49 + $0x4] sm:$0xf]
        %v4803 = vld [vmem:[%s49 + $0x8] sm:$0xf]
        %v4804 = vld [vmem:[%s49 + $0xc] sm:$0xf]
        %v4805 = vld [vmem:[%s49 + $0x10] sm:$0x3]
        %v4811 = vunpack.c.l.b16 %v4801
        %v4812 = vunpack.c.l.b16 %v4802
        %v4813 = vunpack.c.l.b16 %v4803
        %v4814 = vunpack.c.l.b16 %v4804
        %v4815 = vunpack.c.l.b16 %v4805
        %v4816 = vpack.c.b16 %v4812, %v4811
        %v4817 = vpack.c.b16 %v4814, %v4813
        %v4818 = vpack.c.b16 %v4815, %v4815
        %vm4819 = vcmask 179200
        %v4821 = vsel %vm4819, %v4816, 0
        %v4824 = vsel %vm4819, %v4817, 0
        %v4827 = vsel %vm4819, %v4818, 0
        %v4830 = vsel %vm2466, %v4800, 0
        %4832 = vmatprep.subr.bf16.mxu0 0
        %4833 = vmatpush1.bf16.msra.mxu0 0
        %4834 = vmatprep.subr.bf16.mxu0 0
        %4835 = vmatpush1.bf16.msra.mxu0 0
        %4836 = vmatprep.subr.bf16.mxu0 0
        %4837 = vmatpush1.bf16.msra.mxu0 0
        %4838 = vmatprep.subr.bf16.mxu0 0
        %4839 = vmatpush1.bf16.msra.mxu0 0
        %4840 = vmatprep.subr.bf16.mxu0 0
        %4841 = vmatpush1.bf16.msra.mxu0 0
        %4842 = vmatprep.subr.bf16.mxu0 0
        %4843 = vmatpush1.bf16.msra.mxu0 0
        %4844 = vmatprep.subr.bf16.mxu0 0
        %4845 = vmatpush1.bf16.msra.mxu0 %v4830
        %4846 = vmatprep.subr.bf16.mxu0 0
        %4847 = vmatpush1.bf16.msra.mxu0 %v4799
        %4848 = vmatprep.subr.bf16.mxu0 0
        %4849 = vmatpush2.bf16.msra.mxu0 0
        %4850 = vmatprep.subr.bf16.mxu0 0
        %4851 = vmatpush2.bf16.msra.mxu0 0
        %4852 = vmatprep.subr.bf16.mxu0 0
        %4853 = vmatpush2.bf16.msra.mxu0 0
        %4854 = vmatprep.subr.bf16.mxu0 0
        %4855 = vmatpush2.bf16.msra.mxu0 0
        %4856 = vmatprep.subr.bf16.mxu0 0
        %4857 = vmatpush2.bf16.msra.mxu0 0
        %4858 = vmatprep.subr.bf16.mxu0 0
        %4859 = vmatpush2.bf16.msra.mxu0 0
        %4860 = vmatprep.subr.bf16.mxu0 0
        %4861 = vmatpush2.bf16.msra.mxu0 0
        %4862 = vmatprep.subr.bf16.mxu0 0
        %4863 = vmatpush2.bf16.msra.mxu0 0
        %4864 = vmatprep.mubr.bf16.mxu0 0
        %4865 = vmatmul.mubr.bf16.gmra.mxu0 %v4821
        %v4866 = vpop.f32.mrf.mxu0
        %v4867 = vadd.f32 0.0, %v4866
        %v4868 = vpop.f32.mrf.mxu0
        %v4869 = vpop.f32.mrf.mxu0
        %v4870 = vadd.f32 0.0, %v4869
        %v4871 = vpop.f32.mrf.mxu0
        %4872 = vmatprep.mubr.bf16.mxu0 0
        %4873 = vmatmul.mubr.bf16.gmra.mxu0 %v4824
        %v4874 = vpop.f32.mrf.mxu0
        %v4875 = vadd.f32 0.0, %v4874
        %v4876 = vpop.f32.mrf.mxu0
        %v4877 = vpop.f32.mrf.mxu0
        %v4878 = vadd.f32 0.0, %v4877
        %v4879 = vpop.f32.mrf.mxu0
        %4880 = vmatprep.mubr.bf16.mxu0 0
        %4881 = vmatmul.mubr.bf16.gmra.mxu0 %v4827
        %v4882 = vpop.f32.mrf.mxu0
        %v4883 = vadd.f32 0.0, %v4882
        %v4884 = vpop.f32.mrf.mxu0
        %v4885 = vpop.f32.mrf.mxu0
        %v4886 = vpop.f32.mrf.mxu0
        %4887 = vdwg.mxu0
        %v4888 = vpack.c.bf16 %v4870, %v4867
        %v4889 = vpack.c.bf16 %v4878, %v4875
        %v4890 = vpack.c.bf16 %v4883, %v4883
        %v4891 = vld [vmem:[%s51] sm:$0xf]
        %v4892 = vld [vmem:[%s51 + $0x4] sm:$0xf]
        %v4893 = vld [vmem:[%s51 + $0x8] sm:$0xf]
        %v4894 = vld [vmem:[%s51 + $0xc] sm:$0xf]
        %v4895 = vld [vmem:[%s51 + $0x10] sm:$0xf]
        %v4896 = vld [vmem:[%s51 + $0x14] sm:$0xf]
        %v4897 = vld [vmem:[%s51 + $0x18] sm:$0xf]
        %v4898 = vld [vmem:[%s51 + $0x1c] sm:$0xf]
        %v4899 = vld [vmem:[%s51 + $0x20] sm:$0xf]
        %v4900 = vld [vmem:[%s51 + $0x24] sm:$0xf]
        %v4901 = vld [vmem:[%s51 + $0x28] sm:$0xf]
        %v4902 = vld [vmem:[%s51 + $0x2c] sm:$0xf]
        %v4903 = vld [vmem:[%s51 + $0x30] sm:$0xf]
        %v4904 = vld [vmem:[%s51 + $0x34] sm:$0xf]
        %v4905 = vld [vmem:[%s51 + $0x38] sm:$0xf]
        %v4906 = vld [vmem:[%s51 + $0x3c] sm:$0xf]
        %v4907 = vld [vmem:[%s53] sm:$0x1]
        %v4909 = vlaneseq
        %v4910 = vshrl.u32 %v4909, 7
        %v4911 = vsub.s32 0, %v4910
        %v4912 = vrot.slane %v4907, %v4911
        %v4930 = vunpack.c.l.b16 %v4891
        %v4931 = vunpack.c.l.b16 %v4892
        %v4932 = vunpack.c.l.b16 %v4893
        %v4933 = vunpack.c.l.b16 %v4894
        %v4934 = vunpack.c.l.b16 %v4895
        %v4935 = vunpack.c.l.b16 %v4896
        %v4936 = vunpack.c.l.b16 %v4897
        %v4937 = vunpack.c.l.b16 %v4898
        %v4938 = vunpack.c.l.b16 %v4899
        %v4939 = vunpack.c.l.b16 %v4900
        %v4940 = vunpack.c.l.b16 %v4901
        %v4941 = vunpack.c.l.b16 %v4902
        %v4942 = vunpack.c.l.b16 %v4903
        %v4943 = vunpack.c.l.b16 %v4904
        %v4944 = vunpack.c.l.b16 %v4905
        %v4945 = vunpack.c.l.b16 %v4906
        %v4946 = vpack.c.b16 %v4931, %v4930
        %v4947 = vpack.c.b16 %v4933, %v4932
        %v4948 = vpack.c.b16 %v4935, %v4934
        %v4949 = vpack.c.b16 %v4937, %v4936
        %v4950 = vpack.c.b16 %v4939, %v4938
        %v4951 = vpack.c.b16 %v4941, %v4940
        %v4952 = vpack.c.b16 %v4943, %v4942
        %v4953 = vpack.c.b16 %v4945, %v4944
        %4962 = vmatprep.subr.bf16.mxu0 0
        %4963 = vmatpush1.bf16.msra.mxu0 %v4953
        %4964 = vmatprep.subr.bf16.mxu0 0
        %4965 = vmatpush1.bf16.msra.mxu0 %v4952
        %4966 = vmatprep.subr.bf16.mxu0 0
        %4967 = vmatpush1.bf16.msra.mxu0 %v4951
        %4968 = vmatprep.subr.bf16.mxu0 0
        %4969 = vmatpush1.bf16.msra.mxu0 %v4950
        %4970 = vmatprep.subr.bf16.mxu0 0
        %4971 = vmatpush1.bf16.msra.mxu0 %v4949
        %4972 = vmatprep.subr.bf16.mxu0 0
        %4973 = vmatpush1.bf16.msra.mxu0 %v4948
        %4974 = vmatprep.subr.bf16.mxu0 0
        %4975 = vmatpush1.bf16.msra.mxu0 %v4947
        %4976 = vmatprep.subr.bf16.mxu0 0
        %4977 = vmatpush1.bf16.msra.mxu0 %v4946
        %4978 = vmatprep.subr.bf16.mxu0 0
        %4979 = vmatpush2.bf16.msra.mxu0 0
        %4980 = vmatprep.subr.bf16.mxu0 0
        %4981 = vmatpush2.bf16.msra.mxu0 0
        %4982 = vmatprep.subr.bf16.mxu0 0
        %4983 = vmatpush2.bf16.msra.mxu0 0
        %4984 = vmatprep.subr.bf16.mxu0 0
        %4985 = vmatpush2.bf16.msra.mxu0 0
        %4986 = vmatprep.subr.bf16.mxu0 0
        %4987 = vmatpush2.bf16.msra.mxu0 0
        %4988 = vmatprep.subr.bf16.mxu0 0
        %4989 = vmatpush2.bf16.msra.mxu0 0
        %4990 = vmatprep.subr.bf16.mxu0 0
        %4991 = vmatpush2.bf16.msra.mxu0 0
        %4992 = vmatprep.subr.bf16.mxu0 0
        %4993 = vmatpush2.bf16.msra.mxu0 0
        %4994 = vmatprep.mubr.bf16.mxu0 0
        %4995 = vmatmul.mubr.bf16.gmra.mxu0 %v4888
        %v4996 = vpop.f32.mrf.mxu0
        %v4997 = vadd.f32 %v4912, %v4996
        %v4998 = vpop.f32.mrf.mxu0
        %v4999 = vpop.f32.mrf.mxu0
        %v5000 = vadd.f32 %v4912, %v4999
        %v5001 = vpop.f32.mrf.mxu0
        %5002 = vmatprep.mubr.bf16.mxu0 0
        %5003 = vmatmul.mubr.bf16.gmra.mxu0 %v4889
        %v5004 = vpop.f32.mrf.mxu0
        %v5005 = vadd.f32 %v4912, %v5004
        %v5006 = vpop.f32.mrf.mxu0
        %v5007 = vpop.f32.mrf.mxu0
        %v5008 = vadd.f32 %v4912, %v5007
        %v5009 = vpop.f32.mrf.mxu0
        %5010 = vmatprep.mubr.bf16.mxu0 0
        %5011 = vmatmul.mubr.bf16.gmra.mxu0 %v4890
        %v5012 = vpop.f32.mrf.mxu0
        %v5013 = vadd.f32 %v4912, %v5012
        %v5014 = vpop.f32.mrf.mxu0
        %v5015 = vpop.f32.mrf.mxu0
        %v5016 = vpop.f32.mrf.mxu0
        %5017 = vdwg.mxu0
        %v5018 = vld [vmem:[%s55] sm:$0xff]
        %v5019 = vld [vmem:[%s55 + $0x8] sm:$0xff]
        %v5020 = vld [vmem:[%s55 + $0x10] sm:$0xff]
        %v5021 = vld [vmem:[%s55 + $0x18] sm:$0xff]
        %v5022 = vld [vmem:[%s55 + $0x20] sm:$0xf]
        %5024 = vset.pattern.permute.xlu0 0
        %5025 = vperm.xlu0 %5024, %v5018
        %v5026 = vpop.permute.xlu0 %5025
        %5029 = vset.pattern.permute.xlu0 0
        %5030 = vperm.xlu0 %5029, %v5019
        %v5031 = vpop.permute.xlu0 %5030
        %5034 = vset.pattern.permute.xlu0 0
        %5035 = vperm.xlu0 %5034, %v5020
        %v5036 = vpop.permute.xlu0 %5035
        %5039 = vset.pattern.permute.xlu0 0
        %5040 = vperm.xlu0 %5039, %v5021
        %v5041 = vpop.permute.xlu0 %5040
        %5044 = vset.pattern.permute.xlu0 0
        %5045 = vperm.xlu0 %5044, %v5022
        %v5046 = vpop.permute.xlu0 %5045
        %v5048 = vmul.f32 %v4997, %v5026
        %v5049 = vmul.f32 %v5000, %v5031
        %v5050 = vmul.f32 %v5005, %v5036
        %v5051 = vmul.f32 %v5008, %v5041
        %v5052 = vmul.f32 %v5013, %v5046
        %v5053 = vunpack.c.l.bf16 %v4333
        %v5054 = vunpack.c.h.bf16 %v4333
        %v5055 = vunpack.c.l.bf16 %v4334
        %v5056 = vunpack.c.h.bf16 %v4334
        %v5057 = vunpack.c.l.bf16 %v4335
        %v5058 = vadd.f32 %v5048, %v5053
        %v5059 = vadd.f32 %v5049, %v5054
        %v5060 = vadd.f32 %v5050, %v5055
        %v5061 = vadd.f32 %v5051, %v5056
        %v5062 = vadd.f32 %v5052, %v5057
        %v5063 = vpack.c.bf16 %v5059, %v5058
        %v5064 = vpack.c.bf16 %v5061, %v5060
        %v5065 = vpack.c.bf16 %v5062, %v5062
        %v5066 = vld [vmem:[%s57] sm:$0xf]
        %v5067 = vld [vmem:[%s57 + $0x4] sm:$0xf]
        %v5068 = vld [vmem:[%s57 + $0x8] sm:$0xf]
        %v5069 = vld [vmem:[%s57 + $0xc] sm:$0xf]
        %v5070 = vld [vmem:[%s57 + $0x10] sm:$0xf]
        %v5071 = vld [vmem:[%s57 + $0x14] sm:$0xf]
        %v5072 = vld [vmem:[%s57 + $0x18] sm:$0xf]
        %v5073 = vld [vmem:[%s57 + $0x1c] sm:$0xf]
        %v5074 = vld [vmem:[%s57 + $0x20] sm:$0xf]
        %v5075 = vld [vmem:[%s57 + $0x24] sm:$0xf]
        %v5076 = vld [vmem:[%s57 + $0x28] sm:$0xf]
        %v5077 = vld [vmem:[%s57 + $0x2c] sm:$0xf]
        %v5078 = vld [vmem:[%s57 + $0x30] sm:$0xf]
        %v5079 = vld [vmem:[%s57 + $0x34] sm:$0xf]
        %v5080 = vld [vmem:[%s57 + $0x38] sm:$0xf]
        %v5081 = vld [vmem:[%s57 + $0x3c] sm:$0xf]
        %v5082 = vld [vmem:[%s59] sm:$0x1]
        %v5084 = vlaneseq
        %v5085 = vshrl.u32 %v5084, 7
        %v5086 = vsub.s32 0, %v5085
        %v5087 = vrot.slane %v5082, %v5086
        %v5105 = vunpack.c.l.b16 %v5066
        %v5106 = vunpack.c.l.b16 %v5067
        %v5107 = vunpack.c.l.b16 %v5068
        %v5108 = vunpack.c.l.b16 %v5069
        %v5109 = vunpack.c.l.b16 %v5070
        %v5110 = vunpack.c.l.b16 %v5071
        %v5111 = vunpack.c.l.b16 %v5072
        %v5112 = vunpack.c.l.b16 %v5073
        %v5113 = vunpack.c.l.b16 %v5074
        %v5114 = vunpack.c.l.b16 %v5075
        %v5115 = vunpack.c.l.b16 %v5076
        %v5116 = vunpack.c.l.b16 %v5077
        %v5117 = vunpack.c.l.b16 %v5078
        %v5118 = vunpack.c.l.b16 %v5079
        %v5119 = vunpack.c.l.b16 %v5080
        %v5120 = vunpack.c.l.b16 %v5081
        %v5121 = vpack.c.b16 %v5106, %v5105
        %v5122 = vpack.c.b16 %v5108, %v5107
        %v5123 = vpack.c.b16 %v5110, %v5109
        %v5124 = vpack.c.b16 %v5112, %v5111
        %v5125 = vpack.c.b16 %v5114, %v5113
        %v5126 = vpack.c.b16 %v5116, %v5115
        %v5127 = vpack.c.b16 %v5118, %v5117
        %v5128 = vpack.c.b16 %v5120, %v5119
        %5137 = vmatprep.subr.bf16.mxu0 0
        %5138 = vmatpush1.bf16.msra.mxu0 %v5128
        %5139 = vmatprep.subr.bf16.mxu0 0
        %5140 = vmatpush1.bf16.msra.mxu0 %v5127
        %5141 = vmatprep.subr.bf16.mxu0 0
        %5142 = vmatpush1.bf16.msra.mxu0 %v5126
        %5143 = vmatprep.subr.bf16.mxu0 0
        %5144 = vmatpush1.bf16.msra.mxu0 %v5125
        %5145 = vmatprep.subr.bf16.mxu0 0
        %5146 = vmatpush1.bf16.msra.mxu0 %v5124
        %5147 = vmatprep.subr.bf16.mxu0 0
        %5148 = vmatpush1.bf16.msra.mxu0 %v5123
        %5149 = vmatprep.subr.bf16.mxu0 0
        %5150 = vmatpush1.bf16.msra.mxu0 %v5122
        %5151 = vmatprep.subr.bf16.mxu0 0
        %5152 = vmatpush1.bf16.msra.mxu0 %v5121
        %5153 = vmatprep.subr.bf16.mxu0 0
        %5154 = vmatpush2.bf16.msra.mxu0 0
        %5155 = vmatprep.subr.bf16.mxu0 0
        %5156 = vmatpush2.bf16.msra.mxu0 0
        %5157 = vmatprep.subr.bf16.mxu0 0
        %5158 = vmatpush2.bf16.msra.mxu0 0
        %5159 = vmatprep.subr.bf16.mxu0 0
        %5160 = vmatpush2.bf16.msra.mxu0 0
        %5161 = vmatprep.subr.bf16.mxu0 0
        %5162 = vmatpush2.bf16.msra.mxu0 0
        %5163 = vmatprep.subr.bf16.mxu0 0
        %5164 = vmatpush2.bf16.msra.mxu0 0
        %5165 = vmatprep.subr.bf16.mxu0 0
        %5166 = vmatpush2.bf16.msra.mxu0 0
        %5167 = vmatprep.subr.bf16.mxu0 0
        %5168 = vmatpush2.bf16.msra.mxu0 0
        %5169 = vmatprep.mubr.bf16.mxu0 0
        %5170 = vmatmul.mubr.bf16.gmra.mxu0 %v5063
        %v5171 = vpop.f32.mrf.mxu0
        %v5172 = vadd.f32 %v5087, %v5171
        %v5173 = vpop.f32.mrf.mxu0
        %v5174 = vpop.f32.mrf.mxu0
        %v5175 = vadd.f32 %v5087, %v5174
        %v5176 = vpop.f32.mrf.mxu0
        %5177 = vmatprep.mubr.bf16.mxu0 0
        %5178 = vmatmul.mubr.bf16.gmra.mxu0 %v5064
        %v5179 = vpop.f32.mrf.mxu0
        %v5180 = vadd.f32 %v5087, %v5179
        %v5181 = vpop.f32.mrf.mxu0
        %v5182 = vpop.f32.mrf.mxu0
        %v5183 = vadd.f32 %v5087, %v5182
        %v5184 = vpop.f32.mrf.mxu0
        %5185 = vmatprep.mubr.bf16.mxu0 0
        %5186 = vmatmul.mubr.bf16.gmra.mxu0 %v5065
        %v5187 = vpop.f32.mrf.mxu0
        %v5188 = vadd.f32 %v5087, %v5187
        %v5189 = vpop.f32.mrf.mxu0
        %v5190 = vpop.f32.mrf.mxu0
        %v5191 = vpop.f32.mrf.mxu0
        %5192 = vdwg.mxu0
        %v5193 = vmax.f32 %v5172, 0.0
        %v5194 = vmax.f32 %v5175, 0.0
        %v5195 = vmax.f32 %v5180, 0.0
        %v5196 = vmax.f32 %v5183, 0.0
        %v5197 = vmax.f32 %v5188, 0.0
        %v5198 = vmin.f32 %v5193, 6.0
        %v5199 = vmin.f32 %v5194, 6.0
        %v5200 = vmin.f32 %v5195, 6.0
        %v5201 = vmin.f32 %v5196, 6.0
        %v5202 = vmin.f32 %v5197, 6.0
        %v5203 = vld [vmem:[%s61] sm:$0xff]
        %v5204 = vld [vmem:[%s61 + $0x8] sm:$0xff]
        %v5205 = vld [vmem:[%s61 + $0x10] sm:$0xff]
        %v5206 = vld [vmem:[%s61 + $0x18] sm:$0xff]
        %v5207 = vld [vmem:[%s61 + $0x20] sm:$0xf]
        %5209 = vset.pattern.permute.xlu0 0
        %5210 = vperm.xlu0 %5209, %v5203
        %v5211 = vpop.permute.xlu0 %5210
        %5214 = vset.pattern.permute.xlu0 0
        %5215 = vperm.xlu0 %5214, %v5204
        %v5216 = vpop.permute.xlu0 %5215
        %5219 = vset.pattern.permute.xlu0 0
        %5220 = vperm.xlu0 %5219, %v5205
        %v5221 = vpop.permute.xlu0 %5220
        %5224 = vset.pattern.permute.xlu0 0
        %5225 = vperm.xlu0 %5224, %v5206
        %v5226 = vpop.permute.xlu0 %5225
        %5229 = vset.pattern.permute.xlu0 0
        %5230 = vperm.xlu0 %5229, %v5207
        %v5231 = vpop.permute.xlu0 %5230
        %v5233 = vmul.f32 %v5198, %v5211
        %v5234 = vmul.f32 %v5199, %v5216
        %v5235 = vmul.f32 %v5200, %v5221
        %v5236 = vmul.f32 %v5201, %v5226
        %v5237 = vmul.f32 %v5202, %v5231
        %v5238 = vpack.c.bf16 %v5234, %v5233
        %v5239 = vpack.c.bf16 %v5236, %v5235
        %v5240 = vpack.c.bf16 %v5237, %v5237
        %v5244 = vunpack.c.l.b16 %v5238
        %v5245 = vunpack.c.h.b16 %v5238
        %v5246 = vunpack.c.l.b16 %v5239
        %v5247 = vunpack.c.h.b16 %v5239
        %v5248 = vunpack.c.l.b16 %v5240
        %v5249 = vpack.c.b16 %v5244, %v5244
        %v5250 = vpack.c.b16 %v5245, %v5245
        %v5251 = vpack.c.b16 %v5246, %v5246
        %v5252 = vpack.c.b16 %v5247, %v5247
        %v5253 = vpack.c.b16 %v5248, %v5248
        %5259 = vst [vmem:[#allocation5] sm:$0xf] %v5249
        %5260 = vst [vmem:[#allocation5 + $0x4] sm:$0xf] %v5250
        %5261 = vst [vmem:[#allocation5 + $0x8] sm:$0xf] %v5251
        %5262 = vst [vmem:[#allocation5 + $0xc] sm:$0xf] %v5252
        %5263 = vst [vmem:[#allocation5 + $0x10] sm:$0x3] %v5253
        %v5264 = vld [vmem:[#allocation5] sm:$0xf]
        %v5265 = vld [vmem:[#allocation5 + $0x4] sm:$0xf]
        %v5266 = vld [vmem:[#allocation5 + $0x8] sm:$0x7]
        %v5267 = vunpack.c.l.bf16 %v5264
        %v5268 = vunpack.c.l.bf16 %v5265
        %v5269 = vunpack.c.l.bf16 %v5266
        %v5270 = vld [vmem:[%s63] sm:$0x1]
        %v5272 = vlaneseq
        %v5273 = vshrl.u32 %v5272, 7
        %v5274 = vsub.s32 0, %v5273
        %v5275 = vrot.slane %v5270, %v5274
        %v5277 = vmul.f32 %v5267, %v5275
        %v5278 = vmul.f32 %v5268, %v5275
        %v5279 = vmul.f32 %v5269, %v5275
        %v5280 = vadd.f32 %v5277, 0.0
        %v5281 = vadd.f32 %v5278, 0.0
        %v5282 = vadd.f32 %v5279, 0.0
        %v5283 = vld [vmem:[#allocation5 + $0x8] sm:$0xf]
        %v5284 = vunpack.c.l.bf16 %v5283
        %s5285 = scalar_lea.vmem %s63, 1
        %v5286 = vld [vmem:[%s5285] sm:$0x1]
        %v5288 = vlaneseq
        %v5289 = vshrl.u32 %v5288, 7
        %v5290 = vsub.s32 0, %v5289
        %v5291 = vrot.slane %v5286, %v5290
        %v5293 = vmul.f32 %v5267, %v5291
        %v5294 = vmul.f32 %v5268, %v5291
        %v5295 = vmul.f32 %v5284, %v5291
        %v5299 = vrot.slane %v5293, 1
        %v5300 = vrot.slane %v5294, 1
        %v5301 = vsel %vm2028, %v5299, %v5300
        %v5302 = vrot.slane %v5295, 1
        %v5303 = vsel %vm2028, %v5300, %v5302
        %v5307 = vadd.f32 %v5280, %v5301
        %v5308 = vadd.f32 %v5281, %v5303
        %v5309 = vadd.f32 %v5282, %v5302
        %v5310 = vld [vmem:[#allocation5] sm:$0xe]
        %v5311 = vunpack.c.l.bf16 %v5310
        %s5312 = scalar_lea.vmem %s63, 2
        %v5313 = vld [vmem:[%s5312] sm:$0x1]
        %v5315 = vlaneseq
        %v5316 = vshrl.u32 %v5315, 7
        %v5317 = vsub.s32 0, %v5316
        %v5318 = vrot.slane %v5313, %v5317
        %v5320 = vmul.f32 %v5311, %v5318
        %v5321 = vmul.f32 %v5268, %v5318
        %v5322 = vmul.f32 %v5284, %v5318
        %v5326 = vrot.slane %v5320, 2
        %v5327 = vrot.slane %v5321, 2
        %v5328 = vsel %vm2098, %v5326, %v5327
        %v5329 = vrot.slane %v5322, 2
        %v5330 = vsel %vm2098, %v5327, %v5329
        %v5334 = vadd.f32 %v5307, %v5328
        %v5335 = vadd.f32 %v5308, %v5330
        %v5336 = vadd.f32 %v5309, %v5329
        %v5337 = vld [vmem:[#allocation5] sm:$0x8]
        %v5338 = vld [vmem:[#allocation5 + $0xc] sm:$0x3]
        %v5339 = vunpack.c.l.bf16 %v5337
        %v5340 = vunpack.c.l.bf16 %v5338
        %s5341 = scalar_lea.vmem %s63, 3
        %v5342 = vld [vmem:[%s5341] sm:$0x1]
        %v5344 = vlaneseq
        %v5345 = vshrl.u32 %v5344, 7
        %v5346 = vsub.s32 0, %v5345
        %v5347 = vrot.slane %v5342, %v5346
        %v5349 = vmul.f32 %v5339, %v5347
        %v5350 = vmul.f32 %v5268, %v5347
        %v5351 = vmul.f32 %v5284, %v5347
        %v5352 = vmul.f32 %v5340, %v5347
        %v5357 = vrot.slane %v5349, 6
        %v5358 = vrot.slane %v5350, 6
        %v5359 = vsel %vm2540, %v5357, %v5358
        %v5360 = vrot.slane %v5351, 6
        %v5361 = vsel %vm2540, %v5358, %v5360
        %v5362 = vrot.slane %v5352, 6
        %v5363 = vsel %vm2540, %v5360, %v5362
        %v5367 = vadd.f32 %v5334, %v5359
        %v5368 = vadd.f32 %v5335, %v5361
        %v5369 = vadd.f32 %v5336, %v5363
        %v5370 = vld [vmem:[#allocation5 + $0xc] sm:$0x7]
        %v5371 = vunpack.c.l.bf16 %v5370
        %s5372 = scalar_lea.vmem %s63, 4
        %v5373 = vld [vmem:[%s5372] sm:$0x1]
        %v5375 = vlaneseq
        %v5376 = vshrl.u32 %v5375, 7
        %v5377 = vsub.s32 0, %v5376
        %v5378 = vrot.slane %v5373, %v5377
        %v5380 = vmul.f32 %v5339, %v5378
        %v5381 = vmul.f32 %v5268, %v5378
        %v5382 = vmul.f32 %v5284, %v5378
        %v5383 = vmul.f32 %v5371, %v5378
        %v5388 = vrot.slane %v5380, 7
        %v5389 = vrot.slane %v5381, 7
        %v5390 = vsel %vm4658, %v5388, %v5389
        %v5391 = vrot.slane %v5382, 7
        %v5392 = vsel %vm4658, %v5389, %v5391
        %v5393 = vrot.slane %v5383, 7
        %v5394 = vsel %vm4658, %v5391, %v5393
        %v5398 = vadd.f32 %v5367, %v5390
        %v5399 = vadd.f32 %v5368, %v5392
        %v5400 = vadd.f32 %v5369, %v5394
        %s5401 = scalar_lea.vmem %s63, 5
        %v5402 = vld [vmem:[%s5401] sm:$0x1]
        %v5404 = vlaneseq
        %v5405 = vshrl.u32 %v5404, 7
        %v5406 = vsub.s32 0, %v5405
        %v5407 = vrot.slane %v5402, %v5406
        %v5409 = vmul.f32 %v5268, %v5407
        %v5410 = vmul.f32 %v5284, %v5407
        %v5411 = vmul.f32 %v5371, %v5407
        %v5412 = vadd.f32 %v5398, %v5409
        %v5413 = vadd.f32 %v5399, %v5410
        %v5414 = vadd.f32 %v5400, %v5411
        %v5415 = vld [vmem:[#allocation5 + $0x4] sm:$0xc]
        %v5416 = vld [vmem:[#allocation5 + $0xc] sm:$0xf]
        %v5417 = vld [vmem:[#allocation5 + $0x10] sm:$0x1]
        %v5418 = vunpack.c.l.bf16 %v5415
        %v5419 = vunpack.c.l.bf16 %v5416
        %v5420 = vunpack.c.l.bf16 %v5417
        %s5421 = scalar_lea.vmem %s63, 6
        %v5422 = vld [vmem:[%s5421] sm:$0x1]
        %v5424 = vlaneseq
        %v5425 = vshrl.u32 %v5424, 7
        %v5426 = vsub.s32 0, %v5425
        %v5427 = vrot.slane %v5422, %v5426
        %v5429 = vmul.f32 %v5418, %v5427
        %v5430 = vmul.f32 %v5284, %v5427
        %v5431 = vmul.f32 %v5419, %v5427
        %v5432 = vmul.f32 %v5420, %v5427
        %v5437 = vrot.slane %v5429, 4
        %v5438 = vrot.slane %v5430, 4
        %v5439 = vsel %vm2315, %v5437, %v5438
        %v5440 = vrot.slane %v5431, 4
        %v5441 = vsel %vm2315, %v5438, %v5440
        %v5442 = vrot.slane %v5432, 4
        %v5443 = vsel %vm2315, %v5440, %v5442
        %v5447 = vadd.f32 %v5412, %v5439
        %v5448 = vadd.f32 %v5413, %v5441
        %v5449 = vadd.f32 %v5414, %v5443
        %v5450 = vld [vmem:[#allocation5 + $0x10] sm:$0x3]
        %v5451 = vunpack.c.l.bf16 %v5450
        %s5452 = scalar_lea.vmem %s63, 7
        %v5453 = vld [vmem:[%s5452] sm:$0x1]
        %v5455 = vlaneseq
        %v5456 = vshrl.u32 %v5455, 7
        %v5457 = vsub.s32 0, %v5456
        %v5458 = vrot.slane %v5453, %v5457
        %v5460 = vmul.f32 %v5418, %v5458
        %v5461 = vmul.f32 %v5284, %v5458
        %v5462 = vmul.f32 %v5419, %v5458
        %v5463 = vmul.f32 %v5451, %v5458
        %v5468 = vrot.slane %v5460, 5
        %v5469 = vrot.slane %v5461, 5
        %v5470 = vsel %vm2466, %v5468, %v5469
        %v5471 = vrot.slane %v5462, 5
        %v5472 = vsel %vm2466, %v5469, %v5471
        %v5473 = vrot.slane %v5463, 5
        %v5474 = vsel %vm2466, %v5471, %v5473
        %v5478 = vadd.f32 %v5447, %v5470
        %v5479 = vadd.f32 %v5448, %v5472
        %v5480 = vadd.f32 %v5449, %v5474
        %v5481 = vld [vmem:[#allocation5 + $0x4] sm:$0x8]
        %v5482 = vunpack.c.l.bf16 %v5481
        %s5483 = scalar_lea.vmem %s63, 8
        %v5484 = vld [vmem:[%s5483] sm:$0x1]
        %v5486 = vlaneseq
        %v5487 = vshrl.u32 %v5486, 7
        %v5488 = vsub.s32 0, %v5487
        %v5489 = vrot.slane %v5484, %v5488
        %v5491 = vmul.f32 %v5482, %v5489
        %v5492 = vmul.f32 %v5284, %v5489
        %v5493 = vmul.f32 %v5419, %v5489
        %v5494 = vmul.f32 %v5451, %v5489
        %v5499 = vrot.slane %v5491, 6
        %v5500 = vrot.slane %v5492, 6
        %v5501 = vsel %vm2540, %v5499, %v5500
        %v5502 = vrot.slane %v5493, 6
        %v5503 = vsel %vm2540, %v5500, %v5502
        %v5504 = vrot.slane %v5494, 6
        %v5505 = vsel %vm2540, %v5502, %v5504
        %v5509 = vadd.f32 %v5478, %v5501
        %v5510 = vadd.f32 %v5479, %v5503
        %v5511 = vadd.f32 %v5480, %v5505
        %v5512 = vld [vmem:[%s65] sm:$0x1]
        %v5514 = vlaneseq
        %v5515 = vshrl.u32 %v5514, 7
        %v5516 = vsub.s32 0, %v5515
        %v5517 = vrot.slane %v5512, %v5516
        %v5519 = vadd.f32 %v5509, %v5517
        %v5520 = vadd.f32 %v5510, %v5517
        %v5521 = vadd.f32 %v5511, %v5517
        %v5522 = vmax.f32 %v5519, 0.0
        %v5523 = vmax.f32 %v5520, 0.0
        %v5524 = vmax.f32 %v5521, 0.0
        %v5525 = vmin.f32 %v5522, 6.0
        %v5526 = vmin.f32 %v5523, 6.0
        %v5527 = vmin.f32 %v5524, 6.0
        %v5528 = vpack.c.bf16 %v5526, %v5525
        %v5529 = vpack.c.bf16 %v5527, %v5527
        %v5530 = vld [vmem:[%s67] sm:$0xf]
        %v5531 = vld [vmem:[%s67 + $0x4] sm:$0xf]
        %v5534 = vunpack.c.l.b16 %v5530
        %v5535 = vunpack.c.l.b16 %v5531
        %v5536 = vpack.c.b16 %v5535, %v5534
        %v5538 = vsel %vm4819, %v5536, 0
        %v5541 = vsel %vm2466, %v5529, 0
        %5543 = vmatprep.subr.bf16.mxu0 0
        %5544 = vmatpush1.bf16.msra.mxu0 0
        %5545 = vmatprep.subr.bf16.mxu0 0
        %5546 = vmatpush1.bf16.msra.mxu0 0
        %5547 = vmatprep.subr.bf16.mxu0 0
        %5548 = vmatpush1.bf16.msra.mxu0 0
        %5549 = vmatprep.subr.bf16.mxu0 0
        %5550 = vmatpush1.bf16.msra.mxu0 0
        %5551 = vmatprep.subr.bf16.mxu0 0
        %5552 = vmatpush1.bf16.msra.mxu0 0
        %5553 = vmatprep.subr.bf16.mxu0 0
        %5554 = vmatpush1.bf16.msra.mxu0 0
        %5555 = vmatprep.subr.bf16.mxu0 0
        %5556 = vmatpush1.bf16.msra.mxu0 %v5541
        %5557 = vmatprep.subr.bf16.mxu0 0
        %5558 = vmatpush1.bf16.msra.mxu0 %v5528
        %5559 = vmatprep.subr.bf16.mxu0 0
        %5560 = vmatpush2.bf16.msra.mxu0 0
        %5561 = vmatprep.subr.bf16.mxu0 0
        %5562 = vmatpush2.bf16.msra.mxu0 0
        %5563 = vmatprep.subr.bf16.mxu0 0
        %5564 = vmatpush2.bf16.msra.mxu0 0
        %5565 = vmatprep.subr.bf16.mxu0 0
        %5566 = vmatpush2.bf16.msra.mxu0 0
        %5567 = vmatprep.subr.bf16.mxu0 0
        %5568 = vmatpush2.bf16.msra.mxu0 0
        %5569 = vmatprep.subr.bf16.mxu0 0
        %5570 = vmatpush2.bf16.msra.mxu0 0
        %5571 = vmatprep.subr.bf16.mxu0 0
        %5572 = vmatpush2.bf16.msra.mxu0 0
        %5573 = vmatprep.subr.bf16.mxu0 0
        %5574 = vmatpush2.bf16.msra.mxu0 0
        %5575 = vmatprep.mubr.bf16.mxu0 0
        %5576 = vmatmul.mubr.bf16.gmra.mxu0 %v5538
        %v5577 = vpop.f32.mrf.mxu0
        %v5578 = vadd.f32 0.0, %v5577
        %v5579 = vpop.f32.mrf.mxu0
        %v5580 = vpop.f32.mrf.mxu0
        %v5581 = vadd.f32 0.0, %v5580
        %v5582 = vpop.f32.mrf.mxu0
        %5583 = vdwg.mxu0
        %v5584 = vpack.c.bf16 %v5581, %v5578
        %v5585 = vld [vmem:[%s69] sm:$0xf]
        %v5586 = vld [vmem:[%s69 + $0x4] sm:$0xf]
        %v5587 = vld [vmem:[%s69 + $0x8] sm:$0xf]
        %v5588 = vld [vmem:[%s69 + $0xc] sm:$0xf]
        %v5589 = vld [vmem:[%s69 + $0x10] sm:$0xf]
        %v5590 = vld [vmem:[%s69 + $0x14] sm:$0xf]
        %v5591 = vld [vmem:[%s69 + $0x18] sm:$0xf]
        %v5592 = vld [vmem:[%s69 + $0x1c] sm:$0xf]
        %v5593 = vld [vmem:[%s69 + $0x20] sm:$0xf]
        %v5594 = vld [vmem:[%s69 + $0x24] sm:$0xf]
        %v5595 = vld [vmem:[%s69 + $0x28] sm:$0xf]
        %v5596 = vld [vmem:[%s69 + $0x2c] sm:$0xf]
        %v5597 = vld [vmem:[%s69 + $0x30] sm:$0xf]
        %v5598 = vld [vmem:[%s69 + $0x34] sm:$0xf]
        %v5599 = vld [vmem:[%s69 + $0x38] sm:$0xf]
        %v5600 = vld [vmem:[%s69 + $0x3c] sm:$0xf]
        %v5601 = vld [vmem:[%s71] sm:$0x1]
        %v5603 = vlaneseq
        %v5604 = vshrl.u32 %v5603, 7
        %v5605 = vsub.s32 0, %v5604
        %v5606 = vrot.slane %v5601, %v5605
        %v5624 = vunpack.c.l.b16 %v5585
        %v5625 = vunpack.c.l.b16 %v5586
        %v5626 = vunpack.c.l.b16 %v5587
        %v5627 = vunpack.c.l.b16 %v5588
        %v5628 = vunpack.c.l.b16 %v5589
        %v5629 = vunpack.c.l.b16 %v5590
        %v5630 = vunpack.c.l.b16 %v5591
        %v5631 = vunpack.c.l.b16 %v5592
        %v5632 = vunpack.c.l.b16 %v5593
        %v5633 = vunpack.c.l.b16 %v5594
        %v5634 = vunpack.c.l.b16 %v5595
        %v5635 = vunpack.c.l.b16 %v5596
        %v5636 = vunpack.c.l.b16 %v5597
        %v5637 = vunpack.c.l.b16 %v5598
        %v5638 = vunpack.c.l.b16 %v5599
        %v5639 = vunpack.c.l.b16 %v5600
        %v5640 = vpack.c.b16 %v5625, %v5624
        %v5641 = vpack.c.b16 %v5627, %v5626
        %v5642 = vpack.c.b16 %v5629, %v5628
        %v5643 = vpack.c.b16 %v5631, %v5630
        %v5644 = vpack.c.b16 %v5633, %v5632
        %v5645 = vpack.c.b16 %v5635, %v5634
        %v5646 = vpack.c.b16 %v5637, %v5636
        %v5647 = vpack.c.b16 %v5639, %v5638
        %5656 = vmatprep.subr.bf16.mxu0 0
        %5657 = vmatpush1.bf16.msra.mxu0 %v5647
        %5658 = vmatprep.subr.bf16.mxu0 0
        %5659 = vmatpush1.bf16.msra.mxu0 %v5646
        %5660 = vmatprep.subr.bf16.mxu0 0
        %5661 = vmatpush1.bf16.msra.mxu0 %v5645
        %5662 = vmatprep.subr.bf16.mxu0 0
        %5663 = vmatpush1.bf16.msra.mxu0 %v5644
        %5664 = vmatprep.subr.bf16.mxu0 0
        %5665 = vmatpush1.bf16.msra.mxu0 %v5643
        %5666 = vmatprep.subr.bf16.mxu0 0
        %5667 = vmatpush1.bf16.msra.mxu0 %v5642
        %5668 = vmatprep.subr.bf16.mxu0 0
        %5669 = vmatpush1.bf16.msra.mxu0 %v5641
        %5670 = vmatprep.subr.bf16.mxu0 0
        %5671 = vmatpush1.bf16.msra.mxu0 %v5640
        %5672 = vmatprep.subr.bf16.mxu0 0
        %5673 = vmatpush2.bf16.msra.mxu0 0
        %5674 = vmatprep.subr.bf16.mxu0 0
        %5675 = vmatpush2.bf16.msra.mxu0 0
        %5676 = vmatprep.subr.bf16.mxu0 0
        %5677 = vmatpush2.bf16.msra.mxu0 0
        %5678 = vmatprep.subr.bf16.mxu0 0
        %5679 = vmatpush2.bf16.msra.mxu0 0
        %5680 = vmatprep.subr.bf16.mxu0 0
        %5681 = vmatpush2.bf16.msra.mxu0 0
        %5682 = vmatprep.subr.bf16.mxu0 0
        %5683 = vmatpush2.bf16.msra.mxu0 0
        %5684 = vmatprep.subr.bf16.mxu0 0
        %5685 = vmatpush2.bf16.msra.mxu0 0
        %5686 = vmatprep.subr.bf16.mxu0 0
        %5687 = vmatpush2.bf16.msra.mxu0 0
        %5688 = vmatprep.mubr.bf16.mxu0 0
        %5689 = vmatmul.mubr.bf16.gmra.mxu0 %v5584
        %v5690 = vpop.f32.mrf.mxu0
        %v5691 = vadd.f32 %v5606, %v5690
        %v5692 = vpop.f32.mrf.mxu0
        %v5693 = vpop.f32.mrf.mxu0
        %v5694 = vadd.f32 %v5606, %v5693
        %v5695 = vpop.f32.mrf.mxu0
        %5696 = vdwg.mxu0
        %v5697 = vld [vmem:[%s73] sm:$0xff]
        %v5698 = vld [vmem:[%s73 + $0x8] sm:$0xff]
        %5700 = vset.pattern.permute.xlu0 0
        %5701 = vperm.xlu0 %5700, %v5697
        %v5702 = vpop.permute.xlu0 %5701
        %5705 = vset.pattern.permute.xlu0 0
        %5706 = vperm.xlu0 %5705, %v5698
        %v5707 = vpop.permute.xlu0 %5706
        %v5709 = vmul.f32 %v5691, %v5702
        %v5710 = vmul.f32 %v5694, %v5707
        %v5711 = vpack.c.bf16 %v5710, %v5709
        %v5712 = vld [vmem:[%s75] sm:$0xff]
        %v5713 = vld [vmem:[%s75 + $0x8] sm:$0xff]
        %v5714 = vld [vmem:[%s75 + $0x10] sm:$0xff]
        %v5715 = vld [vmem:[%s75 + $0x18] sm:$0xff]
        %v5716 = vld [vmem:[%s75 + $0x20] sm:$0xff]
        %v5717 = vld [vmem:[%s75 + $0x28] sm:$0xff]
        %v5718 = vld [vmem:[%s75 + $0x30] sm:$0xff]
        %v5719 = vld [vmem:[%s75 + $0x38] sm:$0xff]
        %v5720 = vld [vmem:[%s75 + $0x40] sm:$0xff]
        %v5721 = vld [vmem:[%s75 + $0x48] sm:$0xff]
        %v5722 = vld [vmem:[%s75 + $0x50] sm:$0xff]
        %v5723 = vld [vmem:[%s75 + $0x58] sm:$0xff]
        %v5724 = vld [vmem:[%s75 + $0x60] sm:$0xff]
        %v5725 = vld [vmem:[%s75 + $0x68] sm:$0xff]
        %v5726 = vld [vmem:[%s75 + $0x70] sm:$0xff]
        %v5727 = vld [vmem:[%s75 + $0x78] sm:$0xff]
        %v5728 = vld [vmem:[%s77] sm:$0x3]
        %v5730 = vlaneseq
        %v5731 = vshrl.u32 %v5730, 7
        %v5732 = vsub.s32 0, %v5731
        %v5733 = vrot.slane %v5728, %v5732
        %v5734 = vlaneseq
        %v5735 = vshrl.u32 %v5734, 7
        %v5736 = vsub.s32 1, %v5735
        %v5737 = vrot.slane %v5728, %v5736
        %v5756 = vunpack.c.l.b16 %v5712
        %v5757 = vunpack.c.h.b16 %v5712
        %v5758 = vunpack.c.l.b16 %v5713
        %v5759 = vunpack.c.h.b16 %v5713
        %v5760 = vunpack.c.l.b16 %v5714
        %v5761 = vunpack.c.h.b16 %v5714
        %v5762 = vunpack.c.l.b16 %v5715
        %v5763 = vunpack.c.h.b16 %v5715
        %v5764 = vunpack.c.l.b16 %v5716
        %v5765 = vunpack.c.h.b16 %v5716
        %v5766 = vunpack.c.l.b16 %v5717
        %v5767 = vunpack.c.h.b16 %v5717
        %v5768 = vunpack.c.l.b16 %v5718
        %v5769 = vunpack.c.h.b16 %v5718
        %v5770 = vunpack.c.l.b16 %v5719
        %v5771 = vunpack.c.h.b16 %v5719
        %v5772 = vunpack.c.l.b16 %v5720
        %v5773 = vunpack.c.h.b16 %v5720
        %v5774 = vunpack.c.l.b16 %v5721
        %v5775 = vunpack.c.h.b16 %v5721
        %v5776 = vunpack.c.l.b16 %v5722
        %v5777 = vunpack.c.h.b16 %v5722
        %v5778 = vunpack.c.l.b16 %v5723
        %v5779 = vunpack.c.h.b16 %v5723
        %v5780 = vunpack.c.l.b16 %v5724
        %v5781 = vunpack.c.h.b16 %v5724
        %v5782 = vunpack.c.l.b16 %v5725
        %v5783 = vunpack.c.h.b16 %v5725
        %v5784 = vunpack.c.l.b16 %v5726
        %v5785 = vunpack.c.h.b16 %v5726
        %v5786 = vunpack.c.l.b16 %v5727
        %v5787 = vunpack.c.h.b16 %v5727
        %v5788 = vpack.c.b16 %v5758, %v5756
        %v5789 = vpack.c.b16 %v5759, %v5757
        %v5790 = vpack.c.b16 %v5762, %v5760
        %v5791 = vpack.c.b16 %v5763, %v5761
        %v5792 = vpack.c.b16 %v5766, %v5764
        %v5793 = vpack.c.b16 %v5767, %v5765
        %v5794 = vpack.c.b16 %v5770, %v5768
        %v5795 = vpack.c.b16 %v5771, %v5769
        %v5796 = vpack.c.b16 %v5774, %v5772
        %v5797 = vpack.c.b16 %v5775, %v5773
        %v5798 = vpack.c.b16 %v5778, %v5776
        %v5799 = vpack.c.b16 %v5779, %v5777
        %v5800 = vpack.c.b16 %v5782, %v5780
        %v5801 = vpack.c.b16 %v5783, %v5781
        %v5802 = vpack.c.b16 %v5786, %v5784
        %v5803 = vpack.c.b16 %v5787, %v5785
        %5820 = vmatprep.subr.bf16.mxu0 %v5803
        %5821 = vmatpush1.bf16.msra.mxu0 %v5802
        %5822 = vmatprep.subr.bf16.mxu0 %v5801
        %5823 = vmatpush1.bf16.msra.mxu0 %v5800
        %5824 = vmatprep.subr.bf16.mxu0 %v5799
        %5825 = vmatpush1.bf16.msra.mxu0 %v5798
        %5826 = vmatprep.subr.bf16.mxu0 %v5797
        %5827 = vmatpush1.bf16.msra.mxu0 %v5796
        %5828 = vmatprep.subr.bf16.mxu0 %v5795
        %5829 = vmatpush1.bf16.msra.mxu0 %v5794
        %5830 = vmatprep.subr.bf16.mxu0 %v5793
        %5831 = vmatpush1.bf16.msra.mxu0 %v5792
        %5832 = vmatprep.subr.bf16.mxu0 %v5791
        %5833 = vmatpush1.bf16.msra.mxu0 %v5790
        %5834 = vmatprep.subr.bf16.mxu0 %v5789
        %5835 = vmatpush1.bf16.msra.mxu0 %v5788
        %5836 = vmatprep.subr.bf16.mxu0 0
        %5837 = vmatpush2.bf16.msra.mxu0 0
        %5838 = vmatprep.subr.bf16.mxu0 0
        %5839 = vmatpush2.bf16.msra.mxu0 0
        %5840 = vmatprep.subr.bf16.mxu0 0
        %5841 = vmatpush2.bf16.msra.mxu0 0
        %5842 = vmatprep.subr.bf16.mxu0 0
        %5843 = vmatpush2.bf16.msra.mxu0 0
        %5844 = vmatprep.subr.bf16.mxu0 0
        %5845 = vmatpush2.bf16.msra.mxu0 0
        %5846 = vmatprep.subr.bf16.mxu0 0
        %5847 = vmatpush2.bf16.msra.mxu0 0
        %5848 = vmatprep.subr.bf16.mxu0 0
        %5849 = vmatpush2.bf16.msra.mxu0 0
        %5850 = vmatprep.subr.bf16.mxu0 0
        %5851 = vmatpush2.bf16.msra.mxu0 0
        %5852 = vmatprep.mubr.bf16.mxu0 0
        %5853 = vmatmul.mubr.bf16.gmra.mxu0 %v5711
        %v5854 = vpop.f32.mrf.mxu0
        %v5855 = vadd.f32 %v5733, %v5854
        %v5856 = vpop.f32.mrf.mxu0
        %v5857 = vadd.f32 %v5737, %v5856
        %v5858 = vpop.f32.mrf.mxu0
        %v5859 = vadd.f32 %v5733, %v5858
        %v5860 = vpop.f32.mrf.mxu0
        %v5861 = vadd.f32 %v5737, %v5860
        %5862 = vdwg.mxu0
        %v5863 = vmax.f32 %v5855, 0.0
        %v5864 = vmax.f32 %v5857, 0.0
        %v5865 = vmax.f32 %v5859, 0.0
        %v5866 = vmax.f32 %v5861, 0.0
        %v5867 = vmin.f32 %v5863, 6.0
        %v5868 = vmin.f32 %v5864, 6.0
        %v5869 = vmin.f32 %v5865, 6.0
        %v5870 = vmin.f32 %v5866, 6.0
        %v5871 = vld [vmem:[%s79] sm:$0xff]
        %v5872 = vld [vmem:[%s79 + $0x8] sm:$0xff]
        %5874 = vset.pattern.permute.xlu0 0
        %5875 = vperm.xlu0 %5874, %v5871
        %v5876 = vpop.permute.xlu0 %5875
        %5879 = vset.pattern.permute.xlu0 0
        %5880 = vperm.xlu0 %5879, %v5872
        %v5881 = vpop.permute.xlu0 %5880
        %v5883 = vmul.f32 %v5867, %v5876
        %v5884 = vmul.f32 %v5868, %v5876
        %v5885 = vmul.f32 %v5869, %v5881
        %v5886 = vmul.f32 %v5870, %v5881
        %v5887 = vpack.c.bf16 %v5885, %v5883
        %v5888 = vpack.c.bf16 %v5886, %v5884
        %v5891 = vunpack.c.l.b16 %v5887
        %v5892 = vunpack.c.l.b16 %v5888
        %v5893 = vunpack.c.h.b16 %v5887
        %v5894 = vunpack.c.h.b16 %v5888
        %v5895 = vpack.c.b16 %v5892, %v5891
        %v5896 = vpack.c.b16 %v5894, %v5893
        %5899 = vst [vmem:[#allocation6] sm:$0xff] %v5895
        %5900 = vst [vmem:[#allocation6 + $0x8] sm:$0xff] %v5896
        %v5901 = vld [vmem:[#allocation6] sm:$0x77]
        %v5902 = vunpack.c.l.bf16 %v5901
        %v5903 = vunpack.c.h.bf16 %v5901
        %v5904 = vld [vmem:[%s81] sm:$0x3]
        %v5906 = vlaneseq
        %v5907 = vshrl.u32 %v5906, 7
        %v5908 = vsub.s32 0, %v5907
        %v5909 = vrot.slane %v5904, %v5908
        %v5910 = vlaneseq
        %v5911 = vshrl.u32 %v5910, 7
        %v5912 = vsub.s32 1, %v5911
        %v5913 = vrot.slane %v5904, %v5912
        %v5916 = vmul.f32 %v5902, %v5909
        %v5917 = vmul.f32 %v5903, %v5913
        %v5918 = vadd.f32 %v5916, 0.0
        %v5919 = vadd.f32 %v5917, 0.0
        %v5920 = vld [vmem:[#allocation6] sm:$0xff]
        %v5921 = vunpack.c.l.bf16 %v5920
        %v5922 = vunpack.c.h.bf16 %v5920
        %s5923 = scalar_lea.vmem %s81, 2
        %v5924 = vld [vmem:[%s5923] sm:$0x3]
        %v5926 = vlaneseq
        %v5927 = vshrl.u32 %v5926, 7
        %v5928 = vsub.s32 0, %v5927
        %v5929 = vrot.slane %v5924, %v5928
        %v5930 = vlaneseq
        %v5931 = vshrl.u32 %v5930, 7
        %v5932 = vsub.s32 1, %v5931
        %v5933 = vrot.slane %v5924, %v5932
        %v5936 = vmul.f32 %v5921, %v5929
        %v5937 = vmul.f32 %v5922, %v5933
        %v5940 = vrot.slane %v5936, 1
        %v5941 = vrot.slane %v5937, 1
        %v5944 = vadd.f32 %v5918, %v5940
        %v5945 = vadd.f32 %v5919, %v5941
        %v5946 = vld [vmem:[#allocation6] sm:$0xee]
        %v5947 = vunpack.c.l.bf16 %v5946
        %v5948 = vunpack.c.h.bf16 %v5946
        %s5949 = scalar_lea.vmem %s81, 4
        %v5950 = vld [vmem:[%s5949] sm:$0x3]
        %v5952 = vlaneseq
        %v5953 = vshrl.u32 %v5952, 7
        %v5954 = vsub.s32 0, %v5953
        %v5955 = vrot.slane %v5950, %v5954
        %v5956 = vlaneseq
        %v5957 = vshrl.u32 %v5956, 7
        %v5958 = vsub.s32 1, %v5957
        %v5959 = vrot.slane %v5950, %v5958
        %v5962 = vmul.f32 %v5947, %v5955
        %v5963 = vmul.f32 %v5948, %v5959
        %v5966 = vrot.slane %v5962, 2
        %v5967 = vrot.slane %v5963, 2
        %v5970 = vadd.f32 %v5944, %v5966
        %v5971 = vadd.f32 %v5945, %v5967
        %v5972 = vld [vmem:[#allocation6] sm:$0xcc]
        %v5973 = vld [vmem:[#allocation6 + $0x8] sm:$0x11]
        %v5974 = vunpack.c.l.bf16 %v5972
        %v5975 = vunpack.c.h.bf16 %v5972
        %v5976 = vunpack.c.l.bf16 %v5973
        %v5977 = vunpack.c.h.bf16 %v5973
        %s5978 = scalar_lea.vmem %s81, 6
        %v5979 = vld [vmem:[%s5978] sm:$0x3]
        %v5981 = vlaneseq
        %v5982 = vshrl.u32 %v5981, 7
        %v5983 = vsub.s32 0, %v5982
        %v5984 = vrot.slane %v5979, %v5983
        %v5985 = vlaneseq
        %v5986 = vshrl.u32 %v5985, 7
        %v5987 = vsub.s32 1, %v5986
        %v5988 = vrot.slane %v5979, %v5987
        %v5991 = vmul.f32 %v5974, %v5984
        %v5992 = vmul.f32 %v5975, %v5988
        %v5993 = vmul.f32 %v5976, %v5984
        %v5994 = vmul.f32 %v5977, %v5988
        %v5999 = vrot.slane %v5991, 4
        %v6000 = vrot.slane %v5993, 4
        %v6001 = vsel %vm2315, %v5999, %v6000
        %v6002 = vrot.slane %v5992, 4
        %v6003 = vrot.slane %v5994, 4
        %v6004 = vsel %vm2315, %v6002, %v6003
        %v6007 = vadd.f32 %v5970, %v6001
        %v6008 = vadd.f32 %v5971, %v6004
        %v6009 = vld [vmem:[#allocation6 + $0x8] sm:$0x33]
        %v6010 = vunpack.c.l.bf16 %v6009
        %v6011 = vunpack.c.h.bf16 %v6009
        %s6012 = scalar_lea.vmem %s81, 8
        %v6013 = vld [vmem:[%s6012] sm:$0x3]
        %v6015 = vlaneseq
        %v6016 = vshrl.u32 %v6015, 7
        %v6017 = vsub.s32 0, %v6016
        %v6018 = vrot.slane %v6013, %v6017
        %v6019 = vlaneseq
        %v6020 = vshrl.u32 %v6019, 7
        %v6021 = vsub.s32 1, %v6020
        %v6022 = vrot.slane %v6013, %v6021
        %v6025 = vmul.f32 %v5974, %v6018
        %v6026 = vmul.f32 %v5975, %v6022
        %v6027 = vmul.f32 %v6010, %v6018
        %v6028 = vmul.f32 %v6011, %v6022
        %v6033 = vrot.slane %v6025, 5
        %v6034 = vrot.slane %v6027, 5
        %v6035 = vsel %vm2466, %v6033, %v6034
        %v6036 = vrot.slane %v6026, 5
        %v6037 = vrot.slane %v6028, 5
        %v6038 = vsel %vm2466, %v6036, %v6037
        %v6041 = vadd.f32 %v6007, %v6035
        %v6042 = vadd.f32 %v6008, %v6038
        %v6043 = vld [vmem:[#allocation6] sm:$0x88]
        %v6044 = vunpack.c.l.bf16 %v6043
        %v6045 = vunpack.c.h.bf16 %v6043
        %s6046 = scalar_lea.vmem %s81, 10
        %v6047 = vld [vmem:[%s6046] sm:$0x3]
        %v6049 = vlaneseq
        %v6050 = vshrl.u32 %v6049, 7
        %v6051 = vsub.s32 0, %v6050
        %v6052 = vrot.slane %v6047, %v6051
        %v6053 = vlaneseq
        %v6054 = vshrl.u32 %v6053, 7
        %v6055 = vsub.s32 1, %v6054
        %v6056 = vrot.slane %v6047, %v6055
        %v6059 = vmul.f32 %v6044, %v6052
        %v6060 = vmul.f32 %v6045, %v6056
        %v6061 = vmul.f32 %v6010, %v6052
        %v6062 = vmul.f32 %v6011, %v6056
        %v6067 = vrot.slane %v6059, 6
        %v6068 = vrot.slane %v6061, 6
        %v6069 = vsel %vm2540, %v6067, %v6068
        %v6070 = vrot.slane %v6060, 6
        %v6071 = vrot.slane %v6062, 6
        %v6072 = vsel %vm2540, %v6070, %v6071
        %v6075 = vadd.f32 %v6041, %v6069
        %v6076 = vadd.f32 %v6042, %v6072
        %v6077 = vld [vmem:[#allocation6 + $0x8] sm:$0x77]
        %v6078 = vunpack.c.l.bf16 %v6077
        %v6079 = vunpack.c.h.bf16 %v6077
        %s6080 = scalar_lea.vmem %s81, 12
        %v6081 = vld [vmem:[%s6080] sm:$0x3]
        %v6083 = vlaneseq
        %v6084 = vshrl.u32 %v6083, 7
        %v6085 = vsub.s32 0, %v6084
        %v6086 = vrot.slane %v6081, %v6085
        %v6087 = vlaneseq
        %v6088 = vshrl.u32 %v6087, 7
        %v6089 = vsub.s32 1, %v6088
        %v6090 = vrot.slane %v6081, %v6089
        %v6093 = vmul.f32 %v6078, %v6086
        %v6094 = vmul.f32 %v6079, %v6090
        %v6095 = vadd.f32 %v6075, %v6093
        %v6096 = vadd.f32 %v6076, %v6094
        %v6097 = vld [vmem:[#allocation6 + $0x8] sm:$0xff]
        %v6098 = vunpack.c.l.bf16 %v6097
        %v6099 = vunpack.c.h.bf16 %v6097
        %s6100 = scalar_lea.vmem %s81, 14
        %v6101 = vld [vmem:[%s6100] sm:$0x3]
        %v6103 = vlaneseq
        %v6104 = vshrl.u32 %v6103, 7
        %v6105 = vsub.s32 0, %v6104
        %v6106 = vrot.slane %v6101, %v6105
        %v6107 = vlaneseq
        %v6108 = vshrl.u32 %v6107, 7
        %v6109 = vsub.s32 1, %v6108
        %v6110 = vrot.slane %v6101, %v6109
        %v6113 = vmul.f32 %v6098, %v6106
        %v6114 = vmul.f32 %v6099, %v6110
        %v6117 = vrot.slane %v6113, 1
        %v6118 = vrot.slane %v6114, 1
        %v6121 = vadd.f32 %v6095, %v6117
        %v6122 = vadd.f32 %v6096, %v6118
        %v6123 = vld [vmem:[#allocation6 + $0x8] sm:$0xee]
        %v6124 = vunpack.c.l.bf16 %v6123
        %v6125 = vunpack.c.h.bf16 %v6123
        %s6126 = scalar_lea.vmem %s81, 16
        %v6127 = vld [vmem:[%s6126] sm:$0x3]
        %v6129 = vlaneseq
        %v6130 = vshrl.u32 %v6129, 7
        %v6131 = vsub.s32 0, %v6130
        %v6132 = vrot.slane %v6127, %v6131
        %v6133 = vlaneseq
        %v6134 = vshrl.u32 %v6133, 7
        %v6135 = vsub.s32 1, %v6134
        %v6136 = vrot.slane %v6127, %v6135
        %v6139 = vmul.f32 %v6124, %v6132
        %v6140 = vmul.f32 %v6125, %v6136
        %v6143 = vrot.slane %v6139, 2
        %v6144 = vrot.slane %v6140, 2
        %v6147 = vadd.f32 %v6121, %v6143
        %v6148 = vadd.f32 %v6122, %v6144
        %v6149 = vld [vmem:[%s83] sm:$0x3]
        %v6151 = vlaneseq
        %v6152 = vshrl.u32 %v6151, 7
        %v6153 = vsub.s32 0, %v6152
        %v6154 = vrot.slane %v6149, %v6153
        %v6155 = vlaneseq
        %v6156 = vshrl.u32 %v6155, 7
        %v6157 = vsub.s32 1, %v6156
        %v6158 = vrot.slane %v6149, %v6157
        %v6161 = vadd.f32 %v6147, %v6154
        %v6162 = vadd.f32 %v6148, %v6158
        %v6163 = vmax.f32 %v6161, 0.0
        %v6164 = vmax.f32 %v6162, 0.0
        %v6165 = vmin.f32 %v6163, 6.0
        %v6166 = vmin.f32 %v6164, 6.0
        %v6167 = vpack.c.bf16 %v6165, %v6165
        %v6168 = vpack.c.bf16 %v6166, %v6166
        %v6169 = vld [vmem:[%s85] sm:$0xf]
        %v6170 = vld [vmem:[%s85 + $0x4] sm:$0xf]
        %v6173 = vunpack.c.l.b16 %v6169
        %v6174 = vunpack.c.l.b16 %v6170
        %v6175 = vpack.c.b16 %v6174, %v6173
        %vm6176 = vcmask 48128
        %v6178 = vsel %vm6176, %v6175, 0
        %v6181 = vsel %vm2466, %v6167, 0
        %v6184 = vsel %vm2466, %v6168, 0
        %6186 = vmatprep.subr.bf16.mxu0 0
        %6187 = vmatpush1.bf16.msra.mxu0 0
        %6188 = vmatprep.subr.bf16.mxu0 0
        %6189 = vmatpush1.bf16.msra.mxu0 0
        %6190 = vmatprep.subr.bf16.mxu0 0
        %6191 = vmatpush1.bf16.msra.mxu0 0
        %6192 = vmatprep.subr.bf16.mxu0 0
        %6193 = vmatpush1.bf16.msra.mxu0 0
        %6194 = vmatprep.subr.bf16.mxu0 0
        %6195 = vmatpush1.bf16.msra.mxu0 0
        %6196 = vmatprep.subr.bf16.mxu0 0
        %6197 = vmatpush1.bf16.msra.mxu0 0
        %6198 = vmatprep.subr.bf16.mxu0 0
        %6199 = vmatpush1.bf16.msra.mxu0 0
        %6200 = vmatprep.subr.bf16.mxu0 %v6184
        %6201 = vmatpush1.bf16.msra.mxu0 %v6181
        %6202 = vmatprep.subr.bf16.mxu0 0
        %6203 = vmatpush2.bf16.msra.mxu0 0
        %6204 = vmatprep.subr.bf16.mxu0 0
        %6205 = vmatpush2.bf16.msra.mxu0 0
        %6206 = vmatprep.subr.bf16.mxu0 0
        %6207 = vmatpush2.bf16.msra.mxu0 0
        %6208 = vmatprep.subr.bf16.mxu0 0
        %6209 = vmatpush2.bf16.msra.mxu0 0
        %6210 = vmatprep.subr.bf16.mxu0 0
        %6211 = vmatpush2.bf16.msra.mxu0 0
        %6212 = vmatprep.subr.bf16.mxu0 0
        %6213 = vmatpush2.bf16.msra.mxu0 0
        %6214 = vmatprep.subr.bf16.mxu0 0
        %6215 = vmatpush2.bf16.msra.mxu0 0
        %6216 = vmatprep.subr.bf16.mxu0 0
        %6217 = vmatpush2.bf16.msra.mxu0 0
        %6218 = vmatprep.mubr.bf16.mxu0 0
        %6219 = vmatmul.mubr.bf16.gmra.mxu0 %v6178
        %v6220 = vpop.f32.mrf.mxu0
        %v6221 = vadd.f32 0.0, %v6220
        %v6222 = vpop.f32.mrf.mxu0
        %v6223 = vadd.f32 0.0, %v6222
        %v6224 = vpop.f32.mrf.mxu0
        %v6225 = vadd.f32 0.0, %v6224
        %v6226 = vpop.f32.mrf.mxu0
        %v6227 = vadd.f32 0.0, %v6226
        %6228 = vdwg.mxu0
        %v6229 = vpack.c.bf16 %v6225, %v6221
        %v6230 = vpack.c.bf16 %v6227, %v6223
        %v6231 = vld [vmem:[%s87] sm:$0xf]
        %v6232 = vld [vmem:[%s87 + $0x4] sm:$0xf]
        %v6233 = vld [vmem:[%s87 + $0x8] sm:$0xf]
        %v6234 = vld [vmem:[%s87 + $0xc] sm:$0xf]
        %v6235 = vld [vmem:[%s87 + $0x10] sm:$0xf]
        %v6236 = vld [vmem:[%s87 + $0x14] sm:$0xf]
        %v6237 = vld [vmem:[%s87 + $0x18] sm:$0xf]
        %v6238 = vld [vmem:[%s87 + $0x1c] sm:$0xf]
        %v6239 = vld [vmem:[%s87 + $0x20] sm:$0xf]
        %v6240 = vld [vmem:[%s87 + $0x24] sm:$0xf]
        %v6241 = vld [vmem:[%s87 + $0x28] sm:$0xf]
        %v6242 = vld [vmem:[%s87 + $0x2c] sm:$0xf]
        %v6243 = vld [vmem:[%s87 + $0x30] sm:$0xf]
        %v6244 = vld [vmem:[%s87 + $0x34] sm:$0xf]
        %v6245 = vld [vmem:[%s87 + $0x38] sm:$0xf]
        %v6246 = vld [vmem:[%s87 + $0x3c] sm:$0xf]
        %v6247 = vld [vmem:[%s87 + $0x40] sm:$0xf]
        %v6248 = vld [vmem:[%s87 + $0x44] sm:$0xf]
        %v6249 = vld [vmem:[%s87 + $0x48] sm:$0xf]
        %v6250 = vld [vmem:[%s87 + $0x4c] sm:$0xf]
        %v6251 = vld [vmem:[%s87 + $0x50] sm:$0xf]
        %v6252 = vld [vmem:[%s87 + $0x54] sm:$0xf]
        %v6253 = vld [vmem:[%s87 + $0x58] sm:$0xf]
        %v6254 = vld [vmem:[%s87 + $0x5c] sm:$0xf]
        %v6255 = vld [vmem:[%s87 + $0x60] sm:$0xf]
        %v6256 = vld [vmem:[%s87 + $0x64] sm:$0xf]
        %v6257 = vld [vmem:[%s87 + $0x68] sm:$0xf]
        %v6258 = vld [vmem:[%s87 + $0x6c] sm:$0xf]
        %v6259 = vld [vmem:[%s87 + $0x70] sm:$0xf]
        %v6260 = vld [vmem:[%s87 + $0x74] sm:$0xf]
        %v6261 = vld [vmem:[%s87 + $0x78] sm:$0xf]
        %v6262 = vld [vmem:[%s87 + $0x7c] sm:$0xf]
        %v6263 = vld [vmem:[%s89] sm:$0x1]
        %v6265 = vlaneseq
        %v6266 = vshrl.u32 %v6265, 7
        %v6267 = vsub.s32 0, %v6266
        %v6268 = vrot.slane %v6263, %v6267
        %v6302 = vunpack.c.l.b16 %v6231
        %v6303 = vunpack.c.l.b16 %v6232
        %v6304 = vunpack.c.l.b16 %v6233
        %v6305 = vunpack.c.l.b16 %v6234
        %v6306 = vunpack.c.l.b16 %v6235
        %v6307 = vunpack.c.l.b16 %v6236
        %v6308 = vunpack.c.l.b16 %v6237
        %v6309 = vunpack.c.l.b16 %v6238
        %v6310 = vunpack.c.l.b16 %v6239
        %v6311 = vunpack.c.l.b16 %v6240
        %v6312 = vunpack.c.l.b16 %v6241
        %v6313 = vunpack.c.l.b16 %v6242
        %v6314 = vunpack.c.l.b16 %v6243
        %v6315 = vunpack.c.l.b16 %v6244
        %v6316 = vunpack.c.l.b16 %v6245
        %v6317 = vunpack.c.l.b16 %v6246
        %v6318 = vunpack.c.l.b16 %v6247
        %v6319 = vunpack.c.l.b16 %v6248
        %v6320 = vunpack.c.l.b16 %v6249
        %v6321 = vunpack.c.l.b16 %v6250
        %v6322 = vunpack.c.l.b16 %v6251
        %v6323 = vunpack.c.l.b16 %v6252
        %v6324 = vunpack.c.l.b16 %v6253
        %v6325 = vunpack.c.l.b16 %v6254
        %v6326 = vunpack.c.l.b16 %v6255
        %v6327 = vunpack.c.l.b16 %v6256
        %v6328 = vunpack.c.l.b16 %v6257
        %v6329 = vunpack.c.l.b16 %v6258
        %v6330 = vunpack.c.l.b16 %v6259
        %v6331 = vunpack.c.l.b16 %v6260
        %v6332 = vunpack.c.l.b16 %v6261
        %v6333 = vunpack.c.l.b16 %v6262
        %v6334 = vpack.c.b16 %v6303, %v6302
        %v6335 = vpack.c.b16 %v6305, %v6304
        %v6336 = vpack.c.b16 %v6307, %v6306
        %v6337 = vpack.c.b16 %v6309, %v6308
        %v6338 = vpack.c.b16 %v6311, %v6310
        %v6339 = vpack.c.b16 %v6313, %v6312
        %v6340 = vpack.c.b16 %v6315, %v6314
        %v6341 = vpack.c.b16 %v6317, %v6316
        %v6342 = vpack.c.b16 %v6319, %v6318
        %v6343 = vpack.c.b16 %v6321, %v6320
        %v6344 = vpack.c.b16 %v6323, %v6322
        %v6345 = vpack.c.b16 %v6325, %v6324
        %v6346 = vpack.c.b16 %v6327, %v6326
        %v6347 = vpack.c.b16 %v6329, %v6328
        %v6348 = vpack.c.b16 %v6331, %v6330
        %v6349 = vpack.c.b16 %v6333, %v6332
        %6366 = vmatprep.subr.bf16.mxu0 0
        %6367 = vmatpush1.bf16.msra.mxu0 %v6341
        %6368 = vmatprep.subr.bf16.mxu0 0
        %6369 = vmatpush1.bf16.msra.mxu0 %v6340
        %6370 = vmatprep.subr.bf16.mxu0 0
        %6371 = vmatpush1.bf16.msra.mxu0 %v6339
        %6372 = vmatprep.subr.bf16.mxu0 0
        %6373 = vmatpush1.bf16.msra.mxu0 %v6338
        %6374 = vmatprep.subr.bf16.mxu0 0
        %6375 = vmatpush1.bf16.msra.mxu0 %v6337
        %6376 = vmatprep.subr.bf16.mxu0 0
        %6377 = vmatpush1.bf16.msra.mxu0 %v6336
        %6378 = vmatprep.subr.bf16.mxu0 0
        %6379 = vmatpush1.bf16.msra.mxu0 %v6335
        %6380 = vmatprep.subr.bf16.mxu0 0
        %6381 = vmatpush1.bf16.msra.mxu0 %v6334
        %6382 = vmatprep.subr.bf16.mxu0 0
        %6383 = vmatpush2.bf16.msra.mxu0 %v6349
        %6384 = vmatprep.subr.bf16.mxu0 0
        %6385 = vmatpush2.bf16.msra.mxu0 %v6348
        %6386 = vmatprep.subr.bf16.mxu0 0
        %6387 = vmatpush2.bf16.msra.mxu0 %v6347
        %6388 = vmatprep.subr.bf16.mxu0 0
        %6389 = vmatpush2.bf16.msra.mxu0 %v6346
        %6390 = vmatprep.subr.bf16.mxu0 0
        %6391 = vmatpush2.bf16.msra.mxu0 %v6345
        %6392 = vmatprep.subr.bf16.mxu0 0
        %6393 = vmatpush2.bf16.msra.mxu0 %v6344
        %6394 = vmatprep.subr.bf16.mxu0 0
        %6395 = vmatpush2.bf16.msra.mxu0 %v6343
        %6396 = vmatprep.subr.bf16.mxu0 0
        %6397 = vmatpush2.bf16.msra.mxu0 %v6342
        %6398 = vmatprep.mubr.bf16.mxu0 %v6230
        %6399 = vmatmul.mubr.bf16.gmra.mxu0 %v6229
        %v6400 = vpop.f32.mrf.mxu0
        %v6401 = vadd.f32 %v6268, %v6400
        %v6402 = vpop.f32.mrf.mxu0
        %v6403 = vpop.f32.mrf.mxu0
        %v6404 = vadd.f32 %v6268, %v6403
        %v6405 = vpop.f32.mrf.mxu0
        %6406 = vdwg.mxu0
        %v6407 = vld [vmem:[%s91] sm:$0xff]
        %v6408 = vld [vmem:[%s91 + $0x8] sm:$0xff]
        %6410 = vset.pattern.permute.xlu0 0
        %6411 = vperm.xlu0 %6410, %v6407
        %v6412 = vpop.permute.xlu0 %6411
        %6415 = vset.pattern.permute.xlu0 0
        %6416 = vperm.xlu0 %6415, %v6408
        %v6417 = vpop.permute.xlu0 %6416
        %v6419 = vmul.f32 %v6401, %v6412
        %v6420 = vmul.f32 %v6404, %v6417
        %v6421 = vunpack.c.l.bf16 %v5711
        %v6422 = vunpack.c.h.bf16 %v5711
        %v6423 = vadd.f32 %v6419, %v6421
        %v6424 = vadd.f32 %v6420, %v6422
        %v6425 = vpack.c.bf16 %v6424, %v6423
        %v6426 = vld [vmem:[%s93] sm:$0xf]
        %v6427 = vld [vmem:[%s93 + $0x4] sm:$0xf]
        %v6428 = vld [vmem:[%s93 + $0x8] sm:$0xf]
        %v6429 = vld [vmem:[%s93 + $0xc] sm:$0xf]
        %v6430 = vld [vmem:[%s93 + $0x10] sm:$0xf]
        %v6431 = vld [vmem:[%s93 + $0x14] sm:$0xf]
        %v6432 = vld [vmem:[%s93 + $0x18] sm:$0xf]
        %v6433 = vld [vmem:[%s93 + $0x1c] sm:$0xf]
        %v6434 = vld [vmem:[%s93 + $0x20] sm:$0xf]
        %v6435 = vld [vmem:[%s93 + $0x24] sm:$0xf]
        %v6436 = vld [vmem:[%s93 + $0x28] sm:$0xf]
        %v6437 = vld [vmem:[%s93 + $0x2c] sm:$0xf]
        %v6438 = vld [vmem:[%s93 + $0x30] sm:$0xf]
        %v6439 = vld [vmem:[%s93 + $0x34] sm:$0xf]
        %v6440 = vld [vmem:[%s93 + $0x38] sm:$0xf]
        %v6441 = vld [vmem:[%s93 + $0x3c] sm:$0xf]
        %v6442 = vld [vmem:[%s95] sm:$0x1]
        %v6444 = vlaneseq
        %v6445 = vshrl.u32 %v6444, 7
        %v6446 = vsub.s32 0, %v6445
        %v6447 = vrot.slane %v6442, %v6446
        %v6465 = vunpack.c.l.b16 %v6426
        %v6466 = vunpack.c.l.b16 %v6427
        %v6467 = vunpack.c.l.b16 %v6428
        %v6468 = vunpack.c.l.b16 %v6429
        %v6469 = vunpack.c.l.b16 %v6430
        %v6470 = vunpack.c.l.b16 %v6431
        %v6471 = vunpack.c.l.b16 %v6432
        %v6472 = vunpack.c.l.b16 %v6433
        %v6473 = vunpack.c.l.b16 %v6434
        %v6474 = vunpack.c.l.b16 %v6435
        %v6475 = vunpack.c.l.b16 %v6436
        %v6476 = vunpack.c.l.b16 %v6437
        %v6477 = vunpack.c.l.b16 %v6438
        %v6478 = vunpack.c.l.b16 %v6439
        %v6479 = vunpack.c.l.b16 %v6440
        %v6480 = vunpack.c.l.b16 %v6441
        %v6481 = vpack.c.b16 %v6466, %v6465
        %v6482 = vpack.c.b16 %v6468, %v6467
        %v6483 = vpack.c.b16 %v6470, %v6469
        %v6484 = vpack.c.b16 %v6472, %v6471
        %v6485 = vpack.c.b16 %v6474, %v6473
        %v6486 = vpack.c.b16 %v6476, %v6475
        %v6487 = vpack.c.b16 %v6478, %v6477
        %v6488 = vpack.c.b16 %v6480, %v6479
        %6497 = vmatprep.subr.bf16.mxu0 0
        %6498 = vmatpush1.bf16.msra.mxu0 %v6488
        %6499 = vmatprep.subr.bf16.mxu0 0
        %6500 = vmatpush1.bf16.msra.mxu0 %v6487
        %6501 = vmatprep.subr.bf16.mxu0 0
        %6502 = vmatpush1.bf16.msra.mxu0 %v6486
        %6503 = vmatprep.subr.bf16.mxu0 0
        %6504 = vmatpush1.bf16.msra.mxu0 %v6485
        %6505 = vmatprep.subr.bf16.mxu0 0
        %6506 = vmatpush1.bf16.msra.mxu0 %v6484
        %6507 = vmatprep.subr.bf16.mxu0 0
        %6508 = vmatpush1.bf16.msra.mxu0 %v6483
        %6509 = vmatprep.subr.bf16.mxu0 0
        %6510 = vmatpush1.bf16.msra.mxu0 %v6482
        %6511 = vmatprep.subr.bf16.mxu0 0
        %6512 = vmatpush1.bf16.msra.mxu0 %v6481
        %6513 = vmatprep.subr.bf16.mxu0 0
        %6514 = vmatpush2.bf16.msra.mxu0 0
        %6515 = vmatprep.subr.bf16.mxu0 0
        %6516 = vmatpush2.bf16.msra.mxu0 0
        %6517 = vmatprep.subr.bf16.mxu0 0
        %6518 = vmatpush2.bf16.msra.mxu0 0
        %6519 = vmatprep.subr.bf16.mxu0 0
        %6520 = vmatpush2.bf16.msra.mxu0 0
        %6521 = vmatprep.subr.bf16.mxu0 0
        %6522 = vmatpush2.bf16.msra.mxu0 0
        %6523 = vmatprep.subr.bf16.mxu0 0
        %6524 = vmatpush2.bf16.msra.mxu0 0
        %6525 = vmatprep.subr.bf16.mxu0 0
        %6526 = vmatpush2.bf16.msra.mxu0 0
        %6527 = vmatprep.subr.bf16.mxu0 0
        %6528 = vmatpush2.bf16.msra.mxu0 0
        %6529 = vmatprep.mubr.bf16.mxu0 0
        %6530 = vmatmul.mubr.bf16.gmra.mxu0 %v6425
        %v6531 = vpop.f32.mrf.mxu0
        %v6532 = vadd.f32 %v6447, %v6531
        %v6533 = vpop.f32.mrf.mxu0
        %v6534 = vpop.f32.mrf.mxu0
        %v6535 = vadd.f32 %v6447, %v6534
        %v6536 = vpop.f32.mrf.mxu0
        %6537 = vdwg.mxu0
        %v6538 = vmax.f32 %v6532, 0.0
        %v6539 = vmax.f32 %v6535, 0.0
        %v6540 = vmin.f32 %v6538, 6.0
        %v6541 = vmin.f32 %v6539, 6.0
        %v6542 = vld [vmem:[%s97] sm:$0xff]
        %v6543 = vld [vmem:[%s97 + $0x8] sm:$0xff]
        %6545 = vset.pattern.permute.xlu0 0
        %6546 = vperm.xlu0 %6545, %v6542
        %v6547 = vpop.permute.xlu0 %6546
        %6550 = vset.pattern.permute.xlu0 0
        %6551 = vperm.xlu0 %6550, %v6543
        %v6552 = vpop.permute.xlu0 %6551
        %v6554 = vmul.f32 %v6540, %v6547
        %v6555 = vmul.f32 %v6541, %v6552
        %v6556 = vadd.f32 %v6554, %v6555
        %v6557 = vrot.slane %v6556, 4
        %v6558 = vadd.f32 %v6556, %v6557
        %v6559 = vrot.slane %v6558, 2
        %v6560 = vadd.f32 %v6558, %v6559
        %v6561 = vrot.slane %v6560, 1
        %v6562 = vadd.f32 %v6560, %v6561
        %v6563 = vld [vmem:[%s99] sm:$0xff]
        %v6564 = vld [vmem:[%s99 + $0x8] sm:$0xff]
        %v6565 = vld [vmem:[%s99 + $0x10] sm:$0xff]
        %v6566 = vld [vmem:[%s99 + $0x18] sm:$0xff]
        %v6567 = vld [vmem:[%s99 + $0x20] sm:$0xff]
        %v6568 = vld [vmem:[%s99 + $0x28] sm:$0xff]
        %v6569 = vld [vmem:[%s99 + $0x30] sm:$0xff]
        %v6570 = vld [vmem:[%s99 + $0x38] sm:$0xff]
        %v6571 = vld [vmem:[%s99 + $0x40] sm:$0xff]
        %v6572 = vld [vmem:[%s99 + $0x48] sm:$0xff]
        %v6573 = vld [vmem:[%s99 + $0x50] sm:$0xff]
        %v6574 = vld [vmem:[%s99 + $0x58] sm:$0xff]
        %v6575 = vld [vmem:[%s99 + $0x60] sm:$0xff]
        %v6576 = vld [vmem:[%s99 + $0x68] sm:$0xff]
        %v6577 = vld [vmem:[%s99 + $0x70] sm:$0xff]
        %v6578 = vld [vmem:[%s99 + $0x78] sm:$0xff]
        %v6579 = vld [vmem:[%s101] sm:$0x1]
        %6580 = vmatprep.subr.mxu0 0.0
        %6581 = vmatpush1.msra.mxu0 %v6578
        %6582 = vmatprep.subr.mxu0 0.0
        %6583 = vmatpush1.msra.mxu0 %v6577
        %6584 = vmatprep.subr.mxu0 0.0
        %6585 = vmatpush1.msra.mxu0 %v6576
        %6586 = vmatprep.subr.mxu0 0.0
        %6587 = vmatpush1.msra.mxu0 %v6575
        %6588 = vmatprep.subr.mxu0 0.0
        %6589 = vmatpush1.msra.mxu0 %v6574
        %6590 = vmatprep.subr.mxu0 0.0
        %6591 = vmatpush1.msra.mxu0 %v6573
        %6592 = vmatprep.subr.mxu0 0.0
        %6593 = vmatpush1.msra.mxu0 %v6572
        %6594 = vmatprep.subr.mxu0 0.0
        %6595 = vmatpush1.msra.mxu0 %v6571
        %6596 = vmatprep.subr.mxu0 0.0
        %6597 = vmatpush1.msra.mxu0 %v6570
        %6598 = vmatprep.subr.mxu0 0.0
        %6599 = vmatpush1.msra.mxu0 %v6569
        %6600 = vmatprep.subr.mxu0 0.0
        %6601 = vmatpush1.msra.mxu0 %v6568
        %6602 = vmatprep.subr.mxu0 0.0
        %6603 = vmatpush1.msra.mxu0 %v6567
        %6604 = vmatprep.subr.mxu0 0.0
        %6605 = vmatpush1.msra.mxu0 %v6566
        %6606 = vmatprep.subr.mxu0 0.0
        %6607 = vmatpush1.msra.mxu0 %v6565
        %6608 = vmatprep.subr.mxu0 0.0
        %6609 = vmatpush1.msra.mxu0 %v6564
        %6610 = vmatprep.subr.mxu0 0.0
        %6611 = vmatpush1.msra.mxu0 %v6563
        %6612 = vmatprep.subr.mxu0 0.0
        %6613 = vmatpush2.msra.mxu0 0.0
        %6614 = vmatprep.subr.mxu0 0.0
        %6615 = vmatpush2.msra.mxu0 0.0
        %6616 = vmatprep.subr.mxu0 0.0
        %6617 = vmatpush2.msra.mxu0 0.0
        %6618 = vmatprep.subr.mxu0 0.0
        %6619 = vmatpush2.msra.mxu0 0.0
        %6620 = vmatprep.subr.mxu0 0.0
        %6621 = vmatpush2.msra.mxu0 0.0
        %6622 = vmatprep.subr.mxu0 0.0
        %6623 = vmatpush2.msra.mxu0 0.0
        %6624 = vmatprep.subr.mxu0 0.0
        %6625 = vmatpush2.msra.mxu0 0.0
        %6626 = vmatprep.subr.mxu0 0.0
        %6627 = vmatpush2.msra.mxu0 0.0
        %6628 = vmatprep.subr.mxu0 0.0
        %6629 = vmatpush2.msra.mxu0 0.0
        %6630 = vmatprep.subr.mxu0 0.0
        %6631 = vmatpush2.msra.mxu0 0.0
        %6632 = vmatprep.subr.mxu0 0.0
        %6633 = vmatpush2.msra.mxu0 0.0
        %6634 = vmatprep.subr.mxu0 0.0
        %6635 = vmatpush2.msra.mxu0 0.0
        %6636 = vmatprep.subr.mxu0 0.0
        %6637 = vmatpush2.msra.mxu0 0.0
        %6638 = vmatprep.subr.mxu0 0.0
        %6639 = vmatpush2.msra.mxu0 0.0
        %6640 = vmatprep.subr.mxu0 0.0
        %6641 = vmatpush2.msra.mxu0 0.0
        %6642 = vmatprep.subr.mxu0 0.0
        %6643 = vmatpush2.msra.mxu0 0.0
        %6644 = vmatprep.mubr.f32.mxu0 0.0
        %6645 = vmatmul.mubr.f32.gmra.mxu0 %v6562
        %v6646 = vpop.f32.mrf.mxu0
        %v6647 = vadd.f32 %v6579, %v6646
        %v6648 = vpop.f32.mrf.mxu0
        %6649 = vdwg.mxu0
        %v6650 = vlaneseq
        %v6651 = vshrl.u32 %v6650, 7
        %v6652 = vsub.s32 0, %v6651
        %v6653 = vrot.slane %v6647, %v6652
        %6654 = vst [vmem:[%s1554] sm:$0xff] %v6653
        %p6655 = scmp.lt.s32.totalorder %s116, 1
        %s6656 = scalar_select %p6655, %s116, 1
        %s6657 = smul.addr %s6656, 8
        %s6658 = scalar_lea.vmem %s103, %s6657
        // Predicated region
        $region237: #{_lambda_.1} parent=223 // pred_check
          %p6659 = pneg %p1210
        $region238: #{_lambda_.1} parent=223 // pred_check_branch
          %6661 = sbr.rel (%p6659) target = $region240
        $region239: #{_lambda_.1} parent=223 // pred_region
          _
        $region240: #{_lambda_.1} parent=223 // pred_fallthru
          _
      $region224: #{_lambda_.1} parent=5 // pred_fallthru
        _
      %p6662 = scmp.le.s32.totalorder 2, %s111
      // Predicated region
      $region241: #{_lambda_.1} parent=5 // pred_check
        %p6663 = pneg %p6662
      $region242: #{_lambda_.1} parent=5 // pred_check_branch
        %6665 = sbr.rel (%p6663) target = $region244
      $region243: #{_lambda_.1} parent=5 // pred_region
        %s6666 = ssub.s32 %s111, 2
        // Predicated region
        $region245: #{_lambda_.1} parent=243 // pred_check
          %p6667 = pneg %p1216
        $region246: #{_lambda_.1} parent=243 // pred_check_branch
          %6669 = sbr.rel (%p6667) target = $region248
        $region247: #{_lambda_.1} parent=243 // pred_region
          %p6670 = scmp.lt.s32.totalorder %s117, 1
          %s6671 = scalar_select %p6670, %s117, 1
          %s6672 = smul.addr %s6671, 8
          %s6673 = scalar_lea.vmem %s103, %s6672
        $region248: #{_lambda_.1} parent=243 // pred_fallthru
          _
      $region244: #{_lambda_.1} parent=5 // pred_fallthru
        _
    $region6: #{_lambda_.1} parent=1 // loop_footer
      %s115 = sadd.s32 1, %s111
    $region7: #{_lambda_.1} parent=1 // loop_footer_branch
      %110 = sbr.rel target = $region3
    $region8: #{_lambda_.1} parent=1 // loop_exit
      _
    %6674 = vsyncpa [#allocation8], 1
    %s6675 = scalar_lea.sflag [#allocation8], 1
    %6676 = vsyncpa %s6675, 1
    %6677 = vsyncpa [#allocation10], 1

</llo_original>
